<compile_context>
chip_gen: v7x
topology: tpu7x:2x2x1
jax: 0.10.0
libtpu: 0.0.40
codegen_flags: <defaults>
</compile_context>

<pallas_src>
import functools
import math

import jax
import jax.numpy as jnp
from jax.experimental import pallas as pl
from jax.experimental.pallas import tpu as pltpu

N_LAYERS = 3
LN_EPS = 1e-5
LANE = 128
VMEM_LIMIT = 48 * 1024 * 1024  # fits every generation; actual use here is a few MiB


def _round_up(x, m):
    return (x + m - 1) // m * m


def _pad_to(x, shape):
    out = jnp.zeros(shape, x.dtype)
    return out.at[tuple(slice(0, s) for s in x.shape)].set(x)


# --------------------------------------------------------------------------------------
# Kernel 1: input MLP   h = relu(x @ W1 + b1) @ W2 + b2      (grid over node row tiles)
# --------------------------------------------------------------------------------------
def _inp_mlp_kernel(x_ref, w1_ref, b1_ref, w2_ref, b2_ref, o_ref):
    h1 = jnp.dot(x_ref[...], w1_ref[...], preferred_element_type=jnp.float32) + b1_ref[...]
    h1 = jnp.maximum(h1, 0.0)
    h2 = jnp.dot(h1, w2_ref[...], preferred_element_type=jnp.float32) + b2_ref[...]
    o_ref[...] = h2.astype(o_ref.dtype)  # inter-layer h stored bf16


# --------------------------------------------------------------------------------------
# Shared SAGEConv finalize: self/neigh matmuls (bf16 MXU), ReLU, LayerNorm (masked to the
# true hidden width; padded lanes stay exactly 0 because W/b/gamma/beta are zero-padded).
# --------------------------------------------------------------------------------------
def _sage_finalize(h_self_bf16, h_neigh_f32, ws_ref, wn_ref, b_ref, g_ref, beta_ref,
                   o_ref, *, h_true):
    rst = (jnp.dot(h_self_bf16, ws_ref[...], preferred_element_type=jnp.float32)
           + jnp.dot(h_neigh_f32.astype(jnp.bfloat16), wn_ref[...],
                     preferred_element_type=jnp.float32)
           + b_ref[...])
    rst = jnp.maximum(rst, 0.0)                                  # ReLU

    lane_ids = jax.lax.broadcasted_iota(jnp.int32, rst.shape, 1)
    lane_mask = (lane_ids < h_true).astype(jnp.float32)
    inv_h = 1.0 / h_true
    mean = jnp.sum(rst, axis=-1, keepdims=True) * inv_h          # padded lanes are 0
    centered = rst - mean
    var = jnp.sum(centered * centered * lane_mask, axis=-1, keepdims=True) * inv_h
    y = centered * jax.lax.rsqrt(var + LN_EPS) * g_ref[...] + beta_ref[...]
    o_ref[...] = y.astype(o_ref.dtype)


# --------------------------------------------------------------------------------------
# Kernel 2a: first SAGEConv layer.  grid = (row tiles 'parallel', adj reduction 'arbitrary').
# Streams the bf16 adjacency once; h is VMEM-resident (constant index_map) and sliced
# in-kernel.  Also emits 1/max(in_degree,1) for reuse by the remaining layers.
# --------------------------------------------------------------------------------------
def _sage_first_kernel(adj_ref, h_ref, ws_ref, wn_ref, b_ref, g_ref, beta_ref,
                       o_ref, invdeg_ref, neigh_acc, deg_acc, *, h_true, tile_n, tile_k):
    i = pl.program_id(0)
    k = pl.program_id(1)

    @pl.when(k == 0)
    def _():
        neigh_acc[...] = jnp.zeros_like(neigh_acc)
        deg_acc[...] = jnp.zeros_like(deg_acc)

    adj = adj_ref[...]                                    # bf16, fed to the MXU directly
    k_off = pl.multiple_of(k * tile_k, tile_k)
    h_k = h_ref[pl.ds(k_off, tile_k), :]                  # bf16 slab of resident h
    neigh_acc[...] += jnp.dot(adj, h_k, preferred_element_type=jnp.float32)
    deg_acc[...] += jnp.sum(adj.astype(jnp.float32), axis=1, keepdims=True)

    @pl.when(k == pl.num_programs(1) - 1)
    def _():
        # mean aggregation: neigh / max(deg, 1)  (EUP approx reciprocal + 1 Newton step)
        d = jnp.maximum(deg_acc[...], 1.0)
        r = pl.reciprocal(d, approx=True)
        r = r * (2.0 - d * r)
        invdeg_ref[...] = r                               # reused by layers 1..2
        i_off = pl.multiple_of(i * tile_n, tile_n)
        h_self = h_ref[pl.ds(i_off, tile_n), :]
        _sage_finalize(h_self, neigh_acc[...] * r, ws_ref, wn_ref, b_ref, g_ref, beta_ref,
                       o_ref, h_true=h_true)


# --------------------------------------------------------------------------------------
# Kernel 2b: SAGEConv layers 1..2 (inverse in-degree supplied, no adj row-sum needed).
# --------------------------------------------------------------------------------------
def _sage_rest_kernel(adj_ref, h_ref, invdeg_ref, ws_ref, wn_ref, b_ref, g_ref, beta_ref,
                      o_ref, neigh_acc, *, h_true, tile_n, tile_k):
    i = pl.program_id(0)
    k = pl.program_id(1)

    @pl.when(k == 0)
    def _():
        neigh_acc[...] = jnp.zeros_like(neigh_acc)

    k_off = pl.multiple_of(k * tile_k, tile_k)
    neigh_acc[...] += jnp.dot(adj_ref[...], h_ref[pl.ds(k_off, tile_k), :],
                              preferred_element_type=jnp.float32)

    @pl.when(k == pl.num_programs(1) - 1)
    def _():
        i_off = pl.multiple_of(i * tile_n, tile_n)
        h_self = h_ref[pl.ds(i_off, tile_n), :]
        _sage_finalize(h_self, neigh_acc[...] * invdeg_ref[...], ws_ref, wn_ref, b_ref,
                       g_ref, beta_ref, o_ref, h_true=h_true)


# --------------------------------------------------------------------------------------
# Kernel 3: graph readout (mean over valid nodes) fused with the output Linear.
# Accumulates a lane-dense (1, 128) masked node-sum; the tiny (1,128)@(128,f_out) matmul
# happens once in the finalize step.
# --------------------------------------------------------------------------------------
def _readout_kernel(h_ref, wo_ref, bo_ref, o_ref, acc_ref, *, n_true, tile_n):
    i = pl.program_id(0)

    @pl.when(i == 0)
    def _():
        acc_ref[...] = jnp.zeros_like(acc_ref)

    row_ids = jax.lax.broadcasted_iota(jnp.int32, (tile_n, 1), 0) + i * tile_n
    row_mask = (row_ids < n_true).astype(jnp.float32)
    acc_ref[...] += jnp.sum(h_ref[...].astype(jnp.float32) * row_mask,
                            axis=0, keepdims=True)

    @pl.when(i == pl.num_programs(0) - 1)
    def _():
        g = acc_ref[...] * (1.0 / n_true)                  # mean over valid nodes
        o_ref[...] = jnp.dot(g, wo_ref[...], preferred_element_type=jnp.float32) + bo_ref[...]


# --------------------------------------------------------------------------------------
# Wrapper
# --------------------------------------------------------------------------------------
@functools.partial(jax.jit, static_argnames=("hidden", "tile_n", "tile_k"))
def graph_classification_forward(nodes, adj, params, *, hidden, tile_n=256, tile_k=512):
    """nodes: (N, in_feats) f32; adj: (N, N) f32 dense adjacency (adj[i, j]=1 iff edge j->i)."""
    N, f_in = nodes.shape
    h_pad = params["w1"].shape[1]               # hidden, lane-padded to a multiple of 128
    f_out = params["w_out"].shape[1]
    n_pad = _round_up(N, math.lcm(tile_n, tile_k))
    grid_n = n_pad // tile_n
    grid_k = n_pad // tile_k

    # Pad node rows with zeros; store / stream the adjacency as bf16 (lossless for 0/1).
    nodes_p = _pad_to(nodes, (n_pad, f_in))
    adj_bf16 = _pad_to(adj.astype(jnp.bfloat16), (n_pad, n_pad))

    # SAGE weights in bf16 -> single-pass MXU matmuls (bias / LN params stay f32).
    w_self = params["w_self"].astype(jnp.bfloat16)
    w_neigh = params["w_neigh"].astype(jnp.bfloat16)

    # ---- input MLP ----
    h = pl.pallas_call(
        _inp_mlp_kernel,
        out_shape=jax.ShapeDtypeStruct((n_pad, h_pad), jnp.bfloat16),
        grid=(grid_n,),
        in_specs=[
            pl.BlockSpec((tile_n, f_in), lambda i: (i, 0)),
            pl.BlockSpec((f_in, h_pad), lambda i: (0, 0)),
            pl.BlockSpec((1, h_pad), lambda i: (0, 0)),
            pl.BlockSpec((h_pad, h_pad), lambda i: (0, 0)),
            pl.BlockSpec((1, h_pad), lambda i: (0, 0)),
        ],
        out_specs=pl.BlockSpec((tile_n, h_pad), lambda i: (i, 0)),
        compiler_params=pltpu.CompilerParams(
            dimension_semantics=("parallel",), vmem_limit_bytes=VMEM_LIMIT),
    )(nodes_p, params["w1"], params["b1"], params["w2"], params["b2"])

    # ---- 3 x SAGEConv('mean') layers ----
    adj_spec = pl.BlockSpec((tile_n, tile_k), lambda i, k: (i, k))    # streamed bf16 adj
    h_spec = pl.BlockSpec((n_pad, h_pad), lambda i, k: (0, 0))        # VMEM-resident h
    w_spec = pl.BlockSpec((h_pad, h_pad), lambda i, k: (0, 0))
    vec_spec = pl.BlockSpec((1, h_pad), lambda i, k: (0, 0))
    out_h_spec = pl.BlockSpec((tile_n, h_pad), lambda i, k: (i, 0))
    deg_spec = pl.BlockSpec((tile_n, 1), lambda i, k: (i, 0))
    cparams = pltpu.CompilerParams(
        dimension_semantics=("parallel", "arbitrary"), vmem_limit_bytes=VMEM_LIMIT)

    sage_first = pl.pallas_call(
        functools.partial(_sage_first_kernel, h_true=hidden, tile_n=tile_n, tile_k=tile_k),
        out_shape=(jax.ShapeDtypeStruct((n_pad, h_pad), jnp.bfloat16),
                   jax.ShapeDtypeStruct((n_pad, 1), jnp.float32)),
        grid=(grid_n, grid_k),
        in_specs=[adj_spec, h_spec, w_spec, w_spec, vec_spec, vec_spec, vec_spec],
        out_specs=(out_h_spec, deg_spec),
        scratch_shapes=[pltpu.VMEM((tile_n, h_pad), jnp.float32),     # neigh accumulator
                        pltpu.VMEM((tile_n, 1), jnp.float32)],        # degree accumulator
        compiler_params=cparams,
    )
    sage_rest = pl.pallas_call(
        functools.partial(_sage_rest_kernel, h_true=hidden, tile_n=tile_n, tile_k=tile_k),
        out_shape=jax.ShapeDtypeStruct((n_pad, h_pad), jnp.bfloat16),
        grid=(grid_n, grid_k),
        in_specs=[adj_spec, h_spec, deg_spec, w_spec, w_spec, vec_spec, vec_spec, vec_spec],
        out_specs=out_h_spec,
        scratch_shapes=[pltpu.VMEM((tile_n, h_pad), jnp.float32)],
        compiler_params=cparams,
    )

    h, inv_deg = sage_first(adj_bf16, h, w_self[0], w_neigh[0], params["b_sage"][0],
                            params["gamma"][0], params["beta"][0])
    for l in range(1, N_LAYERS):
        h = sage_rest(adj_bf16, h, inv_deg, w_self[l], w_neigh[l], params["b_sage"][l],
                      params["gamma"][l], params["beta"][l])

    # ---- mean_nodes readout + output Linear ----
    out = pl.pallas_call(
        functools.partial(_readout_kernel, n_true=N, tile_n=tile_n),
        out_shape=jax.ShapeDtypeStruct((1, f_out), jnp.float32),
        grid=(grid_n,),
        in_specs=[
            pl.BlockSpec((tile_n, h_pad), lambda i: (i, 0)),
            pl.BlockSpec((h_pad, f_out), lambda i: (0, 0)),
            pl.BlockSpec((1, f_out), lambda i: (0, 0)),
        ],
        out_specs=pl.BlockSpec((1, f_out), lambda i: (0, 0)),
        scratch_shapes=[pltpu.VMEM((1, h_pad), jnp.float32)],
        compiler_params=pltpu.CompilerParams(
            dimension_semantics=("arbitrary",), vmem_limit_bytes=VMEM_LIMIT),
    )(h, params["w_out"], params["b_out"])
    return out


# --------------------------------------------------------------------------------------
# Parameters (stored pre-transposed as (in, out); hidden axis zero-padded to 128 lanes)
# --------------------------------------------------------------------------------------
def init_params(key, in_feats, hidden, out_feats):
    h_pad = _round_up(hidden, LANE)
    ks = jax.random.split(key, 9)
    s = 0.1

    def dense(k, shape, pad_shape):
        return _pad_to(s * jax.random.normal(k, shape, jnp.float32), pad_shape)

    return dict(
        # self.inp = Linear(in, hidden) -> ReLU -> Linear(hidden, hidden)
        w1=dense(ks[0], (in_feats, hidden), (in_feats, h_pad)),
        b1=dense(ks[1], (1, hidden), (1, h_pad)),
        w2=dense(ks[2], (hidden, hidden), (h_pad, h_pad)),
        b2=dense(ks[3], (1, hidden), (1, h_pad)),
        # 3 x SAGEConv('mean'): fc_self, fc_neigh (bias folded into a single vector)
        w_self=dense(ks[4], (N_LAYERS, hidden, hidden), (N_LAYERS, h_pad, h_pad)),
        w_neigh=dense(ks[5], (N_LAYERS, hidden, hidden), (N_LAYERS, h_pad, h_pad)),
        b_sage=dense(ks[6], (N_LAYERS, 1, hidden), (N_LAYERS, 1, h_pad)),
        # LayerNorm(hidden): gamma=1 / beta=0 on true lanes, 0 on padded lanes
        gamma=_pad_to(jnp.ones((N_LAYERS, 1, hidden), jnp.float32), (N_LAYERS, 1, h_pad)),
        beta=jnp.zeros((N_LAYERS, 1, h_pad), jnp.float32),
        # self.out = Linear(hidden, out_feats)
        w_out=dense(ks[7], (hidden, out_feats), (h_pad, out_feats)),
        b_out=s * jax.random.normal(ks[8], (1, out_feats), jnp.float32),
    )


# --------------------------------------------------------------------------------------
# Pure-JAX reference (unpadded, f32 throughout), mirroring the torch/DGL module
# --------------------------------------------------------------------------------------
def reference_forward(nodes, adj, params, hidden):
    H = hidden
    f_in = nodes.shape[1]
    h = jnp.maximum(nodes @ params["w1"][:f_in, :H] + params["b1"][:, :H], 0.0)
    h = h @ params["w2"][:H, :H] + params["b2"][:, :H]
    deg = jnp.sum(adj, axis=1, keepdims=True)
    for l in range(N_LAYERS):
        h_neigh = (adj @ h) / jnp.maximum(deg, 1.0)            # 'mean' aggregation
        rst = (h @ params["w_self"][l, :H, :H]
               + h_neigh @ params["w_neigh"][l, :H, :H]
               + params["b_sage"][l, :, :H])
        rst = jnp.maximum(rst, 0.0)
        mean = jnp.mean(rst, axis=-1, keepdims=True)
        var = jnp.mean((rst - mean) ** 2, axis=-1, keepdims=True)
        h = ((rst - mean) / jnp.sqrt(var + LN_EPS) * params["gamma"][l, :, :H]
             + params["beta"][l, :, :H])
    graph_feat = jnp.mean(h, axis=0, keepdims=True)            # dgl.mean_nodes
    return graph_feat @ params["w_out"][:H, :] + params["b_out"]


if __name__ == "__main__":
    key = jax.random.PRNGKey(0)
    k_nodes, k_adj, k_params = jax.random.split(key, 3)

    # Small but non-trivial graph so both grid axes are exercised with the default tiles:
    # N=600 -> padded to 1024 -> grid_n=4 row tiles x grid_k=2 reduction tiles.
    N, in_feats, hidden, out_feats = 600, 8, 32, 4

    nodes = jax.random.normal(k_nodes, (N, in_feats), jnp.float32)
    adj = (jax.random.uniform(k_adj, (N, N)) < 0.05).astype(jnp.float32)
    adj = adj * (1.0 - jnp.eye(N, dtype=jnp.float32))          # no self loops

    params = init_params(k_params, in_feats, hidden, out_feats)

    out = graph_classification_forward(nodes, adj, params, hidden=hidden)
    out = jax.block_until_ready(out)

    ref = reference_forward(nodes, adj, params, hidden)
    assert out.shape == (1, out_feats)
    # Tolerance covers the bf16 inter-layer features / bf16 SAGE weight matmuls (f32
    # accumulation, LayerNorm after every layer keeps the error bounded) and the EUP
    # approximate-reciprocal (+ Newton step) degree normalization vs the f32 reference.
    assert jnp.allclose(out, ref, atol=2e-2, rtol=2e-2), (out, ref)

    print("KERNEL_OK")
</pallas_src>

<mosaic_0001>
module attributes {stable_mosaic.version = 11 : i64} {
  func.func @_inp_mlp_kernel(%arg0: i32, %arg1: memref<256x8xf32, #tpu.memory_space<vmem>>, %arg2: memref<8x128xf32, #tpu.memory_space<vmem>>, %arg3: memref<1x128xf32, #tpu.memory_space<vmem>>, %arg4: memref<128x128xf32, #tpu.memory_space<vmem>>, %arg5: memref<1x128xf32, #tpu.memory_space<vmem>>, %arg6: memref<256x128xbf16, #tpu.memory_space<vmem>>) attributes {dimension_semantics = [#tpu.dimension_semantics<parallel>], iteration_bounds = array<i64: 4>, scalar_prefetch = 0 : i64, scratch_operands = 0 : i64, tpu.core_type = #tpu.core_type<tc>, window_params = [{transform_indices = @transform_0, window_bounds = array<i64: 256, 8>}, {pipeline_mode = #tpu.pipeline_mode<synchronous>, transform_indices = @transform_1, window_bounds = array<i64: 8, 128>}, {pipeline_mode = #tpu.pipeline_mode<synchronous>, transform_indices = @transform_2, window_bounds = array<i64: 1, 128>}, {pipeline_mode = #tpu.pipeline_mode<synchronous>, transform_indices = @transform_3, window_bounds = array<i64: 128, 128>}, {pipeline_mode = #tpu.pipeline_mode<synchronous>, transform_indices = @transform_4, window_bounds = array<i64: 1, 128>}, {transform_indices = @transform_5, window_bounds = array<i64: 256, 128>}]} {
    %c0 = arith.constant 0 : index
    %c0_0 = arith.constant 0 : index
    %0 = vector.load %arg1[%c0, %c0_0] : memref<256x8xf32, #tpu.memory_space<vmem>>, vector<256x8xf32>
    %c0_1 = arith.constant 0 : index
    %c0_2 = arith.constant 0 : index
    %1 = vector.load %arg2[%c0_1, %c0_2] : memref<8x128xf32, #tpu.memory_space<vmem>>, vector<8x128xf32>
    %cst = arith.constant dense<0.000000e+00> : vector<256x128xf32>
    %2 = tpu.matmul %0, %1, %cst {dimension_numbers = #tpu.dot_dimension_numbers<[1], [0], [0], [1], [0, 0, 1, 1], [], []>} : vector<256x8xf32>, vector<8x128xf32>, vector<256x128xf32> -> vector<256x128xf32>
    %c0_3 = arith.constant 0 : index
    %c0_4 = arith.constant 0 : index
    %3 = vector.load %arg3[%c0_3, %c0_4] : memref<1x128xf32, #tpu.memory_space<vmem>>, vector<1x128xf32>
    %4 = vector.broadcast %3 : vector<1x128xf32> to vector<256x128xf32>
    %5 = arith.addf %2, %4 : vector<256x128xf32>
    %cst_5 = arith.constant 0.000000e+00 : f32
    %6 = vector.broadcast %cst_5 : f32 to vector<256x128xf32>
    %7 = arith.maximumf %5, %6 : vector<256x128xf32>
    %c0_6 = arith.constant 0 : index
    %c0_7 = arith.constant 0 : index
    %8 = vector.load %arg4[%c0_6, %c0_7] : memref<128x128xf32, #tpu.memory_space<vmem>>, vector<128x128xf32>
    %cst_8 = arith.constant dense<0.000000e+00> : vector<256x128xf32>
    %9 = tpu.matmul %7, %8, %cst_8 {dimension_numbers = #tpu.dot_dimension_numbers<[1], [0], [0], [1], [0, 0, 1, 1], [], []>} : vector<256x128xf32>, vector<128x128xf32>, vector<256x128xf32> -> vector<256x128xf32>
    %c0_9 = arith.constant 0 : index
    %c0_10 = arith.constant 0 : index
    %10 = vector.load %arg5[%c0_9, %c0_10] : memref<1x128xf32, #tpu.memory_space<vmem>>, vector<1x128xf32>
    %11 = vector.broadcast %10 : vector<1x128xf32> to vector<256x128xf32>
    %12 = arith.addf %9, %11 : vector<256x128xf32>
    %13 = arith.truncf %12 : vector<256x128xf32> to vector<256x128xbf16>
    %c0_11 = arith.constant 0 : index
    %c0_12 = arith.constant 0 : index
    %14 = vector.load %arg6[%c0_11, %c0_12] : memref<256x128xbf16, #tpu.memory_space<vmem>>, vector<256x128xbf16>
    tpu.vector_store %arg6[%c0_11, %c0_12], %13 {strides = array<i32>} : memref<256x128xbf16, #tpu.memory_space<vmem>>, vector<256x128xbf16>,
    return
  }
  func.func @transform_0(%arg0: i32) -> (i32, i32) {
    %c0_i32 = arith.constant 0 : i32
    %c0_i32_0 = arith.constant 0 : i32
    return %arg0, %c0_i32 : i32, i32
  }
  func.func @transform_1(%arg0: i32) -> (i32, i32) {
    %c0_i32 = arith.constant 0 : i32
    %c0_i32_0 = arith.constant 0 : i32
    %c0_i32_1 = arith.constant 0 : i32
    return %c0_i32, %c0_i32_0 : i32, i32
  }
  func.func @transform_2(%arg0: i32) -> (i32, i32) {
    %c0_i32 = arith.constant 0 : i32
    %c0_i32_0 = arith.constant 0 : i32
    %c0_i32_1 = arith.constant 0 : i32
    return %c0_i32, %c0_i32_0 : i32, i32
  }
  func.func @transform_3(%arg0: i32) -> (i32, i32) {
    %c0_i32 = arith.constant 0 : i32
    %c0_i32_0 = arith.constant 0 : i32
    %c0_i32_1 = arith.constant 0 : i32
    return %c0_i32, %c0_i32_0 : i32, i32
  }
  func.func @transform_4(%arg0: i32) -> (i32, i32) {
    %c0_i32 = arith.constant 0 : i32
    %c0_i32_0 = arith.constant 0 : i32
    %c0_i32_1 = arith.constant 0 : i32
    return %c0_i32, %c0_i32_0 : i32, i32
  }
  func.func @transform_5(%arg0: i32) -> (i32, i32) {
    %c0_i32 = arith.constant 0 : i32
    %c0_i32_0 = arith.constant 0 : i32
    return %arg0, %c0_i32 : i32, i32
  }
}

module attributes {stable_mosaic.version = 11 : i64} {
  func.func @_sage_first_kernel(%arg0: i32, %arg1: i32, %arg2: memref<256x512xbf16, #tpu.memory_space<vmem>>, %arg3: memref<1024x128xbf16, #tpu.memory_space<vmem>>, %arg4: memref<128x128xbf16, #tpu.memory_space<vmem>>, %arg5: memref<128x128xbf16, #tpu.memory_space<vmem>>, %arg6: memref<1x128xf32, #tpu.memory_space<vmem>>, %arg7: memref<1x128xf32, #tpu.memory_space<vmem>>, %arg8: memref<1x128xf32, #tpu.memory_space<vmem>>, %arg9: memref<256x128xbf16, #tpu.memory_space<vmem>>, %arg10: memref<256x1xf32, #tpu.memory_space<vmem>>, %arg11: memref<256x128xf32, #tpu.memory_space<vmem>>, %arg12: memref<256x1xf32, #tpu.memory_space<vmem>>) attributes {dimension_semantics = [#tpu.dimension_semantics<parallel>, #tpu.dimension_semantics<arbitrary>], iteration_bounds = array<i64: 4, 2>, scalar_prefetch = 0 : i64, scratch_operands = 2 : i64, tpu.core_type = #tpu.core_type<tc>, window_params = [{transform_indices = @transform_0, window_bounds = array<i64: 256, 512>}, {pipeline_mode = #tpu.pipeline_mode<synchronous>, transform_indices = @transform_1, window_bounds = array<i64: 1024, 128>}, {pipeline_mode = #tpu.pipeline_mode<synchronous>, transform_indices = @transform_2, window_bounds = array<i64: 128, 128>}, {pipeline_mode = #tpu.pipeline_mode<synchronous>, transform_indices = @transform_3, window_bounds = array<i64: 128, 128>}, {pipeline_mode = #tpu.pipeline_mode<synchronous>, transform_indices = @transform_4, window_bounds = array<i64: 1, 128>}, {pipeline_mode = #tpu.pipeline_mode<synchronous>, transform_indices = @transform_5, window_bounds = array<i64: 1, 128>}, {pipeline_mode = #tpu.pipeline_mode<synchronous>, transform_indices = @transform_6, window_bounds = array<i64: 1, 128>}, {transform_indices = @transform_7, window_bounds = array<i64: 256, 128>}, {transform_indices = @transform_8, window_bounds = array<i64: 256, 1>}]} {
    %c0_i32 = arith.constant 0 : i32
    %0 = arith.cmpi eq, %arg1, %c0_i32 : i32
    %1 = arith.extui %0 : i1 to i32
    %c0_i32_0 = arith.constant 0 : i32
    %2 = arith.cmpi ne, %1, %c0_i32_0 : i32
    scf.if %2 {
      %cst_13 = arith.constant 0.000000e+00 : f32
      %21 = vector.broadcast %cst_13 : f32 to vector<256x128xf32>
      %c0_14 = arith.constant 0 : index
      %c0_15 = arith.constant 0 : index
      %22 = vector.load %arg11[%c0_14, %c0_15] : memref<256x128xf32, #tpu.memory_space<vmem>>, vector<256x128xf32>
      tpu.vector_store %arg11[%c0_14, %c0_15], %21 {strides = array<i32>} : memref<256x128xf32, #tpu.memory_space<vmem>>, vector<256x128xf32>,
      %cst_16 = arith.constant 0.000000e+00 : f32
      %23 = vector.broadcast %cst_16 : f32 to vector<256x1xf32>
      %c0_17 = arith.constant 0 : index
      %c0_18 = arith.constant 0 : index
      %24 = vector.load %arg12[%c0_17, %c0_18] : memref<256x1xf32, #tpu.memory_space<vmem>>, vector<256x1xf32>
      tpu.vector_store %arg12[%c0_17, %c0_18], %23 {strides = array<i32>} : memref<256x1xf32, #tpu.memory_space<vmem>>, vector<256x1xf32>,
    } else {
    }
    %c0 = arith.constant 0 : index
    %c0_1 = arith.constant 0 : index
    %3 = vector.load %arg2[%c0, %c0_1] : memref<256x512xbf16, #tpu.memory_space<vmem>>, vector<256x512xbf16>
    %c512_i32 = arith.constant 512 : i32
    %4 = arith.muli %arg1, %c512_i32 : i32
    %5 = tpu.assume_multiple %4, 512 : i32
    %6 = arith.index_cast %5 : i32 to index
    %c0_2 = arith.constant 0 : index
    %7 = vector.load %arg3[%6, %c0_2] : memref<1024x128xbf16, #tpu.memory_space<vmem>>, vector<512x128xbf16>
    %c0_3 = arith.constant 0 : index
    %c0_4 = arith.constant 0 : index
    %8 = vector.load %arg11[%c0_3, %c0_4] : memref<256x128xf32, #tpu.memory_space<vmem>>, vector<256x128xf32>
    %cst = arith.constant dense<0.000000e+00> : vector<256x128xf32>
    %9 = tpu.matmul %3, %7, %cst {dimension_numbers = #tpu.dot_dimension_numbers<[1], [0], [0], [1], [0, 0, 1, 1], [], []>} : vector<256x512xbf16>, vector<512x128xbf16>, vector<256x128xf32> -> vector<256x128xf32>
    %10 = arith.addf %8, %9 : vector<256x128xf32>
    %c0_5 = arith.constant 0 : index
    %c0_6 = arith.constant 0 : index
    %11 = vector.load %arg11[%c0_5, %c0_6] : memref<256x128xf32, #tpu.memory_space<vmem>>, vector<256x128xf32>
    tpu.vector_store %arg11[%c0_5, %c0_6], %10 {strides = array<i32>} : memref<256x128xf32, #tpu.memory_space<vmem>>, vector<256x128xf32>,
    %c0_7 = arith.constant 0 : index
    %c0_8 = arith.constant 0 : index
    %12 = vector.load %arg12[%c0_7, %c0_8] : memref<256x1xf32, #tpu.memory_space<vmem>>, vector<256x1xf32>
    %13 = arith.extf %3 : vector<256x512xbf16> to vector<256x512xf32>
    %cst_9 = arith.constant dense<0.000000e+00> : vector<256xf32>
    %14 = vector.multi_reduction <add>, %13, %cst_9 [1] : vector<256x512xf32> to vector<256xf32>
    %15 = vector.shape_cast %14 : vector<256xf32> to vector<256x1xf32>
    %16 = arith.addf %12, %15 : vector<256x1xf32>
    %c0_10 = arith.constant 0 : index
    %c0_11 = arith.constant 0 : index
    %17 = vector.load %arg12[%c0_10, %c0_11] : memref<256x1xf32, #tpu.memory_space<vmem>>, vector<256x1xf32>
    tpu.vector_store %arg12[%c0_10, %c0_11], %16 {strides = array<i32>} : memref<256x1xf32, #tpu.memory_space<vmem>>, vector<256x1xf32>,
    %c1_i32 = arith.constant 1 : i32
    %18 = arith.cmpi eq, %arg1, %c1_i32 : i32
    %19 = arith.extui %18 : i1 to i32
    %c0_i32_12 = arith.constant 0 : i32
    %20 = arith.cmpi ne, %19, %c0_i32_12 : i32
    scf.if %20 {
      %c0_13 = arith.constant 0 : index
      %c0_14 = arith.constant 0 : index
      %21 = vector.load %arg12[%c0_13, %c0_14] : memref<256x1xf32, #tpu.memory_space<vmem>>, vector<256x1xf32>
      %cst_15 = arith.constant 1.000000e+00 : f32
      %22 = vector.broadcast %cst_15 : f32 to vector<256x1xf32>
      %23 = arith.maximumf %21, %22 : vector<256x1xf32>
      %24 = tpu.reciprocal %23 {approx = true} : vector<256x1xf32> -> vector<256x1xf32>
      %25 = arith.mulf %23, %24 : vector<256x1xf32>
      %cst_16 = arith.constant 2.000000e+00 : f32
      %26 = vector.broadcast %cst_16 : f32 to vector<256x1xf32>
      %27 = arith.subf %26, %25 : vector<256x1xf32>
      %28 = arith.mulf %24, %27 : vector<256x1xf32>
      %c0_17 = arith.constant 0 : index
      %c0_18 = arith.constant 0 : index
      %29 = vector.load %arg10[%c0_17, %c0_18] : memref<256x1xf32, #tpu.memory_space<vmem>>, vector<256x1xf32>
      tpu.vector_store %arg10[%c0_17, %c0_18], %28 {strides = array<i32>} : memref<256x1xf32, #tpu.memory_space<vmem>>, vector<256x1xf32>,
      %c256_i32 = arith.constant 256 : i32
      %30 = arith.muli %arg0, %c256_i32 : i32
      %31 = tpu.assume_multiple %30, 256 : i32
      %32 = arith.index_cast %31 : i32 to index
      %c0_19 = arith.constant 0 : index
      %33 = vector.load %arg3[%32, %c0_19] : memref<1024x128xbf16, #tpu.memory_space<vmem>>, vector<256x128xbf16>
      %c0_20 = arith.constant 0 : index
      %c0_21 = arith.constant 0 : index
      %34 = vector.load %arg11[%c0_20, %c0_21] : memref<256x128xf32, #tpu.memory_space<vmem>>, vector<256x128xf32>
      %35 = vector.broadcast %28 : vector<256x1xf32> to vector<256x128xf32>
      %36 = arith.mulf %34, %35 : vector<256x128xf32>
      %c0_22 = arith.constant 0 : index
      %c0_23 = arith.constant 0 : index
      %37 = vector.load %arg4[%c0_22, %c0_23] : memref<128x128xbf16, #tpu.memory_space<vmem>>, vector<128x128xbf16>
      %cst_24 = arith.constant dense<0.000000e+00> : vector<256x128xf32>
      %38 = tpu.matmul %33, %37, %cst_24 {dimension_numbers = #tpu.dot_dimension_numbers<[1], [0], [0], [1], [0, 0, 1, 1], [], []>} : vector<256x128xbf16>, vector<128x128xbf16>, vector<256x128xf32> -> vector<256x128xf32>
      %39 = arith.truncf %36 : vector<256x128xf32> to vector<256x128xbf16>
      %c0_25 = arith.constant 0 : index
      %c0_26 = arith.constant 0 : index
      %40 = vector.load %arg5[%c0_25, %c0_26] : memref<128x128xbf16, #tpu.memory_space<vmem>>, vector<128x128xbf16>
      %cst_27 = arith.constant dense<0.000000e+00> : vector<256x128xf32>
      %41 = tpu.matmul %39, %40, %cst_27 {dimension_numbers = #tpu.dot_dimension_numbers<[1], [0], [0], [1], [0, 0, 1, 1], [], []>} : vector<256x128xbf16>, vector<128x128xbf16>, vector<256x128xf32> -> vector<256x128xf32>
      %42 = arith.addf %38, %41 : vector<256x128xf32>
      %c0_28 = arith.constant 0 : index
      %c0_29 = arith.constant 0 : index
      %43 = vector.load %arg6[%c0_28, %c0_29] : memref<1x128xf32, #tpu.memory_space<vmem>>, vector<1x128xf32>
      %44 = vector.broadcast %43 : vector<1x128xf32> to vector<256x128xf32>
      %45 = arith.addf %42, %44 : vector<256x128xf32>
      %cst_30 = arith.constant 0.000000e+00 : f32
      %46 = vector.broadcast %cst_30 : f32 to vector<256x128xf32>
      %47 = arith.maximumf %45, %46 : vector<256x128xf32>
      %48 = tpu.iota {dimensions = array<i32: 1>} : vector<256x128xi32>
      %c32_i32 = arith.constant 32 : i32
      %49 = vector.broadcast %c32_i32 : i32 to vector<256x128xi32>
      %50 = arith.cmpi slt, %48, %49 : vector<256x128xi32>
      %51 = arith.extui %50 : vector<256x128xi1> to vector<256x128xi32>
      %52 = arith.sitofp %51 : vector<256x128xi32> to vector<256x128xf32>
      %cst_31 = arith.constant dense<0.000000e+00> : vector<256xf32>
      %53 = vector.multi_reduction <add>, %47, %cst_31 [1] : vector<256x128xf32> to vector<256xf32>
      %54 = vector.shape_cast %53 : vector<256xf32> to vector<256x1xf32>
      %cst_32 = arith.constant 3.125000e-02 : f32
      %55 = vector.broadcast %cst_32 : f32 to vector<256x1xf32>
      %56 = arith.mulf %54, %55 : vector<256x1xf32>
      %57 = vector.broadcast %56 : vector<256x1xf32> to vector<256x128xf32>
      %58 = arith.subf %47, %57 : vector<256x128xf32>
      %59 = arith.mulf %58, %58 : vector<256x128xf32>
      %60 = arith.mulf %59, %52 : vector<256x128xf32>
      %cst_33 = arith.constant dense<0.000000e+00> : vector<256xf32>
      %61 = vector.multi_reduction <add>, %60, %cst_33 [1] : vector<256x128xf32> to vector<256xf32>
      %62 = vector.shape_cast %61 : vector<256xf32> to vector<256x1xf32>
      %cst_34 = arith.constant 3.125000e-02 : f32
      %63 = vector.broadcast %cst_34 : f32 to vector<256x1xf32>
      %64 = arith.mulf %62, %63 : vector<256x1xf32>
      %cst_35 = arith.constant 9.99999974E-6 : f32
      %65 = vector.broadcast %cst_35 : f32 to vector<256x1xf32>
      %66 = arith.addf %64, %65 : vector<256x1xf32>
      %67 = math.rsqrt %66 : vector<256x1xf32>
      %68 = vector.broadcast %67 : vector<256x1xf32> to vector<256x128xf32>
      %69 = arith.mulf %58, %68 : vector<256x128xf32>
      %c0_36 = arith.constant 0 : index
      %c0_37 = arith.constant 0 : index
      %70 = vector.load %arg7[%c0_36, %c0_37] : memref<1x128xf32, #tpu.memory_space<vmem>>, vector<1x128xf32>
      %71 = vector.broadcast %70 : vector<1x128xf32> to vector<256x128xf32>
      %72 = arith.mulf %69, %71 : vector<256x128xf32>
      %c0_38 = arith.constant 0 : index
      %c0_39 = arith.constant 0 : index
      %73 = vector.load %arg8[%c0_38, %c0_39] : memref<1x128xf32, #tpu.memory_space<vmem>>, vector<1x128xf32>
      %74 = vector.broadcast %73 : vector<1x128xf32> to vector<256x128xf32>
      %75 = arith.addf %72, %74 : vector<256x128xf32>
      %76 = arith.truncf %75 : vector<256x128xf32> to vector<256x128xbf16>
      %c0_40 = arith.constant 0 : index
      %c0_41 = arith.constant 0 : index
      %77 = vector.load %arg9[%c0_40, %c0_41] : memref<256x128xbf16, #tpu.memory_space<vmem>>, vector<256x128xbf16>
      tpu.vector_store %arg9[%c0_40, %c0_41], %76 {strides = array<i32>} : memref<256x128xbf16, #tpu.memory_space<vmem>>, vector<256x128xbf16>,
    } else {
    }
    return
  }
  func.func @transform_0(%arg0: i32, %arg1: i32) -> (i32, i32) {
    %c0_i32 = arith.constant 0 : i32
    return %arg0, %arg1 : i32, i32
  }
  func.func @transform_1(%arg0: i32, %arg1: i32) -> (i32, i32) {
    %c0_i32 = arith.constant 0 : i32
    %c0_i32_0 = arith.constant 0 : i32
    %c0_i32_1 = arith.constant 0 : i32
    return %c0_i32, %c0_i32_0 : i32, i32
  }
  func.func @transform_2(%arg0: i32, %arg1: i32) -> (i32, i32) {
    %c0_i32 = arith.constant 0 : i32
    %c0_i32_0 = arith.constant 0 : i32
    %c0_i32_1 = arith.constant 0 : i32
    return %c0_i32, %c0_i32_0 : i32, i32
  }
  func.func @transform_3(%arg0: i32, %arg1: i32) -> (i32, i32) {
    %c0_i32 = arith.constant 0 : i32
    %c0_i32_0 = arith.constant 0 : i32
    %c0_i32_1 = arith.constant 0 : i32
    return %c0_i32, %c0_i32_0 : i32, i32
  }
  func.func @transform_4(%arg0: i32, %arg1: i32) -> (i32, i32) {
    %c0_i32 = arith.constant 0 : i32
    %c0_i32_0 = arith.constant 0 : i32
    %c0_i32_1 = arith.constant 0 : i32
    return %c0_i32, %c0_i32_0 : i32, i32
  }
  func.func @transform_5(%arg0: i32, %arg1: i32) -> (i32, i32) {
    %c0_i32 = arith.constant 0 : i32
    %c0_i32_0 = arith.constant 0 : i32
    %c0_i32_1 = arith.constant 0 : i32
    return %c0_i32, %c0_i32_0 : i32, i32
  }
  func.func @transform_6(%arg0: i32, %arg1: i32) -> (i32, i32) {
    %c0_i32 = arith.constant 0 : i32
    %c0_i32_0 = arith.constant 0 : i32
    %c0_i32_1 = arith.constant 0 : i32
    return %c0_i32, %c0_i32_0 : i32, i32
  }
  func.func @transform_7(%arg0: i32, %arg1: i32) -> (i32, i32) {
    %c0_i32 = arith.constant 0 : i32
    %c0_i32_0 = arith.constant 0 : i32
    return %arg0, %c0_i32 : i32, i32
  }
  func.func @transform_8(%arg0: i32, %arg1: i32) -> (i32, i32) {
    %c0_i32 = arith.constant 0 : i32
    %c0_i32_0 = arith.constant 0 : i32
    return %arg0, %c0_i32 : i32, i32
  }
}

module attributes {stable_mosaic.version = 11 : i64} {
  func.func @_sage_rest_kernel(%arg0: i32, %arg1: i32, %arg2: memref<256x512xbf16, #tpu.memory_space<vmem>>, %arg3: memref<1024x128xbf16, #tpu.memory_space<vmem>>, %arg4: memref<256x1xf32, #tpu.memory_space<vmem>>, %arg5: memref<128x128xbf16, #tpu.memory_space<vmem>>, %arg6: memref<128x128xbf16, #tpu.memory_space<vmem>>, %arg7: memref<1x128xf32, #tpu.memory_space<vmem>>, %arg8: memref<1x128xf32, #tpu.memory_space<vmem>>, %arg9: memref<1x128xf32, #tpu.memory_space<vmem>>, %arg10: memref<256x128xbf16, #tpu.memory_space<vmem>>, %arg11: memref<256x128xf32, #tpu.memory_space<vmem>>) attributes {dimension_semantics = [#tpu.dimension_semantics<parallel>, #tpu.dimension_semantics<arbitrary>], iteration_bounds = array<i64: 4, 2>, scalar_prefetch = 0 : i64, scratch_operands = 1 : i64, tpu.core_type = #tpu.core_type<tc>, window_params = [{transform_indices = @transform_0, window_bounds = array<i64: 256, 512>}, {pipeline_mode = #tpu.pipeline_mode<synchronous>, transform_indices = @transform_1, window_bounds = array<i64: 1024, 128>}, {transform_indices = @transform_2, window_bounds = array<i64: 256, 1>}, {pipeline_mode = #tpu.pipeline_mode<synchronous>, transform_indices = @transform_3, window_bounds = array<i64: 128, 128>}, {pipeline_mode = #tpu.pipeline_mode<synchronous>, transform_indices = @transform_4, window_bounds = array<i64: 128, 128>}, {pipeline_mode = #tpu.pipeline_mode<synchronous>, transform_indices = @transform_5, window_bounds = array<i64: 1, 128>}, {pipeline_mode = #tpu.pipeline_mode<synchronous>, transform_indices = @transform_6, window_bounds = array<i64: 1, 128>}, {pipeline_mode = #tpu.pipeline_mode<synchronous>, transform_indices = @transform_7, window_bounds = array<i64: 1, 128>}, {transform_indices = @transform_8, window_bounds = array<i64: 256, 128>}]} {
    %c0_i32 = arith.constant 0 : i32
    %0 = arith.cmpi eq, %arg1, %c0_i32 : i32
    %1 = arith.extui %0 : i1 to i32
    %c0_i32_0 = arith.constant 0 : i32
    %2 = arith.cmpi ne, %1, %c0_i32_0 : i32
    scf.if %2 {
      %cst_8 = arith.constant 0.000000e+00 : f32
      %15 = vector.broadcast %cst_8 : f32 to vector<256x128xf32>
      %c0_9 = arith.constant 0 : index
      %c0_10 = arith.constant 0 : index
      %16 = vector.load %arg11[%c0_9, %c0_10] : memref<256x128xf32, #tpu.memory_space<vmem>>, vector<256x128xf32>
      tpu.vector_store %arg11[%c0_9, %c0_10], %15 {strides = array<i32>} : memref<256x128xf32, #tpu.memory_space<vmem>>, vector<256x128xf32>,
    } else {
    }
    %c512_i32 = arith.constant 512 : i32
    %3 = arith.muli %arg1, %c512_i32 : i32
    %4 = tpu.assume_multiple %3, 512 : i32
    %c0 = arith.constant 0 : index
    %c0_1 = arith.constant 0 : index
    %5 = vector.load %arg11[%c0, %c0_1] : memref<256x128xf32, #tpu.memory_space<vmem>>, vector<256x128xf32>
    %c0_2 = arith.constant 0 : index
    %c0_3 = arith.constant 0 : index
    %6 = vector.load %arg2[%c0_2, %c0_3] : memref<256x512xbf16, #tpu.memory_space<vmem>>, vector<256x512xbf16>
    %7 = arith.index_cast %4 : i32 to index
    %c0_4 = arith.constant 0 : index
    %8 = vector.load %arg3[%7, %c0_4] : memref<1024x128xbf16, #tpu.memory_space<vmem>>, vector<512x128xbf16>
    %cst = arith.constant dense<0.000000e+00> : vector<256x128xf32>
    %9 = tpu.matmul %6, %8, %cst {dimension_numbers = #tpu.dot_dimension_numbers<[1], [0], [0], [1], [0, 0, 1, 1], [], []>} : vector<256x512xbf16>, vector<512x128xbf16>, vector<256x128xf32> -> vector<256x128xf32>
    %10 = arith.addf %5, %9 : vector<256x128xf32>
    %c0_5 = arith.constant 0 : index
    %c0_6 = arith.constant 0 : index
    %11 = vector.load %arg11[%c0_5, %c0_6] : memref<256x128xf32, #tpu.memory_space<vmem>>, vector<256x128xf32>
    tpu.vector_store %arg11[%c0_5, %c0_6], %10 {strides = array<i32>} : memref<256x128xf32, #tpu.memory_space<vmem>>, vector<256x128xf32>,
    %c1_i32 = arith.constant 1 : i32
    %12 = arith.cmpi eq, %arg1, %c1_i32 : i32
    %13 = arith.extui %12 : i1 to i32
    %c0_i32_7 = arith.constant 0 : i32
    %14 = arith.cmpi ne, %13, %c0_i32_7 : i32
    scf.if %14 {
      %c256_i32 = arith.constant 256 : i32
      %15 = arith.muli %arg0, %c256_i32 : i32
      %16 = tpu.assume_multiple %15, 256 : i32
      %17 = arith.index_cast %16 : i32 to index
      %c0_8 = arith.constant 0 : index
      %18 = vector.load %arg3[%17, %c0_8] : memref<1024x128xbf16, #tpu.memory_space<vmem>>, vector<256x128xbf16>
      %c0_9 = arith.constant 0 : index
      %c0_10 = arith.constant 0 : index
      %19 = vector.load %arg11[%c0_9, %c0_10] : memref<256x128xf32, #tpu.memory_space<vmem>>, vector<256x128xf32>
      %c0_11 = arith.constant 0 : index
      %c0_12 = arith.constant 0 : index
      %20 = vector.load %arg4[%c0_11, %c0_12] : memref<256x1xf32, #tpu.memory_space<vmem>>, vector<256x1xf32>
      %21 = vector.broadcast %20 : vector<256x1xf32> to vector<256x128xf32>
      %22 = arith.mulf %19, %21 : vector<256x128xf32>
      %c0_13 = arith.constant 0 : index
      %c0_14 = arith.constant 0 : index
      %23 = vector.load %arg5[%c0_13, %c0_14] : memref<128x128xbf16, #tpu.memory_space<vmem>>, vector<128x128xbf16>
      %cst_15 = arith.constant dense<0.000000e+00> : vector<256x128xf32>
      %24 = tpu.matmul %18, %23, %cst_15 {dimension_numbers = #tpu.dot_dimension_numbers<[1], [0], [0], [1], [0, 0, 1, 1], [], []>} : vector<256x128xbf16>, vector<128x128xbf16>, vector<256x128xf32> -> vector<256x128xf32>
      %25 = arith.truncf %22 : vector<256x128xf32> to vector<256x128xbf16>
      %c0_16 = arith.constant 0 : index
      %c0_17 = arith.constant 0 : index
      %26 = vector.load %arg6[%c0_16, %c0_17] : memref<128x128xbf16, #tpu.memory_space<vmem>>, vector<128x128xbf16>
      %cst_18 = arith.constant dense<0.000000e+00> : vector<256x128xf32>
      %27 = tpu.matmul %25, %26, %cst_18 {dimension_numbers = #tpu.dot_dimension_numbers<[1], [0], [0], [1], [0, 0, 1, 1], [], []>} : vector<256x128xbf16>, vector<128x128xbf16>, vector<256x128xf32> -> vector<256x128xf32>
      %28 = arith.addf %24, %27 : vector<256x128xf32>
      %c0_19 = arith.constant 0 : index
      %c0_20 = arith.constant 0 : index
      %29 = vector.load %arg7[%c0_19, %c0_20] : memref<1x128xf32, #tpu.memory_space<vmem>>, vector<1x128xf32>
      %30 = vector.broadcast %29 : vector<1x128xf32> to vector<256x128xf32>
      %31 = arith.addf %28, %30 : vector<256x128xf32>
      %cst_21 = arith.constant 0.000000e+00 : f32
      %32 = vector.broadcast %cst_21 : f32 to vector<256x128xf32>
      %33 = arith.maximumf %31, %32 : vector<256x128xf32>
      %34 = tpu.iota {dimensions = array<i32: 1>} : vector<256x128xi32>
      %c32_i32 = arith.constant 32 : i32
      %35 = vector.broadcast %c32_i32 : i32 to vector<256x128xi32>
      %36 = arith.cmpi slt, %34, %35 : vector<256x128xi32>
      %37 = arith.extui %36 : vector<256x128xi1> to vector<256x128xi32>
      %38 = arith.sitofp %37 : vector<256x128xi32> to vector<256x128xf32>
      %cst_22 = arith.constant dense<0.000000e+00> : vector<256xf32>
      %39 = vector.multi_reduction <add>, %33, %cst_22 [1] : vector<256x128xf32> to vector<256xf32>
      %40 = vector.shape_cast %39 : vector<256xf32> to vector<256x1xf32>
      %cst_23 = arith.constant 3.125000e-02 : f32
      %41 = vector.broadcast %cst_23 : f32 to vector<256x1xf32>
      %42 = arith.mulf %40, %41 : vector<256x1xf32>
      %43 = vector.broadcast %42 : vector<256x1xf32> to vector<256x128xf32>
      %44 = arith.subf %33, %43 : vector<256x128xf32>
      %45 = arith.mulf %44, %44 : vector<256x128xf32>
      %46 = arith.mulf %45, %38 : vector<256x128xf32>
      %cst_24 = arith.constant dense<0.000000e+00> : vector<256xf32>
      %47 = vector.multi_reduction <add>, %46, %cst_24 [1] : vector<256x128xf32> to vector<256xf32>
      %48 = vector.shape_cast %47 : vector<256xf32> to vector<256x1xf32>
      %cst_25 = arith.constant 3.125000e-02 : f32
      %49 = vector.broadcast %cst_25 : f32 to vector<256x1xf32>
      %50 = arith.mulf %48, %49 : vector<256x1xf32>
      %cst_26 = arith.constant 9.99999974E-6 : f32
      %51 = vector.broadcast %cst_26 : f32 to vector<256x1xf32>
      %52 = arith.addf %50, %51 : vector<256x1xf32>
      %53 = math.rsqrt %52 : vector<256x1xf32>
      %54 = vector.broadcast %53 : vector<256x1xf32> to vector<256x128xf32>
      %55 = arith.mulf %44, %54 : vector<256x128xf32>
      %c0_27 = arith.constant 0 : index
      %c0_28 = arith.constant 0 : index
      %56 = vector.load %arg8[%c0_27, %c0_28] : memref<1x128xf32, #tpu.memory_space<vmem>>, vector<1x128xf32>
      %57 = vector.broadcast %56 : vector<1x128xf32> to vector<256x128xf32>
      %58 = arith.mulf %55, %57 : vector<256x128xf32>
      %c0_29 = arith.constant 0 : index
      %c0_30 = arith.constant 0 : index
      %59 = vector.load %arg9[%c0_29, %c0_30] : memref<1x128xf32, #tpu.memory_space<vmem>>, vector<1x128xf32>
      %60 = vector.broadcast %59 : vector<1x128xf32> to vector<256x128xf32>
      %61 = arith.addf %58, %60 : vector<256x128xf32>
      %62 = arith.truncf %61 : vector<256x128xf32> to vector<256x128xbf16>
      %c0_31 = arith.constant 0 : index
      %c0_32 = arith.constant 0 : index
      %63 = vector.load %arg10[%c0_31, %c0_32] : memref<256x128xbf16, #tpu.memory_space<vmem>>, vector<256x128xbf16>
      tpu.vector_store %arg10[%c0_31, %c0_32], %62 {strides = array<i32>} : memref<256x128xbf16, #tpu.memory_space<vmem>>, vector<256x128xbf16>,
    } else {
    }
    return
  }
  func.func @transform_0(%arg0: i32, %arg1: i32) -> (i32, i32) {
    %c0_i32 = arith.constant 0 : i32
    return %arg0, %arg1 : i32, i32
  }
  func.func @transform_1(%arg0: i32, %arg1: i32) -> (i32, i32) {
    %c0_i32 = arith.constant 0 : i32
    %c0_i32_0 = arith.constant 0 : i32
    %c0_i32_1 = arith.constant 0 : i32
    return %c0_i32, %c0_i32_0 : i32, i32
  }
  func.func @transform_2(%arg0: i32, %arg1: i32) -> (i32, i32) {
    %c0_i32 = arith.constant 0 : i32
    %c0_i32_0 = arith.constant 0 : i32
    return %arg0, %c0_i32 : i32, i32
  }
  func.func @transform_3(%arg0: i32, %arg1: i32) -> (i32, i32) {
    %c0_i32 = arith.constant 0 : i32
    %c0_i32_0 = arith.constant 0 : i32
    %c0_i32_1 = arith.constant 0 : i32
    return %c0_i32, %c0_i32_0 : i32, i32
  }
  func.func @transform_4(%arg0: i32, %arg1: i32) -> (i32, i32) {
    %c0_i32 = arith.constant 0 : i32
    %c0_i32_0 = arith.constant 0 : i32
    %c0_i32_1 = arith.constant 0 : i32
    return %c0_i32, %c0_i32_0 : i32, i32
  }
  func.func @transform_5(%arg0: i32, %arg1: i32) -> (i32, i32) {
    %c0_i32 = arith.constant 0 : i32
    %c0_i32_0 = arith.constant 0 : i32
    %c0_i32_1 = arith.constant 0 : i32
    return %c0_i32, %c0_i32_0 : i32, i32
  }
  func.func @transform_6(%arg0: i32, %arg1: i32) -> (i32, i32) {
    %c0_i32 = arith.constant 0 : i32
    %c0_i32_0 = arith.constant 0 : i32
    %c0_i32_1 = arith.constant 0 : i32
    return %c0_i32, %c0_i32_0 : i32, i32
  }
  func.func @transform_7(%arg0: i32, %arg1: i32) -> (i32, i32) {
    %c0_i32 = arith.constant 0 : i32
    %c0_i32_0 = arith.constant 0 : i32
    %c0_i32_1 = arith.constant 0 : i32
    return %c0_i32, %c0_i32_0 : i32, i32
  }
  func.func @transform_8(%arg0: i32, %arg1: i32) -> (i32, i32) {
    %c0_i32 = arith.constant 0 : i32
    %c0_i32_0 = arith.constant 0 : i32
    return %arg0, %c0_i32 : i32, i32
  }
}

module attributes {stable_mosaic.version = 11 : i64} {
  func.func @_readout_kernel(%arg0: i32, %arg1: memref<256x128xbf16, #tpu.memory_space<vmem>>, %arg2: memref<128x4xf32, #tpu.memory_space<vmem>>, %arg3: memref<1x4xf32, #tpu.memory_space<vmem>>, %arg4: memref<1x4xf32, #tpu.memory_space<vmem>>, %arg5: memref<1x128xf32, #tpu.memory_space<vmem>>) attributes {dimension_semantics = [#tpu.dimension_semantics<arbitrary>], iteration_bounds = array<i64: 4>, scalar_prefetch = 0 : i64, scratch_operands = 1 : i64, tpu.core_type = #tpu.core_type<tc>, window_params = [{transform_indices = @transform_0, window_bounds = array<i64: 256, 128>}, {pipeline_mode = #tpu.pipeline_mode<synchronous>, transform_indices = @transform_1, window_bounds = array<i64: 128, 4>}, {pipeline_mode = #tpu.pipeline_mode<synchronous>, transform_indices = @transform_2, window_bounds = array<i64: 1, 4>}, {pipeline_mode = #tpu.pipeline_mode<synchronous>, transform_indices = @transform_3, window_bounds = array<i64: 1, 4>}]} {
    %c0_i32 = arith.constant 0 : i32
    %0 = arith.cmpi eq, %arg0, %c0_i32 : i32
    %1 = arith.extui %0 : i1 to i32
    %c0_i32_0 = arith.constant 0 : i32
    %2 = arith.cmpi ne, %1, %c0_i32_0 : i32
    scf.if %2 {
      %cst_7 = arith.constant 0.000000e+00 : f32
      %23 = vector.broadcast %cst_7 : f32 to vector<1x128xf32>
      %c0_8 = arith.constant 0 : index
      %c0_9 = arith.constant 0 : index
      %24 = vector.load %arg5[%c0_8, %c0_9] : memref<1x128xf32, #tpu.memory_space<vmem>>, vector<1x128xf32>
      tpu.vector_store %arg5[%c0_8, %c0_9], %23 {strides = array<i32>} : memref<1x128xf32, #tpu.memory_space<vmem>>, vector<1x128xf32>,
    } else {
    }
    %3 = tpu.iota {dimensions = array<i32: 0>} : vector<256x1xi32>
    %c256_i32 = arith.constant 256 : i32
    %4 = arith.muli %arg0, %c256_i32 : i32
    %5 = vector.broadcast %4 : i32 to vector<256x1xi32>
    %6 = arith.addi %3, %5 : vector<256x1xi32>
    %c600_i32 = arith.constant 600 : i32
    %7 = vector.broadcast %c600_i32 : i32 to vector<256x1xi32>
    %8 = arith.cmpi slt, %6, %7 : vector<256x1xi32>
    %9 = arith.extui %8 : vector<256x1xi1> to vector<256x1xi32>
    %10 = arith.sitofp %9 : vector<256x1xi32> to vector<256x1xf32>
    %c0 = arith.constant 0 : index
    %c0_1 = arith.constant 0 : index
    %11 = vector.load %arg5[%c0, %c0_1] : memref<1x128xf32, #tpu.memory_space<vmem>>, vector<1x128xf32>
    %c0_2 = arith.constant 0 : index
    %c0_3 = arith.constant 0 : index
    %12 = vector.load %arg1[%c0_2, %c0_3] : memref<256x128xbf16, #tpu.memory_space<vmem>>, vector<256x128xbf16>
    %13 = arith.extf %12 : vector<256x128xbf16> to vector<256x128xf32>
    %14 = vector.broadcast %10 : vector<256x1xf32> to vector<256x128xf32>
    %15 = arith.mulf %13, %14 : vector<256x128xf32>
    %cst = arith.constant dense<0.000000e+00> : vector<128xf32>
    %16 = vector.multi_reduction <add>, %15, %cst [0] : vector<256x128xf32> to vector<128xf32>
    %17 = vector.shape_cast %16 : vector<128xf32> to vector<1x128xf32>
    %18 = arith.addf %11, %17 : vector<1x128xf32>
    %c0_4 = arith.constant 0 : index
    %c0_5 = arith.constant 0 : index
    %19 = vector.load %arg5[%c0_4, %c0_5] : memref<1x128xf32, #tpu.memory_space<vmem>>, vector<1x128xf32>
    tpu.vector_store %arg5[%c0_4, %c0_5], %18 {strides = array<i32>} : memref<1x128xf32, #tpu.memory_space<vmem>>, vector<1x128xf32>,
    %c3_i32 = arith.constant 3 : i32
    %20 = arith.cmpi eq, %arg0, %c3_i32 : i32
    %21 = arith.extui %20 : i1 to i32
    %c0_i32_6 = arith.constant 0 : i32
    %22 = arith.cmpi ne, %21, %c0_i32_6 : i32
    scf.if %22 {
      %c0_7 = arith.constant 0 : index
      %c0_8 = arith.constant 0 : index
      %23 = vector.load %arg5[%c0_7, %c0_8] : memref<1x128xf32, #tpu.memory_space<vmem>>, vector<1x128xf32>
      %cst_9 = arith.constant 0.00166666671 : f32
      %24 = vector.broadcast %cst_9 : f32 to vector<1x128xf32>
      %25 = arith.mulf %23, %24 : vector<1x128xf32>
      %c0_10 = arith.constant 0 : index
      %c0_11 = arith.constant 0 : index
      %26 = vector.load %arg2[%c0_10, %c0_11] : memref<128x4xf32, #tpu.memory_space<vmem>>, vector<128x4xf32>
      %cst_12 = arith.constant dense<0.000000e+00> : vector<1x4xf32>
      %27 = tpu.matmul %25, %26, %cst_12 {dimension_numbers = #tpu.dot_dimension_numbers<[1], [0], [0], [1], [0, 0, 1, 1], [], []>} : vector<1x128xf32>, vector<128x4xf32>, vector<1x4xf32> -> vector<1x4xf32>
      %c0_13 = arith.constant 0 : index
      %c0_14 = arith.constant 0 : index
      %28 = vector.load %arg3[%c0_13, %c0_14] : memref<1x4xf32, #tpu.memory_space<vmem>>, vector<1x4xf32>
      %29 = arith.addf %27, %28 : vector<1x4xf32>
      %c0_15 = arith.constant 0 : index
      %c0_16 = arith.constant 0 : index
      %30 = vector.load %arg4[%c0_15, %c0_16] : memref<1x4xf32, #tpu.memory_space<vmem>>, vector<1x4xf32>
      tpu.vector_store %arg4[%c0_15, %c0_16], %29 {strides = array<i32>} : memref<1x4xf32, #tpu.memory_space<vmem>>, vector<1x4xf32>,
    } else {
    }
    return
  }
  func.func @transform_0(%arg0: i32) -> (i32, i32) {
    %c0_i32 = arith.constant 0 : i32
    %c0_i32_0 = arith.constant 0 : i32
    return %arg0, %c0_i32 : i32, i32
  }
  func.func @transform_1(%arg0: i32) -> (i32, i32) {
    %c0_i32 = arith.constant 0 : i32
    %c0_i32_0 = arith.constant 0 : i32
    %c0_i32_1 = arith.constant 0 : i32
    return %c0_i32, %c0_i32_0 : i32, i32
  }
  func.func @transform_2(%arg0: i32) -> (i32, i32) {
    %c0_i32 = arith.constant 0 : i32
    %c0_i32_0 = arith.constant 0 : i32
    %c0_i32_1 = arith.constant 0 : i32
    return %c0_i32, %c0_i32_0 : i32, i32
  }
  func.func @transform_3(%arg0: i32) -> (i32, i32) {
    %c0_i32 = arith.constant 0 : i32
    %c0_i32_0 = arith.constant 0 : i32
    %c0_i32_1 = arith.constant 0 : i32
    return %c0_i32, %c0_i32_0 : i32, i32
  }
}

</mosaic_0001>

<llo_original>
// kernel: graph_classification_forward.5
$region0: #{graph_classification_forward.5}
  #allocation0 [shape = 'u32[]', space=smem, size = 0x4, offset = 0x4, fixed_abs, tag = 'smem constant byte address 0x4 - core index']
  #allocation1 [shape = 'u32[144,128]{1,0:T(1,128)}', space=vmem, size = 0x12000, scoped, tag = 'internal scratch']
  %s0 = inlined_call_operand.vmem [shape: f32[1024,8], index: 0, kind: input, shape index: {}]
  %s1 = inlined_call_operand.vmem [shape: f32[8,128], index: 1, kind: input, shape index: {}]
  %s2 = inlined_call_operand.vmem [shape: f32[1,128], index: 2, kind: input, shape index: {}]
  %s3 = inlined_call_operand.vmem [shape: f32[128,128], index: 3, kind: input, shape index: {}]
  %s4 = inlined_call_operand.vmem [shape: f32[1,128], index: 4, kind: input, shape index: {}]
  %s5 = inlined_call_operand.vmem [shape: bf16[1024,128], index: 5, kind: output, shape index: {}]
  %s6 = sld [smem:[#allocation0]]
  $region53: #{graph_classification_forward.5} parent=0
    _
  %s8 = ssub.s32 1, %s6
  %s9 = scalar_select 0, %s8, %s6
  loop: start=0, step=1, limit=6
  $region2: #{graph_classification_forward.5} parent=0 // loop_pre_header
    _
  $region3: #{graph_classification_forward.5} parent=0 // loop_header
    %s11 = sphi 0, %s15
    %p12 = scmp.ge.s32.totalorder %s11, 6
    %s21 = sphi 0, %s23
    %s24 = sphi 0, %s21
    %s25 = sphi 0, %s24
    %s41 = sphi 0, %s25
    %s45 = sphi 0, %s45
    %s47 = sphi 0, %s45
    %s48 = sphi 0, %s47
    %s62 = sphi 0, %s48
    %s66 = sphi 0, %s66
    %s68 = sphi 0, %s66
    %s69 = sphi 0, %s68
    %s83 = sphi 0, %s69
    %s87 = sphi 0, %s87
    %s89 = sphi 0, %s87
    %s90 = sphi 0, %s89
    %s104 = sphi 0, %s90
    %s108 = sphi 0, %s108
    %s110 = sphi 0, %s108
    %s111 = sphi 0, %s110
    %s125 = sphi 0, %s111
    %s131 = sphi 0, %s133
    %s134 = sphi 0, %s131
    %s135 = sphi 0, %s134
    %s151 = sphi 0, %s135
  $region4: #{graph_classification_forward.5} parent=0 // loop_header_branch
    %14 = sbr.rel (%p12) target = $region8
  $region5: #{graph_classification_forward.5} parent=0 // loop_body
    %s16 = ssub.s32 %s11, 1
    %s17 = ssub.s32 %s11, 2
    %s18 = sadd.s32 %s11, 1
    %s19 = ssub.s32 %s11, %s18
    %p20 = scmp.eq.s32.totalorder %s19, 0
    %s22 = sadd.s32 %s21, 1
    %s23 = scalar_select %p20, %s21, %s22
    %p26 = pneg %p20
    %p27 = scmp.eq.s32.totalorder %s11, 3
    %p28 = por %p26, %p27
    %p29 = scmp.ne.s32.totalorder %s21, %s24
    %p30 = scmp.eq.s32.totalorder %s11, 0
    %p31 = por %p29, %p30
    %p32 = scmp.ne.s32.totalorder %s21, %s24
    %p33 = scmp.eq.s32.totalorder %s16, 3
    %p34 = por %p32, %p33
    %p35 = scmp.ne.s32.totalorder %s24, %s25
    %p36 = scmp.eq.s32.totalorder %s16, 0
    %p37 = por %p35, %p36
    %p38 = scmp.ne.s32.totalorder %s24, %s25
    %p39 = scmp.eq.s32.totalorder %s17, 3
    %p40 = por %p38, %p39
    %p42 = scmp.ne.s32.totalorder %s25, %s41
    %p43 = scmp.eq.s32.totalorder %s17, 0
    %p44 = por %p42, %p43
    %s46 = sadd.s32 %s45, 1
    %p49 = scmp.eq.s32.totalorder %s11, 3
    %p50 = scmp.ne.s32.totalorder %s45, %s47
    %p51 = scmp.eq.s32.totalorder %s11, 0
    %p52 = por %p50, %p51
    %p53 = scmp.ne.s32.totalorder %s45, %s47
    %p54 = scmp.eq.s32.totalorder %s16, 3
    %p55 = por %p53, %p54
    %p56 = scmp.ne.s32.totalorder %s47, %s48
    %p57 = scmp.eq.s32.totalorder %s16, 0
    %p58 = por %p56, %p57
    %p59 = scmp.ne.s32.totalorder %s47, %s48
    %p60 = scmp.eq.s32.totalorder %s17, 3
    %p61 = por %p59, %p60
    %p63 = scmp.ne.s32.totalorder %s48, %s62
    %p64 = scmp.eq.s32.totalorder %s17, 0
    %p65 = por %p63, %p64
    %s67 = sadd.s32 %s66, 1
    %p70 = scmp.eq.s32.totalorder %s11, 3
    %p71 = scmp.ne.s32.totalorder %s66, %s68
    %p72 = scmp.eq.s32.totalorder %s11, 0
    %p73 = por %p71, %p72
    %p74 = scmp.ne.s32.totalorder %s66, %s68
    %p75 = scmp.eq.s32.totalorder %s16, 3
    %p76 = por %p74, %p75
    %p77 = scmp.ne.s32.totalorder %s68, %s69
    %p78 = scmp.eq.s32.totalorder %s16, 0
    %p79 = por %p77, %p78
    %p80 = scmp.ne.s32.totalorder %s68, %s69
    %p81 = scmp.eq.s32.totalorder %s17, 3
    %p82 = por %p80, %p81
    %p84 = scmp.ne.s32.totalorder %s69, %s83
    %p85 = scmp.eq.s32.totalorder %s17, 0
    %p86 = por %p84, %p85
    %s88 = sadd.s32 %s87, 1
    %p91 = scmp.eq.s32.totalorder %s11, 3
    %p92 = scmp.ne.s32.totalorder %s87, %s89
    %p93 = scmp.eq.s32.totalorder %s11, 0
    %p94 = por %p92, %p93
    %p95 = scmp.ne.s32.totalorder %s87, %s89
    %p96 = scmp.eq.s32.totalorder %s16, 3
    %p97 = por %p95, %p96
    %p98 = scmp.ne.s32.totalorder %s89, %s90
    %p99 = scmp.eq.s32.totalorder %s16, 0
    %p100 = por %p98, %p99
    %p101 = scmp.ne.s32.totalorder %s89, %s90
    %p102 = scmp.eq.s32.totalorder %s17, 3
    %p103 = por %p101, %p102
    %p105 = scmp.ne.s32.totalorder %s90, %s104
    %p106 = scmp.eq.s32.totalorder %s17, 0
    %p107 = por %p105, %p106
    %s109 = sadd.s32 %s108, 1
    %p112 = scmp.eq.s32.totalorder %s11, 3
    %p113 = scmp.ne.s32.totalorder %s108, %s110
    %p114 = scmp.eq.s32.totalorder %s11, 0
    %p115 = por %p113, %p114
    %p116 = scmp.ne.s32.totalorder %s108, %s110
    %p117 = scmp.eq.s32.totalorder %s16, 3
    %p118 = por %p116, %p117
    %p119 = scmp.ne.s32.totalorder %s110, %s111
    %p120 = scmp.eq.s32.totalorder %s16, 0
    %p121 = por %p119, %p120
    %p122 = scmp.ne.s32.totalorder %s110, %s111
    %p123 = scmp.eq.s32.totalorder %s17, 3
    %p124 = por %p122, %p123
    %p126 = scmp.ne.s32.totalorder %s111, %s125
    %p127 = scmp.eq.s32.totalorder %s17, 0
    %p128 = por %p126, %p127
    %s129 = ssub.s32 %s11, %s18
    %p130 = scmp.eq.s32.totalorder %s129, 0
    %s132 = sadd.s32 %s131, 1
    %s133 = scalar_select %p130, %s131, %s132
    %p136 = pneg %p130
    %p137 = scmp.eq.s32.totalorder %s11, 3
    %p138 = por %p136, %p137
    %p139 = scmp.ne.s32.totalorder %s131, %s134
    %p140 = scmp.eq.s32.totalorder %s11, 0
    %p141 = por %p139, %p140
    %p142 = scmp.ne.s32.totalorder %s131, %s134
    %p143 = scmp.eq.s32.totalorder %s16, 3
    %p144 = por %p142, %p143
    %p145 = scmp.ne.s32.totalorder %s134, %s135
    %p146 = scmp.eq.s32.totalorder %s16, 0
    %p147 = por %p145, %p146
    %p148 = scmp.ne.s32.totalorder %s134, %s135
    %p149 = scmp.eq.s32.totalorder %s17, 3
    %p150 = por %p148, %p149
    %p152 = scmp.ne.s32.totalorder %s135, %s151
    %p153 = scmp.eq.s32.totalorder %s17, 0
    %p154 = por %p152, %p153
    %p155 = scmp.le.s32.totalorder 1, %s11
    %p156 = scmp.lt.s32.totalorder %s11, 5
    %p157 = pnand %p155, %p156
    %p158 = pneg %p157
    // Predicated region
    $region9: #{graph_classification_forward.5} parent=5 // pred_check
      _
    $region10: #{graph_classification_forward.5} parent=5 // pred_check_branch
      %160 = sbr.rel (%p157) target = $region12
    $region11: #{graph_classification_forward.5} parent=5 // pred_region
      %s161 = ssub.s32 %s11, 1
      // Predicated region
      $region13: #{graph_classification_forward.5} parent=11 // pred_check
        %p162 = pneg %p58
      $region14: #{graph_classification_forward.5} parent=11 // pred_check_branch
        %164 = sbr.rel (%p162) target = $region16
      $region15: #{graph_classification_forward.5} parent=11 // pred_region
        _
      $region16: #{graph_classification_forward.5} parent=11 // pred_fallthru
        _
      // Predicated region
      $region17: #{graph_classification_forward.5} parent=11 // pred_check
        %p165 = pneg %p79
      $region18: #{graph_classification_forward.5} parent=11 // pred_check_branch
        %167 = sbr.rel (%p165) target = $region20
      $region19: #{graph_classification_forward.5} parent=11 // pred_region
        _
      $region20: #{graph_classification_forward.5} parent=11 // pred_fallthru
        _
      // Predicated region
      $region21: #{graph_classification_forward.5} parent=11 // pred_check
        %p168 = pneg %p100
      $region22: #{graph_classification_forward.5} parent=11 // pred_check_branch
        %170 = sbr.rel (%p168) target = $region24
      $region23: #{graph_classification_forward.5} parent=11 // pred_region
        _
      $region24: #{graph_classification_forward.5} parent=11 // pred_fallthru
        _
      // Predicated region
      $region25: #{graph_classification_forward.5} parent=11 // pred_check
        %p171 = pneg %p121
      $region26: #{graph_classification_forward.5} parent=11 // pred_check_branch
        %173 = sbr.rel (%p171) target = $region28
      $region27: #{graph_classification_forward.5} parent=11 // pred_region
        _
      $region28: #{graph_classification_forward.5} parent=11 // pred_fallthru
        _
    $region12: #{graph_classification_forward.5} parent=5 // pred_fallthru
      _
    %p174 = scmp.lt.s32.totalorder %s11, 4
    // Predicated region
    $region29: #{graph_classification_forward.5} parent=5 // pred_check
      %p175 = pneg %p174
    $region30: #{graph_classification_forward.5} parent=5 // pred_check_branch
      %177 = sbr.rel (%p175) target = $region32
    $region31: #{graph_classification_forward.5} parent=5 // pred_region
      // Predicated region
      $region33: #{graph_classification_forward.5} parent=31 // pred_check
        %p178 = pneg %p31
      $region34: #{graph_classification_forward.5} parent=31 // pred_check_branch
        %180 = sbr.rel (%p178) target = $region36
      $region35: #{graph_classification_forward.5} parent=31 // pred_region
        %s181 = smul.u32 32, %s11
        %p182 = scmp.lt.s32.totalorder %s181, 127
        %s183 = scalar_select %p182, %s181, 127
        %s184 = smul.addr %s183, 8
        %s185 = scalar_lea.vmem %s0, %s184
        %s186 = smul.u32 32, %s11
      $region36: #{graph_classification_forward.5} parent=31 // pred_fallthru
        _
    $region32: #{graph_classification_forward.5} parent=5 // pred_fallthru
      _
    %p187 = scmp.le.s32.totalorder 1, %s11
    %p188 = scmp.lt.s32.totalorder %s11, 5
    %p189 = pnand %p187, %p188
    %p190 = pneg %p189
    // Predicated region
    $region37: #{graph_classification_forward.5} parent=5 // pred_check
      _
    $region38: #{graph_classification_forward.5} parent=5 // pred_check_branch
      %192 = sbr.rel (%p189) target = $region40
    $region39: #{graph_classification_forward.5} parent=5 // pred_region
      %s193 = ssub.s32 %s11, 1
      %s194 = smul.u32 32, %s16
      %p195 = scmp.lt.s32.totalorder %s194, 127
      %s196 = scalar_select %p195, %s194, 127
      %s197 = smul.addr %s196, 8
      %s198 = scalar_lea.vmem %s0, %s197
      %p199 = pneg %p37
      %p200 = pneg %p34
      %p201 = pneg %p58
      %p202 = pneg %p55
      %p203 = pneg %p79
      %p204 = pneg %p76
      %p205 = pneg %p100
      %p206 = pneg %p97
      %p207 = pneg %p121
      %p208 = pneg %p118
      %p209 = pneg %p147
      %p210 = pneg %p144
      %s211 = smul.u32 32, %s16
      %p212 = scmp.lt.s32.totalorder %s211, 127
      %s213 = scalar_select %p212, %s211, 127
      %s214 = smul.addr %s213, 4
      %s215 = scalar_lea.vmem %s5, %s214
      %s216 = smul.u32 32, %s16
      %p217 = scmp.lt.s32.totalorder %s216, 127
      %s218 = scalar_select %p217, %s216, 127
      %s219 = smul.addr %s218, 8
      %s220 = scalar_lea.vmem %s0, %s219
      %s221 = smul.u32 32, %s16
      %s222 = smul.u32 32, %s16
      %p223 = scmp.lt.s32.totalorder %s222, 127
      %s224 = scalar_select %p223, %s222, 127
      %s225 = smul.addr %s224, 4
      %s226 = scalar_lea.vmem %s5, %s225
      %s227 = smul.u32 32, %s16
      %v228 = vld [vmem:[%s220] sm:$0xff]
      %v229 = vld [vmem:[%s220 + $0x8] sm:$0xff]
      %v230 = vld [vmem:[%s220 + $0x10] sm:$0xff]
      %v231 = vld [vmem:[%s220 + $0x18] sm:$0xff]
      %v232 = vld [vmem:[%s220 + $0x20] sm:$0xff]
      %v233 = vld [vmem:[%s220 + $0x28] sm:$0xff]
      %v234 = vld [vmem:[%s220 + $0x30] sm:$0xff]
      %v235 = vld [vmem:[%s220 + $0x38] sm:$0xff]
      %v236 = vld [vmem:[%s220 + $0x40] sm:$0xff]
      %v237 = vld [vmem:[%s220 + $0x48] sm:$0xff]
      %v238 = vld [vmem:[%s220 + $0x50] sm:$0xff]
      %v239 = vld [vmem:[%s220 + $0x58] sm:$0xff]
      %v240 = vld [vmem:[%s220 + $0x60] sm:$0xff]
      %v241 = vld [vmem:[%s220 + $0x68] sm:$0xff]
      %v242 = vld [vmem:[%s220 + $0x70] sm:$0xff]
      %v243 = vld [vmem:[%s220 + $0x78] sm:$0xff]
      %v244 = vld [vmem:[%s220 + $0x80] sm:$0xff]
      %v245 = vld [vmem:[%s220 + $0x88] sm:$0xff]
      %v246 = vld [vmem:[%s220 + $0x90] sm:$0xff]
      %v247 = vld [vmem:[%s220 + $0x98] sm:$0xff]
      %v248 = vld [vmem:[%s220 + $0xa0] sm:$0xff]
      %v249 = vld [vmem:[%s220 + $0xa8] sm:$0xff]
      %v250 = vld [vmem:[%s220 + $0xb0] sm:$0xff]
      %v251 = vld [vmem:[%s220 + $0xb8] sm:$0xff]
      %v252 = vld [vmem:[%s220 + $0xc0] sm:$0xff]
      %v253 = vld [vmem:[%s220 + $0xc8] sm:$0xff]
      %v254 = vld [vmem:[%s220 + $0xd0] sm:$0xff]
      %v255 = vld [vmem:[%s220 + $0xd8] sm:$0xff]
      %v256 = vld [vmem:[%s220 + $0xe0] sm:$0xff]
      %v257 = vld [vmem:[%s220 + $0xe8] sm:$0xff]
      %v258 = vld [vmem:[%s220 + $0xf0] sm:$0xff]
      %v259 = vld [vmem:[%s220 + $0xf8] sm:$0xff]
      %v260 = vld [vmem:[%s1] sm:$0xff]
      %v261 = vld [vmem:[%s2] sm:$0x1]
      %v263 = vlaneseq
      %v264 = vshrl.u32 %v263, 7
      %v265 = vsub.s32 0, %v264
      %v266 = vrot.slane %v261, %v265
      %vm268 = vcmask 64512
      %v270 = vsel %vm268, %v228, 0
      %v273 = vsel %vm268, %v229, 0
      %v276 = vsel %vm268, %v230, 0
      %v279 = vsel %vm268, %v231, 0
      %v282 = vsel %vm268, %v232, 0
      %v285 = vsel %vm268, %v233, 0
      %v288 = vsel %vm268, %v234, 0
      %v291 = vsel %vm268, %v235, 0
      %v294 = vsel %vm268, %v236, 0
      %v297 = vsel %vm268, %v237, 0
      %v300 = vsel %vm268, %v238, 0
      %v303 = vsel %vm268, %v239, 0
      %v306 = vsel %vm268, %v240, 0
      %v309 = vsel %vm268, %v241, 0
      %v312 = vsel %vm268, %v242, 0
      %v315 = vsel %vm268, %v243, 0
      %v318 = vsel %vm268, %v244, 0
      %v321 = vsel %vm268, %v245, 0
      %v324 = vsel %vm268, %v246, 0
      %v327 = vsel %vm268, %v247, 0
      %v330 = vsel %vm268, %v248, 0
      %v333 = vsel %vm268, %v249, 0
      %v336 = vsel %vm268, %v250, 0
      %v339 = vsel %vm268, %v251, 0
      %v342 = vsel %vm268, %v252, 0
      %v345 = vsel %vm268, %v253, 0
      %v348 = vsel %vm268, %v254, 0
      %v351 = vsel %vm268, %v255, 0
      %v354 = vsel %vm268, %v256, 0
      %v357 = vsel %vm268, %v257, 0
      %v360 = vsel %vm268, %v258, 0
      %v363 = vsel %vm268, %v259, 0
      %365 = vmatprep.subr.mxu0 0.0
      %366 = vmatpush1.msra.mxu0 %v260
      %367 = vmatprep.subr.mxu0 0.0
      %368 = vmatpush1.msra.mxu0 0.0
      %369 = vmatprep.subr.mxu0 0.0
      %370 = vmatpush1.msra.mxu0 0.0
      %371 = vmatprep.subr.mxu0 0.0
      %372 = vmatpush1.msra.mxu0 0.0
      %373 = vmatprep.subr.mxu0 0.0
      %374 = vmatpush1.msra.mxu0 0.0
      %375 = vmatprep.subr.mxu0 0.0
      %376 = vmatpush1.msra.mxu0 0.0
      %377 = vmatprep.subr.mxu0 0.0
      %378 = vmatpush1.msra.mxu0 0.0
      %379 = vmatprep.subr.mxu0 0.0
      %380 = vmatpush1.msra.mxu0 0.0
      %381 = vmatprep.subr.mxu0 0.0
      %382 = vmatpush1.msra.mxu0 0.0
      %383 = vmatprep.subr.mxu0 0.0
      %384 = vmatpush1.msra.mxu0 0.0
      %385 = vmatprep.subr.mxu0 0.0
      %386 = vmatpush1.msra.mxu0 0.0
      %387 = vmatprep.subr.mxu0 0.0
      %388 = vmatpush1.msra.mxu0 0.0
      %389 = vmatprep.subr.mxu0 0.0
      %390 = vmatpush1.msra.mxu0 0.0
      %391 = vmatprep.subr.mxu0 0.0
      %392 = vmatpush1.msra.mxu0 0.0
      %393 = vmatprep.subr.mxu0 0.0
      %394 = vmatpush1.msra.mxu0 0.0
      %395 = vmatprep.subr.mxu0 0.0
      %396 = vmatpush1.msra.mxu0 0.0
      %397 = vmatprep.subr.mxu0 0.0
      %398 = vmatpush1.msra.mxu0 0.0
      %399 = vmatprep.subr.mxu0 0.0
      %400 = vmatpush1.msra.mxu0 0.0
      %401 = vmatprep.subr.mxu0 0.0
      %402 = vmatpush1.msra.mxu0 0.0
      %403 = vmatprep.subr.mxu0 0.0
      %404 = vmatpush1.msra.mxu0 0.0
      %405 = vmatprep.subr.mxu0 0.0
      %406 = vmatpush1.msra.mxu0 0.0
      %407 = vmatprep.subr.mxu0 0.0
      %408 = vmatpush1.msra.mxu0 0.0
      %409 = vmatprep.subr.mxu0 0.0
      %410 = vmatpush1.msra.mxu0 0.0
      %411 = vmatprep.subr.mxu0 0.0
      %412 = vmatpush1.msra.mxu0 0.0
      %413 = vmatprep.subr.mxu0 0.0
      %414 = vmatpush1.msra.mxu0 0.0
      %415 = vmatprep.subr.mxu0 0.0
      %416 = vmatpush1.msra.mxu0 0.0
      %417 = vmatprep.subr.mxu0 0.0
      %418 = vmatpush1.msra.mxu0 0.0
      %419 = vmatprep.subr.mxu0 0.0
      %420 = vmatpush1.msra.mxu0 0.0
      %421 = vmatprep.subr.mxu0 0.0
      %422 = vmatpush1.msra.mxu0 0.0
      %423 = vmatprep.subr.mxu0 0.0
      %424 = vmatpush1.msra.mxu0 0.0
      %425 = vmatprep.subr.mxu0 0.0
      %426 = vmatpush1.msra.mxu0 0.0
      %427 = vmatprep.subr.mxu0 0.0
      %428 = vmatpush1.msra.mxu0 0.0
      %429 = vmatprep.mubr.f32.mxu0 0.0
      %430 = vmatmul.mubr.f32.gmra.mrb[0].mxu0 %v270
      %v431 = vpop.f32.mrb[0].mxu0
      %v432 = vadd.f32 %v266, %v431
      %v433 = vpop.f32.mrb[0].mxu0
      %434 = vmatprep.mubr.f32.mxu0 0.0
      %435 = vmatmul.mubr.f32.gmra.mrb[0].mxu0 %v273
      %v436 = vpop.f32.mrb[0].mxu0
      %v437 = vadd.f32 %v266, %v436
      %v438 = vpop.f32.mrb[0].mxu0
      %439 = vmatprep.mubr.f32.mxu0 0.0
      %440 = vmatmul.mubr.f32.gmra.mrb[0].mxu0 %v276
      %v441 = vpop.f32.mrb[0].mxu0
      %v442 = vadd.f32 %v266, %v441
      %v443 = vpop.f32.mrb[0].mxu0
      %444 = vmatprep.mubr.f32.mxu0 0.0
      %445 = vmatmul.mubr.f32.gmra.mrb[0].mxu0 %v279
      %v446 = vpop.f32.mrb[0].mxu0
      %v447 = vadd.f32 %v266, %v446
      %v448 = vpop.f32.mrb[0].mxu0
      %449 = vmatprep.mubr.f32.mxu0 0.0
      %450 = vmatmul.mubr.f32.gmra.mrb[0].mxu0 %v282
      %v451 = vpop.f32.mrb[0].mxu0
      %v452 = vadd.f32 %v266, %v451
      %v453 = vpop.f32.mrb[0].mxu0
      %454 = vmatprep.mubr.f32.mxu0 0.0
      %455 = vmatmul.mubr.f32.gmra.mrb[0].mxu0 %v285
      %v456 = vpop.f32.mrb[0].mxu0
      %v457 = vadd.f32 %v266, %v456
      %v458 = vpop.f32.mrb[0].mxu0
      %459 = vmatprep.mubr.f32.mxu0 0.0
      %460 = vmatmul.mubr.f32.gmra.mrb[0].mxu0 %v288
      %v461 = vpop.f32.mrb[0].mxu0
      %v462 = vadd.f32 %v266, %v461
      %v463 = vpop.f32.mrb[0].mxu0
      %464 = vmatprep.mubr.f32.mxu0 0.0
      %465 = vmatmul.mubr.f32.gmra.mrb[0].mxu0 %v291
      %v466 = vpop.f32.mrb[0].mxu0
      %v467 = vadd.f32 %v266, %v466
      %v468 = vpop.f32.mrb[0].mxu0
      %469 = vmatprep.mubr.f32.mxu0 0.0
      %470 = vmatmul.mubr.f32.gmra.mrb[0].mxu0 %v294
      %v471 = vpop.f32.mrb[0].mxu0
      %v472 = vadd.f32 %v266, %v471
      %v473 = vpop.f32.mrb[0].mxu0
      %474 = vmatprep.mubr.f32.mxu0 0.0
      %475 = vmatmul.mubr.f32.gmra.mrb[0].mxu0 %v297
      %v476 = vpop.f32.mrb[0].mxu0
      %v477 = vadd.f32 %v266, %v476
      %v478 = vpop.f32.mrb[0].mxu0
      %479 = vmatprep.mubr.f32.mxu0 0.0
      %480 = vmatmul.mubr.f32.gmra.mrb[0].mxu0 %v300
      %v481 = vpop.f32.mrb[0].mxu0
      %v482 = vadd.f32 %v266, %v481
      %v483 = vpop.f32.mrb[0].mxu0
      %484 = vmatprep.mubr.f32.mxu0 0.0
      %485 = vmatmul.mubr.f32.gmra.mrb[0].mxu0 %v303
      %v486 = vpop.f32.mrb[0].mxu0
      %v487 = vadd.f32 %v266, %v486
      %v488 = vpop.f32.mrb[0].mxu0
      %489 = vmatprep.mubr.f32.mxu0 0.0
      %490 = vmatmul.mubr.f32.gmra.mrb[0].mxu0 %v306
      %v491 = vpop.f32.mrb[0].mxu0
      %v492 = vadd.f32 %v266, %v491
      %v493 = vpop.f32.mrb[0].mxu0
      %494 = vmatprep.mubr.f32.mxu0 0.0
      %495 = vmatmul.mubr.f32.gmra.mrb[0].mxu0 %v309
      %v496 = vpop.f32.mrb[0].mxu0
      %v497 = vadd.f32 %v266, %v496
      %v498 = vpop.f32.mrb[0].mxu0
      %499 = vmatprep.mubr.f32.mxu0 0.0
      %500 = vmatmul.mubr.f32.gmra.mrb[0].mxu0 %v312
      %v501 = vpop.f32.mrb[0].mxu0
      %v502 = vadd.f32 %v266, %v501
      %v503 = vpop.f32.mrb[0].mxu0
      %504 = vmatprep.mubr.f32.mxu0 0.0
      %505 = vmatmul.mubr.f32.gmra.mrb[0].mxu0 %v315
      %v506 = vpop.f32.mrb[0].mxu0
      %v507 = vadd.f32 %v266, %v506
      %v508 = vpop.f32.mrb[0].mxu0
      %509 = vmatprep.mubr.f32.mxu0 0.0
      %510 = vmatmul.mubr.f32.gmra.mrb[0].mxu0 %v318
      %v511 = vpop.f32.mrb[0].mxu0
      %v512 = vadd.f32 %v266, %v511
      %v513 = vpop.f32.mrb[0].mxu0
      %514 = vmatprep.mubr.f32.mxu0 0.0
      %515 = vmatmul.mubr.f32.gmra.mrb[0].mxu0 %v321
      %v516 = vpop.f32.mrb[0].mxu0
      %v517 = vadd.f32 %v266, %v516
      %v518 = vpop.f32.mrb[0].mxu0
      %519 = vmatprep.mubr.f32.mxu0 0.0
      %520 = vmatmul.mubr.f32.gmra.mrb[0].mxu0 %v324
      %v521 = vpop.f32.mrb[0].mxu0
      %v522 = vadd.f32 %v266, %v521
      %v523 = vpop.f32.mrb[0].mxu0
      %524 = vmatprep.mubr.f32.mxu0 0.0
      %525 = vmatmul.mubr.f32.gmra.mrb[0].mxu0 %v327
      %v526 = vpop.f32.mrb[0].mxu0
      %v527 = vadd.f32 %v266, %v526
      %v528 = vpop.f32.mrb[0].mxu0
      %529 = vmatprep.mubr.f32.mxu0 0.0
      %530 = vmatmul.mubr.f32.gmra.mrb[0].mxu0 %v330
      %v531 = vpop.f32.mrb[0].mxu0
      %v532 = vadd.f32 %v266, %v531
      %v533 = vpop.f32.mrb[0].mxu0
      %534 = vmatprep.mubr.f32.mxu0 0.0
      %535 = vmatmul.mubr.f32.gmra.mrb[0].mxu0 %v333
      %v536 = vpop.f32.mrb[0].mxu0
      %v537 = vadd.f32 %v266, %v536
      %v538 = vpop.f32.mrb[0].mxu0
      %539 = vmatprep.mubr.f32.mxu0 0.0
      %540 = vmatmul.mubr.f32.gmra.mrb[0].mxu0 %v336
      %v541 = vpop.f32.mrb[0].mxu0
      %v542 = vadd.f32 %v266, %v541
      %v543 = vpop.f32.mrb[0].mxu0
      %544 = vmatprep.mubr.f32.mxu0 0.0
      %545 = vmatmul.mubr.f32.gmra.mrb[0].mxu0 %v339
      %v546 = vpop.f32.mrb[0].mxu0
      %v547 = vadd.f32 %v266, %v546
      %v548 = vpop.f32.mrb[0].mxu0
      %549 = vmatprep.mubr.f32.mxu0 0.0
      %550 = vmatmul.mubr.f32.gmra.mrb[0].mxu0 %v342
      %v551 = vpop.f32.mrb[0].mxu0
      %v552 = vadd.f32 %v266, %v551
      %v553 = vpop.f32.mrb[0].mxu0
      %554 = vmatprep.mubr.f32.mxu0 0.0
      %555 = vmatmul.mubr.f32.gmra.mrb[0].mxu0 %v345
      %v556 = vpop.f32.mrb[0].mxu0
      %v557 = vadd.f32 %v266, %v556
      %v558 = vpop.f32.mrb[0].mxu0
      %559 = vmatprep.mubr.f32.mxu0 0.0
      %560 = vmatmul.mubr.f32.gmra.mrb[0].mxu0 %v348
      %v561 = vpop.f32.mrb[0].mxu0
      %v562 = vadd.f32 %v266, %v561
      %v563 = vpop.f32.mrb[0].mxu0
      %564 = vmatprep.mubr.f32.mxu0 0.0
      %565 = vmatmul.mubr.f32.gmra.mrb[0].mxu0 %v351
      %v566 = vpop.f32.mrb[0].mxu0
      %v567 = vadd.f32 %v266, %v566
      %v568 = vpop.f32.mrb[0].mxu0
      %569 = vmatprep.mubr.f32.mxu0 0.0
      %570 = vmatmul.mubr.f32.gmra.mrb[0].mxu0 %v354
      %v571 = vpop.f32.mrb[0].mxu0
      %v572 = vadd.f32 %v266, %v571
      %v573 = vpop.f32.mrb[0].mxu0
      %574 = vmatprep.mubr.f32.mxu0 0.0
      %575 = vmatmul.mubr.f32.gmra.mrb[0].mxu0 %v357
      %v576 = vpop.f32.mrb[0].mxu0
      %v577 = vadd.f32 %v266, %v576
      %v578 = vpop.f32.mrb[0].mxu0
      %579 = vmatprep.mubr.f32.mxu0 0.0
      %580 = vmatmul.mubr.f32.gmra.mrb[0].mxu0 %v360
      %v581 = vpop.f32.mrb[0].mxu0
      %v582 = vadd.f32 %v266, %v581
      %v583 = vpop.f32.mrb[0].mxu0
      %584 = vmatprep.mubr.f32.mxu0 0.0
      %585 = vmatmul.mubr.f32.gmra.mrb[0].mxu0 %v363
      %v586 = vpop.f32.mrb[0].mxu0
      %v587 = vadd.f32 %v266, %v586
      %v588 = vpop.f32.mrb[0].mxu0
      %589 = vdwg.mxu0
      %v590 = vmax.f32 %v432, 0.0
      %v591 = vmax.f32 %v437, 0.0
      %v592 = vmax.f32 %v442, 0.0
      %v593 = vmax.f32 %v447, 0.0
      %v594 = vmax.f32 %v452, 0.0
      %v595 = vmax.f32 %v457, 0.0
      %v596 = vmax.f32 %v462, 0.0
      %v597 = vmax.f32 %v467, 0.0
      %v598 = vmax.f32 %v472, 0.0
      %v599 = vmax.f32 %v477, 0.0
      %v600 = vmax.f32 %v482, 0.0
      %v601 = vmax.f32 %v487, 0.0
      %v602 = vmax.f32 %v492, 0.0
      %v603 = vmax.f32 %v497, 0.0
      %v604 = vmax.f32 %v502, 0.0
      %v605 = vmax.f32 %v507, 0.0
      %v606 = vmax.f32 %v512, 0.0
      %v607 = vmax.f32 %v517, 0.0
      %v608 = vmax.f32 %v522, 0.0
      %v609 = vmax.f32 %v527, 0.0
      %v610 = vmax.f32 %v532, 0.0
      %v611 = vmax.f32 %v537, 0.0
      %v612 = vmax.f32 %v542, 0.0
      %v613 = vmax.f32 %v547, 0.0
      %v614 = vmax.f32 %v552, 0.0
      %v615 = vmax.f32 %v557, 0.0
      %v616 = vmax.f32 %v562, 0.0
      %v617 = vmax.f32 %v567, 0.0
      %v618 = vmax.f32 %v572, 0.0
      %v619 = vmax.f32 %v577, 0.0
      %v620 = vmax.f32 %v582, 0.0
      %v621 = vmax.f32 %v587, 0.0
      %v622 = vld [vmem:[%s3] sm:$0xff]
      %v623 = vld [vmem:[%s3 + $0x8] sm:$0xff]
      %v624 = vld [vmem:[%s3 + $0x10] sm:$0xff]
      %v625 = vld [vmem:[%s3 + $0x18] sm:$0xff]
      %v626 = vld [vmem:[%s3 + $0x20] sm:$0xff]
      %v627 = vld [vmem:[%s3 + $0x28] sm:$0xff]
      %v628 = vld [vmem:[%s3 + $0x30] sm:$0xff]
      %v629 = vld [vmem:[%s3 + $0x38] sm:$0xff]
      %v630 = vld [vmem:[%s3 + $0x40] sm:$0xff]
      %v631 = vld [vmem:[%s3 + $0x48] sm:$0xff]
      %v632 = vld [vmem:[%s3 + $0x50] sm:$0xff]
      %v633 = vld [vmem:[%s3 + $0x58] sm:$0xff]
      %v634 = vld [vmem:[%s3 + $0x60] sm:$0xff]
      %v635 = vld [vmem:[%s3 + $0x68] sm:$0xff]
      %v636 = vld [vmem:[%s3 + $0x70] sm:$0xff]
      %v637 = vld [vmem:[%s3 + $0x78] sm:$0xff]
      %v638 = vld [vmem:[%s4] sm:$0x1]
      %v640 = vlaneseq
      %v641 = vshrl.u32 %v640, 7
      %v642 = vsub.s32 0, %v641
      %v643 = vrot.slane %v638, %v642
      %645 = vmatprep.subr.mxu0 0.0
      %646 = vmatpush1.msra.mxu0 %v622
      %647 = vmatprep.subr.mxu0 0.0
      %648 = vmatpush1.msra.mxu0 %v623
      %649 = vmatprep.subr.mxu0 0.0
      %650 = vmatpush1.msra.mxu0 %v624
      %651 = vmatprep.subr.mxu0 0.0
      %652 = vmatpush1.msra.mxu0 %v625
      %653 = vmatprep.subr.mxu0 0.0
      %654 = vmatpush1.msra.mxu0 %v626
      %655 = vmatprep.subr.mxu0 0.0
      %656 = vmatpush1.msra.mxu0 %v627
      %657 = vmatprep.subr.mxu0 0.0
      %658 = vmatpush1.msra.mxu0 %v628
      %659 = vmatprep.subr.mxu0 0.0
      %660 = vmatpush1.msra.mxu0 %v629
      %661 = vmatprep.subr.mxu0 0.0
      %662 = vmatpush1.msra.mxu0 %v630
      %663 = vmatprep.subr.mxu0 0.0
      %664 = vmatpush1.msra.mxu0 %v631
      %665 = vmatprep.subr.mxu0 0.0
      %666 = vmatpush1.msra.mxu0 %v632
      %667 = vmatprep.subr.mxu0 0.0
      %668 = vmatpush1.msra.mxu0 %v633
      %669 = vmatprep.subr.mxu0 0.0
      %670 = vmatpush1.msra.mxu0 %v634
      %671 = vmatprep.subr.mxu0 0.0
      %672 = vmatpush1.msra.mxu0 %v635
      %673 = vmatprep.subr.mxu0 0.0
      %674 = vmatpush1.msra.mxu0 %v636
      %675 = vmatprep.subr.mxu0 0.0
      %676 = vmatpush1.msra.mxu0 %v637
      %677 = vmatprep.subr.mxu0 0.0
      %678 = vmatpush1.msra.mxu0 0.0
      %679 = vmatprep.subr.mxu0 0.0
      %680 = vmatpush1.msra.mxu0 0.0
      %681 = vmatprep.subr.mxu0 0.0
      %682 = vmatpush1.msra.mxu0 0.0
      %683 = vmatprep.subr.mxu0 0.0
      %684 = vmatpush1.msra.mxu0 0.0
      %685 = vmatprep.subr.mxu0 0.0
      %686 = vmatpush1.msra.mxu0 0.0
      %687 = vmatprep.subr.mxu0 0.0
      %688 = vmatpush1.msra.mxu0 0.0
      %689 = vmatprep.subr.mxu0 0.0
      %690 = vmatpush1.msra.mxu0 0.0
      %691 = vmatprep.subr.mxu0 0.0
      %692 = vmatpush1.msra.mxu0 0.0
      %693 = vmatprep.subr.mxu0 0.0
      %694 = vmatpush1.msra.mxu0 0.0
      %695 = vmatprep.subr.mxu0 0.0
      %696 = vmatpush1.msra.mxu0 0.0
      %697 = vmatprep.subr.mxu0 0.0
      %698 = vmatpush1.msra.mxu0 0.0
      %699 = vmatprep.subr.mxu0 0.0
      %700 = vmatpush1.msra.mxu0 0.0
      %701 = vmatprep.subr.mxu0 0.0
      %702 = vmatpush1.msra.mxu0 0.0
      %703 = vmatprep.subr.mxu0 0.0
      %704 = vmatpush1.msra.mxu0 0.0
      %705 = vmatprep.subr.mxu0 0.0
      %706 = vmatpush1.msra.mxu0 0.0
      %707 = vmatprep.subr.mxu0 0.0
      %708 = vmatpush1.msra.mxu0 0.0
      %709 = vmatprep.mubr.f32.mxu0 0.0
      %710 = vmatmul.mubr.f32.gmra.mrb[0].mxu0 %v590
      %v711 = vpop.f32.mrb[0].mxu0
      %v712 = vadd.f32 %v643, %v711
      %v713 = vpop.f32.mrb[0].mxu0
      %714 = vmatprep.mubr.f32.mxu0 0.0
      %715 = vmatmul.mubr.f32.gmra.mrb[0].mxu0 %v591
      %v716 = vpop.f32.mrb[0].mxu0
      %v717 = vadd.f32 %v643, %v716
      %v718 = vpop.f32.mrb[0].mxu0
      %719 = vmatprep.mubr.f32.mxu0 0.0
      %720 = vmatmul.mubr.f32.gmra.mrb[0].mxu0 %v592
      %v721 = vpop.f32.mrb[0].mxu0
      %v722 = vadd.f32 %v643, %v721
      %v723 = vpop.f32.mrb[0].mxu0
      %724 = vmatprep.mubr.f32.mxu0 0.0
      %725 = vmatmul.mubr.f32.gmra.mrb[0].mxu0 %v593
      %v726 = vpop.f32.mrb[0].mxu0
      %v727 = vadd.f32 %v643, %v726
      %v728 = vpop.f32.mrb[0].mxu0
      %729 = vmatprep.mubr.f32.mxu0 0.0
      %730 = vmatmul.mubr.f32.gmra.mrb[0].mxu0 %v594
      %v731 = vpop.f32.mrb[0].mxu0
      %v732 = vadd.f32 %v643, %v731
      %v733 = vpop.f32.mrb[0].mxu0
      %734 = vmatprep.mubr.f32.mxu0 0.0
      %735 = vmatmul.mubr.f32.gmra.mrb[0].mxu0 %v595
      %v736 = vpop.f32.mrb[0].mxu0
      %v737 = vadd.f32 %v643, %v736
      %v738 = vpop.f32.mrb[0].mxu0
      %739 = vmatprep.mubr.f32.mxu0 0.0
      %740 = vmatmul.mubr.f32.gmra.mrb[0].mxu0 %v596
      %v741 = vpop.f32.mrb[0].mxu0
      %v742 = vadd.f32 %v643, %v741
      %v743 = vpop.f32.mrb[0].mxu0
      %744 = vmatprep.mubr.f32.mxu0 0.0
      %745 = vmatmul.mubr.f32.gmra.mrb[0].mxu0 %v597
      %v746 = vpop.f32.mrb[0].mxu0
      %v747 = vadd.f32 %v643, %v746
      %v748 = vpop.f32.mrb[0].mxu0
      %749 = vmatprep.mubr.f32.mxu0 0.0
      %750 = vmatmul.mubr.f32.gmra.mrb[0].mxu0 %v598
      %v751 = vpop.f32.mrb[0].mxu0
      %v752 = vadd.f32 %v643, %v751
      %v753 = vpop.f32.mrb[0].mxu0
      %754 = vmatprep.mubr.f32.mxu0 0.0
      %755 = vmatmul.mubr.f32.gmra.mrb[0].mxu0 %v599
      %v756 = vpop.f32.mrb[0].mxu0
      %v757 = vadd.f32 %v643, %v756
      %v758 = vpop.f32.mrb[0].mxu0
      %759 = vmatprep.mubr.f32.mxu0 0.0
      %760 = vmatmul.mubr.f32.gmra.mrb[0].mxu0 %v600
      %v761 = vpop.f32.mrb[0].mxu0
      %v762 = vadd.f32 %v643, %v761
      %v763 = vpop.f32.mrb[0].mxu0
      %764 = vmatprep.mubr.f32.mxu0 0.0
      %765 = vmatmul.mubr.f32.gmra.mrb[0].mxu0 %v601
      %v766 = vpop.f32.mrb[0].mxu0
      %v767 = vadd.f32 %v643, %v766
      %v768 = vpop.f32.mrb[0].mxu0
      %769 = vmatprep.mubr.f32.mxu0 0.0
      %770 = vmatmul.mubr.f32.gmra.mrb[0].mxu0 %v602
      %v771 = vpop.f32.mrb[0].mxu0
      %v772 = vadd.f32 %v643, %v771
      %v773 = vpop.f32.mrb[0].mxu0
      %774 = vmatprep.mubr.f32.mxu0 0.0
      %775 = vmatmul.mubr.f32.gmra.mrb[0].mxu0 %v603
      %v776 = vpop.f32.mrb[0].mxu0
      %v777 = vadd.f32 %v643, %v776
      %v778 = vpop.f32.mrb[0].mxu0
      %779 = vmatprep.mubr.f32.mxu0 0.0
      %780 = vmatmul.mubr.f32.gmra.mrb[0].mxu0 %v604
      %v781 = vpop.f32.mrb[0].mxu0
      %v782 = vadd.f32 %v643, %v781
      %v783 = vpop.f32.mrb[0].mxu0
      %784 = vmatprep.mubr.f32.mxu0 0.0
      %785 = vmatmul.mubr.f32.gmra.mrb[0].mxu0 %v605
      %v786 = vpop.f32.mrb[0].mxu0
      %v787 = vadd.f32 %v643, %v786
      %v788 = vpop.f32.mrb[0].mxu0
      %789 = vmatprep.mubr.f32.mxu0 0.0
      %790 = vmatmul.mubr.f32.gmra.mrb[0].mxu0 %v606
      %v791 = vpop.f32.mrb[0].mxu0
      %v792 = vadd.f32 %v643, %v791
      %v793 = vpop.f32.mrb[0].mxu0
      %794 = vmatprep.mubr.f32.mxu0 0.0
      %795 = vmatmul.mubr.f32.gmra.mrb[0].mxu0 %v607
      %v796 = vpop.f32.mrb[0].mxu0
      %v797 = vadd.f32 %v643, %v796
      %v798 = vpop.f32.mrb[0].mxu0
      %799 = vmatprep.mubr.f32.mxu0 0.0
      %800 = vmatmul.mubr.f32.gmra.mrb[0].mxu0 %v608
      %v801 = vpop.f32.mrb[0].mxu0
      %v802 = vadd.f32 %v643, %v801
      %v803 = vpop.f32.mrb[0].mxu0
      %804 = vmatprep.mubr.f32.mxu0 0.0
      %805 = vmatmul.mubr.f32.gmra.mrb[0].mxu0 %v609
      %v806 = vpop.f32.mrb[0].mxu0
      %v807 = vadd.f32 %v643, %v806
      %v808 = vpop.f32.mrb[0].mxu0
      %809 = vmatprep.mubr.f32.mxu0 0.0
      %810 = vmatmul.mubr.f32.gmra.mrb[0].mxu0 %v610
      %v811 = vpop.f32.mrb[0].mxu0
      %v812 = vadd.f32 %v643, %v811
      %v813 = vpop.f32.mrb[0].mxu0
      %814 = vmatprep.mubr.f32.mxu0 0.0
      %815 = vmatmul.mubr.f32.gmra.mrb[0].mxu0 %v611
      %v816 = vpop.f32.mrb[0].mxu0
      %v817 = vadd.f32 %v643, %v816
      %v818 = vpop.f32.mrb[0].mxu0
      %819 = vmatprep.mubr.f32.mxu0 0.0
      %820 = vmatmul.mubr.f32.gmra.mrb[0].mxu0 %v612
      %v821 = vpop.f32.mrb[0].mxu0
      %v822 = vadd.f32 %v643, %v821
      %v823 = vpop.f32.mrb[0].mxu0
      %824 = vmatprep.mubr.f32.mxu0 0.0
      %825 = vmatmul.mubr.f32.gmra.mrb[0].mxu0 %v613
      %v826 = vpop.f32.mrb[0].mxu0
      %v827 = vadd.f32 %v643, %v826
      %v828 = vpop.f32.mrb[0].mxu0
      %829 = vmatprep.mubr.f32.mxu0 0.0
      %830 = vmatmul.mubr.f32.gmra.mrb[0].mxu0 %v614
      %v831 = vpop.f32.mrb[0].mxu0
      %v832 = vadd.f32 %v643, %v831
      %v833 = vpop.f32.mrb[0].mxu0
      %834 = vmatprep.mubr.f32.mxu0 0.0
      %835 = vmatmul.mubr.f32.gmra.mrb[0].mxu0 %v615
      %v836 = vpop.f32.mrb[0].mxu0
      %v837 = vadd.f32 %v643, %v836
      %v838 = vpop.f32.mrb[0].mxu0
      %839 = vmatprep.mubr.f32.mxu0 0.0
      %840 = vmatmul.mubr.f32.gmra.mrb[0].mxu0 %v616
      %v841 = vpop.f32.mrb[0].mxu0
      %v842 = vadd.f32 %v643, %v841
      %v843 = vpop.f32.mrb[0].mxu0
      %844 = vmatprep.mubr.f32.mxu0 0.0
      %845 = vmatmul.mubr.f32.gmra.mrb[0].mxu0 %v617
      %v846 = vpop.f32.mrb[0].mxu0
      %v847 = vadd.f32 %v643, %v846
      %v848 = vpop.f32.mrb[0].mxu0
      %849 = vmatprep.mubr.f32.mxu0 0.0
      %850 = vmatmul.mubr.f32.gmra.mrb[0].mxu0 %v618
      %v851 = vpop.f32.mrb[0].mxu0
      %v852 = vadd.f32 %v643, %v851
      %v853 = vpop.f32.mrb[0].mxu0
      %854 = vmatprep.mubr.f32.mxu0 0.0
      %855 = vmatmul.mubr.f32.gmra.mrb[0].mxu0 %v619
      %v856 = vpop.f32.mrb[0].mxu0
      %v857 = vadd.f32 %v643, %v856
      %v858 = vpop.f32.mrb[0].mxu0
      %859 = vmatprep.mubr.f32.mxu0 0.0
      %860 = vmatmul.mubr.f32.gmra.mrb[0].mxu0 %v620
      %v861 = vpop.f32.mrb[0].mxu0
      %v862 = vadd.f32 %v643, %v861
      %v863 = vpop.f32.mrb[0].mxu0
      %864 = vmatprep.mubr.f32.mxu0 0.0
      %865 = vmatmul.mubr.f32.gmra.mrb[0].mxu0 %v621
      %v866 = vpop.f32.mrb[0].mxu0
      %v867 = vadd.f32 %v643, %v866
      %v868 = vpop.f32.mrb[0].mxu0
      %869 = vdwg.mxu0
      %v870 = vpack.c.bf16 %v717, %v712
      %v871 = vpack.c.bf16 %v727, %v722
      %v872 = vpack.c.bf16 %v737, %v732
      %v873 = vpack.c.bf16 %v747, %v742
      %v874 = vpack.c.bf16 %v757, %v752
      %v875 = vpack.c.bf16 %v767, %v762
      %v876 = vpack.c.bf16 %v777, %v772
      %v877 = vpack.c.bf16 %v787, %v782
      %v878 = vpack.c.bf16 %v797, %v792
      %v879 = vpack.c.bf16 %v807, %v802
      %v880 = vpack.c.bf16 %v817, %v812
      %v881 = vpack.c.bf16 %v827, %v822
      %v882 = vpack.c.bf16 %v837, %v832
      %v883 = vpack.c.bf16 %v847, %v842
      %v884 = vpack.c.bf16 %v857, %v852
      %v885 = vpack.c.bf16 %v867, %v862
      %v902 = vunpack.c.l.b16 %v870
      %v903 = vunpack.c.h.b16 %v870
      %v904 = vunpack.c.l.b16 %v871
      %v905 = vunpack.c.h.b16 %v871
      %v906 = vunpack.c.l.b16 %v872
      %v907 = vunpack.c.h.b16 %v872
      %v908 = vunpack.c.l.b16 %v873
      %v909 = vunpack.c.h.b16 %v873
      %v910 = vunpack.c.l.b16 %v874
      %v911 = vunpack.c.h.b16 %v874
      %v912 = vunpack.c.l.b16 %v875
      %v913 = vunpack.c.h.b16 %v875
      %v914 = vunpack.c.l.b16 %v876
      %v915 = vunpack.c.h.b16 %v876
      %v916 = vunpack.c.l.b16 %v877
      %v917 = vunpack.c.h.b16 %v877
      %v918 = vunpack.c.l.b16 %v878
      %v919 = vunpack.c.h.b16 %v878
      %v920 = vunpack.c.l.b16 %v879
      %v921 = vunpack.c.h.b16 %v879
      %v922 = vunpack.c.l.b16 %v880
      %v923 = vunpack.c.h.b16 %v880
      %v924 = vunpack.c.l.b16 %v881
      %v925 = vunpack.c.h.b16 %v881
      %v926 = vunpack.c.l.b16 %v882
      %v927 = vunpack.c.h.b16 %v882
      %v928 = vunpack.c.l.b16 %v883
      %v929 = vunpack.c.h.b16 %v883
      %v930 = vunpack.c.l.b16 %v884
      %v931 = vunpack.c.h.b16 %v884
      %v932 = vunpack.c.l.b16 %v885
      %v933 = vunpack.c.h.b16 %v885
      %v934 = vpack.c.b16 %v902, %v902
      %v935 = vpack.c.b16 %v903, %v903
      %v936 = vpack.c.b16 %v904, %v904
      %v937 = vpack.c.b16 %v905, %v905
      %v938 = vpack.c.b16 %v906, %v906
      %v939 = vpack.c.b16 %v907, %v907
      %v940 = vpack.c.b16 %v908, %v908
      %v941 = vpack.c.b16 %v909, %v909
      %v942 = vpack.c.b16 %v910, %v910
      %v943 = vpack.c.b16 %v911, %v911
      %v944 = vpack.c.b16 %v912, %v912
      %v945 = vpack.c.b16 %v913, %v913
      %v946 = vpack.c.b16 %v914, %v914
      %v947 = vpack.c.b16 %v915, %v915
      %v948 = vpack.c.b16 %v916, %v916
      %v949 = vpack.c.b16 %v917, %v917
      %v950 = vpack.c.b16 %v918, %v918
      %v951 = vpack.c.b16 %v919, %v919
      %v952 = vpack.c.b16 %v920, %v920
      %v953 = vpack.c.b16 %v921, %v921
      %v954 = vpack.c.b16 %v922, %v922
      %v955 = vpack.c.b16 %v923, %v923
      %v956 = vpack.c.b16 %v924, %v924
      %v957 = vpack.c.b16 %v925, %v925
      %v958 = vpack.c.b16 %v926, %v926
      %v959 = vpack.c.b16 %v927, %v927
      %v960 = vpack.c.b16 %v928, %v928
      %v961 = vpack.c.b16 %v929, %v929
      %v962 = vpack.c.b16 %v930, %v930
      %v963 = vpack.c.b16 %v931, %v931
      %v964 = vpack.c.b16 %v932, %v932
      %v965 = vpack.c.b16 %v933, %v933
      %998 = vst [vmem:[%s226] sm:$0xf] %v934
      %999 = vst [vmem:[%s226 + $0x4] sm:$0xf] %v935
      %1000 = vst [vmem:[%s226 + $0x8] sm:$0xf] %v936
      %1001 = vst [vmem:[%s226 + $0xc] sm:$0xf] %v937
      %1002 = vst [vmem:[%s226 + $0x10] sm:$0xf] %v938
      %1003 = vst [vmem:[%s226 + $0x14] sm:$0xf] %v939
      %1004 = vst [vmem:[%s226 + $0x18] sm:$0xf] %v940
      %1005 = vst [vmem:[%s226 + $0x1c] sm:$0xf] %v941
      %1006 = vst [vmem:[%s226 + $0x20] sm:$0xf] %v942
      %1007 = vst [vmem:[%s226 + $0x24] sm:$0xf] %v943
      %1008 = vst [vmem:[%s226 + $0x28] sm:$0xf] %v944
      %1009 = vst [vmem:[%s226 + $0x2c] sm:$0xf] %v945
      %1010 = vst [vmem:[%s226 + $0x30] sm:$0xf] %v946
      %1011 = vst [vmem:[%s226 + $0x34] sm:$0xf] %v947
      %1012 = vst [vmem:[%s226 + $0x38] sm:$0xf] %v948
      %1013 = vst [vmem:[%s226 + $0x3c] sm:$0xf] %v949
      %1014 = vst [vmem:[%s226 + $0x40] sm:$0xf] %v950
      %1015 = vst [vmem:[%s226 + $0x44] sm:$0xf] %v951
      %1016 = vst [vmem:[%s226 + $0x48] sm:$0xf] %v952
      %1017 = vst [vmem:[%s226 + $0x4c] sm:$0xf] %v953
      %1018 = vst [vmem:[%s226 + $0x50] sm:$0xf] %v954
      %1019 = vst [vmem:[%s226 + $0x54] sm:$0xf] %v955
      %1020 = vst [vmem:[%s226 + $0x58] sm:$0xf] %v956
      %1021 = vst [vmem:[%s226 + $0x5c] sm:$0xf] %v957
      %1022 = vst [vmem:[%s226 + $0x60] sm:$0xf] %v958
      %1023 = vst [vmem:[%s226 + $0x64] sm:$0xf] %v959
      %1024 = vst [vmem:[%s226 + $0x68] sm:$0xf] %v960
      %1025 = vst [vmem:[%s226 + $0x6c] sm:$0xf] %v961
      %1026 = vst [vmem:[%s226 + $0x70] sm:$0xf] %v962
      %1027 = vst [vmem:[%s226 + $0x74] sm:$0xf] %v963
      %1028 = vst [vmem:[%s226 + $0x78] sm:$0xf] %v964
      %1029 = vst [vmem:[%s226 + $0x7c] sm:$0xf] %v965
      %s1030 = smul.u32 32, %s16
      %p1031 = scmp.lt.s32.totalorder %s1030, 127
      %s1032 = scalar_select %p1031, %s1030, 127
      %s1033 = smul.addr %s1032, 4
      %s1034 = scalar_lea.vmem %s5, %s1033
      // Predicated region
      $region41: #{graph_classification_forward.5} parent=39 // pred_check
        %p1035 = pneg %p144
      $region42: #{graph_classification_forward.5} parent=39 // pred_check_branch
        %1037 = sbr.rel (%p1035) target = $region44
      $region43: #{graph_classification_forward.5} parent=39 // pred_region
        %s1038 = smul.u32 32, %s16
      $region44: #{graph_classification_forward.5} parent=39 // pred_fallthru
        _
    $region40: #{graph_classification_forward.5} parent=5 // pred_fallthru
      _
    %p1039 = scmp.le.s32.totalorder 2, %s11
    // Predicated region
    $region45: #{graph_classification_forward.5} parent=5 // pred_check
      %p1040 = pneg %p1039
    $region46: #{graph_classification_forward.5} parent=5 // pred_check_branch
      %1042 = sbr.rel (%p1040) target = $region48
    $region47: #{graph_classification_forward.5} parent=5 // pred_region
      %s1043 = ssub.s32 %s11, 2
      // Predicated region
      $region49: #{graph_classification_forward.5} parent=47 // pred_check
        %p1044 = pneg %p150
      $region50: #{graph_classification_forward.5} parent=47 // pred_check_branch
        %1046 = sbr.rel (%p1044) target = $region52
      $region51: #{graph_classification_forward.5} parent=47 // pred_region
        %s1047 = smul.u32 32, %s17
        %p1048 = scmp.lt.s32.totalorder %s1047, 127
        %s1049 = scalar_select %p1048, %s1047, 127
        %s1050 = smul.addr %s1049, 4
        %s1051 = scalar_lea.vmem %s5, %s1050
      $region52: #{graph_classification_forward.5} parent=47 // pred_fallthru
        _
    $region48: #{graph_classification_forward.5} parent=5 // pred_fallthru
      _
  $region6: #{graph_classification_forward.5} parent=0 // loop_footer
    %s15 = sadd.s32 1, %s11
  $region7: #{graph_classification_forward.5} parent=0 // loop_footer_branch
    %10 = sbr.rel target = $region3
  $region8: #{graph_classification_forward.5} parent=0 // loop_exit
    _

// kernel: graph_classification_forward.9
$region0: #{graph_classification_forward.9}
  #allocation0 [shape = 'u32[]', space=smem, size = 0x4, offset = 0x4, fixed_abs, tag = 'smem constant byte address 0x4 - core index']
  #allocation1 [shape = 'u32[144,128]{1,0:T(1,128)}', space=vmem, size = 0x12000, scoped, tag = 'internal scratch']
  #allocation2 [shape = 'f32[1,128]{1,0:T(1,128)}', space=vmem, size = 0x200, scoped, tag = 'scratch operand']
  %s0 = inlined_call_operand.vmem [shape: bf16[1024,128], index: 0, kind: input, shape index: {}]
  %s1 = inlined_call_operand.vmem [shape: f32[128,4], index: 1, kind: input, shape index: {}]
  %s2 = inlined_call_operand.vmem [shape: f32[1,4], index: 2, kind: input, shape index: {}]
  %s3 = inlined_call_operand.hbm [shape: f32[1,4], index: 3, kind: output, shape index: {}]
  %s4 = sld [smem:[#allocation0]]
  $region53: #{graph_classification_forward.9} parent=0
    _
  %s6 = ssub.s32 1, %s4
  %s7 = scalar_select 0, %s6, %s4
  $region1: #{graph_classification_forward.9} parent=0
    #allocation3 [shape = 'u8[512]{0}', space=vmem, size = 0x400, scoped, tag = 'output window, operand 0, single buffered']
    #allocation4 [shape = 's32[2]{0}', space=sflag, size = 0x8, scoped, tag = 'scoped memory for graph_classification_forward.9']
    %8 = vsyncpa [#allocation4], 0
    loop: start=0, step=1, limit=6
    $region2: #{graph_classification_forward.9} parent=1 // loop_pre_header
      _
    $region3: #{graph_classification_forward.9} parent=1 // loop_header
      %s10 = sphi 0, %s14
      %p11 = scmp.ge.s32.totalorder %s10, 6
      %s20 = sphi 0, %s22
      %s23 = sphi 0, %s20
      %s24 = sphi 0, %s23
      %s40 = sphi 0, %s24
      %s44 = sphi 0, %s44
      %s46 = sphi 0, %s44
      %s47 = sphi 0, %s46
      %s61 = sphi 0, %s47
      %s65 = sphi 0, %s65
      %s67 = sphi 0, %s65
      %s68 = sphi 0, %s67
      %s82 = sphi 0, %s68
      %s86 = sphi 0, %s86
      %s88 = sphi 0, %s86
      %s89 = sphi 0, %s88
      %s103 = sphi 0, %s89
    $region4: #{graph_classification_forward.9} parent=1 // loop_header_branch
      %13 = sbr.rel (%p11) target = $region8
    $region5: #{graph_classification_forward.9} parent=1 // loop_body
      %s15 = ssub.s32 %s10, 1
      %s16 = ssub.s32 %s10, 2
      %s17 = sadd.s32 %s10, 1
      %s18 = ssub.s32 %s10, %s17
      %p19 = scmp.eq.s32.totalorder %s18, 0
      %s21 = sadd.s32 %s20, 1
      %s22 = scalar_select %p19, %s20, %s21
      %p25 = pneg %p19
      %p26 = scmp.eq.s32.totalorder %s10, 3
      %p27 = por %p25, %p26
      %p28 = scmp.ne.s32.totalorder %s20, %s23
      %p29 = scmp.eq.s32.totalorder %s10, 0
      %p30 = por %p28, %p29
      %p31 = scmp.ne.s32.totalorder %s20, %s23
      %p32 = scmp.eq.s32.totalorder %s15, 3
      %p33 = por %p31, %p32
      %p34 = scmp.ne.s32.totalorder %s23, %s24
      %p35 = scmp.eq.s32.totalorder %s15, 0
      %p36 = por %p34, %p35
      %p37 = scmp.ne.s32.totalorder %s23, %s24
      %p38 = scmp.eq.s32.totalorder %s16, 3
      %p39 = por %p37, %p38
      %p41 = scmp.ne.s32.totalorder %s24, %s40
      %p42 = scmp.eq.s32.totalorder %s16, 0
      %p43 = por %p41, %p42
      %s45 = sadd.s32 %s44, 1
      %p48 = scmp.eq.s32.totalorder %s10, 3
      %p49 = scmp.ne.s32.totalorder %s44, %s46
      %p50 = scmp.eq.s32.totalorder %s10, 0
      %p51 = por %p49, %p50
      %p52 = scmp.ne.s32.totalorder %s44, %s46
      %p53 = scmp.eq.s32.totalorder %s15, 3
      %p54 = por %p52, %p53
      %p55 = scmp.ne.s32.totalorder %s46, %s47
      %p56 = scmp.eq.s32.totalorder %s15, 0
      %p57 = por %p55, %p56
      %p58 = scmp.ne.s32.totalorder %s46, %s47
      %p59 = scmp.eq.s32.totalorder %s16, 3
      %p60 = por %p58, %p59
      %p62 = scmp.ne.s32.totalorder %s47, %s61
      %p63 = scmp.eq.s32.totalorder %s16, 0
      %p64 = por %p62, %p63
      %s66 = sadd.s32 %s65, 1
      %p69 = scmp.eq.s32.totalorder %s10, 3
      %p70 = scmp.ne.s32.totalorder %s65, %s67
      %p71 = scmp.eq.s32.totalorder %s10, 0
      %p72 = por %p70, %p71
      %p73 = scmp.ne.s32.totalorder %s65, %s67
      %p74 = scmp.eq.s32.totalorder %s15, 3
      %p75 = por %p73, %p74
      %p76 = scmp.ne.s32.totalorder %s67, %s68
      %p77 = scmp.eq.s32.totalorder %s15, 0
      %p78 = por %p76, %p77
      %p79 = scmp.ne.s32.totalorder %s67, %s68
      %p80 = scmp.eq.s32.totalorder %s16, 3
      %p81 = por %p79, %p80
      %p83 = scmp.ne.s32.totalorder %s68, %s82
      %p84 = scmp.eq.s32.totalorder %s16, 0
      %p85 = por %p83, %p84
      %s87 = sadd.s32 %s86, 1
      %p90 = scmp.eq.s32.totalorder %s10, 3
      %p91 = scmp.ne.s32.totalorder %s86, %s88
      %p92 = scmp.eq.s32.totalorder %s10, 0
      %p93 = por %p91, %p92
      %p94 = scmp.ne.s32.totalorder %s86, %s88
      %p95 = scmp.eq.s32.totalorder %s15, 3
      %p96 = por %p94, %p95
      %p97 = scmp.ne.s32.totalorder %s88, %s89
      %p98 = scmp.eq.s32.totalorder %s15, 0
      %p99 = por %p97, %p98
      %p100 = scmp.ne.s32.totalorder %s88, %s89
      %p101 = scmp.eq.s32.totalorder %s16, 3
      %p102 = por %p100, %p101
      %p104 = scmp.ne.s32.totalorder %s89, %s103
      %p105 = scmp.eq.s32.totalorder %s16, 0
      %p106 = por %p104, %p105
      %p107 = scmp.le.s32.totalorder 1, %s10
      %p108 = scmp.lt.s32.totalorder %s10, 5
      %p109 = pnand %p107, %p108
      %p110 = pneg %p109
      // Predicated region
      $region9: #{graph_classification_forward.9} parent=5 // pred_check
        _
      $region10: #{graph_classification_forward.9} parent=5 // pred_check_branch
        %112 = sbr.rel (%p109) target = $region12
      $region11: #{graph_classification_forward.9} parent=5 // pred_region
        %s113 = ssub.s32 %s10, 1
        // Predicated region
        $region13: #{graph_classification_forward.9} parent=11 // pred_check
          %p114 = pneg %p57
        $region14: #{graph_classification_forward.9} parent=11 // pred_check_branch
          %116 = sbr.rel (%p114) target = $region16
        $region15: #{graph_classification_forward.9} parent=11 // pred_region
          _
        $region16: #{graph_classification_forward.9} parent=11 // pred_fallthru
          _
        // Predicated region
        $region17: #{graph_classification_forward.9} parent=11 // pred_check
          %p117 = pneg %p78
        $region18: #{graph_classification_forward.9} parent=11 // pred_check_branch
          %119 = sbr.rel (%p117) target = $region20
        $region19: #{graph_classification_forward.9} parent=11 // pred_region
          _
        $region20: #{graph_classification_forward.9} parent=11 // pred_fallthru
          _
      $region12: #{graph_classification_forward.9} parent=5 // pred_fallthru
        _
      %p120 = scmp.lt.s32.totalorder %s10, 4
      // Predicated region
      $region21: #{graph_classification_forward.9} parent=5 // pred_check
        %p121 = pneg %p120
      $region22: #{graph_classification_forward.9} parent=5 // pred_check_branch
        %123 = sbr.rel (%p121) target = $region24
      $region23: #{graph_classification_forward.9} parent=5 // pred_region
        // Predicated region
        $region25: #{graph_classification_forward.9} parent=23 // pred_check
          %p124 = pneg %p30
        $region26: #{graph_classification_forward.9} parent=23 // pred_check_branch
          %126 = sbr.rel (%p124) target = $region28
        $region27: #{graph_classification_forward.9} parent=23 // pred_region
          %s127 = smul.u32 32, %s10
          %p128 = scmp.lt.s32.totalorder %s127, 127
          %s129 = scalar_select %p128, %s127, 127
          %s130 = smul.addr %s129, 4
          %s131 = scalar_lea.vmem %s0, %s130
          %s132 = smul.u32 32, %s10
        $region28: #{graph_classification_forward.9} parent=23 // pred_fallthru
          _
      $region24: #{graph_classification_forward.9} parent=5 // pred_fallthru
        _
      %p133 = scmp.le.s32.totalorder 1, %s10
      %p134 = scmp.lt.s32.totalorder %s10, 5
      %p135 = pnand %p133, %p134
      %p136 = pneg %p135
      // Predicated region
      $region29: #{graph_classification_forward.9} parent=5 // pred_check
        _
      $region30: #{graph_classification_forward.9} parent=5 // pred_check_branch
        %138 = sbr.rel (%p135) target = $region32
      $region31: #{graph_classification_forward.9} parent=5 // pred_region
        %s139 = ssub.s32 %s10, 1
        %s140 = smul.u32 32, %s15
        %p141 = scmp.lt.s32.totalorder %s140, 127
        %s142 = scalar_select %p141, %s140, 127
        %s143 = smul.addr %s142, 4
        %s144 = scalar_lea.vmem %s0, %s143
        %p145 = pneg %p36
        %p146 = pneg %p33
        %p147 = pneg %p57
        %p148 = pneg %p54
        %p149 = pneg %p78
        %p150 = pneg %p75
        %p151 = pneg %p99
        %p152 = pneg %p96
        %s153 = smul.u32 32, %s15
        %p154 = scmp.lt.s32.totalorder %s153, 127
        %s155 = scalar_select %p154, %s153, 127
        %s156 = smul.addr %s155, 4
        %s157 = scalar_lea.vmem %s0, %s156
        %s158 = smul.u32 32, %s15
        %p159 = scmp.eq.s32.totalorder %s15, 0
        // Predicated region
        $region33: #{graph_classification_forward.9} parent=31 // pred_check
          %p160 = pneg %p159
        $region34: #{graph_classification_forward.9} parent=31 // pred_check_branch
          %162 = sbr.rel (%p160) target = $region36
        $region35: #{graph_classification_forward.9} parent=31 // pred_region
          %163 = vst [vmem:[#allocation2] sm:$0x1] 0.0
        $region36: #{graph_classification_forward.9} parent=31 // pred_fallthru
          _
        %v164 = vlaneseq
        %v165 = vshrl.u32 %v164, 7
        %v166 = vadd.s32 %v165, 8
        %v167 = vadd.s32 %v165, 16
        %v168 = vadd.s32 %v165, 24
        %v169 = vadd.s32 %v165, 32
        %v170 = vadd.s32 %v165, 40
        %v171 = vadd.s32 %v165, 48
        %v172 = vadd.s32 %v165, 56
        %v173 = vadd.s32 %v165, 64
        %v174 = vadd.s32 %v165, 72
        %v175 = vadd.s32 %v165, 80
        %v176 = vadd.s32 %v165, 88
        %v177 = vadd.s32 %v165, 96
        %v178 = vadd.s32 %v165, 104
        %v179 = vadd.s32 %v165, 112
        %v180 = vadd.s32 %v165, 120
        %v181 = vadd.s32 %v165, 128
        %v182 = vadd.s32 %v165, 136
        %v183 = vadd.s32 %v165, 144
        %v184 = vadd.s32 %v165, 152
        %v185 = vadd.s32 %v165, 160
        %v186 = vadd.s32 %v165, 168
        %v187 = vadd.s32 %v165, 176
        %v188 = vadd.s32 %v165, 184
        %v189 = vadd.s32 %v165, 192
        %v190 = vadd.s32 %v165, 200
        %v191 = vadd.s32 %v165, 208
        %v192 = vadd.s32 %v165, 216
        %v193 = vadd.s32 %v165, 224
        %v194 = vadd.s32 %v165, 232
        %v195 = vadd.s32 %v165, 240
        %v196 = vadd.s32 %v165, 248
        %s197 = smul.u32 %s15, 256
        %v198 = vstv %s197
        %v199 = vadd.s32 %v165, %v198
        %v200 = vadd.s32 %v166, %v198
        %v201 = vadd.s32 %v167, %v198
        %v202 = vadd.s32 %v168, %v198
        %v203 = vadd.s32 %v169, %v198
        %v204 = vadd.s32 %v170, %v198
        %v205 = vadd.s32 %v171, %v198
        %v206 = vadd.s32 %v172, %v198
        %v207 = vadd.s32 %v173, %v198
        %v208 = vadd.s32 %v174, %v198
        %v209 = vadd.s32 %v175, %v198
        %v210 = vadd.s32 %v176, %v198
        %v211 = vadd.s32 %v177, %v198
        %v212 = vadd.s32 %v178, %v198
        %v213 = vadd.s32 %v179, %v198
        %v214 = vadd.s32 %v180, %v198
        %v215 = vadd.s32 %v181, %v198
        %v216 = vadd.s32 %v182, %v198
        %v217 = vadd.s32 %v183, %v198
        %v218 = vadd.s32 %v184, %v198
        %v219 = vadd.s32 %v185, %v198
        %v220 = vadd.s32 %v186, %v198
        %v221 = vadd.s32 %v187, %v198
        %v222 = vadd.s32 %v188, %v198
        %v223 = vadd.s32 %v189, %v198
        %v224 = vadd.s32 %v190, %v198
        %v225 = vadd.s32 %v191, %v198
        %v226 = vadd.s32 %v192, %v198
        %v227 = vadd.s32 %v193, %v198
        %v228 = vadd.s32 %v194, %v198
        %v229 = vadd.s32 %v195, %v198
        %v230 = vadd.s32 %v196, %v198
        %vm231 = vcmp.lt.s32.totalorder %v199, 600
        %vm232 = vcmp.lt.s32.totalorder %v200, 600
        %vm233 = vcmp.lt.s32.totalorder %v201, 600
        %vm234 = vcmp.lt.s32.totalorder %v202, 600
        %vm235 = vcmp.lt.s32.totalorder %v203, 600
        %vm236 = vcmp.lt.s32.totalorder %v204, 600
        %vm237 = vcmp.lt.s32.totalorder %v205, 600
        %vm238 = vcmp.lt.s32.totalorder %v206, 600
        %vm239 = vcmp.lt.s32.totalorder %v207, 600
        %vm240 = vcmp.lt.s32.totalorder %v208, 600
        %vm241 = vcmp.lt.s32.totalorder %v209, 600
        %vm242 = vcmp.lt.s32.totalorder %v210, 600
        %vm243 = vcmp.lt.s32.totalorder %v211, 600
        %vm244 = vcmp.lt.s32.totalorder %v212, 600
        %vm245 = vcmp.lt.s32.totalorder %v213, 600
        %vm246 = vcmp.lt.s32.totalorder %v214, 600
        %vm247 = vcmp.lt.s32.totalorder %v215, 600
        %vm248 = vcmp.lt.s32.totalorder %v216, 600
        %vm249 = vcmp.lt.s32.totalorder %v217, 600
        %vm250 = vcmp.lt.s32.totalorder %v218, 600
        %vm251 = vcmp.lt.s32.totalorder %v219, 600
        %vm252 = vcmp.lt.s32.totalorder %v220, 600
        %vm253 = vcmp.lt.s32.totalorder %v221, 600
        %vm254 = vcmp.lt.s32.totalorder %v222, 600
        %vm255 = vcmp.lt.s32.totalorder %v223, 600
        %vm256 = vcmp.lt.s32.totalorder %v224, 600
        %vm257 = vcmp.lt.s32.totalorder %v225, 600
        %vm258 = vcmp.lt.s32.totalorder %v226, 600
        %vm259 = vcmp.lt.s32.totalorder %v227, 600
        %vm260 = vcmp.lt.s32.totalorder %v228, 600
        %vm261 = vcmp.lt.s32.totalorder %v229, 600
        %vm262 = vcmp.lt.s32.totalorder %v230, 600
        %v263 = vsel %vm231, 1, 0
        %v264 = vsel %vm232, 1, 0
        %v265 = vsel %vm233, 1, 0
        %v266 = vsel %vm234, 1, 0
        %v267 = vsel %vm235, 1, 0
        %v268 = vsel %vm236, 1, 0
        %v269 = vsel %vm237, 1, 0
        %v270 = vsel %vm238, 1, 0
        %v271 = vsel %vm239, 1, 0
        %v272 = vsel %vm240, 1, 0
        %v273 = vsel %vm241, 1, 0
        %v274 = vsel %vm242, 1, 0
        %v275 = vsel %vm243, 1, 0
        %v276 = vsel %vm244, 1, 0
        %v277 = vsel %vm245, 1, 0
        %v278 = vsel %vm246, 1, 0
        %v279 = vsel %vm247, 1, 0
        %v280 = vsel %vm248, 1, 0
        %v281 = vsel %vm249, 1, 0
        %v282 = vsel %vm250, 1, 0
        %v283 = vsel %vm251, 1, 0
        %v284 = vsel %vm252, 1, 0
        %v285 = vsel %vm253, 1, 0
        %v286 = vsel %vm254, 1, 0
        %v287 = vsel %vm255, 1, 0
        %v288 = vsel %vm256, 1, 0
        %v289 = vsel %vm257, 1, 0
        %v290 = vsel %vm258, 1, 0
        %v291 = vsel %vm259, 1, 0
        %v292 = vsel %vm260, 1, 0
        %v293 = vsel %vm261, 1, 0
        %v294 = vsel %vm262, 1, 0
        %v295 = vcvt.s32.f32 %v263
        %v296 = vcvt.s32.f32 %v264
        %v297 = vcvt.s32.f32 %v265
        %v298 = vcvt.s32.f32 %v266
        %v299 = vcvt.s32.f32 %v267
        %v300 = vcvt.s32.f32 %v268
        %v301 = vcvt.s32.f32 %v269
        %v302 = vcvt.s32.f32 %v270
        %v303 = vcvt.s32.f32 %v271
        %v304 = vcvt.s32.f32 %v272
        %v305 = vcvt.s32.f32 %v273
        %v306 = vcvt.s32.f32 %v274
        %v307 = vcvt.s32.f32 %v275
        %v308 = vcvt.s32.f32 %v276
        %v309 = vcvt.s32.f32 %v277
        %v310 = vcvt.s32.f32 %v278
        %v311 = vcvt.s32.f32 %v279
        %v312 = vcvt.s32.f32 %v280
        %v313 = vcvt.s32.f32 %v281
        %v314 = vcvt.s32.f32 %v282
        %v315 = vcvt.s32.f32 %v283
        %v316 = vcvt.s32.f32 %v284
        %v317 = vcvt.s32.f32 %v285
        %v318 = vcvt.s32.f32 %v286
        %v319 = vcvt.s32.f32 %v287
        %v320 = vcvt.s32.f32 %v288
        %v321 = vcvt.s32.f32 %v289
        %v322 = vcvt.s32.f32 %v290
        %v323 = vcvt.s32.f32 %v291
        %v324 = vcvt.s32.f32 %v292
        %v325 = vcvt.s32.f32 %v293
        %v326 = vcvt.s32.f32 %v294
        %v327 = vld [vmem:[#allocation2] sm:$0x1]
        %v328 = vld [vmem:[%s157] sm:$0xf]
        %v329 = vld [vmem:[%s157 + $0x4] sm:$0xf]
        %v330 = vld [vmem:[%s157 + $0x8] sm:$0xf]
        %v331 = vld [vmem:[%s157 + $0xc] sm:$0xf]
        %v332 = vld [vmem:[%s157 + $0x10] sm:$0xf]
        %v333 = vld [vmem:[%s157 + $0x14] sm:$0xf]
        %v334 = vld [vmem:[%s157 + $0x18] sm:$0xf]
        %v335 = vld [vmem:[%s157 + $0x1c] sm:$0xf]
        %v336 = vld [vmem:[%s157 + $0x20] sm:$0xf]
        %v337 = vld [vmem:[%s157 + $0x24] sm:$0xf]
        %v338 = vld [vmem:[%s157 + $0x28] sm:$0xf]
        %v339 = vld [vmem:[%s157 + $0x2c] sm:$0xf]
        %v340 = vld [vmem:[%s157 + $0x30] sm:$0xf]
        %v341 = vld [vmem:[%s157 + $0x34] sm:$0xf]
        %v342 = vld [vmem:[%s157 + $0x38] sm:$0xf]
        %v343 = vld [vmem:[%s157 + $0x3c] sm:$0xf]
        %v344 = vld [vmem:[%s157 + $0x40] sm:$0xf]
        %v345 = vld [vmem:[%s157 + $0x44] sm:$0xf]
        %v346 = vld [vmem:[%s157 + $0x48] sm:$0xf]
        %v347 = vld [vmem:[%s157 + $0x4c] sm:$0xf]
        %v348 = vld [vmem:[%s157 + $0x50] sm:$0xf]
        %v349 = vld [vmem:[%s157 + $0x54] sm:$0xf]
        %v350 = vld [vmem:[%s157 + $0x58] sm:$0xf]
        %v351 = vld [vmem:[%s157 + $0x5c] sm:$0xf]
        %v352 = vld [vmem:[%s157 + $0x60] sm:$0xf]
        %v353 = vld [vmem:[%s157 + $0x64] sm:$0xf]
        %v354 = vld [vmem:[%s157 + $0x68] sm:$0xf]
        %v355 = vld [vmem:[%s157 + $0x6c] sm:$0xf]
        %v356 = vld [vmem:[%s157 + $0x70] sm:$0xf]
        %v357 = vld [vmem:[%s157 + $0x74] sm:$0xf]
        %v358 = vld [vmem:[%s157 + $0x78] sm:$0xf]
        %v359 = vld [vmem:[%s157 + $0x7c] sm:$0xf]
        %v360 = vunpack.c.l.bf16 %v328
        %v361 = vunpack.c.l.bf16 %v329
        %v362 = vunpack.c.l.bf16 %v330
        %v363 = vunpack.c.l.bf16 %v331
        %v364 = vunpack.c.l.bf16 %v332
        %v365 = vunpack.c.l.bf16 %v333
        %v366 = vunpack.c.l.bf16 %v334
        %v367 = vunpack.c.l.bf16 %v335
        %v368 = vunpack.c.l.bf16 %v336
        %v369 = vunpack.c.l.bf16 %v337
        %v370 = vunpack.c.l.bf16 %v338
        %v371 = vunpack.c.l.bf16 %v339
        %v372 = vunpack.c.l.bf16 %v340
        %v373 = vunpack.c.l.bf16 %v341
        %v374 = vunpack.c.l.bf16 %v342
        %v375 = vunpack.c.l.bf16 %v343
        %v376 = vunpack.c.l.bf16 %v344
        %v377 = vunpack.c.l.bf16 %v345
        %v378 = vunpack.c.l.bf16 %v346
        %v379 = vunpack.c.l.bf16 %v347
        %v380 = vunpack.c.l.bf16 %v348
        %v381 = vunpack.c.l.bf16 %v349
        %v382 = vunpack.c.l.bf16 %v350
        %v383 = vunpack.c.l.bf16 %v351
        %v384 = vunpack.c.l.bf16 %v352
        %v385 = vunpack.c.l.bf16 %v353
        %v386 = vunpack.c.l.bf16 %v354
        %v387 = vunpack.c.l.bf16 %v355
        %v388 = vunpack.c.l.bf16 %v356
        %v389 = vunpack.c.l.bf16 %v357
        %v390 = vunpack.c.l.bf16 %v358
        %v391 = vunpack.c.l.bf16 %v359
        %v392 = vmul.f32 %v360, %v295
        %v393 = vmul.f32 %v361, %v296
        %v394 = vmul.f32 %v362, %v297
        %v395 = vmul.f32 %v363, %v298
        %v396 = vmul.f32 %v364, %v299
        %v397 = vmul.f32 %v365, %v300
        %v398 = vmul.f32 %v366, %v301
        %v399 = vmul.f32 %v367, %v302
        %v400 = vmul.f32 %v368, %v303
        %v401 = vmul.f32 %v369, %v304
        %v402 = vmul.f32 %v370, %v305
        %v403 = vmul.f32 %v371, %v306
        %v404 = vmul.f32 %v372, %v307
        %v405 = vmul.f32 %v373, %v308
        %v406 = vmul.f32 %v374, %v309
        %v407 = vmul.f32 %v375, %v310
        %v408 = vmul.f32 %v376, %v311
        %v409 = vmul.f32 %v377, %v312
        %v410 = vmul.f32 %v378, %v313
        %v411 = vmul.f32 %v379, %v314
        %v412 = vmul.f32 %v380, %v315
        %v413 = vmul.f32 %v381, %v316
        %v414 = vmul.f32 %v382, %v317
        %v415 = vmul.f32 %v383, %v318
        %v416 = vmul.f32 %v384, %v319
        %v417 = vmul.f32 %v385, %v320
        %v418 = vmul.f32 %v386, %v321
        %v419 = vmul.f32 %v387, %v322
        %v420 = vmul.f32 %v388, %v323
        %v421 = vmul.f32 %v389, %v324
        %v422 = vmul.f32 %v390, %v325
        %v423 = vmul.f32 %v391, %v326
        %v424 = vadd.f32 %v392, %v393
        %v425 = vadd.f32 %v424, %v394
        %v426 = vadd.f32 %v425, %v395
        %v427 = vadd.f32 %v426, %v396
        %v428 = vadd.f32 %v427, %v397
        %v429 = vadd.f32 %v428, %v398
        %v430 = vadd.f32 %v429, %v399
        %v431 = vadd.f32 %v430, %v400
        %v432 = vadd.f32 %v431, %v401
        %v433 = vadd.f32 %v432, %v402
        %v434 = vadd.f32 %v433, %v403
        %v435 = vadd.f32 %v434, %v404
        %v436 = vadd.f32 %v435, %v405
        %v437 = vadd.f32 %v436, %v406
        %v438 = vadd.f32 %v437, %v407
        %v439 = vadd.f32 %v438, %v408
        %v440 = vadd.f32 %v439, %v409
        %v441 = vadd.f32 %v440, %v410
        %v442 = vadd.f32 %v441, %v411
        %v443 = vadd.f32 %v442, %v412
        %v444 = vadd.f32 %v443, %v413
        %v445 = vadd.f32 %v444, %v414
        %v446 = vadd.f32 %v445, %v415
        %v447 = vadd.f32 %v446, %v416
        %v448 = vadd.f32 %v447, %v417
        %v449 = vadd.f32 %v448, %v418
        %v450 = vadd.f32 %v449, %v419
        %v451 = vadd.f32 %v450, %v420
        %v452 = vadd.f32 %v451, %v421
        %v453 = vadd.f32 %v452, %v422
        %v454 = vadd.f32 %v453, %v423
        %v455 = vrot.slane %v454, 4
        %v456 = vadd.f32 %v454, %v455
        %v457 = vrot.slane %v456, 2
        %v458 = vadd.f32 %v456, %v457
        %v459 = vrot.slane %v458, 1
        %v460 = vadd.f32 %v458, %v459
        %v461 = vadd.f32 %v327, %v460
        %462 = vst [vmem:[#allocation2] sm:$0x1] %v461
        %p463 = scmp.eq.s32.totalorder %s15, 3
        // Predicated region
        $region37: #{graph_classification_forward.9} parent=31 // pred_check
          %p464 = pneg %p463
        $region38: #{graph_classification_forward.9} parent=31 // pred_check_branch
          %466 = sbr.rel (%p464) target = $region40
        $region39: #{graph_classification_forward.9} parent=31 // pred_region
          %v467 = vld [vmem:[#allocation2] sm:$0x1]
          %v468 = vmul.f32 %v467, 0.0016666667
          %v469 = vld [vmem:[%s1] sm:$0xff]
          %v470 = vld [vmem:[%s1 + $0x8] sm:$0xff]
          %v471 = vld [vmem:[%s1 + $0x10] sm:$0xff]
          %v472 = vld [vmem:[%s1 + $0x18] sm:$0xff]
          %v473 = vld [vmem:[%s1 + $0x20] sm:$0xff]
          %v474 = vld [vmem:[%s1 + $0x28] sm:$0xff]
          %v475 = vld [vmem:[%s1 + $0x30] sm:$0xff]
          %v476 = vld [vmem:[%s1 + $0x38] sm:$0xff]
          %v477 = vld [vmem:[%s1 + $0x40] sm:$0xff]
          %v478 = vld [vmem:[%s1 + $0x48] sm:$0xff]
          %v479 = vld [vmem:[%s1 + $0x50] sm:$0xff]
          %v480 = vld [vmem:[%s1 + $0x58] sm:$0xff]
          %v481 = vld [vmem:[%s1 + $0x60] sm:$0xff]
          %v482 = vld [vmem:[%s1 + $0x68] sm:$0xff]
          %v483 = vld [vmem:[%s1 + $0x70] sm:$0xff]
          %v484 = vld [vmem:[%s1 + $0x78] sm:$0xff]
          %v485 = vld [vmem:[%s2] sm:$0x1]
          %486 = vmatprep.subr.mxu0 0.0
          %487 = vmatpush1.msra.mxu0 %v469
          %488 = vmatprep.subr.mxu0 0.0
          %489 = vmatpush1.msra.mxu0 %v470
          %490 = vmatprep.subr.mxu0 0.0
          %491 = vmatpush1.msra.mxu0 %v471
          %492 = vmatprep.subr.mxu0 0.0
          %493 = vmatpush1.msra.mxu0 %v472
          %494 = vmatprep.subr.mxu0 0.0
          %495 = vmatpush1.msra.mxu0 %v473
          %496 = vmatprep.subr.mxu0 0.0
          %497 = vmatpush1.msra.mxu0 %v474
          %498 = vmatprep.subr.mxu0 0.0
          %499 = vmatpush1.msra.mxu0 %v475
          %500 = vmatprep.subr.mxu0 0.0
          %501 = vmatpush1.msra.mxu0 %v476
          %502 = vmatprep.subr.mxu0 0.0
          %503 = vmatpush1.msra.mxu0 %v477
          %504 = vmatprep.subr.mxu0 0.0
          %505 = vmatpush1.msra.mxu0 %v478
          %506 = vmatprep.subr.mxu0 0.0
          %507 = vmatpush1.msra.mxu0 %v479
          %508 = vmatprep.subr.mxu0 0.0
          %509 = vmatpush1.msra.mxu0 %v480
          %510 = vmatprep.subr.mxu0 0.0
          %511 = vmatpush1.msra.mxu0 %v481
          %512 = vmatprep.subr.mxu0 0.0
          %513 = vmatpush1.msra.mxu0 %v482
          %514 = vmatprep.subr.mxu0 0.0
          %515 = vmatpush1.msra.mxu0 %v483
          %516 = vmatprep.subr.mxu0 0.0
          %517 = vmatpush1.msra.mxu0 %v484
          %518 = vmatprep.subr.mxu0 0.0
          %519 = vmatpush1.msra.mxu0 0.0
          %520 = vmatprep.subr.mxu0 0.0
          %521 = vmatpush1.msra.mxu0 0.0
          %522 = vmatprep.subr.mxu0 0.0
          %523 = vmatpush1.msra.mxu0 0.0
          %524 = vmatprep.subr.mxu0 0.0
          %525 = vmatpush1.msra.mxu0 0.0
          %526 = vmatprep.subr.mxu0 0.0
          %527 = vmatpush1.msra.mxu0 0.0
          %528 = vmatprep.subr.mxu0 0.0
          %529 = vmatpush1.msra.mxu0 0.0
          %530 = vmatprep.subr.mxu0 0.0
          %531 = vmatpush1.msra.mxu0 0.0
          %532 = vmatprep.subr.mxu0 0.0
          %533 = vmatpush1.msra.mxu0 0.0
          %534 = vmatprep.subr.mxu0 0.0
          %535 = vmatpush1.msra.mxu0 0.0
          %536 = vmatprep.subr.mxu0 0.0
          %537 = vmatpush1.msra.mxu0 0.0
          %538 = vmatprep.subr.mxu0 0.0
          %539 = vmatpush1.msra.mxu0 0.0
          %540 = vmatprep.subr.mxu0 0.0
          %541 = vmatpush1.msra.mxu0 0.0
          %542 = vmatprep.subr.mxu0 0.0
          %543 = vmatpush1.msra.mxu0 0.0
          %544 = vmatprep.subr.mxu0 0.0
          %545 = vmatpush1.msra.mxu0 0.0
          %546 = vmatprep.subr.mxu0 0.0
          %547 = vmatpush1.msra.mxu0 0.0
          %548 = vmatprep.subr.mxu0 0.0
          %549 = vmatpush1.msra.mxu0 0.0
          %550 = vmatprep.mubr.f32.mxu0 0.0
          %551 = vmatmul.mubr.f32.gmra.mrb[0].mxu0 %v468
          %v552 = vpop.f32.mrb[0].mxu0
          %v553 = vadd.f32 %v485, %v552
          %v554 = vpop.f32.mrb[0].mxu0
          %555 = vdwg.mxu0
          %vm556 = vcmask 24576
          %557 = vst.msk [vmem:[#allocation3] sm:$0x1] %vm556, %v553
        $region40: #{graph_classification_forward.9} parent=31 // pred_fallthru
          _
        // Predicated region
        $region41: #{graph_classification_forward.9} parent=31 // pred_check
          %p558 = pneg %p96
        $region42: #{graph_classification_forward.9} parent=31 // pred_check_branch
          %560 = sbr.rel (%p558) target = $region44
        $region43: #{graph_classification_forward.9} parent=31 // pred_region
          %s562 = ssub.s32 16, 16
          %563 = vsyncadd [#allocation4], %s562
          %s565 = sshll.u32 [#allocation3], 4
          %s566 = int_to_ptr.vmem [resolvable:$true] %s565
          %568 = dma.vmem_to_hbm [thread:$0]  %s566, 16, %s3, [#allocation4]
        $region44: #{graph_classification_forward.9} parent=31 // pred_fallthru
          _
        // Predicated region
        $region45: #{graph_classification_forward.9} parent=31 // pred_check
          %p569 = pneg %p96
        $region46: #{graph_classification_forward.9} parent=31 // pred_check_branch
          %571 = sbr.rel (%p569) target = $region48
        $region47: #{graph_classification_forward.9} parent=31 // pred_region
          %572 = dma.done [#allocation4], 16
        $region48: #{graph_classification_forward.9} parent=31 // pred_fallthru
          _
      $region32: #{graph_classification_forward.9} parent=5 // pred_fallthru
        _
      %p573 = scmp.le.s32.totalorder 2, %s10
      // Predicated region
      $region49: #{graph_classification_forward.9} parent=5 // pred_check
        %p574 = pneg %p573
      $region50: #{graph_classification_forward.9} parent=5 // pred_check_branch
        %576 = sbr.rel (%p574) target = $region52
      $region51: #{graph_classification_forward.9} parent=5 // pred_region
        %s577 = ssub.s32 %s10, 2
      $region52: #{graph_classification_forward.9} parent=5 // pred_fallthru
        _
    $region6: #{graph_classification_forward.9} parent=1 // loop_footer
      %s14 = sadd.s32 1, %s10
    $region7: #{graph_classification_forward.9} parent=1 // loop_footer_branch
      %9 = sbr.rel target = $region3
    $region8: #{graph_classification_forward.9} parent=1 // loop_exit
      _
    %578 = vsyncpa [#allocation4], 1
    %s579 = scalar_lea.sflag [#allocation4], 1
    %580 = vsyncpa %s579, 1

// kernel: graph_classification_forward.7
$region0: #{graph_classification_forward.7}
  #allocation0 [shape = 'u32[]', space=smem, size = 0x4, offset = 0x4, fixed_abs, tag = 'smem constant byte address 0x4 - core index']
  #allocation1 [shape = 'u32[144,128]{1,0:T(1,128)}', space=vmem, size = 0x12000, scoped, tag = 'internal scratch']
  #allocation2 [shape = 'f32[256,128]{1,0:T(8,128)}', space=vmem, size = 0x20000, scoped, tag = 'scratch operand']
  %s0 = inlined_call_operand.vmem [shape: bf16[1024,1024], index: 0, kind: input, shape index: {}]
  %s1 = inlined_call_operand.vmem [shape: bf16[1024,128], index: 1, kind: input, shape index: {}]
  %s2 = inlined_call_operand.vmem [shape: f32[1024,1], index: 2, kind: input, shape index: {}]
  %s3 = inlined_call_operand.vmem [shape: bf16[128,128], index: 3, kind: input, shape index: {}]
  %s4 = inlined_call_operand.vmem [shape: bf16[128,128], index: 4, kind: input, shape index: {}]
  %s5 = inlined_call_operand.vmem [shape: f32[1,128], index: 5, kind: input, shape index: {}]
  %s6 = inlined_call_operand.vmem [shape: f32[1,128], index: 6, kind: input, shape index: {}]
  %s7 = inlined_call_operand.vmem [shape: f32[1,128], index: 7, kind: input, shape index: {}]
  %s8 = inlined_call_operand.vmem [shape: bf16[1024,128], index: 8, kind: output, shape index: {}]
  %s9 = sld [smem:[#allocation0]]
  $region96: #{graph_classification_forward.7} parent=0
    _
  %s11 = ssub.s32 1, %s9
  %s12 = scalar_select 0, %s11, %s9
  $region1: #{graph_classification_forward.7} parent=0
    #allocation3 [shape = 'u8[524288]{0}', space=vmem, size = 0x80000, scoped, tag = 'input window, operand 0']
    loop: start=0, step=1, limit=10
    $region2: #{graph_classification_forward.7} parent=1 // loop_pre_header
      _
    $region3: #{graph_classification_forward.7} parent=1 // loop_header
      %s14 = sphi 0, %s18
      %p15 = scmp.ge.s32.totalorder %s14, 10
      %s21 = sphi 0, %s33
      %s22 = sphi 0, %s29
      %s23 = sphi 0, %s21
      %s24 = sphi 0, %s22
      %s25 = sphi 0, %s23
      %s26 = sphi 0, %s24
      %s38 = sphi 0, %s40
      %s41 = sphi 0, %s38
      %s42 = sphi 0, %s41
      %s58 = sphi 0, %s42
      %s62 = sphi 0, %s62
      %s64 = sphi 0, %s62
      %s65 = sphi 0, %s64
      %s79 = sphi 0, %s65
      %s85 = sphi 0, %s87
      %s88 = sphi 0, %s85
      %s89 = sphi 0, %s88
      %s105 = sphi 0, %s89
      %s109 = sphi 0, %s109
      %s111 = sphi 0, %s109
      %s112 = sphi 0, %s111
      %s126 = sphi 0, %s112
      %s130 = sphi 0, %s130
      %s132 = sphi 0, %s130
      %s133 = sphi 0, %s132
      %s147 = sphi 0, %s133
      %s151 = sphi 0, %s151
      %s153 = sphi 0, %s151
      %s154 = sphi 0, %s153
      %s168 = sphi 0, %s154
      %s172 = sphi 0, %s172
      %s174 = sphi 0, %s172
      %s175 = sphi 0, %s174
      %s189 = sphi 0, %s175
      %s193 = sphi 0, %s193
      %s195 = sphi 0, %s193
      %s196 = sphi 0, %s195
      %s210 = sphi 0, %s196
      %s216 = sphi 0, %s218
      %s219 = sphi 0, %s216
      %s220 = sphi 0, %s219
      %s236 = sphi 0, %s220
    $region4: #{graph_classification_forward.7} parent=1 // loop_header_branch
      %17 = sbr.rel (%p15) target = $region8
    $region5: #{graph_classification_forward.7} parent=1 // loop_body
      %s19 = ssub.s32 %s14, 1
      %s20 = ssub.s32 %s14, 2
      %s27 = sadd.s32 1, %s22
      %p28 = scmp.ge.s32.totalorder %s27, 2
      %s29 = scalar_select %p28, 0, %s27
      %s30 = sadd.s32 1, %s21
      %s31 = scalar_select %p28, %s30, %s21
      %p32 = scmp.ge.s32.totalorder %s31, 4
      %s33 = scalar_select %p32, 0, %s31
      %s34 = ssub.s32 %s21, %s33
      %s35 = ssub.s32 %s22, %s29
      %s36 = sor.u32 %s34, %s35
      %p37 = scmp.eq.s32.totalorder %s36, 0
      %s39 = sadd.s32 %s38, 1
      %s40 = scalar_select %p37, %s38, %s39
      %p43 = pneg %p37
      %p44 = scmp.eq.s32.totalorder %s14, 7
      %p45 = por %p43, %p44
      %p46 = scmp.ne.s32.totalorder %s38, %s41
      %p47 = scmp.eq.s32.totalorder %s14, 0
      %p48 = por %p46, %p47
      %p49 = scmp.ne.s32.totalorder %s38, %s41
      %p50 = scmp.eq.s32.totalorder %s19, 7
      %p51 = por %p49, %p50
      %p52 = scmp.ne.s32.totalorder %s41, %s42
      %p53 = scmp.eq.s32.totalorder %s19, 0
      %p54 = por %p52, %p53
      %p55 = scmp.ne.s32.totalorder %s41, %s42
      %p56 = scmp.eq.s32.totalorder %s20, 7
      %p57 = por %p55, %p56
      %p59 = scmp.ne.s32.totalorder %s42, %s58
      %p60 = scmp.eq.s32.totalorder %s20, 0
      %p61 = por %p59, %p60
      %s63 = sadd.s32 %s62, 1
      %p66 = scmp.eq.s32.totalorder %s14, 7
      %p67 = scmp.ne.s32.totalorder %s62, %s64
      %p68 = scmp.eq.s32.totalorder %s14, 0
      %p69 = por %p67, %p68
      %p70 = scmp.ne.s32.totalorder %s62, %s64
      %p71 = scmp.eq.s32.totalorder %s19, 7
      %p72 = por %p70, %p71
      %p73 = scmp.ne.s32.totalorder %s64, %s65
      %p74 = scmp.eq.s32.totalorder %s19, 0
      %p75 = por %p73, %p74
      %p76 = scmp.ne.s32.totalorder %s64, %s65
      %p77 = scmp.eq.s32.totalorder %s20, 7
      %p78 = por %p76, %p77
      %p80 = scmp.ne.s32.totalorder %s65, %s79
      %p81 = scmp.eq.s32.totalorder %s20, 0
      %p82 = por %p80, %p81
      %s83 = ssub.s32 %s21, %s33
      %p84 = scmp.eq.s32.totalorder %s83, 0
      %s86 = sadd.s32 %s85, 1
      %s87 = scalar_select %p84, %s85, %s86
      %p90 = pneg %p84
      %p91 = scmp.eq.s32.totalorder %s14, 7
      %p92 = por %p90, %p91
      %p93 = scmp.ne.s32.totalorder %s85, %s88
      %p94 = scmp.eq.s32.totalorder %s14, 0
      %p95 = por %p93, %p94
      %p96 = scmp.ne.s32.totalorder %s85, %s88
      %p97 = scmp.eq.s32.totalorder %s19, 7
      %p98 = por %p96, %p97
      %p99 = scmp.ne.s32.totalorder %s88, %s89
      %p100 = scmp.eq.s32.totalorder %s19, 0
      %p101 = por %p99, %p100
      %p102 = scmp.ne.s32.totalorder %s88, %s89
      %p103 = scmp.eq.s32.totalorder %s20, 7
      %p104 = por %p102, %p103
      %p106 = scmp.ne.s32.totalorder %s89, %s105
      %p107 = scmp.eq.s32.totalorder %s20, 0
      %p108 = por %p106, %p107
      %s110 = sadd.s32 %s109, 1
      %p113 = scmp.eq.s32.totalorder %s14, 7
      %p114 = scmp.ne.s32.totalorder %s109, %s111
      %p115 = scmp.eq.s32.totalorder %s14, 0
      %p116 = por %p114, %p115
      %p117 = scmp.ne.s32.totalorder %s109, %s111
      %p118 = scmp.eq.s32.totalorder %s19, 7
      %p119 = por %p117, %p118
      %p120 = scmp.ne.s32.totalorder %s111, %s112
      %p121 = scmp.eq.s32.totalorder %s19, 0
      %p122 = por %p120, %p121
      %p123 = scmp.ne.s32.totalorder %s111, %s112
      %p124 = scmp.eq.s32.totalorder %s20, 7
      %p125 = por %p123, %p124
      %p127 = scmp.ne.s32.totalorder %s112, %s126
      %p128 = scmp.eq.s32.totalorder %s20, 0
      %p129 = por %p127, %p128
      %s131 = sadd.s32 %s130, 1
      %p134 = scmp.eq.s32.totalorder %s14, 7
      %p135 = scmp.ne.s32.totalorder %s130, %s132
      %p136 = scmp.eq.s32.totalorder %s14, 0
      %p137 = por %p135, %p136
      %p138 = scmp.ne.s32.totalorder %s130, %s132
      %p139 = scmp.eq.s32.totalorder %s19, 7
      %p140 = por %p138, %p139
      %p141 = scmp.ne.s32.totalorder %s132, %s133
      %p142 = scmp.eq.s32.totalorder %s19, 0
      %p143 = por %p141, %p142
      %p144 = scmp.ne.s32.totalorder %s132, %s133
      %p145 = scmp.eq.s32.totalorder %s20, 7
      %p146 = por %p144, %p145
      %p148 = scmp.ne.s32.totalorder %s133, %s147
      %p149 = scmp.eq.s32.totalorder %s20, 0
      %p150 = por %p148, %p149
      %s152 = sadd.s32 %s151, 1
      %p155 = scmp.eq.s32.totalorder %s14, 7
      %p156 = scmp.ne.s32.totalorder %s151, %s153
      %p157 = scmp.eq.s32.totalorder %s14, 0
      %p158 = por %p156, %p157
      %p159 = scmp.ne.s32.totalorder %s151, %s153
      %p160 = scmp.eq.s32.totalorder %s19, 7
      %p161 = por %p159, %p160
      %p162 = scmp.ne.s32.totalorder %s153, %s154
      %p163 = scmp.eq.s32.totalorder %s19, 0
      %p164 = por %p162, %p163
      %p165 = scmp.ne.s32.totalorder %s153, %s154
      %p166 = scmp.eq.s32.totalorder %s20, 7
      %p167 = por %p165, %p166
      %p169 = scmp.ne.s32.totalorder %s154, %s168
      %p170 = scmp.eq.s32.totalorder %s20, 0
      %p171 = por %p169, %p170
      %s173 = sadd.s32 %s172, 1
      %p176 = scmp.eq.s32.totalorder %s14, 7
      %p177 = scmp.ne.s32.totalorder %s172, %s174
      %p178 = scmp.eq.s32.totalorder %s14, 0
      %p179 = por %p177, %p178
      %p180 = scmp.ne.s32.totalorder %s172, %s174
      %p181 = scmp.eq.s32.totalorder %s19, 7
      %p182 = por %p180, %p181
      %p183 = scmp.ne.s32.totalorder %s174, %s175
      %p184 = scmp.eq.s32.totalorder %s19, 0
      %p185 = por %p183, %p184
      %p186 = scmp.ne.s32.totalorder %s174, %s175
      %p187 = scmp.eq.s32.totalorder %s20, 7
      %p188 = por %p186, %p187
      %p190 = scmp.ne.s32.totalorder %s175, %s189
      %p191 = scmp.eq.s32.totalorder %s20, 0
      %p192 = por %p190, %p191
      %s194 = sadd.s32 %s193, 1
      %p197 = scmp.eq.s32.totalorder %s14, 7
      %p198 = scmp.ne.s32.totalorder %s193, %s195
      %p199 = scmp.eq.s32.totalorder %s14, 0
      %p200 = por %p198, %p199
      %p201 = scmp.ne.s32.totalorder %s193, %s195
      %p202 = scmp.eq.s32.totalorder %s19, 7
      %p203 = por %p201, %p202
      %p204 = scmp.ne.s32.totalorder %s195, %s196
      %p205 = scmp.eq.s32.totalorder %s19, 0
      %p206 = por %p204, %p205
      %p207 = scmp.ne.s32.totalorder %s195, %s196
      %p208 = scmp.eq.s32.totalorder %s20, 7
      %p209 = por %p207, %p208
      %p211 = scmp.ne.s32.totalorder %s196, %s210
      %p212 = scmp.eq.s32.totalorder %s20, 0
      %p213 = por %p211, %p212
      %s214 = ssub.s32 %s21, %s33
      %p215 = scmp.eq.s32.totalorder %s214, 0
      %s217 = sadd.s32 %s216, 1
      %s218 = scalar_select %p215, %s216, %s217
      %p221 = pneg %p215
      %p222 = scmp.eq.s32.totalorder %s14, 7
      %p223 = por %p221, %p222
      %p224 = scmp.ne.s32.totalorder %s216, %s219
      %p225 = scmp.eq.s32.totalorder %s14, 0
      %p226 = por %p224, %p225
      %p227 = scmp.ne.s32.totalorder %s216, %s219
      %p228 = scmp.eq.s32.totalorder %s19, 7
      %p229 = por %p227, %p228
      %p230 = scmp.ne.s32.totalorder %s219, %s220
      %p231 = scmp.eq.s32.totalorder %s19, 0
      %p232 = por %p230, %p231
      %p233 = scmp.ne.s32.totalorder %s219, %s220
      %p234 = scmp.eq.s32.totalorder %s20, 7
      %p235 = por %p233, %p234
      %p237 = scmp.ne.s32.totalorder %s220, %s236
      %p238 = scmp.eq.s32.totalorder %s20, 0
      %p239 = por %p237, %p238
      %p240 = scmp.le.s32.totalorder 1, %s14
      %p241 = scmp.lt.s32.totalorder %s14, 9
      %p242 = pnand %p240, %p241
      %p243 = pneg %p242
      // Predicated region
      $region9: #{graph_classification_forward.7} parent=5 // pred_check
        _
      $region10: #{graph_classification_forward.7} parent=5 // pred_check_branch
        %245 = sbr.rel (%p242) target = $region12
      $region11: #{graph_classification_forward.7} parent=5 // pred_region
        %s246 = ssub.s32 %s14, 1
        // Predicated region
        $region13: #{graph_classification_forward.7} parent=11 // pred_check
          %p247 = pneg %p75
        $region14: #{graph_classification_forward.7} parent=11 // pred_check_branch
          %249 = sbr.rel (%p247) target = $region16
        $region15: #{graph_classification_forward.7} parent=11 // pred_region
          _
        $region16: #{graph_classification_forward.7} parent=11 // pred_fallthru
          _
        // Predicated region
        $region17: #{graph_classification_forward.7} parent=11 // pred_check
          %p250 = pneg %p122
        $region18: #{graph_classification_forward.7} parent=11 // pred_check_branch
          %252 = sbr.rel (%p250) target = $region20
        $region19: #{graph_classification_forward.7} parent=11 // pred_region
          _
        $region20: #{graph_classification_forward.7} parent=11 // pred_fallthru
          _
        // Predicated region
        $region21: #{graph_classification_forward.7} parent=11 // pred_check
          %p253 = pneg %p143
        $region22: #{graph_classification_forward.7} parent=11 // pred_check_branch
          %255 = sbr.rel (%p253) target = $region24
        $region23: #{graph_classification_forward.7} parent=11 // pred_region
          _
        $region24: #{graph_classification_forward.7} parent=11 // pred_fallthru
          _
        // Predicated region
        $region25: #{graph_classification_forward.7} parent=11 // pred_check
          %p256 = pneg %p164
        $region26: #{graph_classification_forward.7} parent=11 // pred_check_branch
          %258 = sbr.rel (%p256) target = $region28
        $region27: #{graph_classification_forward.7} parent=11 // pred_region
          _
        $region28: #{graph_classification_forward.7} parent=11 // pred_fallthru
          _
        // Predicated region
        $region29: #{graph_classification_forward.7} parent=11 // pred_check
          %p259 = pneg %p185
        $region30: #{graph_classification_forward.7} parent=11 // pred_check_branch
          %261 = sbr.rel (%p259) target = $region32
        $region31: #{graph_classification_forward.7} parent=11 // pred_region
          _
        $region32: #{graph_classification_forward.7} parent=11 // pred_fallthru
          _
        // Predicated region
        $region33: #{graph_classification_forward.7} parent=11 // pred_check
          %p262 = pneg %p206
        $region34: #{graph_classification_forward.7} parent=11 // pred_check_branch
          %264 = sbr.rel (%p262) target = $region36
        $region35: #{graph_classification_forward.7} parent=11 // pred_region
          _
        $region36: #{graph_classification_forward.7} parent=11 // pred_fallthru
          _
      $region12: #{graph_classification_forward.7} parent=5 // pred_fallthru
        _
      %p265 = scmp.lt.s32.totalorder %s14, 8
      // Predicated region
      $region37: #{graph_classification_forward.7} parent=5 // pred_check
        %p266 = pneg %p265
      $region38: #{graph_classification_forward.7} parent=5 // pred_check_branch
        %268 = sbr.rel (%p266) target = $region40
      $region39: #{graph_classification_forward.7} parent=5 // pred_region
        // Predicated region
        $region41: #{graph_classification_forward.7} parent=39 // pred_check
          %p269 = pneg %p48
        $region42: #{graph_classification_forward.7} parent=39 // pred_check_branch
          %271 = sbr.rel (%p269) target = $region44
        $region43: #{graph_classification_forward.7} parent=39 // pred_region
          %s272 = sand.u32 %s38, 1
          %s273 = sand.u32 %s38, 1
          %s274 = smul.addr %s273, 512
          %s275 = scalar_lea.vmem [#allocation3], %s274
          %s276 = smul.u32 32, %s21
          %s277 = smul.u32 4, %s22
          %s278 = smul.addr %s276, 8
          %s279 = sadd.s32 %s277, %s278
          %s280 = smul.addr %s279, 4
          %s281 = scalar_lea.vmem %s0, %s280
          // Predicated region
          $region45: #{graph_classification_forward.7} parent=43 // pred_check
            _
          $region46: #{graph_classification_forward.7} parent=43 // pred_check_branch
            %283 = sbr.rel (0) target = $region48
          $region47: #{graph_classification_forward.7} parent=43 // pred_region
            // Predicated region
            $region49: #{graph_classification_forward.7} parent=47 // pred_check
              _
            $region50: #{graph_classification_forward.7} parent=47 // pred_check_branch
              %285 = sbr.rel (0) target = $region52
            $region51: #{graph_classification_forward.7} parent=47 // pred_region
              loop: start=0, step=1, limit=1
              $region53: #{graph_classification_forward.7} parent=51 // loop_pre_header
                _
              $region54: #{graph_classification_forward.7} parent=51 // loop_header
                %s287 = sphi 0, %s291
                %p288 = scmp.ge.s32.totalorder %s287, 1
                %s292 = sphi %s281, %s281
                %s293 = sphi %s275, %s275
              $region55: #{graph_classification_forward.7} parent=51 // loop_header_branch
                %290 = sbr.rel (%p288) target = $region59
              $region56: #{graph_classification_forward.7} parent=51 // loop_body
                %v294 = vld [vmem:[%s292] sm:$0xff]
                %295 = vst [vmem:[%s293] sm:$0xff] %v294
                %v296 = vld [vmem:[%s292 + $0x8] sm:$0xff]
                %297 = vst [vmem:[%s293 + $0x8] sm:$0xff] %v296
                %v298 = vld [vmem:[%s292 + $0x20] sm:$0xff]
                %299 = vst [vmem:[%s293 + $0x10] sm:$0xff] %v298
                %v300 = vld [vmem:[%s292 + $0x28] sm:$0xff]
                %301 = vst [vmem:[%s293 + $0x18] sm:$0xff] %v300
                %v302 = vld [vmem:[%s292 + $0x40] sm:$0xff]
                %303 = vst [vmem:[%s293 + $0x20] sm:$0xff] %v302
                %v304 = vld [vmem:[%s292 + $0x48] sm:$0xff]
                %305 = vst [vmem:[%s293 + $0x28] sm:$0xff] %v304
                %v306 = vld [vmem:[%s292 + $0x60] sm:$0xff]
                %307 = vst [vmem:[%s293 + $0x30] sm:$0xff] %v306
                %v308 = vld [vmem:[%s292 + $0x68] sm:$0xff]
                %309 = vst [vmem:[%s293 + $0x38] sm:$0xff] %v308
                %v310 = vld [vmem:[%s292 + $0x80] sm:$0xff]
                %311 = vst [vmem:[%s293 + $0x40] sm:$0xff] %v310
                %v312 = vld [vmem:[%s292 + $0x88] sm:$0xff]
                %313 = vst [vmem:[%s293 + $0x48] sm:$0xff] %v312
                %v314 = vld [vmem:[%s292 + $0xa0] sm:$0xff]
                %315 = vst [vmem:[%s293 + $0x50] sm:$0xff] %v314
                %v316 = vld [vmem:[%s292 + $0xa8] sm:$0xff]
                %317 = vst [vmem:[%s293 + $0x58] sm:$0xff] %v316
                %v318 = vld [vmem:[%s292 + $0xc0] sm:$0xff]
                %319 = vst [vmem:[%s293 + $0x60] sm:$0xff] %v318
                %v320 = vld [vmem:[%s292 + $0xc8] sm:$0xff]
                %321 = vst [vmem:[%s293 + $0x68] sm:$0xff] %v320
                %v322 = vld [vmem:[%s292 + $0xe0] sm:$0xff]
                %323 = vst [vmem:[%s293 + $0x70] sm:$0xff] %v322
                %v324 = vld [vmem:[%s292 + $0xe8] sm:$0xff]
                %325 = vst [vmem:[%s293 + $0x78] sm:$0xff] %v324
                %v326 = vld [vmem:[%s292 + $0x100] sm:$0xff]
                %327 = vst [vmem:[%s293 + $0x80] sm:$0xff] %v326
                %v328 = vld [vmem:[%s292 + $0x108] sm:$0xff]
                %329 = vst [vmem:[%s293 + $0x88] sm:$0xff] %v328
                %v330 = vld [vmem:[%s292 + $0x120] sm:$0xff]
                %331 = vst [vmem:[%s293 + $0x90] sm:$0xff] %v330
                %v332 = vld [vmem:[%s292 + $0x128] sm:$0xff]
                %333 = vst [vmem:[%s293 + $0x98] sm:$0xff] %v332
                %v334 = vld [vmem:[%s292 + $0x140] sm:$0xff]
                %335 = vst [vmem:[%s293 + $0xa0] sm:$0xff] %v334
                %v336 = vld [vmem:[%s292 + $0x148] sm:$0xff]
                %337 = vst [vmem:[%s293 + $0xa8] sm:$0xff] %v336
                %v338 = vld [vmem:[%s292 + $0x160] sm:$0xff]
                %339 = vst [vmem:[%s293 + $0xb0] sm:$0xff] %v338
                %v340 = vld [vmem:[%s292 + $0x168] sm:$0xff]
                %341 = vst [vmem:[%s293 + $0xb8] sm:$0xff] %v340
                %v342 = vld [vmem:[%s292 + $0x180] sm:$0xff]
                %343 = vst [vmem:[%s293 + $0xc0] sm:$0xff] %v342
                %v344 = vld [vmem:[%s292 + $0x188] sm:$0xff]
                %345 = vst [vmem:[%s293 + $0xc8] sm:$0xff] %v344
                %v346 = vld [vmem:[%s292 + $0x1a0] sm:$0xff]
                %347 = vst [vmem:[%s293 + $0xd0] sm:$0xff] %v346
                %v348 = vld [vmem:[%s292 + $0x1a8] sm:$0xff]
                %349 = vst [vmem:[%s293 + $0xd8] sm:$0xff] %v348
                %v350 = vld [vmem:[%s292 + $0x1c0] sm:$0xff]
                %351 = vst [vmem:[%s293 + $0xe0] sm:$0xff] %v350
                %v352 = vld [vmem:[%s292 + $0x1c8] sm:$0xff]
                %353 = vst [vmem:[%s293 + $0xe8] sm:$0xff] %v352
                %v354 = vld [vmem:[%s292 + $0x1e0] sm:$0xff]
                %355 = vst [vmem:[%s293 + $0xf0] sm:$0xff] %v354
                %v356 = vld [vmem:[%s292 + $0x1e8] sm:$0xff]
                %357 = vst [vmem:[%s293 + $0xf8] sm:$0xff] %v356
                %v358 = vld [vmem:[%s292 + $0x200] sm:$0xff]
                %359 = vst [vmem:[%s293 + $0x100] sm:$0xff] %v358
                %v360 = vld [vmem:[%s292 + $0x208] sm:$0xff]
                %361 = vst [vmem:[%s293 + $0x108] sm:$0xff] %v360
                %v362 = vld [vmem:[%s292 + $0x220] sm:$0xff]
                %363 = vst [vmem:[%s293 + $0x110] sm:$0xff] %v362
                %v364 = vld [vmem:[%s292 + $0x228] sm:$0xff]
                %365 = vst [vmem:[%s293 + $0x118] sm:$0xff] %v364
                %v366 = vld [vmem:[%s292 + $0x240] sm:$0xff]
                %367 = vst [vmem:[%s293 + $0x120] sm:$0xff] %v366
                %v368 = vld [vmem:[%s292 + $0x248] sm:$0xff]
                %369 = vst [vmem:[%s293 + $0x128] sm:$0xff] %v368
                %v370 = vld [vmem:[%s292 + $0x260] sm:$0xff]
                %371 = vst [vmem:[%s293 + $0x130] sm:$0xff] %v370
                %v372 = vld [vmem:[%s292 + $0x268] sm:$0xff]
                %373 = vst [vmem:[%s293 + $0x138] sm:$0xff] %v372
                %v374 = vld [vmem:[%s292 + $0x280] sm:$0xff]
                %375 = vst [vmem:[%s293 + $0x140] sm:$0xff] %v374
                %v376 = vld [vmem:[%s292 + $0x288] sm:$0xff]
                %377 = vst [vmem:[%s293 + $0x148] sm:$0xff] %v376
                %v378 = vld [vmem:[%s292 + $0x2a0] sm:$0xff]
                %379 = vst [vmem:[%s293 + $0x150] sm:$0xff] %v378
                %v380 = vld [vmem:[%s292 + $0x2a8] sm:$0xff]
                %381 = vst [vmem:[%s293 + $0x158] sm:$0xff] %v380
                %v382 = vld [vmem:[%s292 + $0x2c0] sm:$0xff]
                %383 = vst [vmem:[%s293 + $0x160] sm:$0xff] %v382
                %v384 = vld [vmem:[%s292 + $0x2c8] sm:$0xff]
                %385 = vst [vmem:[%s293 + $0x168] sm:$0xff] %v384
                %v386 = vld [vmem:[%s292 + $0x2e0] sm:$0xff]
                %387 = vst [vmem:[%s293 + $0x170] sm:$0xff] %v386
                %v388 = vld [vmem:[%s292 + $0x2e8] sm:$0xff]
                %389 = vst [vmem:[%s293 + $0x178] sm:$0xff] %v388
                %v390 = vld [vmem:[%s292 + $0x300] sm:$0xff]
                %391 = vst [vmem:[%s293 + $0x180] sm:$0xff] %v390
                %v392 = vld [vmem:[%s292 + $0x308] sm:$0xff]
                %393 = vst [vmem:[%s293 + $0x188] sm:$0xff] %v392
                %v394 = vld [vmem:[%s292 + $0x320] sm:$0xff]
                %395 = vst [vmem:[%s293 + $0x190] sm:$0xff] %v394
                %v396 = vld [vmem:[%s292 + $0x328] sm:$0xff]
                %397 = vst [vmem:[%s293 + $0x198] sm:$0xff] %v396
                %v398 = vld [vmem:[%s292 + $0x340] sm:$0xff]
                %399 = vst [vmem:[%s293 + $0x1a0] sm:$0xff] %v398
                %v400 = vld [vmem:[%s292 + $0x348] sm:$0xff]
                %401 = vst [vmem:[%s293 + $0x1a8] sm:$0xff] %v400
                %v402 = vld [vmem:[%s292 + $0x360] sm:$0xff]
                %403 = vst [vmem:[%s293 + $0x1b0] sm:$0xff] %v402
                %v404 = vld [vmem:[%s292 + $0x368] sm:$0xff]
                %405 = vst [vmem:[%s293 + $0x1b8] sm:$0xff] %v404
                %v406 = vld [vmem:[%s292 + $0x380] sm:$0xff]
                %407 = vst [vmem:[%s293 + $0x1c0] sm:$0xff] %v406
                %v408 = vld [vmem:[%s292 + $0x388] sm:$0xff]
                %409 = vst [vmem:[%s293 + $0x1c8] sm:$0xff] %v408
                %v410 = vld [vmem:[%s292 + $0x3a0] sm:$0xff]
                %411 = vst [vmem:[%s293 + $0x1d0] sm:$0xff] %v410
                %v412 = vld [vmem:[%s292 + $0x3a8] sm:$0xff]
                %413 = vst [vmem:[%s293 + $0x1d8] sm:$0xff] %v412
                %v414 = vld [vmem:[%s292 + $0x3c0] sm:$0xff]
                %415 = vst [vmem:[%s293 + $0x1e0] sm:$0xff] %v414
                %v416 = vld [vmem:[%s292 + $0x3c8] sm:$0xff]
                %417 = vst [vmem:[%s293 + $0x1e8] sm:$0xff] %v416
                %v418 = vld [vmem:[%s292 + $0x3e0] sm:$0xff]
                %419 = vst [vmem:[%s293 + $0x1f0] sm:$0xff] %v418
                %v420 = vld [vmem:[%s292 + $0x3e8] sm:$0xff]
                %421 = vst [vmem:[%s293 + $0x1f8] sm:$0xff] %v420
              $region57: #{graph_classification_forward.7} parent=51 // loop_footer
                %s291 = sadd.s32 1, %s287
              $region58: #{graph_classification_forward.7} parent=51 // loop_footer_branch
                %286 = sbr.rel target = $region54
              $region59: #{graph_classification_forward.7} parent=51 // loop_exit
                _
            $region52: #{graph_classification_forward.7} parent=47 // pred_fallthru
              _
            // Predicated region
            $region60: #{graph_classification_forward.7} parent=47 // pred_check
              _
            $region61: #{graph_classification_forward.7} parent=47 // pred_check_branch
              %423 = sbr.rel target = $region63
            $region62: #{graph_classification_forward.7} parent=47 // pred_region
              _
            $region63: #{graph_classification_forward.7} parent=47 // pred_fallthru
              _
          $region48: #{graph_classification_forward.7} parent=43 // pred_fallthru
            _
          %424 = vnop
        $region44: #{graph_classification_forward.7} parent=39 // pred_fallthru
          _
        // Predicated region
        $region64: #{graph_classification_forward.7} parent=39 // pred_check
          %p425 = pneg %p95
        $region65: #{graph_classification_forward.7} parent=39 // pred_check_branch
          %427 = sbr.rel (%p425) target = $region67
        $region66: #{graph_classification_forward.7} parent=39 // pred_region
          %s428 = smul.u32 32, %s21
          %p429 = scmp.lt.s32.totalorder %s428, 127
          %s430 = scalar_select %p429, %s428, 127
          %s431 = smul.addr %s430, 8
          %s432 = scalar_lea.vmem %s2, %s431
          %s433 = smul.u32 32, %s21
        $region67: #{graph_classification_forward.7} parent=39 // pred_fallthru
          _
      $region40: #{graph_classification_forward.7} parent=5 // pred_fallthru
        _
      %p434 = scmp.le.s32.totalorder 1, %s14
      %p435 = scmp.lt.s32.totalorder %s14, 9
      %p436 = pnand %p434, %p435
      %p437 = pneg %p436
      // Predicated region
      $region68: #{graph_classification_forward.7} parent=5 // pred_check
        _
      $region69: #{graph_classification_forward.7} parent=5 // pred_check_branch
        %439 = sbr.rel (%p436) target = $region71
      $region70: #{graph_classification_forward.7} parent=5 // pred_region
        %s440 = ssub.s32 %s14, 1
        %s441 = sand.u32 %s41, 1
        %s442 = sand.u32 %s41, 1
        %s443 = smul.addr %s442, 512
        %s444 = scalar_lea.vmem [#allocation3], %s443
        // Predicated region
        $region72: #{graph_classification_forward.7} parent=70 // pred_check
          %p445 = pneg %p54
        $region73: #{graph_classification_forward.7} parent=70 // pred_check_branch
          %447 = sbr.rel (%p445) target = $region75
        $region74: #{graph_classification_forward.7} parent=70 // pred_region
          _
        $region75: #{graph_classification_forward.7} parent=70 // pred_fallthru
          _
        %s448 = sand.u32 %s41, 1
        %s449 = sand.u32 %s41, 1
        %s450 = smul.addr %s449, 512
        %s451 = scalar_lea.vmem [#allocation3], %s450
        %p452 = pneg %p54
        %p453 = pneg %p51
        %p454 = pneg %p75
        %p455 = pneg %p72
        %s456 = smul.u32 32, %s23
        %p457 = scmp.lt.s32.totalorder %s456, 127
        %s458 = scalar_select %p457, %s456, 127
        %s459 = smul.addr %s458, 8
        %s460 = scalar_lea.vmem %s2, %s459
        %p461 = pneg %p101
        %p462 = pneg %p98
        %p463 = pneg %p122
        %p464 = pneg %p119
        %p465 = pneg %p143
        %p466 = pneg %p140
        %p467 = pneg %p164
        %p468 = pneg %p161
        %p469 = pneg %p185
        %p470 = pneg %p182
        %p471 = pneg %p206
        %p472 = pneg %p203
        %p473 = pneg %p232
        %p474 = pneg %p229
        %s475 = smul.u32 32, %s23
        %p476 = scmp.lt.s32.totalorder %s475, 127
        %s477 = scalar_select %p476, %s475, 127
        %s478 = smul.addr %s477, 4
        %s479 = scalar_lea.vmem %s8, %s478
        %s480 = smul.u32 32, %s23
        %s481 = smul.u32 4, %s24
        %s482 = smul.u32 32, %s23
        %p483 = scmp.lt.s32.totalorder %s482, 127
        %s484 = scalar_select %p483, %s482, 127
        %s485 = smul.addr %s484, 8
        %s486 = scalar_lea.vmem %s2, %s485
        %s487 = smul.u32 32, %s23
        %s488 = smul.u32 32, %s23
        %p489 = scmp.lt.s32.totalorder %s488, 127
        %s490 = scalar_select %p489, %s488, 127
        %s491 = smul.addr %s490, 4
        %s492 = scalar_lea.vmem %s8, %s491
        %s493 = smul.u32 32, %s23
        %p495 = scmp.eq.s32.totalorder %s24, 0
        // Predicated region
        $region76: #{graph_classification_forward.7} parent=70 // pred_check
          %p496 = pneg %p495
        $region77: #{graph_classification_forward.7} parent=70 // pred_check_branch
          %498 = sbr.rel (%p496) target = $region79
        $region78: #{graph_classification_forward.7} parent=70 // pred_region
          %499 = vst [vmem:[#allocation2] sm:$0xff] 0.0
          %500 = vst [vmem:[#allocation2 + $0x8] sm:$0xff] 0.0
          %501 = vst [vmem:[#allocation2 + $0x10] sm:$0xff] 0.0
          %502 = vst [vmem:[#allocation2 + $0x18] sm:$0xff] 0.0
          %503 = vst [vmem:[#allocation2 + $0x20] sm:$0xff] 0.0
          %504 = vst [vmem:[#allocation2 + $0x28] sm:$0xff] 0.0
          %505 = vst [vmem:[#allocation2 + $0x30] sm:$0xff] 0.0
          %506 = vst [vmem:[#allocation2 + $0x38] sm:$0xff] 0.0
          %507 = vst [vmem:[#allocation2 + $0x40] sm:$0xff] 0.0
          %508 = vst [vmem:[#allocation2 + $0x48] sm:$0xff] 0.0
          %509 = vst [vmem:[#allocation2 + $0x50] sm:$0xff] 0.0
          %510 = vst [vmem:[#allocation2 + $0x58] sm:$0xff] 0.0
          %511 = vst [vmem:[#allocation2 + $0x60] sm:$0xff] 0.0
          %512 = vst [vmem:[#allocation2 + $0x68] sm:$0xff] 0.0
          %513 = vst [vmem:[#allocation2 + $0x70] sm:$0xff] 0.0
          %514 = vst [vmem:[#allocation2 + $0x78] sm:$0xff] 0.0
          %515 = vst [vmem:[#allocation2 + $0x80] sm:$0xff] 0.0
          %516 = vst [vmem:[#allocation2 + $0x88] sm:$0xff] 0.0
          %517 = vst [vmem:[#allocation2 + $0x90] sm:$0xff] 0.0
          %518 = vst [vmem:[#allocation2 + $0x98] sm:$0xff] 0.0
          %519 = vst [vmem:[#allocation2 + $0xa0] sm:$0xff] 0.0
          %520 = vst [vmem:[#allocation2 + $0xa8] sm:$0xff] 0.0
          %521 = vst [vmem:[#allocation2 + $0xb0] sm:$0xff] 0.0
          %522 = vst [vmem:[#allocation2 + $0xb8] sm:$0xff] 0.0
          %523 = vst [vmem:[#allocation2 + $0xc0] sm:$0xff] 0.0
          %524 = vst [vmem:[#allocation2 + $0xc8] sm:$0xff] 0.0
          %525 = vst [vmem:[#allocation2 + $0xd0] sm:$0xff] 0.0
          %526 = vst [vmem:[#allocation2 + $0xd8] sm:$0xff] 0.0
          %527 = vst [vmem:[#allocation2 + $0xe0] sm:$0xff] 0.0
          %528 = vst [vmem:[#allocation2 + $0xe8] sm:$0xff] 0.0
          %529 = vst [vmem:[#allocation2 + $0xf0] sm:$0xff] 0.0
          %530 = vst [vmem:[#allocation2 + $0xf8] sm:$0xff] 0.0
        $region79: #{graph_classification_forward.7} parent=70 // pred_fallthru
          _
        %s531 = smul.u32 %s24, 512
        %v532 = vld [vmem:[#allocation2] sm:$0xff]
        %v533 = vld [vmem:[#allocation2 + $0x8] sm:$0xff]
        %v534 = vld [vmem:[#allocation2 + $0x10] sm:$0xff]
        %v535 = vld [vmem:[#allocation2 + $0x18] sm:$0xff]
        %v536 = vld [vmem:[#allocation2 + $0x20] sm:$0xff]
        %v537 = vld [vmem:[#allocation2 + $0x28] sm:$0xff]
        %v538 = vld [vmem:[#allocation2 + $0x30] sm:$0xff]
        %v539 = vld [vmem:[#allocation2 + $0x38] sm:$0xff]
        %v540 = vld [vmem:[#allocation2 + $0x40] sm:$0xff]
        %v541 = vld [vmem:[#allocation2 + $0x48] sm:$0xff]
        %v542 = vld [vmem:[#allocation2 + $0x50] sm:$0xff]
        %v543 = vld [vmem:[#allocation2 + $0x58] sm:$0xff]
        %v544 = vld [vmem:[#allocation2 + $0x60] sm:$0xff]
        %v545 = vld [vmem:[#allocation2 + $0x68] sm:$0xff]
        %v546 = vld [vmem:[#allocation2 + $0x70] sm:$0xff]
        %v547 = vld [vmem:[#allocation2 + $0x78] sm:$0xff]
        %v548 = vld [vmem:[#allocation2 + $0x80] sm:$0xff]
        %v549 = vld [vmem:[#allocation2 + $0x88] sm:$0xff]
        %v550 = vld [vmem:[#allocation2 + $0x90] sm:$0xff]
        %v551 = vld [vmem:[#allocation2 + $0x98] sm:$0xff]
        %v552 = vld [vmem:[#allocation2 + $0xa0] sm:$0xff]
        %v553 = vld [vmem:[#allocation2 + $0xa8] sm:$0xff]
        %v554 = vld [vmem:[#allocation2 + $0xb0] sm:$0xff]
        %v555 = vld [vmem:[#allocation2 + $0xb8] sm:$0xff]
        %v556 = vld [vmem:[#allocation2 + $0xc0] sm:$0xff]
        %v557 = vld [vmem:[#allocation2 + $0xc8] sm:$0xff]
        %v558 = vld [vmem:[#allocation2 + $0xd0] sm:$0xff]
        %v559 = vld [vmem:[#allocation2 + $0xd8] sm:$0xff]
        %v560 = vld [vmem:[#allocation2 + $0xe0] sm:$0xff]
        %v561 = vld [vmem:[#allocation2 + $0xe8] sm:$0xff]
        %v562 = vld [vmem:[#allocation2 + $0xf0] sm:$0xff]
        %v563 = vld [vmem:[#allocation2 + $0xf8] sm:$0xff]
        %v564 = vld [vmem:[%s444] sm:$0xff]
        %v565 = vld [vmem:[%s444 + $0x8] sm:$0xff]
        %v566 = vld [vmem:[%s444 + $0x10] sm:$0xff]
        %v567 = vld [vmem:[%s444 + $0x18] sm:$0xff]
        %v568 = vld [vmem:[%s444 + $0x20] sm:$0xff]
        %v569 = vld [vmem:[%s444 + $0x28] sm:$0xff]
        %v570 = vld [vmem:[%s444 + $0x30] sm:$0xff]
        %v571 = vld [vmem:[%s444 + $0x38] sm:$0xff]
        %v572 = vld [vmem:[%s444 + $0x40] sm:$0xff]
        %v573 = vld [vmem:[%s444 + $0x48] sm:$0xff]
        %v574 = vld [vmem:[%s444 + $0x50] sm:$0xff]
        %v575 = vld [vmem:[%s444 + $0x58] sm:$0xff]
        %v576 = vld [vmem:[%s444 + $0x60] sm:$0xff]
        %v577 = vld [vmem:[%s444 + $0x68] sm:$0xff]
        %v578 = vld [vmem:[%s444 + $0x70] sm:$0xff]
        %v579 = vld [vmem:[%s444 + $0x78] sm:$0xff]
        %v580 = vld [vmem:[%s444 + $0x80] sm:$0xff]
        %v581 = vld [vmem:[%s444 + $0x88] sm:$0xff]
        %v582 = vld [vmem:[%s444 + $0x90] sm:$0xff]
        %v583 = vld [vmem:[%s444 + $0x98] sm:$0xff]
        %v584 = vld [vmem:[%s444 + $0xa0] sm:$0xff]
        %v585 = vld [vmem:[%s444 + $0xa8] sm:$0xff]
        %v586 = vld [vmem:[%s444 + $0xb0] sm:$0xff]
        %v587 = vld [vmem:[%s444 + $0xb8] sm:$0xff]
        %v588 = vld [vmem:[%s444 + $0xc0] sm:$0xff]
        %v589 = vld [vmem:[%s444 + $0xc8] sm:$0xff]
        %v590 = vld [vmem:[%s444 + $0xd0] sm:$0xff]
        %v591 = vld [vmem:[%s444 + $0xd8] sm:$0xff]
        %v592 = vld [vmem:[%s444 + $0xe0] sm:$0xff]
        %v593 = vld [vmem:[%s444 + $0xe8] sm:$0xff]
        %v594 = vld [vmem:[%s444 + $0xf0] sm:$0xff]
        %v595 = vld [vmem:[%s444 + $0xf8] sm:$0xff]
        %v596 = vld [vmem:[%s444 + $0x100] sm:$0xff]
        %v597 = vld [vmem:[%s444 + $0x108] sm:$0xff]
        %v598 = vld [vmem:[%s444 + $0x110] sm:$0xff]
        %v599 = vld [vmem:[%s444 + $0x118] sm:$0xff]
        %v600 = vld [vmem:[%s444 + $0x120] sm:$0xff]
        %v601 = vld [vmem:[%s444 + $0x128] sm:$0xff]
        %v602 = vld [vmem:[%s444 + $0x130] sm:$0xff]
        %v603 = vld [vmem:[%s444 + $0x138] sm:$0xff]
        %v604 = vld [vmem:[%s444 + $0x140] sm:$0xff]
        %v605 = vld [vmem:[%s444 + $0x148] sm:$0xff]
        %v606 = vld [vmem:[%s444 + $0x150] sm:$0xff]
        %v607 = vld [vmem:[%s444 + $0x158] sm:$0xff]
        %v608 = vld [vmem:[%s444 + $0x160] sm:$0xff]
        %v609 = vld [vmem:[%s444 + $0x168] sm:$0xff]
        %v610 = vld [vmem:[%s444 + $0x170] sm:$0xff]
        %v611 = vld [vmem:[%s444 + $0x178] sm:$0xff]
        %v612 = vld [vmem:[%s444 + $0x180] sm:$0xff]
        %v613 = vld [vmem:[%s444 + $0x188] sm:$0xff]
        %v614 = vld [vmem:[%s444 + $0x190] sm:$0xff]
        %v615 = vld [vmem:[%s444 + $0x198] sm:$0xff]
        %v616 = vld [vmem:[%s444 + $0x1a0] sm:$0xff]
        %v617 = vld [vmem:[%s444 + $0x1a8] sm:$0xff]
        %v618 = vld [vmem:[%s444 + $0x1b0] sm:$0xff]
        %v619 = vld [vmem:[%s444 + $0x1b8] sm:$0xff]
        %v620 = vld [vmem:[%s444 + $0x1c0] sm:$0xff]
        %v621 = vld [vmem:[%s444 + $0x1c8] sm:$0xff]
        %v622 = vld [vmem:[%s444 + $0x1d0] sm:$0xff]
        %v623 = vld [vmem:[%s444 + $0x1d8] sm:$0xff]
        %v624 = vld [vmem:[%s444 + $0x1e0] sm:$0xff]
        %v625 = vld [vmem:[%s444 + $0x1e8] sm:$0xff]
        %v626 = vld [vmem:[%s444 + $0x1f0] sm:$0xff]
        %v627 = vld [vmem:[%s444 + $0x1f8] sm:$0xff]
        %s628 = sshra.s32 %s531, 3
        %s629 = sand.u32 %s531, 7
        %s630 = smul.addr %s628, 4
        %s631 = scalar_lea.vmem %s1, %s630
        %v632 = vld [vmem:[%s631] sm:$0xf]
        %v633 = vld [vmem:[%s631 + $0x4] sm:$0xf]
        %v634 = vld [vmem:[%s631 + $0x8] sm:$0xf]
        %v635 = vld [vmem:[%s631 + $0xc] sm:$0xf]
        %v636 = vld [vmem:[%s631 + $0x10] sm:$0xf]
        %v637 = vld [vmem:[%s631 + $0x14] sm:$0xf]
        %v638 = vld [vmem:[%s631 + $0x18] sm:$0xf]
        %v639 = vld [vmem:[%s631 + $0x1c] sm:$0xf]
        %v640 = vld [vmem:[%s631 + $0x20] sm:$0xf]
        %v641 = vld [vmem:[%s631 + $0x24] sm:$0xf]
        %v642 = vld [vmem:[%s631 + $0x28] sm:$0xf]
        %v643 = vld [vmem:[%s631 + $0x2c] sm:$0xf]
        %v644 = vld [vmem:[%s631 + $0x30] sm:$0xf]
        %v645 = vld [vmem:[%s631 + $0x34] sm:$0xf]
        %v646 = vld [vmem:[%s631 + $0x38] sm:$0xf]
        %v647 = vld [vmem:[%s631 + $0x3c] sm:$0xf]
        %v648 = vld [vmem:[%s631 + $0x40] sm:$0xf]
        %v649 = vld [vmem:[%s631 + $0x44] sm:$0xf]
        %v650 = vld [vmem:[%s631 + $0x48] sm:$0xf]
        %v651 = vld [vmem:[%s631 + $0x4c] sm:$0xf]
        %v652 = vld [vmem:[%s631 + $0x50] sm:$0xf]
        %v653 = vld [vmem:[%s631 + $0x54] sm:$0xf]
        %v654 = vld [vmem:[%s631 + $0x58] sm:$0xf]
        %v655 = vld [vmem:[%s631 + $0x5c] sm:$0xf]
        %v656 = vld [vmem:[%s631 + $0x60] sm:$0xf]
        %v657 = vld [vmem:[%s631 + $0x64] sm:$0xf]
        %v658 = vld [vmem:[%s631 + $0x68] sm:$0xf]
        %v659 = vld [vmem:[%s631 + $0x6c] sm:$0xf]
        %v660 = vld [vmem:[%s631 + $0x70] sm:$0xf]
        %v661 = vld [vmem:[%s631 + $0x74] sm:$0xf]
        %v662 = vld [vmem:[%s631 + $0x78] sm:$0xf]
        %v663 = vld [vmem:[%s631 + $0x7c] sm:$0xf]
        %v664 = vld [vmem:[%s631 + $0x80] sm:$0xf]
        %v665 = vld [vmem:[%s631 + $0x84] sm:$0xf]
        %v666 = vld [vmem:[%s631 + $0x88] sm:$0xf]
        %v667 = vld [vmem:[%s631 + $0x8c] sm:$0xf]
        %v668 = vld [vmem:[%s631 + $0x90] sm:$0xf]
        %v669 = vld [vmem:[%s631 + $0x94] sm:$0xf]
        %v670 = vld [vmem:[%s631 + $0x98] sm:$0xf]
        %v671 = vld [vmem:[%s631 + $0x9c] sm:$0xf]
        %v672 = vld [vmem:[%s631 + $0xa0] sm:$0xf]
        %v673 = vld [vmem:[%s631 + $0xa4] sm:$0xf]
        %v674 = vld [vmem:[%s631 + $0xa8] sm:$0xf]
        %v675 = vld [vmem:[%s631 + $0xac] sm:$0xf]
        %v676 = vld [vmem:[%s631 + $0xb0] sm:$0xf]
        %v677 = vld [vmem:[%s631 + $0xb4] sm:$0xf]
        %v678 = vld [vmem:[%s631 + $0xb8] sm:$0xf]
        %v679 = vld [vmem:[%s631 + $0xbc] sm:$0xf]
        %v680 = vld [vmem:[%s631 + $0xc0] sm:$0xf]
        %v681 = vld [vmem:[%s631 + $0xc4] sm:$0xf]
        %v682 = vld [vmem:[%s631 + $0xc8] sm:$0xf]
        %v683 = vld [vmem:[%s631 + $0xcc] sm:$0xf]
        %v684 = vld [vmem:[%s631 + $0xd0] sm:$0xf]
        %v685 = vld [vmem:[%s631 + $0xd4] sm:$0xf]
        %v686 = vld [vmem:[%s631 + $0xd8] sm:$0xf]
        %v687 = vld [vmem:[%s631 + $0xdc] sm:$0xf]
        %v688 = vld [vmem:[%s631 + $0xe0] sm:$0xf]
        %v689 = vld [vmem:[%s631 + $0xe4] sm:$0xf]
        %v690 = vld [vmem:[%s631 + $0xe8] sm:$0xf]
        %v691 = vld [vmem:[%s631 + $0xec] sm:$0xf]
        %v692 = vld [vmem:[%s631 + $0xf0] sm:$0xf]
        %v693 = vld [vmem:[%s631 + $0xf4] sm:$0xf]
        %v694 = vld [vmem:[%s631 + $0xf8] sm:$0xf]
        %v695 = vld [vmem:[%s631 + $0xfc] sm:$0xf]
        %v760 = vunpack.c.l.b16 %v564
        %v761 = vunpack.c.h.b16 %v564
        %v762 = vunpack.c.l.b16 %v565
        %v763 = vunpack.c.h.b16 %v565
        %v764 = vunpack.c.l.b16 %v566
        %v765 = vunpack.c.h.b16 %v566
        %v766 = vunpack.c.l.b16 %v567
        %v767 = vunpack.c.h.b16 %v567
        %v768 = vunpack.c.l.b16 %v568
        %v769 = vunpack.c.h.b16 %v568
        %v770 = vunpack.c.l.b16 %v569
        %v771 = vunpack.c.h.b16 %v569
        %v772 = vunpack.c.l.b16 %v570
        %v773 = vunpack.c.h.b16 %v570
        %v774 = vunpack.c.l.b16 %v571
        %v775 = vunpack.c.h.b16 %v571
        %v776 = vunpack.c.l.b16 %v572
        %v777 = vunpack.c.h.b16 %v572
        %v778 = vunpack.c.l.b16 %v573
        %v779 = vunpack.c.h.b16 %v573
        %v780 = vunpack.c.l.b16 %v574
        %v781 = vunpack.c.h.b16 %v574
        %v782 = vunpack.c.l.b16 %v575
        %v783 = vunpack.c.h.b16 %v575
        %v784 = vunpack.c.l.b16 %v576
        %v785 = vunpack.c.h.b16 %v576
        %v786 = vunpack.c.l.b16 %v577
        %v787 = vunpack.c.h.b16 %v577
        %v788 = vunpack.c.l.b16 %v578
        %v789 = vunpack.c.h.b16 %v578
        %v790 = vunpack.c.l.b16 %v579
        %v791 = vunpack.c.h.b16 %v579
        %v792 = vunpack.c.l.b16 %v580
        %v793 = vunpack.c.h.b16 %v580
        %v794 = vunpack.c.l.b16 %v581
        %v795 = vunpack.c.h.b16 %v581
        %v796 = vunpack.c.l.b16 %v582
        %v797 = vunpack.c.h.b16 %v582
        %v798 = vunpack.c.l.b16 %v583
        %v799 = vunpack.c.h.b16 %v583
        %v800 = vunpack.c.l.b16 %v584
        %v801 = vunpack.c.h.b16 %v584
        %v802 = vunpack.c.l.b16 %v585
        %v803 = vunpack.c.h.b16 %v585
        %v804 = vunpack.c.l.b16 %v586
        %v805 = vunpack.c.h.b16 %v586
        %v806 = vunpack.c.l.b16 %v587
        %v807 = vunpack.c.h.b16 %v587
        %v808 = vunpack.c.l.b16 %v588
        %v809 = vunpack.c.h.b16 %v588
        %v810 = vunpack.c.l.b16 %v589
        %v811 = vunpack.c.h.b16 %v589
        %v812 = vunpack.c.l.b16 %v590
        %v813 = vunpack.c.h.b16 %v590
        %v814 = vunpack.c.l.b16 %v591
        %v815 = vunpack.c.h.b16 %v591
        %v816 = vunpack.c.l.b16 %v592
        %v817 = vunpack.c.h.b16 %v592
        %v818 = vunpack.c.l.b16 %v593
        %v819 = vunpack.c.h.b16 %v593
        %v820 = vunpack.c.l.b16 %v594
        %v821 = vunpack.c.h.b16 %v594
        %v822 = vunpack.c.l.b16 %v595
        %v823 = vunpack.c.h.b16 %v595
        %v824 = vunpack.c.l.b16 %v596
        %v825 = vunpack.c.h.b16 %v596
        %v826 = vunpack.c.l.b16 %v597
        %v827 = vunpack.c.h.b16 %v597
        %v828 = vunpack.c.l.b16 %v598
        %v829 = vunpack.c.h.b16 %v598
        %v830 = vunpack.c.l.b16 %v599
        %v831 = vunpack.c.h.b16 %v599
        %v832 = vunpack.c.l.b16 %v600
        %v833 = vunpack.c.h.b16 %v600
        %v834 = vunpack.c.l.b16 %v601
        %v835 = vunpack.c.h.b16 %v601
        %v836 = vunpack.c.l.b16 %v602
        %v837 = vunpack.c.h.b16 %v602
        %v838 = vunpack.c.l.b16 %v603
        %v839 = vunpack.c.h.b16 %v603
        %v840 = vunpack.c.l.b16 %v604
        %v841 = vunpack.c.h.b16 %v604
        %v842 = vunpack.c.l.b16 %v605
        %v843 = vunpack.c.h.b16 %v605
        %v844 = vunpack.c.l.b16 %v606
        %v845 = vunpack.c.h.b16 %v606
        %v846 = vunpack.c.l.b16 %v607
        %v847 = vunpack.c.h.b16 %v607
        %v848 = vunpack.c.l.b16 %v608
        %v849 = vunpack.c.h.b16 %v608
        %v850 = vunpack.c.l.b16 %v609
        %v851 = vunpack.c.h.b16 %v609
        %v852 = vunpack.c.l.b16 %v610
        %v853 = vunpack.c.h.b16 %v610
        %v854 = vunpack.c.l.b16 %v611
        %v855 = vunpack.c.h.b16 %v611
        %v856 = vunpack.c.l.b16 %v612
        %v857 = vunpack.c.h.b16 %v612
        %v858 = vunpack.c.l.b16 %v613
        %v859 = vunpack.c.h.b16 %v613
        %v860 = vunpack.c.l.b16 %v614
        %v861 = vunpack.c.h.b16 %v614
        %v862 = vunpack.c.l.b16 %v615
        %v863 = vunpack.c.h.b16 %v615
        %v864 = vunpack.c.l.b16 %v616
        %v865 = vunpack.c.h.b16 %v616
        %v866 = vunpack.c.l.b16 %v617
        %v867 = vunpack.c.h.b16 %v617
        %v868 = vunpack.c.l.b16 %v618
        %v869 = vunpack.c.h.b16 %v618
        %v870 = vunpack.c.l.b16 %v619
        %v871 = vunpack.c.h.b16 %v619
        %v872 = vunpack.c.l.b16 %v620
        %v873 = vunpack.c.h.b16 %v620
        %v874 = vunpack.c.l.b16 %v621
        %v875 = vunpack.c.h.b16 %v621
        %v876 = vunpack.c.l.b16 %v622
        %v877 = vunpack.c.h.b16 %v622
        %v878 = vunpack.c.l.b16 %v623
        %v879 = vunpack.c.h.b16 %v623
        %v880 = vunpack.c.l.b16 %v624
        %v881 = vunpack.c.h.b16 %v624
        %v882 = vunpack.c.l.b16 %v625
        %v883 = vunpack.c.h.b16 %v625
        %v884 = vunpack.c.l.b16 %v626
        %v885 = vunpack.c.h.b16 %v626
        %v886 = vunpack.c.l.b16 %v627
        %v887 = vunpack.c.h.b16 %v627
        %v888 = vpack.c.b16 %v764, %v760
        %v889 = vpack.c.b16 %v765, %v761
        %v890 = vpack.c.b16 %v766, %v762
        %v891 = vpack.c.b16 %v767, %v763
        %v892 = vpack.c.b16 %v772, %v768
        %v893 = vpack.c.b16 %v773, %v769
        %v894 = vpack.c.b16 %v774, %v770
        %v895 = vpack.c.b16 %v775, %v771
        %v896 = vpack.c.b16 %v780, %v776
        %v897 = vpack.c.b16 %v781, %v777
        %v898 = vpack.c.b16 %v782, %v778
        %v899 = vpack.c.b16 %v783, %v779
        %v900 = vpack.c.b16 %v788, %v784
        %v901 = vpack.c.b16 %v789, %v785
        %v902 = vpack.c.b16 %v790, %v786
        %v903 = vpack.c.b16 %v791, %v787
        %v904 = vpack.c.b16 %v796, %v792
        %v905 = vpack.c.b16 %v797, %v793
        %v906 = vpack.c.b16 %v798, %v794
        %v907 = vpack.c.b16 %v799, %v795
        %v908 = vpack.c.b16 %v804, %v800
        %v909 = vpack.c.b16 %v805, %v801
        %v910 = vpack.c.b16 %v806, %v802
        %v911 = vpack.c.b16 %v807, %v803
        %v912 = vpack.c.b16 %v812, %v808
        %v913 = vpack.c.b16 %v813, %v809
        %v914 = vpack.c.b16 %v814, %v810
        %v915 = vpack.c.b16 %v815, %v811
        %v916 = vpack.c.b16 %v820, %v816
        %v917 = vpack.c.b16 %v821, %v817
        %v918 = vpack.c.b16 %v822, %v818
        %v919 = vpack.c.b16 %v823, %v819
        %v920 = vpack.c.b16 %v828, %v824
        %v921 = vpack.c.b16 %v829, %v825
        %v922 = vpack.c.b16 %v830, %v826
        %v923 = vpack.c.b16 %v831, %v827
        %v924 = vpack.c.b16 %v836, %v832
        %v925 = vpack.c.b16 %v837, %v833
        %v926 = vpack.c.b16 %v838, %v834
        %v927 = vpack.c.b16 %v839, %v835
        %v928 = vpack.c.b16 %v844, %v840
        %v929 = vpack.c.b16 %v845, %v841
        %v930 = vpack.c.b16 %v846, %v842
        %v931 = vpack.c.b16 %v847, %v843
        %v932 = vpack.c.b16 %v852, %v848
        %v933 = vpack.c.b16 %v853, %v849
        %v934 = vpack.c.b16 %v854, %v850
        %v935 = vpack.c.b16 %v855, %v851
        %v936 = vpack.c.b16 %v860, %v856
        %v937 = vpack.c.b16 %v861, %v857
        %v938 = vpack.c.b16 %v862, %v858
        %v939 = vpack.c.b16 %v863, %v859
        %v940 = vpack.c.b16 %v868, %v864
        %v941 = vpack.c.b16 %v869, %v865
        %v942 = vpack.c.b16 %v870, %v866
        %v943 = vpack.c.b16 %v871, %v867
        %v944 = vpack.c.b16 %v876, %v872
        %v945 = vpack.c.b16 %v877, %v873
        %v946 = vpack.c.b16 %v878, %v874
        %v947 = vpack.c.b16 %v879, %v875
        %v948 = vpack.c.b16 %v884, %v880
        %v949 = vpack.c.b16 %v885, %v881
        %v950 = vpack.c.b16 %v886, %v882
        %v951 = vpack.c.b16 %v887, %v883
        %v1080 = vunpack.c.l.b16 %v632
        %v1081 = vunpack.c.l.b16 %v633
        %v1082 = vunpack.c.l.b16 %v634
        %v1083 = vunpack.c.l.b16 %v635
        %v1084 = vunpack.c.l.b16 %v636
        %v1085 = vunpack.c.l.b16 %v637
        %v1086 = vunpack.c.l.b16 %v638
        %v1087 = vunpack.c.l.b16 %v639
        %v1088 = vunpack.c.l.b16 %v640
        %v1089 = vunpack.c.l.b16 %v641
        %v1090 = vunpack.c.l.b16 %v642
        %v1091 = vunpack.c.l.b16 %v643
        %v1092 = vunpack.c.l.b16 %v644
        %v1093 = vunpack.c.l.b16 %v645
        %v1094 = vunpack.c.l.b16 %v646
        %v1095 = vunpack.c.l.b16 %v647
        %v1096 = vunpack.c.l.b16 %v648
        %v1097 = vunpack.c.l.b16 %v649
        %v1098 = vunpack.c.l.b16 %v650
        %v1099 = vunpack.c.l.b16 %v651
        %v1100 = vunpack.c.l.b16 %v652
        %v1101 = vunpack.c.l.b16 %v653
        %v1102 = vunpack.c.l.b16 %v654
        %v1103 = vunpack.c.l.b16 %v655
        %v1104 = vunpack.c.l.b16 %v656
        %v1105 = vunpack.c.l.b16 %v657
        %v1106 = vunpack.c.l.b16 %v658
        %v1107 = vunpack.c.l.b16 %v659
        %v1108 = vunpack.c.l.b16 %v660
        %v1109 = vunpack.c.l.b16 %v661
        %v1110 = vunpack.c.l.b16 %v662
        %v1111 = vunpack.c.l.b16 %v663
        %v1112 = vunpack.c.l.b16 %v664
        %v1113 = vunpack.c.l.b16 %v665
        %v1114 = vunpack.c.l.b16 %v666
        %v1115 = vunpack.c.l.b16 %v667
        %v1116 = vunpack.c.l.b16 %v668
        %v1117 = vunpack.c.l.b16 %v669
        %v1118 = vunpack.c.l.b16 %v670
        %v1119 = vunpack.c.l.b16 %v671
        %v1120 = vunpack.c.l.b16 %v672
        %v1121 = vunpack.c.l.b16 %v673
        %v1122 = vunpack.c.l.b16 %v674
        %v1123 = vunpack.c.l.b16 %v675
        %v1124 = vunpack.c.l.b16 %v676
        %v1125 = vunpack.c.l.b16 %v677
        %v1126 = vunpack.c.l.b16 %v678
        %v1127 = vunpack.c.l.b16 %v679
        %v1128 = vunpack.c.l.b16 %v680
        %v1129 = vunpack.c.l.b16 %v681
        %v1130 = vunpack.c.l.b16 %v682
        %v1131 = vunpack.c.l.b16 %v683
        %v1132 = vunpack.c.l.b16 %v684
        %v1133 = vunpack.c.l.b16 %v685
        %v1134 = vunpack.c.l.b16 %v686
        %v1135 = vunpack.c.l.b16 %v687
        %v1136 = vunpack.c.l.b16 %v688
        %v1137 = vunpack.c.l.b16 %v689
        %v1138 = vunpack.c.l.b16 %v690
        %v1139 = vunpack.c.l.b16 %v691
        %v1140 = vunpack.c.l.b16 %v692
        %v1141 = vunpack.c.l.b16 %v693
        %v1142 = vunpack.c.l.b16 %v694
        %v1143 = vunpack.c.l.b16 %v695
        %v1144 = vpack.c.b16 %v1081, %v1080
        %v1145 = vpack.c.b16 %v1083, %v1082
        %v1146 = vpack.c.b16 %v1085, %v1084
        %v1147 = vpack.c.b16 %v1087, %v1086
        %v1148 = vpack.c.b16 %v1089, %v1088
        %v1149 = vpack.c.b16 %v1091, %v1090
        %v1150 = vpack.c.b16 %v1093, %v1092
        %v1151 = vpack.c.b16 %v1095, %v1094
        %v1152 = vpack.c.b16 %v1097, %v1096
        %v1153 = vpack.c.b16 %v1099, %v1098
        %v1154 = vpack.c.b16 %v1101, %v1100
        %v1155 = vpack.c.b16 %v1103, %v1102
        %v1156 = vpack.c.b16 %v1105, %v1104
        %v1157 = vpack.c.b16 %v1107, %v1106
        %v1158 = vpack.c.b16 %v1109, %v1108
        %v1159 = vpack.c.b16 %v1111, %v1110
        %v1160 = vpack.c.b16 %v1113, %v1112
        %v1161 = vpack.c.b16 %v1115, %v1114
        %v1162 = vpack.c.b16 %v1117, %v1116
        %v1163 = vpack.c.b16 %v1119, %v1118
        %v1164 = vpack.c.b16 %v1121, %v1120
        %v1165 = vpack.c.b16 %v1123, %v1122
        %v1166 = vpack.c.b16 %v1125, %v1124
        %v1167 = vpack.c.b16 %v1127, %v1126
        %v1168 = vpack.c.b16 %v1129, %v1128
        %v1169 = vpack.c.b16 %v1131, %v1130
        %v1170 = vpack.c.b16 %v1133, %v1132
        %v1171 = vpack.c.b16 %v1135, %v1134
        %v1172 = vpack.c.b16 %v1137, %v1136
        %v1173 = vpack.c.b16 %v1139, %v1138
        %v1174 = vpack.c.b16 %v1141, %v1140
        %v1175 = vpack.c.b16 %v1143, %v1142
        %1208 = vmatprep.subr.bf16.mxu0 0
        %1209 = vmatpush1.bf16.msra.mxu0 %v1144
        %1210 = vmatprep.subr.bf16.mxu0 0
        %1211 = vmatpush1.bf16.msra.mxu0 %v1145
        %1212 = vmatprep.subr.bf16.mxu0 0
        %1213 = vmatpush1.bf16.msra.mxu0 %v1146
        %1214 = vmatprep.subr.bf16.mxu0 0
        %1215 = vmatpush1.bf16.msra.mxu0 %v1147
        %1216 = vmatprep.subr.bf16.mxu0 0
        %1217 = vmatpush1.bf16.msra.mxu0 %v1148
        %1218 = vmatprep.subr.bf16.mxu0 0
        %1219 = vmatpush1.bf16.msra.mxu0 %v1149
        %1220 = vmatprep.subr.bf16.mxu0 0
        %1221 = vmatpush1.bf16.msra.mxu0 %v1150
        %1222 = vmatprep.subr.bf16.mxu0 0
        %1223 = vmatpush1.bf16.msra.mxu0 %v1151
        %1224 = vmatprep.subr.bf16.mxu0 0
        %1225 = vmatpush1.bf16.msra.mxu0 %v1152
        %1226 = vmatprep.subr.bf16.mxu0 0
        %1227 = vmatpush1.bf16.msra.mxu0 %v1153
        %1228 = vmatprep.subr.bf16.mxu0 0
        %1229 = vmatpush1.bf16.msra.mxu0 %v1154
        %1230 = vmatprep.subr.bf16.mxu0 0
        %1231 = vmatpush1.bf16.msra.mxu0 %v1155
        %1232 = vmatprep.subr.bf16.mxu0 0
        %1233 = vmatpush1.bf16.msra.mxu0 %v1156
        %1234 = vmatprep.subr.bf16.mxu0 0
        %1235 = vmatpush1.bf16.msra.mxu0 %v1157
        %1236 = vmatprep.subr.bf16.mxu0 0
        %1237 = vmatpush1.bf16.msra.mxu0 %v1158
        %1238 = vmatprep.subr.bf16.mxu0 0
        %1239 = vmatpush1.bf16.msra.mxu0 %v1159
        %1240 = vmatprep.mubr.bf16.mxu0 %v889
        %1241 = vmatmul.mubr.bf16.gmra.mrb[0].mxu0 %v888
        %v1242 = vpop.f32.mrb[0].mxu0
        %v1243 = vadd.f32 0.0, %v1242
        %v1244 = vpop.f32.mrb[0].mxu0
        %v1245 = vpop.f32.mrb[0].mxu0
        %v1246 = vadd.f32 0.0, %v1245
        %v1247 = vpop.f32.mrb[0].mxu0
        %1248 = vmatprep.mubr.bf16.mxu0 %v893
        %1249 = vmatmul.mubr.bf16.gmra.mrb[0].mxu0 %v892
        %v1250 = vpop.f32.mrb[0].mxu0
        %v1251 = vadd.f32 0.0, %v1250
        %v1252 = vpop.f32.mrb[0].mxu0
        %v1253 = vpop.f32.mrb[0].mxu0
        %v1254 = vadd.f32 0.0, %v1253
        %v1255 = vpop.f32.mrb[0].mxu0
        %1256 = vmatprep.mubr.bf16.mxu0 %v897
        %1257 = vmatmul.mubr.bf16.gmra.mrb[0].mxu0 %v896
        %v1258 = vpop.f32.mrb[0].mxu0
        %v1259 = vadd.f32 0.0, %v1258
        %v1260 = vpop.f32.mrb[0].mxu0
        %v1261 = vpop.f32.mrb[0].mxu0
        %v1262 = vadd.f32 0.0, %v1261
        %v1263 = vpop.f32.mrb[0].mxu0
        %1264 = vmatprep.mubr.bf16.mxu0 %v901
        %1265 = vmatmul.mubr.bf16.gmra.mrb[0].mxu0 %v900
        %v1266 = vpop.f32.mrb[0].mxu0
        %v1267 = vadd.f32 0.0, %v1266
        %v1268 = vpop.f32.mrb[0].mxu0
        %v1269 = vpop.f32.mrb[0].mxu0
        %v1270 = vadd.f32 0.0, %v1269
        %v1271 = vpop.f32.mrb[0].mxu0
        %1272 = vmatprep.mubr.bf16.mxu0 %v905
        %1273 = vmatmul.mubr.bf16.gmra.mrb[0].mxu0 %v904
        %v1274 = vpop.f32.mrb[0].mxu0
        %v1275 = vadd.f32 0.0, %v1274
        %v1276 = vpop.f32.mrb[0].mxu0
        %v1277 = vpop.f32.mrb[0].mxu0
        %v1278 = vadd.f32 0.0, %v1277
        %v1279 = vpop.f32.mrb[0].mxu0
        %1280 = vmatprep.mubr.bf16.mxu0 %v909
        %1281 = vmatmul.mubr.bf16.gmra.mrb[0].mxu0 %v908
        %v1282 = vpop.f32.mrb[0].mxu0
        %v1283 = vadd.f32 0.0, %v1282
        %v1284 = vpop.f32.mrb[0].mxu0
        %v1285 = vpop.f32.mrb[0].mxu0
        %v1286 = vadd.f32 0.0, %v1285
        %v1287 = vpop.f32.mrb[0].mxu0
        %1288 = vmatprep.mubr.bf16.mxu0 %v913
        %1289 = vmatmul.mubr.bf16.gmra.mrb[0].mxu0 %v912
        %v1290 = vpop.f32.mrb[0].mxu0
        %v1291 = vadd.f32 0.0, %v1290
        %v1292 = vpop.f32.mrb[0].mxu0
        %v1293 = vpop.f32.mrb[0].mxu0
        %v1294 = vadd.f32 0.0, %v1293
        %v1295 = vpop.f32.mrb[0].mxu0
        %1296 = vmatprep.mubr.bf16.mxu0 %v917
        %1297 = vmatmul.mubr.bf16.gmra.mrb[0].mxu0 %v916
        %v1298 = vpop.f32.mrb[0].mxu0
        %v1299 = vadd.f32 0.0, %v1298
        %v1300 = vpop.f32.mrb[0].mxu0
        %v1301 = vpop.f32.mrb[0].mxu0
        %v1302 = vadd.f32 0.0, %v1301
        %v1303 = vpop.f32.mrb[0].mxu0
        %1304 = vmatprep.mubr.bf16.mxu0 %v921
        %1305 = vmatmul.mubr.bf16.gmra.mrb[0].mxu0 %v920
        %v1306 = vpop.f32.mrb[0].mxu0
        %v1307 = vadd.f32 0.0, %v1306
        %v1308 = vpop.f32.mrb[0].mxu0
        %v1309 = vpop.f32.mrb[0].mxu0
        %v1310 = vadd.f32 0.0, %v1309
        %v1311 = vpop.f32.mrb[0].mxu0
        %1312 = vmatprep.mubr.bf16.mxu0 %v925
        %1313 = vmatmul.mubr.bf16.gmra.mrb[0].mxu0 %v924
        %v1314 = vpop.f32.mrb[0].mxu0
        %v1315 = vadd.f32 0.0, %v1314
        %v1316 = vpop.f32.mrb[0].mxu0
        %v1317 = vpop.f32.mrb[0].mxu0
        %v1318 = vadd.f32 0.0, %v1317
        %v1319 = vpop.f32.mrb[0].mxu0
        %1320 = vmatprep.mubr.bf16.mxu0 %v929
        %1321 = vmatmul.mubr.bf16.gmra.mrb[0].mxu0 %v928
        %v1322 = vpop.f32.mrb[0].mxu0
        %v1323 = vadd.f32 0.0, %v1322
        %v1324 = vpop.f32.mrb[0].mxu0
        %v1325 = vpop.f32.mrb[0].mxu0
        %v1326 = vadd.f32 0.0, %v1325
        %v1327 = vpop.f32.mrb[0].mxu0
        %1328 = vmatprep.mubr.bf16.mxu0 %v933
        %1329 = vmatmul.mubr.bf16.gmra.mrb[0].mxu0 %v932
        %v1330 = vpop.f32.mrb[0].mxu0
        %v1331 = vadd.f32 0.0, %v1330
        %v1332 = vpop.f32.mrb[0].mxu0
        %v1333 = vpop.f32.mrb[0].mxu0
        %v1334 = vadd.f32 0.0, %v1333
        %v1335 = vpop.f32.mrb[0].mxu0
        %1336 = vmatprep.mubr.bf16.mxu0 %v937
        %1337 = vmatmul.mubr.bf16.gmra.mrb[0].mxu0 %v936
        %v1338 = vpop.f32.mrb[0].mxu0
        %v1339 = vadd.f32 0.0, %v1338
        %v1340 = vpop.f32.mrb[0].mxu0
        %v1341 = vpop.f32.mrb[0].mxu0
        %v1342 = vadd.f32 0.0, %v1341
        %v1343 = vpop.f32.mrb[0].mxu0
        %1344 = vmatprep.mubr.bf16.mxu0 %v941
        %1345 = vmatmul.mubr.bf16.gmra.mrb[0].mxu0 %v940
        %v1346 = vpop.f32.mrb[0].mxu0
        %v1347 = vadd.f32 0.0, %v1346
        %v1348 = vpop.f32.mrb[0].mxu0
        %v1349 = vpop.f32.mrb[0].mxu0
        %v1350 = vadd.f32 0.0, %v1349
        %v1351 = vpop.f32.mrb[0].mxu0
        %1352 = vmatprep.mubr.bf16.mxu0 %v945
        %1353 = vmatmul.mubr.bf16.gmra.mrb[0].mxu0 %v944
        %v1354 = vpop.f32.mrb[0].mxu0
        %v1355 = vadd.f32 0.0, %v1354
        %v1356 = vpop.f32.mrb[0].mxu0
        %v1357 = vpop.f32.mrb[0].mxu0
        %v1358 = vadd.f32 0.0, %v1357
        %v1359 = vpop.f32.mrb[0].mxu0
        %1360 = vmatprep.mubr.bf16.mxu0 %v949
        %1361 = vmatmul.mubr.bf16.gmra.mrb[0].mxu0 %v948
        %v1362 = vpop.f32.mrb[0].mxu0
        %v1363 = vadd.f32 0.0, %v1362
        %v1364 = vpop.f32.mrb[0].mxu0
        %v1365 = vpop.f32.mrb[0].mxu0
        %v1366 = vadd.f32 0.0, %v1365
        %v1367 = vpop.f32.mrb[0].mxu0
        %1368 = vdwg.mxu0
        %1369 = vmatprep.subr.bf16.mxu0 0
        %1370 = vmatpush1.bf16.msra.mxu0 %v1160
        %1371 = vmatprep.subr.bf16.mxu0 0
        %1372 = vmatpush1.bf16.msra.mxu0 %v1161
        %1373 = vmatprep.subr.bf16.mxu0 0
        %1374 = vmatpush1.bf16.msra.mxu0 %v1162
        %1375 = vmatprep.subr.bf16.mxu0 0
        %1376 = vmatpush1.bf16.msra.mxu0 %v1163
        %1377 = vmatprep.subr.bf16.mxu0 0
        %1378 = vmatpush1.bf16.msra.mxu0 %v1164
        %1379 = vmatprep.subr.bf16.mxu0 0
        %1380 = vmatpush1.bf16.msra.mxu0 %v1165
        %1381 = vmatprep.subr.bf16.mxu0 0
        %1382 = vmatpush1.bf16.msra.mxu0 %v1166
        %1383 = vmatprep.subr.bf16.mxu0 0
        %1384 = vmatpush1.bf16.msra.mxu0 %v1167
        %1385 = vmatprep.subr.bf16.mxu0 0
        %1386 = vmatpush1.bf16.msra.mxu0 %v1168
        %1387 = vmatprep.subr.bf16.mxu0 0
        %1388 = vmatpush1.bf16.msra.mxu0 %v1169
        %1389 = vmatprep.subr.bf16.mxu0 0
        %1390 = vmatpush1.bf16.msra.mxu0 %v1170
        %1391 = vmatprep.subr.bf16.mxu0 0
        %1392 = vmatpush1.bf16.msra.mxu0 %v1171
        %1393 = vmatprep.subr.bf16.mxu0 0
        %1394 = vmatpush1.bf16.msra.mxu0 %v1172
        %1395 = vmatprep.subr.bf16.mxu0 0
        %1396 = vmatpush1.bf16.msra.mxu0 %v1173
        %1397 = vmatprep.subr.bf16.mxu0 0
        %1398 = vmatpush1.bf16.msra.mxu0 %v1174
        %1399 = vmatprep.subr.bf16.mxu0 0
        %1400 = vmatpush1.bf16.msra.mxu0 %v1175
        %1401 = vmatprep.mubr.bf16.mxu0 %v891
        %1402 = vmatmul.mubr.bf16.gmra.mrb[0].mxu0 %v890
        %v1403 = vpop.f32.mrb[0].mxu0
        %v1404 = vadd.f32 %v1243, %v1403
        %v1405 = vpop.f32.mrb[0].mxu0
        %v1406 = vpop.f32.mrb[0].mxu0
        %v1407 = vadd.f32 %v1246, %v1406
        %v1408 = vpop.f32.mrb[0].mxu0
        %1409 = vmatprep.mubr.bf16.mxu0 %v895
        %1410 = vmatmul.mubr.bf16.gmra.mrb[0].mxu0 %v894
        %v1411 = vpop.f32.mrb[0].mxu0
        %v1412 = vadd.f32 %v1251, %v1411
        %v1413 = vpop.f32.mrb[0].mxu0
        %v1414 = vpop.f32.mrb[0].mxu0
        %v1415 = vadd.f32 %v1254, %v1414
        %v1416 = vpop.f32.mrb[0].mxu0
        %1417 = vmatprep.mubr.bf16.mxu0 %v899
        %1418 = vmatmul.mubr.bf16.gmra.mrb[0].mxu0 %v898
        %v1419 = vpop.f32.mrb[0].mxu0
        %v1420 = vadd.f32 %v1259, %v1419
        %v1421 = vpop.f32.mrb[0].mxu0
        %v1422 = vpop.f32.mrb[0].mxu0
        %v1423 = vadd.f32 %v1262, %v1422
        %v1424 = vpop.f32.mrb[0].mxu0
        %1425 = vmatprep.mubr.bf16.mxu0 %v903
        %1426 = vmatmul.mubr.bf16.gmra.mrb[0].mxu0 %v902
        %v1427 = vpop.f32.mrb[0].mxu0
        %v1428 = vadd.f32 %v1267, %v1427
        %v1429 = vpop.f32.mrb[0].mxu0
        %v1430 = vpop.f32.mrb[0].mxu0
        %v1431 = vadd.f32 %v1270, %v1430
        %v1432 = vpop.f32.mrb[0].mxu0
        %1433 = vmatprep.mubr.bf16.mxu0 %v907
        %1434 = vmatmul.mubr.bf16.gmra.mrb[0].mxu0 %v906
        %v1435 = vpop.f32.mrb[0].mxu0
        %v1436 = vadd.f32 %v1275, %v1435
        %v1437 = vpop.f32.mrb[0].mxu0
        %v1438 = vpop.f32.mrb[0].mxu0
        %v1439 = vadd.f32 %v1278, %v1438
        %v1440 = vpop.f32.mrb[0].mxu0
        %1441 = vmatprep.mubr.bf16.mxu0 %v911
        %1442 = vmatmul.mubr.bf16.gmra.mrb[0].mxu0 %v910
        %v1443 = vpop.f32.mrb[0].mxu0
        %v1444 = vadd.f32 %v1283, %v1443
        %v1445 = vpop.f32.mrb[0].mxu0
        %v1446 = vpop.f32.mrb[0].mxu0
        %v1447 = vadd.f32 %v1286, %v1446
        %v1448 = vpop.f32.mrb[0].mxu0
        %1449 = vmatprep.mubr.bf16.mxu0 %v915
        %1450 = vmatmul.mubr.bf16.gmra.mrb[0].mxu0 %v914
        %v1451 = vpop.f32.mrb[0].mxu0
        %v1452 = vadd.f32 %v1291, %v1451
        %v1453 = vpop.f32.mrb[0].mxu0
        %v1454 = vpop.f32.mrb[0].mxu0
        %v1455 = vadd.f32 %v1294, %v1454
        %v1456 = vpop.f32.mrb[0].mxu0
        %1457 = vmatprep.mubr.bf16.mxu0 %v919
        %1458 = vmatmul.mubr.bf16.gmra.mrb[0].mxu0 %v918
        %v1459 = vpop.f32.mrb[0].mxu0
        %v1460 = vadd.f32 %v1299, %v1459
        %v1461 = vpop.f32.mrb[0].mxu0
        %v1462 = vpop.f32.mrb[0].mxu0
        %v1463 = vadd.f32 %v1302, %v1462
        %v1464 = vpop.f32.mrb[0].mxu0
        %1465 = vmatprep.mubr.bf16.mxu0 %v923
        %1466 = vmatmul.mubr.bf16.gmra.mrb[0].mxu0 %v922
        %v1467 = vpop.f32.mrb[0].mxu0
        %v1468 = vadd.f32 %v1307, %v1467
        %v1469 = vpop.f32.mrb[0].mxu0
        %v1470 = vpop.f32.mrb[0].mxu0
        %v1471 = vadd.f32 %v1310, %v1470
        %v1472 = vpop.f32.mrb[0].mxu0
        %1473 = vmatprep.mubr.bf16.mxu0 %v927
        %1474 = vmatmul.mubr.bf16.gmra.mrb[0].mxu0 %v926
        %v1475 = vpop.f32.mrb[0].mxu0
        %v1476 = vadd.f32 %v1315, %v1475
        %v1477 = vpop.f32.mrb[0].mxu0
        %v1478 = vpop.f32.mrb[0].mxu0
        %v1479 = vadd.f32 %v1318, %v1478
        %v1480 = vpop.f32.mrb[0].mxu0
        %1481 = vmatprep.mubr.bf16.mxu0 %v931
        %1482 = vmatmul.mubr.bf16.gmra.mrb[0].mxu0 %v930
        %v1483 = vpop.f32.mrb[0].mxu0
        %v1484 = vadd.f32 %v1323, %v1483
        %v1485 = vpop.f32.mrb[0].mxu0
        %v1486 = vpop.f32.mrb[0].mxu0
        %v1487 = vadd.f32 %v1326, %v1486
        %v1488 = vpop.f32.mrb[0].mxu0
        %1489 = vmatprep.mubr.bf16.mxu0 %v935
        %1490 = vmatmul.mubr.bf16.gmra.mrb[0].mxu0 %v934
        %v1491 = vpop.f32.mrb[0].mxu0
        %v1492 = vadd.f32 %v1331, %v1491
        %v1493 = vpop.f32.mrb[0].mxu0
        %v1494 = vpop.f32.mrb[0].mxu0
        %v1495 = vadd.f32 %v1334, %v1494
        %v1496 = vpop.f32.mrb[0].mxu0
        %1497 = vmatprep.mubr.bf16.mxu0 %v939
        %1498 = vmatmul.mubr.bf16.gmra.mrb[0].mxu0 %v938
        %v1499 = vpop.f32.mrb[0].mxu0
        %v1500 = vadd.f32 %v1339, %v1499
        %v1501 = vpop.f32.mrb[0].mxu0
        %v1502 = vpop.f32.mrb[0].mxu0
        %v1503 = vadd.f32 %v1342, %v1502
        %v1504 = vpop.f32.mrb[0].mxu0
        %1505 = vmatprep.mubr.bf16.mxu0 %v943
        %1506 = vmatmul.mubr.bf16.gmra.mrb[0].mxu0 %v942
        %v1507 = vpop.f32.mrb[0].mxu0
        %v1508 = vadd.f32 %v1347, %v1507
        %v1509 = vpop.f32.mrb[0].mxu0
        %v1510 = vpop.f32.mrb[0].mxu0
        %v1511 = vadd.f32 %v1350, %v1510
        %v1512 = vpop.f32.mrb[0].mxu0
        %1513 = vmatprep.mubr.bf16.mxu0 %v947
        %1514 = vmatmul.mubr.bf16.gmra.mrb[0].mxu0 %v946
        %v1515 = vpop.f32.mrb[0].mxu0
        %v1516 = vadd.f32 %v1355, %v1515
        %v1517 = vpop.f32.mrb[0].mxu0
        %v1518 = vpop.f32.mrb[0].mxu0
        %v1519 = vadd.f32 %v1358, %v1518
        %v1520 = vpop.f32.mrb[0].mxu0
        %1521 = vmatprep.mubr.bf16.mxu0 %v951
        %1522 = vmatmul.mubr.bf16.gmra.mrb[0].mxu0 %v950
        %v1523 = vpop.f32.mrb[0].mxu0
        %v1524 = vadd.f32 %v1363, %v1523
        %v1525 = vpop.f32.mrb[0].mxu0
        %v1526 = vpop.f32.mrb[0].mxu0
        %v1527 = vadd.f32 %v1366, %v1526
        %v1528 = vpop.f32.mrb[0].mxu0
        %1529 = vdwg.mxu0
        %v1530 = vadd.f32 %v532, %v1404
        %v1531 = vadd.f32 %v533, %v1407
        %v1532 = vadd.f32 %v534, %v1412
        %v1533 = vadd.f32 %v535, %v1415
        %v1534 = vadd.f32 %v536, %v1420
        %v1535 = vadd.f32 %v537, %v1423
        %v1536 = vadd.f32 %v538, %v1428
        %v1537 = vadd.f32 %v539, %v1431
        %v1538 = vadd.f32 %v540, %v1436
        %v1539 = vadd.f32 %v541, %v1439
        %v1540 = vadd.f32 %v542, %v1444
        %v1541 = vadd.f32 %v543, %v1447
        %v1542 = vadd.f32 %v544, %v1452
        %v1543 = vadd.f32 %v545, %v1455
        %v1544 = vadd.f32 %v546, %v1460
        %v1545 = vadd.f32 %v547, %v1463
        %v1546 = vadd.f32 %v548, %v1468
        %v1547 = vadd.f32 %v549, %v1471
        %v1548 = vadd.f32 %v550, %v1476
        %v1549 = vadd.f32 %v551, %v1479
        %v1550 = vadd.f32 %v552, %v1484
        %v1551 = vadd.f32 %v553, %v1487
        %v1552 = vadd.f32 %v554, %v1492
        %v1553 = vadd.f32 %v555, %v1495
        %v1554 = vadd.f32 %v556, %v1500
        %v1555 = vadd.f32 %v557, %v1503
        %v1556 = vadd.f32 %v558, %v1508
        %v1557 = vadd.f32 %v559, %v1511
        %v1558 = vadd.f32 %v560, %v1516
        %v1559 = vadd.f32 %v561, %v1519
        %v1560 = vadd.f32 %v562, %v1524
        %v1561 = vadd.f32 %v563, %v1527
        %1562 = vst [vmem:[#allocation2] sm:$0xff] %v1530
        %1563 = vst [vmem:[#allocation2 + $0x8] sm:$0xff] %v1531
        %1564 = vst [vmem:[#allocation2 + $0x10] sm:$0xff] %v1532
        %1565 = vst [vmem:[#allocation2 + $0x18] sm:$0xff] %v1533
        %1566 = vst [vmem:[#allocation2 + $0x20] sm:$0xff] %v1534
        %1567 = vst [vmem:[#allocation2 + $0x28] sm:$0xff] %v1535
        %1568 = vst [vmem:[#allocation2 + $0x30] sm:$0xff] %v1536
        %1569 = vst [vmem:[#allocation2 + $0x38] sm:$0xff] %v1537
        %1570 = vst [vmem:[#allocation2 + $0x40] sm:$0xff] %v1538
        %1571 = vst [vmem:[#allocation2 + $0x48] sm:$0xff] %v1539
        %1572 = vst [vmem:[#allocation2 + $0x50] sm:$0xff] %v1540
        %1573 = vst [vmem:[#allocation2 + $0x58] sm:$0xff] %v1541
        %1574 = vst [vmem:[#allocation2 + $0x60] sm:$0xff] %v1542
        %1575 = vst [vmem:[#allocation2 + $0x68] sm:$0xff] %v1543
        %1576 = vst [vmem:[#allocation2 + $0x70] sm:$0xff] %v1544
        %1577 = vst [vmem:[#allocation2 + $0x78] sm:$0xff] %v1545
        %1578 = vst [vmem:[#allocation2 + $0x80] sm:$0xff] %v1546
        %1579 = vst [vmem:[#allocation2 + $0x88] sm:$0xff] %v1547
        %1580 = vst [vmem:[#allocation2 + $0x90] sm:$0xff] %v1548
        %1581 = vst [vmem:[#allocation2 + $0x98] sm:$0xff] %v1549
        %1582 = vst [vmem:[#allocation2 + $0xa0] sm:$0xff] %v1550
        %1583 = vst [vmem:[#allocation2 + $0xa8] sm:$0xff] %v1551
        %1584 = vst [vmem:[#allocation2 + $0xb0] sm:$0xff] %v1552
        %1585 = vst [vmem:[#allocation2 + $0xb8] sm:$0xff] %v1553
        %1586 = vst [vmem:[#allocation2 + $0xc0] sm:$0xff] %v1554
        %1587 = vst [vmem:[#allocation2 + $0xc8] sm:$0xff] %v1555
        %1588 = vst [vmem:[#allocation2 + $0xd0] sm:$0xff] %v1556
        %1589 = vst [vmem:[#allocation2 + $0xd8] sm:$0xff] %v1557
        %1590 = vst [vmem:[#allocation2 + $0xe0] sm:$0xff] %v1558
        %1591 = vst [vmem:[#allocation2 + $0xe8] sm:$0xff] %v1559
        %1592 = vst [vmem:[#allocation2 + $0xf0] sm:$0xff] %v1560
        %1593 = vst [vmem:[#allocation2 + $0xf8] sm:$0xff] %v1561
        %p1594 = scmp.eq.s32.totalorder %s24, 1
        // Predicated region
        $region80: #{graph_classification_forward.7} parent=70 // pred_check
          %p1595 = pneg %p1594
        $region81: #{graph_classification_forward.7} parent=70 // pred_check_branch
          %1597 = sbr.rel (%p1595) target = $region83
        $region82: #{graph_classification_forward.7} parent=70 // pred_region
          %s1598 = smul.u32 %s23, 256
          %s1599 = sshra.s32 %s1598, 3
          %s1600 = sand.u32 %s1598, 7
          %s1601 = smul.addr %s1599, 4
          %s1602 = scalar_lea.vmem %s1, %s1601
          %v1603 = vld [vmem:[%s1602] sm:$0xf]
          %v1604 = vld [vmem:[%s1602 + $0x4] sm:$0xf]
          %v1605 = vld [vmem:[%s1602 + $0x8] sm:$0xf]
          %v1606 = vld [vmem:[%s1602 + $0xc] sm:$0xf]
          %v1607 = vld [vmem:[%s1602 + $0x10] sm:$0xf]
          %v1608 = vld [vmem:[%s1602 + $0x14] sm:$0xf]
          %v1609 = vld [vmem:[%s1602 + $0x18] sm:$0xf]
          %v1610 = vld [vmem:[%s1602 + $0x1c] sm:$0xf]
          %v1611 = vld [vmem:[%s1602 + $0x20] sm:$0xf]
          %v1612 = vld [vmem:[%s1602 + $0x24] sm:$0xf]
          %v1613 = vld [vmem:[%s1602 + $0x28] sm:$0xf]
          %v1614 = vld [vmem:[%s1602 + $0x2c] sm:$0xf]
          %v1615 = vld [vmem:[%s1602 + $0x30] sm:$0xf]
          %v1616 = vld [vmem:[%s1602 + $0x34] sm:$0xf]
          %v1617 = vld [vmem:[%s1602 + $0x38] sm:$0xf]
          %v1618 = vld [vmem:[%s1602 + $0x3c] sm:$0xf]
          %v1619 = vld [vmem:[%s1602 + $0x40] sm:$0xf]
          %v1620 = vld [vmem:[%s1602 + $0x44] sm:$0xf]
          %v1621 = vld [vmem:[%s1602 + $0x48] sm:$0xf]
          %v1622 = vld [vmem:[%s1602 + $0x4c] sm:$0xf]
          %v1623 = vld [vmem:[%s1602 + $0x50] sm:$0xf]
          %v1624 = vld [vmem:[%s1602 + $0x54] sm:$0xf]
          %v1625 = vld [vmem:[%s1602 + $0x58] sm:$0xf]
          %v1626 = vld [vmem:[%s1602 + $0x5c] sm:$0xf]
          %v1627 = vld [vmem:[%s1602 + $0x60] sm:$0xf]
          %v1628 = vld [vmem:[%s1602 + $0x64] sm:$0xf]
          %v1629 = vld [vmem:[%s1602 + $0x68] sm:$0xf]
          %v1630 = vld [vmem:[%s1602 + $0x6c] sm:$0xf]
          %v1631 = vld [vmem:[%s1602 + $0x70] sm:$0xf]
          %v1632 = vld [vmem:[%s1602 + $0x74] sm:$0xf]
          %v1633 = vld [vmem:[%s1602 + $0x78] sm:$0xf]
          %v1634 = vld [vmem:[%s1602 + $0x7c] sm:$0xf]
          %v1635 = vld [vmem:[#allocation2] sm:$0xff]
          %v1636 = vld [vmem:[#allocation2 + $0x8] sm:$0xff]
          %v1637 = vld [vmem:[#allocation2 + $0x10] sm:$0xff]
          %v1638 = vld [vmem:[#allocation2 + $0x18] sm:$0xff]
          %v1639 = vld [vmem:[#allocation2 + $0x20] sm:$0xff]
          %v1640 = vld [vmem:[#allocation2 + $0x28] sm:$0xff]
          %v1641 = vld [vmem:[#allocation2 + $0x30] sm:$0xff]
          %v1642 = vld [vmem:[#allocation2 + $0x38] sm:$0xff]
          %v1643 = vld [vmem:[#allocation2 + $0x40] sm:$0xff]
          %v1644 = vld [vmem:[#allocation2 + $0x48] sm:$0xff]
          %v1645 = vld [vmem:[#allocation2 + $0x50] sm:$0xff]
          %v1646 = vld [vmem:[#allocation2 + $0x58] sm:$0xff]
          %v1647 = vld [vmem:[#allocation2 + $0x60] sm:$0xff]
          %v1648 = vld [vmem:[#allocation2 + $0x68] sm:$0xff]
          %v1649 = vld [vmem:[#allocation2 + $0x70] sm:$0xff]
          %v1650 = vld [vmem:[#allocation2 + $0x78] sm:$0xff]
          %v1651 = vld [vmem:[#allocation2 + $0x80] sm:$0xff]
          %v1652 = vld [vmem:[#allocation2 + $0x88] sm:$0xff]
          %v1653 = vld [vmem:[#allocation2 + $0x90] sm:$0xff]
          %v1654 = vld [vmem:[#allocation2 + $0x98] sm:$0xff]
          %v1655 = vld [vmem:[#allocation2 + $0xa0] sm:$0xff]
          %v1656 = vld [vmem:[#allocation2 + $0xa8] sm:$0xff]
          %v1657 = vld [vmem:[#allocation2 + $0xb0] sm:$0xff]
          %v1658 = vld [vmem:[#allocation2 + $0xb8] sm:$0xff]
          %v1659 = vld [vmem:[#allocation2 + $0xc0] sm:$0xff]
          %v1660 = vld [vmem:[#allocation2 + $0xc8] sm:$0xff]
          %v1661 = vld [vmem:[#allocation2 + $0xd0] sm:$0xff]
          %v1662 = vld [vmem:[#allocation2 + $0xd8] sm:$0xff]
          %v1663 = vld [vmem:[#allocation2 + $0xe0] sm:$0xff]
          %v1664 = vld [vmem:[#allocation2 + $0xe8] sm:$0xff]
          %v1665 = vld [vmem:[#allocation2 + $0xf0] sm:$0xff]
          %v1666 = vld [vmem:[#allocation2 + $0xf8] sm:$0xff]
          %v1667 = vld [vmem:[%s486] sm:$0xff]
          %v1668 = vld [vmem:[%s486 + $0x8] sm:$0xff]
          %v1669 = vld [vmem:[%s486 + $0x10] sm:$0xff]
          %v1670 = vld [vmem:[%s486 + $0x18] sm:$0xff]
          %v1671 = vld [vmem:[%s486 + $0x20] sm:$0xff]
          %v1672 = vld [vmem:[%s486 + $0x28] sm:$0xff]
          %v1673 = vld [vmem:[%s486 + $0x30] sm:$0xff]
          %v1674 = vld [vmem:[%s486 + $0x38] sm:$0xff]
          %v1675 = vld [vmem:[%s486 + $0x40] sm:$0xff]
          %v1676 = vld [vmem:[%s486 + $0x48] sm:$0xff]
          %v1677 = vld [vmem:[%s486 + $0x50] sm:$0xff]
          %v1678 = vld [vmem:[%s486 + $0x58] sm:$0xff]
          %v1679 = vld [vmem:[%s486 + $0x60] sm:$0xff]
          %v1680 = vld [vmem:[%s486 + $0x68] sm:$0xff]
          %v1681 = vld [vmem:[%s486 + $0x70] sm:$0xff]
          %v1682 = vld [vmem:[%s486 + $0x78] sm:$0xff]
          %v1683 = vld [vmem:[%s486 + $0x80] sm:$0xff]
          %v1684 = vld [vmem:[%s486 + $0x88] sm:$0xff]
          %v1685 = vld [vmem:[%s486 + $0x90] sm:$0xff]
          %v1686 = vld [vmem:[%s486 + $0x98] sm:$0xff]
          %v1687 = vld [vmem:[%s486 + $0xa0] sm:$0xff]
          %v1688 = vld [vmem:[%s486 + $0xa8] sm:$0xff]
          %v1689 = vld [vmem:[%s486 + $0xb0] sm:$0xff]
          %v1690 = vld [vmem:[%s486 + $0xb8] sm:$0xff]
          %v1691 = vld [vmem:[%s486 + $0xc0] sm:$0xff]
          %v1692 = vld [vmem:[%s486 + $0xc8] sm:$0xff]
          %v1693 = vld [vmem:[%s486 + $0xd0] sm:$0xff]
          %v1694 = vld [vmem:[%s486 + $0xd8] sm:$0xff]
          %v1695 = vld [vmem:[%s486 + $0xe0] sm:$0xff]
          %v1696 = vld [vmem:[%s486 + $0xe8] sm:$0xff]
          %v1697 = vld [vmem:[%s486 + $0xf0] sm:$0xff]
          %v1698 = vld [vmem:[%s486 + $0xf8] sm:$0xff]
          %1700 = vset.pattern.permute.xlu0 0
          %1701 = vperm.xlu0 %1700, %v1667
          %v1702 = vpop.permute.xlu0 %1701
          %1705 = vset.pattern.permute.xlu0 0
          %1706 = vperm.xlu0 %1705, %v1668
          %v1707 = vpop.permute.xlu0 %1706
          %1710 = vset.pattern.permute.xlu0 0
          %1711 = vperm.xlu0 %1710, %v1669
          %v1712 = vpop.permute.xlu0 %1711
          %1715 = vset.pattern.permute.xlu0 0
          %1716 = vperm.xlu0 %1715, %v1670
          %v1717 = vpop.permute.xlu0 %1716
          %1720 = vset.pattern.permute.xlu0 0
          %1721 = vperm.xlu0 %1720, %v1671
          %v1722 = vpop.permute.xlu0 %1721
          %1725 = vset.pattern.permute.xlu0 0
          %1726 = vperm.xlu0 %1725, %v1672
          %v1727 = vpop.permute.xlu0 %1726
          %1730 = vset.pattern.permute.xlu0 0
          %1731 = vperm.xlu0 %1730, %v1673
          %v1732 = vpop.permute.xlu0 %1731
          %1735 = vset.pattern.permute.xlu0 0
          %1736 = vperm.xlu0 %1735, %v1674
          %v1737 = vpop.permute.xlu0 %1736
          %1740 = vset.pattern.permute.xlu0 0
          %1741 = vperm.xlu0 %1740, %v1675
          %v1742 = vpop.permute.xlu0 %1741
          %1745 = vset.pattern.permute.xlu0 0
          %1746 = vperm.xlu0 %1745, %v1676
          %v1747 = vpop.permute.xlu0 %1746
          %1750 = vset.pattern.permute.xlu0 0
          %1751 = vperm.xlu0 %1750, %v1677
          %v1752 = vpop.permute.xlu0 %1751
          %1755 = vset.pattern.permute.xlu0 0
          %1756 = vperm.xlu0 %1755, %v1678
          %v1757 = vpop.permute.xlu0 %1756
          %1760 = vset.pattern.permute.xlu0 0
          %1761 = vperm.xlu0 %1760, %v1679
          %v1762 = vpop.permute.xlu0 %1761
          %1765 = vset.pattern.permute.xlu0 0
          %1766 = vperm.xlu0 %1765, %v1680
          %v1767 = vpop.permute.xlu0 %1766
          %1770 = vset.pattern.permute.xlu0 0
          %1771 = vperm.xlu0 %1770, %v1681
          %v1772 = vpop.permute.xlu0 %1771
          %1775 = vset.pattern.permute.xlu0 0
          %1776 = vperm.xlu0 %1775, %v1682
          %v1777 = vpop.permute.xlu0 %1776
          %1780 = vset.pattern.permute.xlu0 0
          %1781 = vperm.xlu0 %1780, %v1683
          %v1782 = vpop.permute.xlu0 %1781
          %1785 = vset.pattern.permute.xlu0 0
          %1786 = vperm.xlu0 %1785, %v1684
          %v1787 = vpop.permute.xlu0 %1786
          %1790 = vset.pattern.permute.xlu0 0
          %1791 = vperm.xlu0 %1790, %v1685
          %v1792 = vpop.permute.xlu0 %1791
          %1795 = vset.pattern.permute.xlu0 0
          %1796 = vperm.xlu0 %1795, %v1686
          %v1797 = vpop.permute.xlu0 %1796
          %1800 = vset.pattern.permute.xlu0 0
          %1801 = vperm.xlu0 %1800, %v1687
          %v1802 = vpop.permute.xlu0 %1801
          %1805 = vset.pattern.permute.xlu0 0
          %1806 = vperm.xlu0 %1805, %v1688
          %v1807 = vpop.permute.xlu0 %1806
          %1810 = vset.pattern.permute.xlu0 0
          %1811 = vperm.xlu0 %1810, %v1689
          %v1812 = vpop.permute.xlu0 %1811
          %1815 = vset.pattern.permute.xlu0 0
          %1816 = vperm.xlu0 %1815, %v1690
          %v1817 = vpop.permute.xlu0 %1816
          %1820 = vset.pattern.permute.xlu0 0
          %1821 = vperm.xlu0 %1820, %v1691
          %v1822 = vpop.permute.xlu0 %1821
          %1825 = vset.pattern.permute.xlu0 0
          %1826 = vperm.xlu0 %1825, %v1692
          %v1827 = vpop.permute.xlu0 %1826
          %1830 = vset.pattern.permute.xlu0 0
          %1831 = vperm.xlu0 %1830, %v1693
          %v1832 = vpop.permute.xlu0 %1831
          %1835 = vset.pattern.permute.xlu0 0
          %1836 = vperm.xlu0 %1835, %v1694
          %v1837 = vpop.permute.xlu0 %1836
          %1840 = vset.pattern.permute.xlu0 0
          %1841 = vperm.xlu0 %1840, %v1695
          %v1842 = vpop.permute.xlu0 %1841
          %1845 = vset.pattern.permute.xlu0 0
          %1846 = vperm.xlu0 %1845, %v1696
          %v1847 = vpop.permute.xlu0 %1846
          %1850 = vset.pattern.permute.xlu0 0
          %1851 = vperm.xlu0 %1850, %v1697
          %v1852 = vpop.permute.xlu0 %1851
          %1855 = vset.pattern.permute.xlu0 0
          %1856 = vperm.xlu0 %1855, %v1698
          %v1857 = vpop.permute.xlu0 %1856
          %v1859 = vmul.f32 %v1635, %v1702
          %v1860 = vmul.f32 %v1636, %v1707
          %v1861 = vmul.f32 %v1637, %v1712
          %v1862 = vmul.f32 %v1638, %v1717
          %v1863 = vmul.f32 %v1639, %v1722
          %v1864 = vmul.f32 %v1640, %v1727
          %v1865 = vmul.f32 %v1641, %v1732
          %v1866 = vmul.f32 %v1642, %v1737
          %v1867 = vmul.f32 %v1643, %v1742
          %v1868 = vmul.f32 %v1644, %v1747
          %v1869 = vmul.f32 %v1645, %v1752
          %v1870 = vmul.f32 %v1646, %v1757
          %v1871 = vmul.f32 %v1647, %v1762
          %v1872 = vmul.f32 %v1648, %v1767
          %v1873 = vmul.f32 %v1649, %v1772
          %v1874 = vmul.f32 %v1650, %v1777
          %v1875 = vmul.f32 %v1651, %v1782
          %v1876 = vmul.f32 %v1652, %v1787
          %v1877 = vmul.f32 %v1653, %v1792
          %v1878 = vmul.f32 %v1654, %v1797
          %v1879 = vmul.f32 %v1655, %v1802
          %v1880 = vmul.f32 %v1656, %v1807
          %v1881 = vmul.f32 %v1657, %v1812
          %v1882 = vmul.f32 %v1658, %v1817
          %v1883 = vmul.f32 %v1659, %v1822
          %v1884 = vmul.f32 %v1660, %v1827
          %v1885 = vmul.f32 %v1661, %v1832
          %v1886 = vmul.f32 %v1662, %v1837
          %v1887 = vmul.f32 %v1663, %v1842
          %v1888 = vmul.f32 %v1664, %v1847
          %v1889 = vmul.f32 %v1665, %v1852
          %v1890 = vmul.f32 %v1666, %v1857
          %v1891 = vld [vmem:[%s3] sm:$0xf]
          %v1892 = vld [vmem:[%s3 + $0x4] sm:$0xf]
          %v1893 = vld [vmem:[%s3 + $0x8] sm:$0xf]
          %v1894 = vld [vmem:[%s3 + $0xc] sm:$0xf]
          %v1895 = vld [vmem:[%s3 + $0x10] sm:$0xf]
          %v1896 = vld [vmem:[%s3 + $0x14] sm:$0xf]
          %v1897 = vld [vmem:[%s3 + $0x18] sm:$0xf]
          %v1898 = vld [vmem:[%s3 + $0x1c] sm:$0xf]
          %v1899 = vld [vmem:[%s3 + $0x20] sm:$0xf]
          %v1900 = vld [vmem:[%s3 + $0x24] sm:$0xf]
          %v1901 = vld [vmem:[%s3 + $0x28] sm:$0xf]
          %v1902 = vld [vmem:[%s3 + $0x2c] sm:$0xf]
          %v1903 = vld [vmem:[%s3 + $0x30] sm:$0xf]
          %v1904 = vld [vmem:[%s3 + $0x34] sm:$0xf]
          %v1905 = vld [vmem:[%s3 + $0x38] sm:$0xf]
          %v1906 = vld [vmem:[%s3 + $0x3c] sm:$0xf]
          %v1907 = vpack.c.bf16 %v1860, %v1859
          %v1908 = vpack.c.bf16 %v1862, %v1861
          %v1909 = vpack.c.bf16 %v1864, %v1863
          %v1910 = vpack.c.bf16 %v1866, %v1865
          %v1911 = vpack.c.bf16 %v1868, %v1867
          %v1912 = vpack.c.bf16 %v1870, %v1869
          %v1913 = vpack.c.bf16 %v1872, %v1871
          %v1914 = vpack.c.bf16 %v1874, %v1873
          %v1915 = vpack.c.bf16 %v1876, %v1875
          %v1916 = vpack.c.bf16 %v1878, %v1877
          %v1917 = vpack.c.bf16 %v1880, %v1879
          %v1918 = vpack.c.bf16 %v1882, %v1881
          %v1919 = vpack.c.bf16 %v1884, %v1883
          %v1920 = vpack.c.bf16 %v1886, %v1885
          %v1921 = vpack.c.bf16 %v1888, %v1887
          %v1922 = vpack.c.bf16 %v1890, %v1889
          %v1923 = vld [vmem:[%s4] sm:$0xf]
          %v1924 = vld [vmem:[%s4 + $0x4] sm:$0xf]
          %v1925 = vld [vmem:[%s4 + $0x8] sm:$0xf]
          %v1926 = vld [vmem:[%s4 + $0xc] sm:$0xf]
          %v1927 = vld [vmem:[%s4 + $0x10] sm:$0xf]
          %v1928 = vld [vmem:[%s4 + $0x14] sm:$0xf]
          %v1929 = vld [vmem:[%s4 + $0x18] sm:$0xf]
          %v1930 = vld [vmem:[%s4 + $0x1c] sm:$0xf]
          %v1931 = vld [vmem:[%s4 + $0x20] sm:$0xf]
          %v1932 = vld [vmem:[%s4 + $0x24] sm:$0xf]
          %v1933 = vld [vmem:[%s4 + $0x28] sm:$0xf]
          %v1934 = vld [vmem:[%s4 + $0x2c] sm:$0xf]
          %v1935 = vld [vmem:[%s4 + $0x30] sm:$0xf]
          %v1936 = vld [vmem:[%s4 + $0x34] sm:$0xf]
          %v1937 = vld [vmem:[%s4 + $0x38] sm:$0xf]
          %v1938 = vld [vmem:[%s4 + $0x3c] sm:$0xf]
          %v1955 = vunpack.c.l.b16 %v1923
          %v1956 = vunpack.c.l.b16 %v1924
          %v1957 = vunpack.c.l.b16 %v1925
          %v1958 = vunpack.c.l.b16 %v1926
          %v1959 = vunpack.c.l.b16 %v1927
          %v1960 = vunpack.c.l.b16 %v1928
          %v1961 = vunpack.c.l.b16 %v1929
          %v1962 = vunpack.c.l.b16 %v1930
          %v1963 = vunpack.c.l.b16 %v1931
          %v1964 = vunpack.c.l.b16 %v1932
          %v1965 = vunpack.c.l.b16 %v1933
          %v1966 = vunpack.c.l.b16 %v1934
          %v1967 = vunpack.c.l.b16 %v1935
          %v1968 = vunpack.c.l.b16 %v1936
          %v1969 = vunpack.c.l.b16 %v1937
          %v1970 = vunpack.c.l.b16 %v1938
          %v1971 = vpack.c.b16 %v1956, %v1955
          %v1972 = vpack.c.b16 %v1958, %v1957
          %v1973 = vpack.c.b16 %v1960, %v1959
          %v1974 = vpack.c.b16 %v1962, %v1961
          %v1975 = vpack.c.b16 %v1964, %v1963
          %v1976 = vpack.c.b16 %v1966, %v1965
          %v1977 = vpack.c.b16 %v1968, %v1967
          %v1978 = vpack.c.b16 %v1970, %v1969
          %1987 = vmatprep.subr.bf16.mxu0 0
          %1988 = vmatpush1.bf16.msra.mxu0 %v1971
          %1989 = vmatprep.subr.bf16.mxu0 0
          %1990 = vmatpush1.bf16.msra.mxu0 %v1972
          %1991 = vmatprep.subr.bf16.mxu0 0
          %1992 = vmatpush1.bf16.msra.mxu0 %v1973
          %1993 = vmatprep.subr.bf16.mxu0 0
          %1994 = vmatpush1.bf16.msra.mxu0 %v1974
          %1995 = vmatprep.subr.bf16.mxu0 0
          %1996 = vmatpush1.bf16.msra.mxu0 %v1975
          %1997 = vmatprep.subr.bf16.mxu0 0
          %1998 = vmatpush1.bf16.msra.mxu0 %v1976
          %1999 = vmatprep.subr.bf16.mxu0 0
          %2000 = vmatpush1.bf16.msra.mxu0 %v1977
          %2001 = vmatprep.subr.bf16.mxu0 0
          %2002 = vmatpush1.bf16.msra.mxu0 %v1978
          %2003 = vmatprep.subr.bf16.mxu0 0
          %2004 = vmatpush1.bf16.msra.mxu0 0
          %2005 = vmatprep.subr.bf16.mxu0 0
          %2006 = vmatpush1.bf16.msra.mxu0 0
          %2007 = vmatprep.subr.bf16.mxu0 0
          %2008 = vmatpush1.bf16.msra.mxu0 0
          %2009 = vmatprep.subr.bf16.mxu0 0
          %2010 = vmatpush1.bf16.msra.mxu0 0
          %2011 = vmatprep.subr.bf16.mxu0 0
          %2012 = vmatpush1.bf16.msra.mxu0 0
          %2013 = vmatprep.subr.bf16.mxu0 0
          %2014 = vmatpush1.bf16.msra.mxu0 0
          %2015 = vmatprep.subr.bf16.mxu0 0
          %2016 = vmatpush1.bf16.msra.mxu0 0
          %2017 = vmatprep.subr.bf16.mxu0 0
          %2018 = vmatpush1.bf16.msra.mxu0 0
          %2019 = vmatprep.mubr.bf16.mxu0 0
          %2020 = vmatmul.mubr.bf16.gmra.mrb[0].mxu0 %v1907
          %v2021 = vpop.f32.mrb[0].mxu0
          %v2022 = vadd.f32 0.0, %v2021
          %v2023 = vpop.f32.mrb[0].mxu0
          %v2024 = vpop.f32.mrb[0].mxu0
          %v2025 = vadd.f32 0.0, %v2024
          %v2026 = vpop.f32.mrb[0].mxu0
          %2027 = vmatprep.mubr.bf16.mxu0 0
          %2028 = vmatmul.mubr.bf16.gmra.mrb[0].mxu0 %v1908
          %v2029 = vpop.f32.mrb[0].mxu0
          %v2030 = vadd.f32 0.0, %v2029
          %v2031 = vpop.f32.mrb[0].mxu0
          %v2032 = vpop.f32.mrb[0].mxu0
          %v2033 = vadd.f32 0.0, %v2032
          %v2034 = vpop.f32.mrb[0].mxu0
          %2035 = vmatprep.mubr.bf16.mxu0 0
          %2036 = vmatmul.mubr.bf16.gmra.mrb[0].mxu0 %v1909
          %v2037 = vpop.f32.mrb[0].mxu0
          %v2038 = vadd.f32 0.0, %v2037
          %v2039 = vpop.f32.mrb[0].mxu0
          %v2040 = vpop.f32.mrb[0].mxu0
          %v2041 = vadd.f32 0.0, %v2040
          %v2042 = vpop.f32.mrb[0].mxu0
          %2043 = vmatprep.mubr.bf16.mxu0 0
          %2044 = vmatmul.mubr.bf16.gmra.mrb[0].mxu0 %v1910
          %v2045 = vpop.f32.mrb[0].mxu0
          %v2046 = vadd.f32 0.0, %v2045
          %v2047 = vpop.f32.mrb[0].mxu0
          %v2048 = vpop.f32.mrb[0].mxu0
          %v2049 = vadd.f32 0.0, %v2048
          %v2050 = vpop.f32.mrb[0].mxu0
          %2051 = vmatprep.mubr.bf16.mxu0 0
          %2052 = vmatmul.mubr.bf16.gmra.mrb[0].mxu0 %v1911
          %v2053 = vpop.f32.mrb[0].mxu0
          %v2054 = vadd.f32 0.0, %v2053
          %v2055 = vpop.f32.mrb[0].mxu0
          %v2056 = vpop.f32.mrb[0].mxu0
          %v2057 = vadd.f32 0.0, %v2056
          %v2058 = vpop.f32.mrb[0].mxu0
          %2059 = vmatprep.mubr.bf16.mxu0 0
          %2060 = vmatmul.mubr.bf16.gmra.mrb[0].mxu0 %v1912
          %v2061 = vpop.f32.mrb[0].mxu0
          %v2062 = vadd.f32 0.0, %v2061
          %v2063 = vpop.f32.mrb[0].mxu0
          %v2064 = vpop.f32.mrb[0].mxu0
          %v2065 = vadd.f32 0.0, %v2064
          %v2066 = vpop.f32.mrb[0].mxu0
          %2067 = vmatprep.mubr.bf16.mxu0 0
          %2068 = vmatmul.mubr.bf16.gmra.mrb[0].mxu0 %v1913
          %v2069 = vpop.f32.mrb[0].mxu0
          %v2070 = vadd.f32 0.0, %v2069
          %v2071 = vpop.f32.mrb[0].mxu0
          %v2072 = vpop.f32.mrb[0].mxu0
          %v2073 = vadd.f32 0.0, %v2072
          %v2074 = vpop.f32.mrb[0].mxu0
          %2075 = vmatprep.mubr.bf16.mxu0 0
          %2076 = vmatmul.mubr.bf16.gmra.mrb[0].mxu0 %v1914
          %v2077 = vpop.f32.mrb[0].mxu0
          %v2078 = vadd.f32 0.0, %v2077
          %v2079 = vpop.f32.mrb[0].mxu0
          %v2080 = vpop.f32.mrb[0].mxu0
          %v2081 = vadd.f32 0.0, %v2080
          %v2082 = vpop.f32.mrb[0].mxu0
          %2083 = vmatprep.mubr.bf16.mxu0 0
          %2084 = vmatmul.mubr.bf16.gmra.mrb[0].mxu0 %v1915
          %v2085 = vpop.f32.mrb[0].mxu0
          %v2086 = vadd.f32 0.0, %v2085
          %v2087 = vpop.f32.mrb[0].mxu0
          %v2088 = vpop.f32.mrb[0].mxu0
          %v2089 = vadd.f32 0.0, %v2088
          %v2090 = vpop.f32.mrb[0].mxu0
          %2091 = vmatprep.mubr.bf16.mxu0 0
          %2092 = vmatmul.mubr.bf16.gmra.mrb[0].mxu0 %v1916
          %v2093 = vpop.f32.mrb[0].mxu0
          %v2094 = vadd.f32 0.0, %v2093
          %v2095 = vpop.f32.mrb[0].mxu0
          %v2096 = vpop.f32.mrb[0].mxu0
          %v2097 = vadd.f32 0.0, %v2096
          %v2098 = vpop.f32.mrb[0].mxu0
          %2099 = vmatprep.mubr.bf16.mxu0 0
          %2100 = vmatmul.mubr.bf16.gmra.mrb[0].mxu0 %v1917
          %v2101 = vpop.f32.mrb[0].mxu0
          %v2102 = vadd.f32 0.0, %v2101
          %v2103 = vpop.f32.mrb[0].mxu0
          %v2104 = vpop.f32.mrb[0].mxu0
          %v2105 = vadd.f32 0.0, %v2104
          %v2106 = vpop.f32.mrb[0].mxu0
          %2107 = vmatprep.mubr.bf16.mxu0 0
          %2108 = vmatmul.mubr.bf16.gmra.mrb[0].mxu0 %v1918
          %v2109 = vpop.f32.mrb[0].mxu0
          %v2110 = vadd.f32 0.0, %v2109
          %v2111 = vpop.f32.mrb[0].mxu0
          %v2112 = vpop.f32.mrb[0].mxu0
          %v2113 = vadd.f32 0.0, %v2112
          %v2114 = vpop.f32.mrb[0].mxu0
          %2115 = vmatprep.mubr.bf16.mxu0 0
          %2116 = vmatmul.mubr.bf16.gmra.mrb[0].mxu0 %v1919
          %v2117 = vpop.f32.mrb[0].mxu0
          %v2118 = vadd.f32 0.0, %v2117
          %v2119 = vpop.f32.mrb[0].mxu0
          %v2120 = vpop.f32.mrb[0].mxu0
          %v2121 = vadd.f32 0.0, %v2120
          %v2122 = vpop.f32.mrb[0].mxu0
          %2123 = vmatprep.mubr.bf16.mxu0 0
          %2124 = vmatmul.mubr.bf16.gmra.mrb[0].mxu0 %v1920
          %v2125 = vpop.f32.mrb[0].mxu0
          %v2126 = vadd.f32 0.0, %v2125
          %v2127 = vpop.f32.mrb[0].mxu0
          %v2128 = vpop.f32.mrb[0].mxu0
          %v2129 = vadd.f32 0.0, %v2128
          %v2130 = vpop.f32.mrb[0].mxu0
          %2131 = vmatprep.mubr.bf16.mxu0 0
          %2132 = vmatmul.mubr.bf16.gmra.mrb[0].mxu0 %v1921
          %v2133 = vpop.f32.mrb[0].mxu0
          %v2134 = vadd.f32 0.0, %v2133
          %v2135 = vpop.f32.mrb[0].mxu0
          %v2136 = vpop.f32.mrb[0].mxu0
          %v2137 = vadd.f32 0.0, %v2136
          %v2138 = vpop.f32.mrb[0].mxu0
          %2139 = vmatprep.mubr.bf16.mxu0 0
          %2140 = vmatmul.mubr.bf16.gmra.mrb[0].mxu0 %v1922
          %v2141 = vpop.f32.mrb[0].mxu0
          %v2142 = vadd.f32 0.0, %v2141
          %v2143 = vpop.f32.mrb[0].mxu0
          %v2144 = vpop.f32.mrb[0].mxu0
          %v2145 = vadd.f32 0.0, %v2144
          %v2146 = vpop.f32.mrb[0].mxu0
          %2147 = vdwg.mxu0
          %v2180 = vunpack.c.l.b16 %v1603
          %v2181 = vunpack.c.l.b16 %v1604
          %v2182 = vunpack.c.l.b16 %v1605
          %v2183 = vunpack.c.l.b16 %v1606
          %v2184 = vunpack.c.l.b16 %v1607
          %v2185 = vunpack.c.l.b16 %v1608
          %v2186 = vunpack.c.l.b16 %v1609
          %v2187 = vunpack.c.l.b16 %v1610
          %v2188 = vunpack.c.l.b16 %v1611
          %v2189 = vunpack.c.l.b16 %v1612
          %v2190 = vunpack.c.l.b16 %v1613
          %v2191 = vunpack.c.l.b16 %v1614
          %v2192 = vunpack.c.l.b16 %v1615
          %v2193 = vunpack.c.l.b16 %v1616
          %v2194 = vunpack.c.l.b16 %v1617
          %v2195 = vunpack.c.l.b16 %v1618
          %v2196 = vunpack.c.l.b16 %v1619
          %v2197 = vunpack.c.l.b16 %v1620
          %v2198 = vunpack.c.l.b16 %v1621
          %v2199 = vunpack.c.l.b16 %v1622
          %v2200 = vunpack.c.l.b16 %v1623
          %v2201 = vunpack.c.l.b16 %v1624
          %v2202 = vunpack.c.l.b16 %v1625
          %v2203 = vunpack.c.l.b16 %v1626
          %v2204 = vunpack.c.l.b16 %v1627
          %v2205 = vunpack.c.l.b16 %v1628
          %v2206 = vunpack.c.l.b16 %v1629
          %v2207 = vunpack.c.l.b16 %v1630
          %v2208 = vunpack.c.l.b16 %v1631
          %v2209 = vunpack.c.l.b16 %v1632
          %v2210 = vunpack.c.l.b16 %v1633
          %v2211 = vunpack.c.l.b16 %v1634
          %v2212 = vpack.c.b16 %v2181, %v2180
          %v2213 = vpack.c.b16 %v2183, %v2182
          %v2214 = vpack.c.b16 %v2185, %v2184
          %v2215 = vpack.c.b16 %v2187, %v2186
          %v2216 = vpack.c.b16 %v2189, %v2188
          %v2217 = vpack.c.b16 %v2191, %v2190
          %v2218 = vpack.c.b16 %v2193, %v2192
          %v2219 = vpack.c.b16 %v2195, %v2194
          %v2220 = vpack.c.b16 %v2197, %v2196
          %v2221 = vpack.c.b16 %v2199, %v2198
          %v2222 = vpack.c.b16 %v2201, %v2200
          %v2223 = vpack.c.b16 %v2203, %v2202
          %v2224 = vpack.c.b16 %v2205, %v2204
          %v2225 = vpack.c.b16 %v2207, %v2206
          %v2226 = vpack.c.b16 %v2209, %v2208
          %v2227 = vpack.c.b16 %v2211, %v2210
          %v2260 = vunpack.c.l.b16 %v1891
          %v2261 = vunpack.c.l.b16 %v1892
          %v2262 = vunpack.c.l.b16 %v1893
          %v2263 = vunpack.c.l.b16 %v1894
          %v2264 = vunpack.c.l.b16 %v1895
          %v2265 = vunpack.c.l.b16 %v1896
          %v2266 = vunpack.c.l.b16 %v1897
          %v2267 = vunpack.c.l.b16 %v1898
          %v2268 = vunpack.c.l.b16 %v1899
          %v2269 = vunpack.c.l.b16 %v1900
          %v2270 = vunpack.c.l.b16 %v1901
          %v2271 = vunpack.c.l.b16 %v1902
          %v2272 = vunpack.c.l.b16 %v1903
          %v2273 = vunpack.c.l.b16 %v1904
          %v2274 = vunpack.c.l.b16 %v1905
          %v2275 = vunpack.c.l.b16 %v1906
          %v2276 = vpack.c.b16 %v2261, %v2260
          %v2277 = vpack.c.b16 %v2263, %v2262
          %v2278 = vpack.c.b16 %v2265, %v2264
          %v2279 = vpack.c.b16 %v2267, %v2266
          %v2280 = vpack.c.b16 %v2269, %v2268
          %v2281 = vpack.c.b16 %v2271, %v2270
          %v2282 = vpack.c.b16 %v2273, %v2272
          %v2283 = vpack.c.b16 %v2275, %v2274
          %2292 = vmatprep.subr.bf16.mxu0 0
          %2293 = vmatpush1.bf16.msra.mxu0 %v2276
          %2294 = vmatprep.subr.bf16.mxu0 0
          %2295 = vmatpush1.bf16.msra.mxu0 %v2277
          %2296 = vmatprep.subr.bf16.mxu0 0
          %2297 = vmatpush1.bf16.msra.mxu0 %v2278
          %2298 = vmatprep.subr.bf16.mxu0 0
          %2299 = vmatpush1.bf16.msra.mxu0 %v2279
          %2300 = vmatprep.subr.bf16.mxu0 0
          %2301 = vmatpush1.bf16.msra.mxu0 %v2280
          %2302 = vmatprep.subr.bf16.mxu0 0
          %2303 = vmatpush1.bf16.msra.mxu0 %v2281
          %2304 = vmatprep.subr.bf16.mxu0 0
          %2305 = vmatpush1.bf16.msra.mxu0 %v2282
          %2306 = vmatprep.subr.bf16.mxu0 0
          %2307 = vmatpush1.bf16.msra.mxu0 %v2283
          %2308 = vmatprep.subr.bf16.mxu0 0
          %2309 = vmatpush1.bf16.msra.mxu0 0
          %2310 = vmatprep.subr.bf16.mxu0 0
          %2311 = vmatpush1.bf16.msra.mxu0 0
          %2312 = vmatprep.subr.bf16.mxu0 0
          %2313 = vmatpush1.bf16.msra.mxu0 0
          %2314 = vmatprep.subr.bf16.mxu0 0
          %2315 = vmatpush1.bf16.msra.mxu0 0
          %2316 = vmatprep.subr.bf16.mxu0 0
          %2317 = vmatpush1.bf16.msra.mxu0 0
          %2318 = vmatprep.subr.bf16.mxu0 0
          %2319 = vmatpush1.bf16.msra.mxu0 0
          %2320 = vmatprep.subr.bf16.mxu0 0
          %2321 = vmatpush1.bf16.msra.mxu0 0
          %2322 = vmatprep.subr.bf16.mxu0 0
          %2323 = vmatpush1.bf16.msra.mxu0 0
          %2324 = vmatprep.mubr.bf16.mxu0 0
          %2325 = vmatmul.mubr.bf16.gmra.mrb[0].mxu0 %v2212
          %v2326 = vpop.f32.mrb[0].mxu0
          %v2327 = vadd.f32 %v2022, %v2326
          %v2328 = vpop.f32.mrb[0].mxu0
          %v2329 = vpop.f32.mrb[0].mxu0
          %v2330 = vadd.f32 %v2025, %v2329
          %v2331 = vpop.f32.mrb[0].mxu0
          %2332 = vmatprep.mubr.bf16.mxu0 0
          %2333 = vmatmul.mubr.bf16.gmra.mrb[0].mxu0 %v2213
          %v2334 = vpop.f32.mrb[0].mxu0
          %v2335 = vadd.f32 %v2030, %v2334
          %v2336 = vpop.f32.mrb[0].mxu0
          %v2337 = vpop.f32.mrb[0].mxu0
          %v2338 = vadd.f32 %v2033, %v2337
          %v2339 = vpop.f32.mrb[0].mxu0
          %2340 = vmatprep.mubr.bf16.mxu0 0
          %2341 = vmatmul.mubr.bf16.gmra.mrb[0].mxu0 %v2214
          %v2342 = vpop.f32.mrb[0].mxu0
          %v2343 = vadd.f32 %v2038, %v2342
          %v2344 = vpop.f32.mrb[0].mxu0
          %v2345 = vpop.f32.mrb[0].mxu0
          %v2346 = vadd.f32 %v2041, %v2345
          %v2347 = vpop.f32.mrb[0].mxu0
          %2348 = vmatprep.mubr.bf16.mxu0 0
          %2349 = vmatmul.mubr.bf16.gmra.mrb[0].mxu0 %v2215
          %v2350 = vpop.f32.mrb[0].mxu0
          %v2351 = vadd.f32 %v2046, %v2350
          %v2352 = vpop.f32.mrb[0].mxu0
          %v2353 = vpop.f32.mrb[0].mxu0
          %v2354 = vadd.f32 %v2049, %v2353
          %v2355 = vpop.f32.mrb[0].mxu0
          %2356 = vmatprep.mubr.bf16.mxu0 0
          %2357 = vmatmul.mubr.bf16.gmra.mrb[0].mxu0 %v2216
          %v2358 = vpop.f32.mrb[0].mxu0
          %v2359 = vadd.f32 %v2054, %v2358
          %v2360 = vpop.f32.mrb[0].mxu0
          %v2361 = vpop.f32.mrb[0].mxu0
          %v2362 = vadd.f32 %v2057, %v2361
          %v2363 = vpop.f32.mrb[0].mxu0
          %2364 = vmatprep.mubr.bf16.mxu0 0
          %2365 = vmatmul.mubr.bf16.gmra.mrb[0].mxu0 %v2217
          %v2366 = vpop.f32.mrb[0].mxu0
          %v2367 = vadd.f32 %v2062, %v2366
          %v2368 = vpop.f32.mrb[0].mxu0
          %v2369 = vpop.f32.mrb[0].mxu0
          %v2370 = vadd.f32 %v2065, %v2369
          %v2371 = vpop.f32.mrb[0].mxu0
          %2372 = vmatprep.mubr.bf16.mxu0 0
          %2373 = vmatmul.mubr.bf16.gmra.mrb[0].mxu0 %v2218
          %v2374 = vpop.f32.mrb[0].mxu0
          %v2375 = vadd.f32 %v2070, %v2374
          %v2376 = vpop.f32.mrb[0].mxu0
          %v2377 = vpop.f32.mrb[0].mxu0
          %v2378 = vadd.f32 %v2073, %v2377
          %v2379 = vpop.f32.mrb[0].mxu0
          %2380 = vmatprep.mubr.bf16.mxu0 0
          %2381 = vmatmul.mubr.bf16.gmra.mrb[0].mxu0 %v2219
          %v2382 = vpop.f32.mrb[0].mxu0
          %v2383 = vadd.f32 %v2078, %v2382
          %v2384 = vpop.f32.mrb[0].mxu0
          %v2385 = vpop.f32.mrb[0].mxu0
          %v2386 = vadd.f32 %v2081, %v2385
          %v2387 = vpop.f32.mrb[0].mxu0
          %2388 = vmatprep.mubr.bf16.mxu0 0
          %2389 = vmatmul.mubr.bf16.gmra.mrb[0].mxu0 %v2220
          %v2390 = vpop.f32.mrb[0].mxu0
          %v2391 = vadd.f32 %v2086, %v2390
          %v2392 = vpop.f32.mrb[0].mxu0
          %v2393 = vpop.f32.mrb[0].mxu0
          %v2394 = vadd.f32 %v2089, %v2393
          %v2395 = vpop.f32.mrb[0].mxu0
          %2396 = vmatprep.mubr.bf16.mxu0 0
          %2397 = vmatmul.mubr.bf16.gmra.mrb[0].mxu0 %v2221
          %v2398 = vpop.f32.mrb[0].mxu0
          %v2399 = vadd.f32 %v2094, %v2398
          %v2400 = vpop.f32.mrb[0].mxu0
          %v2401 = vpop.f32.mrb[0].mxu0
          %v2402 = vadd.f32 %v2097, %v2401
          %v2403 = vpop.f32.mrb[0].mxu0
          %2404 = vmatprep.mubr.bf16.mxu0 0
          %2405 = vmatmul.mubr.bf16.gmra.mrb[0].mxu0 %v2222
          %v2406 = vpop.f32.mrb[0].mxu0
          %v2407 = vadd.f32 %v2102, %v2406
          %v2408 = vpop.f32.mrb[0].mxu0
          %v2409 = vpop.f32.mrb[0].mxu0
          %v2410 = vadd.f32 %v2105, %v2409
          %v2411 = vpop.f32.mrb[0].mxu0
          %2412 = vmatprep.mubr.bf16.mxu0 0
          %2413 = vmatmul.mubr.bf16.gmra.mrb[0].mxu0 %v2223
          %v2414 = vpop.f32.mrb[0].mxu0
          %v2415 = vadd.f32 %v2110, %v2414
          %v2416 = vpop.f32.mrb[0].mxu0
          %v2417 = vpop.f32.mrb[0].mxu0
          %v2418 = vadd.f32 %v2113, %v2417
          %v2419 = vpop.f32.mrb[0].mxu0
          %2420 = vmatprep.mubr.bf16.mxu0 0
          %2421 = vmatmul.mubr.bf16.gmra.mrb[0].mxu0 %v2224
          %v2422 = vpop.f32.mrb[0].mxu0
          %v2423 = vadd.f32 %v2118, %v2422
          %v2424 = vpop.f32.mrb[0].mxu0
          %v2425 = vpop.f32.mrb[0].mxu0
          %v2426 = vadd.f32 %v2121, %v2425
          %v2427 = vpop.f32.mrb[0].mxu0
          %2428 = vmatprep.mubr.bf16.mxu0 0
          %2429 = vmatmul.mubr.bf16.gmra.mrb[0].mxu0 %v2225
          %v2430 = vpop.f32.mrb[0].mxu0
          %v2431 = vadd.f32 %v2126, %v2430
          %v2432 = vpop.f32.mrb[0].mxu0
          %v2433 = vpop.f32.mrb[0].mxu0
          %v2434 = vadd.f32 %v2129, %v2433
          %v2435 = vpop.f32.mrb[0].mxu0
          %2436 = vmatprep.mubr.bf16.mxu0 0
          %2437 = vmatmul.mubr.bf16.gmra.mrb[0].mxu0 %v2226
          %v2438 = vpop.f32.mrb[0].mxu0
          %v2439 = vadd.f32 %v2134, %v2438
          %v2440 = vpop.f32.mrb[0].mxu0
          %v2441 = vpop.f32.mrb[0].mxu0
          %v2442 = vadd.f32 %v2137, %v2441
          %v2443 = vpop.f32.mrb[0].mxu0
          %2444 = vmatprep.mubr.bf16.mxu0 0
          %2445 = vmatmul.mubr.bf16.gmra.mrb[0].mxu0 %v2227
          %v2446 = vpop.f32.mrb[0].mxu0
          %v2447 = vadd.f32 %v2142, %v2446
          %v2448 = vpop.f32.mrb[0].mxu0
          %v2449 = vpop.f32.mrb[0].mxu0
          %v2450 = vadd.f32 %v2145, %v2449
          %v2451 = vpop.f32.mrb[0].mxu0
          %2452 = vdwg.mxu0
          %v2453 = vld [vmem:[%s5] sm:$0x1]
          %v2455 = vlaneseq
          %v2456 = vshrl.u32 %v2455, 7
          %v2457 = vsub.s32 0, %v2456
          %v2458 = vrot.slane %v2453, %v2457
          %v2460 = vadd.f32 %v2327, %v2458
          %v2461 = vadd.f32 %v2330, %v2458
          %v2462 = vadd.f32 %v2335, %v2458
          %v2463 = vadd.f32 %v2338, %v2458
          %v2464 = vadd.f32 %v2343, %v2458
          %v2465 = vadd.f32 %v2346, %v2458
          %v2466 = vadd.f32 %v2351, %v2458
          %v2467 = vadd.f32 %v2354, %v2458
          %v2468 = vadd.f32 %v2359, %v2458
          %v2469 = vadd.f32 %v2362, %v2458
          %v2470 = vadd.f32 %v2367, %v2458
          %v2471 = vadd.f32 %v2370, %v2458
          %v2472 = vadd.f32 %v2375, %v2458
          %v2473 = vadd.f32 %v2378, %v2458
          %v2474 = vadd.f32 %v2383, %v2458
          %v2475 = vadd.f32 %v2386, %v2458
          %v2476 = vadd.f32 %v2391, %v2458
          %v2477 = vadd.f32 %v2394, %v2458
          %v2478 = vadd.f32 %v2399, %v2458
          %v2479 = vadd.f32 %v2402, %v2458
          %v2480 = vadd.f32 %v2407, %v2458
          %v2481 = vadd.f32 %v2410, %v2458
          %v2482 = vadd.f32 %v2415, %v2458
          %v2483 = vadd.f32 %v2418, %v2458
          %v2484 = vadd.f32 %v2423, %v2458
          %v2485 = vadd.f32 %v2426, %v2458
          %v2486 = vadd.f32 %v2431, %v2458
          %v2487 = vadd.f32 %v2434, %v2458
          %v2488 = vadd.f32 %v2439, %v2458
          %v2489 = vadd.f32 %v2442, %v2458
          %v2490 = vadd.f32 %v2447, %v2458
          %v2491 = vadd.f32 %v2450, %v2458
          %v2492 = vmax.f32 %v2460, 0.0
          %v2493 = vmax.f32 %v2461, 0.0
          %v2494 = vmax.f32 %v2462, 0.0
          %v2495 = vmax.f32 %v2463, 0.0
          %v2496 = vmax.f32 %v2464, 0.0
          %v2497 = vmax.f32 %v2465, 0.0
          %v2498 = vmax.f32 %v2466, 0.0
          %v2499 = vmax.f32 %v2467, 0.0
          %v2500 = vmax.f32 %v2468, 0.0
          %v2501 = vmax.f32 %v2469, 0.0
          %v2502 = vmax.f32 %v2470, 0.0
          %v2503 = vmax.f32 %v2471, 0.0
          %v2504 = vmax.f32 %v2472, 0.0
          %v2505 = vmax.f32 %v2473, 0.0
          %v2506 = vmax.f32 %v2474, 0.0
          %v2507 = vmax.f32 %v2475, 0.0
          %v2508 = vmax.f32 %v2476, 0.0
          %v2509 = vmax.f32 %v2477, 0.0
          %v2510 = vmax.f32 %v2478, 0.0
          %v2511 = vmax.f32 %v2479, 0.0
          %v2512 = vmax.f32 %v2480, 0.0
          %v2513 = vmax.f32 %v2481, 0.0
          %v2514 = vmax.f32 %v2482, 0.0
          %v2515 = vmax.f32 %v2483, 0.0
          %v2516 = vmax.f32 %v2484, 0.0
          %v2517 = vmax.f32 %v2485, 0.0
          %v2518 = vmax.f32 %v2486, 0.0
          %v2519 = vmax.f32 %v2487, 0.0
          %v2520 = vmax.f32 %v2488, 0.0
          %v2521 = vmax.f32 %v2489, 0.0
          %v2522 = vmax.f32 %v2490, 0.0
          %v2523 = vmax.f32 %v2491, 0.0
          %v2524 = vlaneseq
          %v2525 = vand.u32 %v2524, 127
          %vm2526 = vcmp.lt.s32.totalorder %v2525, 32
          %v2527 = vsel %vm2526, 1, 0
          %v2528 = vcvt.s32.f32 %v2527
          %2529 = vadd.xlane.f32.xlu0 %v2492
          %v2530 = vpop.xlane.xlu0 %2529
          %2531 = vadd.xlane.f32.xlu0 %v2493
          %v2532 = vpop.xlane.xlu0 %2531
          %2533 = vadd.xlane.f32.xlu0 %v2494
          %v2534 = vpop.xlane.xlu0 %2533
          %2535 = vadd.xlane.f32.xlu0 %v2495
          %v2536 = vpop.xlane.xlu0 %2535
          %2537 = vadd.xlane.f32.xlu0 %v2496
          %v2538 = vpop.xlane.xlu0 %2537
          %2539 = vadd.xlane.f32.xlu0 %v2497
          %v2540 = vpop.xlane.xlu0 %2539
          %2541 = vadd.xlane.f32.xlu0 %v2498
          %v2542 = vpop.xlane.xlu0 %2541
          %2543 = vadd.xlane.f32.xlu0 %v2499
          %v2544 = vpop.xlane.xlu0 %2543
          %2545 = vadd.xlane.f32.xlu0 %v2500
          %v2546 = vpop.xlane.xlu0 %2545
          %2547 = vadd.xlane.f32.xlu0 %v2501
          %v2548 = vpop.xlane.xlu0 %2547
          %2549 = vadd.xlane.f32.xlu0 %v2502
          %v2550 = vpop.xlane.xlu0 %2549
          %2551 = vadd.xlane.f32.xlu0 %v2503
          %v2552 = vpop.xlane.xlu0 %2551
          %2553 = vadd.xlane.f32.xlu0 %v2504
          %v2554 = vpop.xlane.xlu0 %2553
          %2555 = vadd.xlane.f32.xlu0 %v2505
          %v2556 = vpop.xlane.xlu0 %2555
          %2557 = vadd.xlane.f32.xlu0 %v2506
          %v2558 = vpop.xlane.xlu0 %2557
          %2559 = vadd.xlane.f32.xlu0 %v2507
          %v2560 = vpop.xlane.xlu0 %2559
          %2561 = vadd.xlane.f32.xlu0 %v2508
          %v2562 = vpop.xlane.xlu0 %2561
          %2563 = vadd.xlane.f32.xlu0 %v2509
          %v2564 = vpop.xlane.xlu0 %2563
          %2565 = vadd.xlane.f32.xlu0 %v2510
          %v2566 = vpop.xlane.xlu0 %2565
          %2567 = vadd.xlane.f32.xlu0 %v2511
          %v2568 = vpop.xlane.xlu0 %2567
          %2569 = vadd.xlane.f32.xlu0 %v2512
          %v2570 = vpop.xlane.xlu0 %2569
          %2571 = vadd.xlane.f32.xlu0 %v2513
          %v2572 = vpop.xlane.xlu0 %2571
          %2573 = vadd.xlane.f32.xlu0 %v2514
          %v2574 = vpop.xlane.xlu0 %2573
          %2575 = vadd.xlane.f32.xlu0 %v2515
          %v2576 = vpop.xlane.xlu0 %2575
          %2577 = vadd.xlane.f32.xlu0 %v2516
          %v2578 = vpop.xlane.xlu0 %2577
          %2579 = vadd.xlane.f32.xlu0 %v2517
          %v2580 = vpop.xlane.xlu0 %2579
          %2581 = vadd.xlane.f32.xlu0 %v2518
          %v2582 = vpop.xlane.xlu0 %2581
          %2583 = vadd.xlane.f32.xlu0 %v2519
          %v2584 = vpop.xlane.xlu0 %2583
          %2585 = vadd.xlane.f32.xlu0 %v2520
          %v2586 = vpop.xlane.xlu0 %2585
          %2587 = vadd.xlane.f32.xlu0 %v2521
          %v2588 = vpop.xlane.xlu0 %2587
          %2589 = vadd.xlane.f32.xlu0 %v2522
          %v2590 = vpop.xlane.xlu0 %2589
          %2591 = vadd.xlane.f32.xlu0 %v2523
          %v2592 = vpop.xlane.xlu0 %2591
          %v2593 = vmul.f32 %v2530, 0.03125
          %v2594 = vmul.f32 %v2532, 0.03125
          %v2595 = vmul.f32 %v2534, 0.03125
          %v2596 = vmul.f32 %v2536, 0.03125
          %v2597 = vmul.f32 %v2538, 0.03125
          %v2598 = vmul.f32 %v2540, 0.03125
          %v2599 = vmul.f32 %v2542, 0.03125
          %v2600 = vmul.f32 %v2544, 0.03125
          %v2601 = vmul.f32 %v2546, 0.03125
          %v2602 = vmul.f32 %v2548, 0.03125
          %v2603 = vmul.f32 %v2550, 0.03125
          %v2604 = vmul.f32 %v2552, 0.03125
          %v2605 = vmul.f32 %v2554, 0.03125
          %v2606 = vmul.f32 %v2556, 0.03125
          %v2607 = vmul.f32 %v2558, 0.03125
          %v2608 = vmul.f32 %v2560, 0.03125
          %v2609 = vmul.f32 %v2562, 0.03125
          %v2610 = vmul.f32 %v2564, 0.03125
          %v2611 = vmul.f32 %v2566, 0.03125
          %v2612 = vmul.f32 %v2568, 0.03125
          %v2613 = vmul.f32 %v2570, 0.03125
          %v2614 = vmul.f32 %v2572, 0.03125
          %v2615 = vmul.f32 %v2574, 0.03125
          %v2616 = vmul.f32 %v2576, 0.03125
          %v2617 = vmul.f32 %v2578, 0.03125
          %v2618 = vmul.f32 %v2580, 0.03125
          %v2619 = vmul.f32 %v2582, 0.03125
          %v2620 = vmul.f32 %v2584, 0.03125
          %v2621 = vmul.f32 %v2586, 0.03125
          %v2622 = vmul.f32 %v2588, 0.03125
          %v2623 = vmul.f32 %v2590, 0.03125
          %v2624 = vmul.f32 %v2592, 0.03125
          %v2625 = vsub.f32 %v2492, %v2593
          %v2626 = vsub.f32 %v2493, %v2594
          %v2627 = vsub.f32 %v2494, %v2595
          %v2628 = vsub.f32 %v2495, %v2596
          %v2629 = vsub.f32 %v2496, %v2597
          %v2630 = vsub.f32 %v2497, %v2598
          %v2631 = vsub.f32 %v2498, %v2599
          %v2632 = vsub.f32 %v2499, %v2600
          %v2633 = vsub.f32 %v2500, %v2601
          %v2634 = vsub.f32 %v2501, %v2602
          %v2635 = vsub.f32 %v2502, %v2603
          %v2636 = vsub.f32 %v2503, %v2604
          %v2637 = vsub.f32 %v2504, %v2605
          %v2638 = vsub.f32 %v2505, %v2606
          %v2639 = vsub.f32 %v2506, %v2607
          %v2640 = vsub.f32 %v2507, %v2608
          %v2641 = vsub.f32 %v2508, %v2609
          %v2642 = vsub.f32 %v2509, %v2610
          %v2643 = vsub.f32 %v2510, %v2611
          %v2644 = vsub.f32 %v2511, %v2612
          %v2645 = vsub.f32 %v2512, %v2613
          %v2646 = vsub.f32 %v2513, %v2614
          %v2647 = vsub.f32 %v2514, %v2615
          %v2648 = vsub.f32 %v2515, %v2616
          %v2649 = vsub.f32 %v2516, %v2617
          %v2650 = vsub.f32 %v2517, %v2618
          %v2651 = vsub.f32 %v2518, %v2619
          %v2652 = vsub.f32 %v2519, %v2620
          %v2653 = vsub.f32 %v2520, %v2621
          %v2654 = vsub.f32 %v2521, %v2622
          %v2655 = vsub.f32 %v2522, %v2623
          %v2656 = vsub.f32 %v2523, %v2624
          %v2657 = vmul.f32 %v2625, %v2625
          %v2658 = vmul.f32 %v2626, %v2626
          %v2659 = vmul.f32 %v2627, %v2627
          %v2660 = vmul.f32 %v2628, %v2628
          %v2661 = vmul.f32 %v2629, %v2629
          %v2662 = vmul.f32 %v2630, %v2630
          %v2663 = vmul.f32 %v2631, %v2631
          %v2664 = vmul.f32 %v2632, %v2632
          %v2665 = vmul.f32 %v2633, %v2633
          %v2666 = vmul.f32 %v2634, %v2634
          %v2667 = vmul.f32 %v2635, %v2635
          %v2668 = vmul.f32 %v2636, %v2636
          %v2669 = vmul.f32 %v2637, %v2637
          %v2670 = vmul.f32 %v2638, %v2638
          %v2671 = vmul.f32 %v2639, %v2639
          %v2672 = vmul.f32 %v2640, %v2640
          %v2673 = vmul.f32 %v2641, %v2641
          %v2674 = vmul.f32 %v2642, %v2642
          %v2675 = vmul.f32 %v2643, %v2643
          %v2676 = vmul.f32 %v2644, %v2644
          %v2677 = vmul.f32 %v2645, %v2645
          %v2678 = vmul.f32 %v2646, %v2646
          %v2679 = vmul.f32 %v2647, %v2647
          %v2680 = vmul.f32 %v2648, %v2648
          %v2681 = vmul.f32 %v2649, %v2649
          %v2682 = vmul.f32 %v2650, %v2650
          %v2683 = vmul.f32 %v2651, %v2651
          %v2684 = vmul.f32 %v2652, %v2652
          %v2685 = vmul.f32 %v2653, %v2653
          %v2686 = vmul.f32 %v2654, %v2654
          %v2687 = vmul.f32 %v2655, %v2655
          %v2688 = vmul.f32 %v2656, %v2656
          %v2689 = vmul.f32 %v2657, %v2528
          %v2690 = vmul.f32 %v2658, %v2528
          %v2691 = vmul.f32 %v2659, %v2528
          %v2692 = vmul.f32 %v2660, %v2528
          %v2693 = vmul.f32 %v2661, %v2528
          %v2694 = vmul.f32 %v2662, %v2528
          %v2695 = vmul.f32 %v2663, %v2528
          %v2696 = vmul.f32 %v2664, %v2528
          %v2697 = vmul.f32 %v2665, %v2528
          %v2698 = vmul.f32 %v2666, %v2528
          %v2699 = vmul.f32 %v2667, %v2528
          %v2700 = vmul.f32 %v2668, %v2528
          %v2701 = vmul.f32 %v2669, %v2528
          %v2702 = vmul.f32 %v2670, %v2528
          %v2703 = vmul.f32 %v2671, %v2528
          %v2704 = vmul.f32 %v2672, %v2528
          %v2705 = vmul.f32 %v2673, %v2528
          %v2706 = vmul.f32 %v2674, %v2528
          %v2707 = vmul.f32 %v2675, %v2528
          %v2708 = vmul.f32 %v2676, %v2528
          %v2709 = vmul.f32 %v2677, %v2528
          %v2710 = vmul.f32 %v2678, %v2528
          %v2711 = vmul.f32 %v2679, %v2528
          %v2712 = vmul.f32 %v2680, %v2528
          %v2713 = vmul.f32 %v2681, %v2528
          %v2714 = vmul.f32 %v2682, %v2528
          %v2715 = vmul.f32 %v2683, %v2528
          %v2716 = vmul.f32 %v2684, %v2528
          %v2717 = vmul.f32 %v2685, %v2528
          %v2718 = vmul.f32 %v2686, %v2528
          %v2719 = vmul.f32 %v2687, %v2528
          %v2720 = vmul.f32 %v2688, %v2528
          %2721 = vadd.xlane.f32.xlu0 %v2689
          %v2722 = vpop.xlane.xlu0 %2721
          %2723 = vadd.xlane.f32.xlu0 %v2690
          %v2724 = vpop.xlane.xlu0 %2723
          %2725 = vadd.xlane.f32.xlu0 %v2691
          %v2726 = vpop.xlane.xlu0 %2725
          %2727 = vadd.xlane.f32.xlu0 %v2692
          %v2728 = vpop.xlane.xlu0 %2727
          %2729 = vadd.xlane.f32.xlu0 %v2693
          %v2730 = vpop.xlane.xlu0 %2729
          %2731 = vadd.xlane.f32.xlu0 %v2694
          %v2732 = vpop.xlane.xlu0 %2731
          %2733 = vadd.xlane.f32.xlu0 %v2695
          %v2734 = vpop.xlane.xlu0 %2733
          %2735 = vadd.xlane.f32.xlu0 %v2696
          %v2736 = vpop.xlane.xlu0 %2735
          %2737 = vadd.xlane.f32.xlu0 %v2697
          %v2738 = vpop.xlane.xlu0 %2737
          %2739 = vadd.xlane.f32.xlu0 %v2698
          %v2740 = vpop.xlane.xlu0 %2739
          %2741 = vadd.xlane.f32.xlu0 %v2699
          %v2742 = vpop.xlane.xlu0 %2741
          %2743 = vadd.xlane.f32.xlu0 %v2700
          %v2744 = vpop.xlane.xlu0 %2743
          %2745 = vadd.xlane.f32.xlu0 %v2701
          %v2746 = vpop.xlane.xlu0 %2745
          %2747 = vadd.xlane.f32.xlu0 %v2702
          %v2748 = vpop.xlane.xlu0 %2747
          %2749 = vadd.xlane.f32.xlu0 %v2703
          %v2750 = vpop.xlane.xlu0 %2749
          %2751 = vadd.xlane.f32.xlu0 %v2704
          %v2752 = vpop.xlane.xlu0 %2751
          %2753 = vadd.xlane.f32.xlu0 %v2705
          %v2754 = vpop.xlane.xlu0 %2753
          %2755 = vadd.xlane.f32.xlu0 %v2706
          %v2756 = vpop.xlane.xlu0 %2755
          %2757 = vadd.xlane.f32.xlu0 %v2707
          %v2758 = vpop.xlane.xlu0 %2757
          %2759 = vadd.xlane.f32.xlu0 %v2708
          %v2760 = vpop.xlane.xlu0 %2759
          %2761 = vadd.xlane.f32.xlu0 %v2709
          %v2762 = vpop.xlane.xlu0 %2761
          %2763 = vadd.xlane.f32.xlu0 %v2710
          %v2764 = vpop.xlane.xlu0 %2763
          %2765 = vadd.xlane.f32.xlu0 %v2711
          %v2766 = vpop.xlane.xlu0 %2765
          %2767 = vadd.xlane.f32.xlu0 %v2712
          %v2768 = vpop.xlane.xlu0 %2767
          %2769 = vadd.xlane.f32.xlu0 %v2713
          %v2770 = vpop.xlane.xlu0 %2769
          %2771 = vadd.xlane.f32.xlu0 %v2714
          %v2772 = vpop.xlane.xlu0 %2771
          %2773 = vadd.xlane.f32.xlu0 %v2715
          %v2774 = vpop.xlane.xlu0 %2773
          %2775 = vadd.xlane.f32.xlu0 %v2716
          %v2776 = vpop.xlane.xlu0 %2775
          %2777 = vadd.xlane.f32.xlu0 %v2717
          %v2778 = vpop.xlane.xlu0 %2777
          %2779 = vadd.xlane.f32.xlu0 %v2718
          %v2780 = vpop.xlane.xlu0 %2779
          %2781 = vadd.xlane.f32.xlu0 %v2719
          %v2782 = vpop.xlane.xlu0 %2781
          %2783 = vadd.xlane.f32.xlu0 %v2720
          %v2784 = vpop.xlane.xlu0 %2783
          %v2785 = vmul.f32 %v2722, 0.03125
          %v2786 = vmul.f32 %v2724, 0.03125
          %v2787 = vmul.f32 %v2726, 0.03125
          %v2788 = vmul.f32 %v2728, 0.03125
          %v2789 = vmul.f32 %v2730, 0.03125
          %v2790 = vmul.f32 %v2732, 0.03125
          %v2791 = vmul.f32 %v2734, 0.03125
          %v2792 = vmul.f32 %v2736, 0.03125
          %v2793 = vmul.f32 %v2738, 0.03125
          %v2794 = vmul.f32 %v2740, 0.03125
          %v2795 = vmul.f32 %v2742, 0.03125
          %v2796 = vmul.f32 %v2744, 0.03125
          %v2797 = vmul.f32 %v2746, 0.03125
          %v2798 = vmul.f32 %v2748, 0.03125
          %v2799 = vmul.f32 %v2750, 0.03125
          %v2800 = vmul.f32 %v2752, 0.03125
          %v2801 = vmul.f32 %v2754, 0.03125
          %v2802 = vmul.f32 %v2756, 0.03125
          %v2803 = vmul.f32 %v2758, 0.03125
          %v2804 = vmul.f32 %v2760, 0.03125
          %v2805 = vmul.f32 %v2762, 0.03125
          %v2806 = vmul.f32 %v2764, 0.03125
          %v2807 = vmul.f32 %v2766, 0.03125
          %v2808 = vmul.f32 %v2768, 0.03125
          %v2809 = vmul.f32 %v2770, 0.03125
          %v2810 = vmul.f32 %v2772, 0.03125
          %v2811 = vmul.f32 %v2774, 0.03125
          %v2812 = vmul.f32 %v2776, 0.03125
          %v2813 = vmul.f32 %v2778, 0.03125
          %v2814 = vmul.f32 %v2780, 0.03125
          %v2815 = vmul.f32 %v2782, 0.03125
          %v2816 = vmul.f32 %v2784, 0.03125
          %v2817 = vadd.f32 %v2785, 1e-05
          %v2818 = vadd.f32 %v2786, 1e-05
          %v2819 = vadd.f32 %v2787, 1e-05
          %v2820 = vadd.f32 %v2788, 1e-05
          %v2821 = vadd.f32 %v2789, 1e-05
          %v2822 = vadd.f32 %v2790, 1e-05
          %v2823 = vadd.f32 %v2791, 1e-05
          %v2824 = vadd.f32 %v2792, 1e-05
          %v2825 = vadd.f32 %v2793, 1e-05
          %v2826 = vadd.f32 %v2794, 1e-05
          %v2827 = vadd.f32 %v2795, 1e-05
          %v2828 = vadd.f32 %v2796, 1e-05
          %v2829 = vadd.f32 %v2797, 1e-05
          %v2830 = vadd.f32 %v2798, 1e-05
          %v2831 = vadd.f32 %v2799, 1e-05
          %v2832 = vadd.f32 %v2800, 1e-05
          %v2833 = vadd.f32 %v2801, 1e-05
          %v2834 = vadd.f32 %v2802, 1e-05
          %v2835 = vadd.f32 %v2803, 1e-05
          %v2836 = vadd.f32 %v2804, 1e-05
          %v2837 = vadd.f32 %v2805, 1e-05
          %v2838 = vadd.f32 %v2806, 1e-05
          %v2839 = vadd.f32 %v2807, 1e-05
          %v2840 = vadd.f32 %v2808, 1e-05
          %v2841 = vadd.f32 %v2809, 1e-05
          %v2842 = vadd.f32 %v2810, 1e-05
          %v2843 = vadd.f32 %v2811, 1e-05
          %v2844 = vadd.f32 %v2812, 1e-05
          %v2845 = vadd.f32 %v2813, 1e-05
          %v2846 = vadd.f32 %v2814, 1e-05
          %v2847 = vadd.f32 %v2815, 1e-05
          %v2848 = vadd.f32 %v2816, 1e-05
          %v2849 = vrsqrt.pop %v2817
          %v2850 = vrsqrt.pop %v2818
          %v2851 = vrsqrt.pop %v2819
          %v2852 = vrsqrt.pop %v2820
          %v2853 = vrsqrt.pop %v2821
          %v2854 = vrsqrt.pop %v2822
          %v2855 = vrsqrt.pop %v2823
          %v2856 = vrsqrt.pop %v2824
          %v2857 = vrsqrt.pop %v2825
          %v2858 = vrsqrt.pop %v2826
          %v2859 = vrsqrt.pop %v2827
          %v2860 = vrsqrt.pop %v2828
          %v2861 = vrsqrt.pop %v2829
          %v2862 = vrsqrt.pop %v2830
          %v2863 = vrsqrt.pop %v2831
          %v2864 = vrsqrt.pop %v2832
          %v2865 = vrsqrt.pop %v2833
          %v2866 = vrsqrt.pop %v2834
          %v2867 = vrsqrt.pop %v2835
          %v2868 = vrsqrt.pop %v2836
          %v2869 = vrsqrt.pop %v2837
          %v2870 = vrsqrt.pop %v2838
          %v2871 = vrsqrt.pop %v2839
          %v2872 = vrsqrt.pop %v2840
          %v2873 = vrsqrt.pop %v2841
          %v2874 = vrsqrt.pop %v2842
          %v2875 = vrsqrt.pop %v2843
          %v2876 = vrsqrt.pop %v2844
          %v2877 = vrsqrt.pop %v2845
          %v2878 = vrsqrt.pop %v2846
          %v2879 = vrsqrt.pop %v2847
          %v2880 = vrsqrt.pop %v2848
          %v2881 = vmul.f32 %v2625, %v2849
          %v2882 = vmul.f32 %v2626, %v2850
          %v2883 = vmul.f32 %v2627, %v2851
          %v2884 = vmul.f32 %v2628, %v2852
          %v2885 = vmul.f32 %v2629, %v2853
          %v2886 = vmul.f32 %v2630, %v2854
          %v2887 = vmul.f32 %v2631, %v2855
          %v2888 = vmul.f32 %v2632, %v2856
          %v2889 = vmul.f32 %v2633, %v2857
          %v2890 = vmul.f32 %v2634, %v2858
          %v2891 = vmul.f32 %v2635, %v2859
          %v2892 = vmul.f32 %v2636, %v2860
          %v2893 = vmul.f32 %v2637, %v2861
          %v2894 = vmul.f32 %v2638, %v2862
          %v2895 = vmul.f32 %v2639, %v2863
          %v2896 = vmul.f32 %v2640, %v2864
          %v2897 = vmul.f32 %v2641, %v2865
          %v2898 = vmul.f32 %v2642, %v2866
          %v2899 = vmul.f32 %v2643, %v2867
          %v2900 = vmul.f32 %v2644, %v2868
          %v2901 = vmul.f32 %v2645, %v2869
          %v2902 = vmul.f32 %v2646, %v2870
          %v2903 = vmul.f32 %v2647, %v2871
          %v2904 = vmul.f32 %v2648, %v2872
          %v2905 = vmul.f32 %v2649, %v2873
          %v2906 = vmul.f32 %v2650, %v2874
          %v2907 = vmul.f32 %v2651, %v2875
          %v2908 = vmul.f32 %v2652, %v2876
          %v2909 = vmul.f32 %v2653, %v2877
          %v2910 = vmul.f32 %v2654, %v2878
          %v2911 = vmul.f32 %v2655, %v2879
          %v2912 = vmul.f32 %v2656, %v2880
          %v2913 = vld [vmem:[%s6] sm:$0x1]
          %v2915 = vlaneseq
          %v2916 = vshrl.u32 %v2915, 7
          %v2917 = vsub.s32 0, %v2916
          %v2918 = vrot.slane %v2913, %v2917
          %v2920 = vmul.f32 %v2881, %v2918
          %v2921 = vmul.f32 %v2882, %v2918
          %v2922 = vmul.f32 %v2883, %v2918
          %v2923 = vmul.f32 %v2884, %v2918
          %v2924 = vmul.f32 %v2885, %v2918
          %v2925 = vmul.f32 %v2886, %v2918
          %v2926 = vmul.f32 %v2887, %v2918
          %v2927 = vmul.f32 %v2888, %v2918
          %v2928 = vmul.f32 %v2889, %v2918
          %v2929 = vmul.f32 %v2890, %v2918
          %v2930 = vmul.f32 %v2891, %v2918
          %v2931 = vmul.f32 %v2892, %v2918
          %v2932 = vmul.f32 %v2893, %v2918
          %v2933 = vmul.f32 %v2894, %v2918
          %v2934 = vmul.f32 %v2895, %v2918
          %v2935 = vmul.f32 %v2896, %v2918
          %v2936 = vmul.f32 %v2897, %v2918
          %v2937 = vmul.f32 %v2898, %v2918
          %v2938 = vmul.f32 %v2899, %v2918
          %v2939 = vmul.f32 %v2900, %v2918
          %v2940 = vmul.f32 %v2901, %v2918
          %v2941 = vmul.f32 %v2902, %v2918
          %v2942 = vmul.f32 %v2903, %v2918
          %v2943 = vmul.f32 %v2904, %v2918
          %v2944 = vmul.f32 %v2905, %v2918
          %v2945 = vmul.f32 %v2906, %v2918
          %v2946 = vmul.f32 %v2907, %v2918
          %v2947 = vmul.f32 %v2908, %v2918
          %v2948 = vmul.f32 %v2909, %v2918
          %v2949 = vmul.f32 %v2910, %v2918
          %v2950 = vmul.f32 %v2911, %v2918
          %v2951 = vmul.f32 %v2912, %v2918
          %v2952 = vld [vmem:[%s7] sm:$0x1]
          %v2954 = vlaneseq
          %v2955 = vshrl.u32 %v2954, 7
          %v2956 = vsub.s32 0, %v2955
          %v2957 = vrot.slane %v2952, %v2956
          %v2959 = vadd.f32 %v2920, %v2957
          %v2960 = vadd.f32 %v2921, %v2957
          %v2961 = vadd.f32 %v2922, %v2957
          %v2962 = vadd.f32 %v2923, %v2957
          %v2963 = vadd.f32 %v2924, %v2957
          %v2964 = vadd.f32 %v2925, %v2957
          %v2965 = vadd.f32 %v2926, %v2957
          %v2966 = vadd.f32 %v2927, %v2957
          %v2967 = vadd.f32 %v2928, %v2957
          %v2968 = vadd.f32 %v2929, %v2957
          %v2969 = vadd.f32 %v2930, %v2957
          %v2970 = vadd.f32 %v2931, %v2957
          %v2971 = vadd.f32 %v2932, %v2957
          %v2972 = vadd.f32 %v2933, %v2957
          %v2973 = vadd.f32 %v2934, %v2957
          %v2974 = vadd.f32 %v2935, %v2957
          %v2975 = vadd.f32 %v2936, %v2957
          %v2976 = vadd.f32 %v2937, %v2957
          %v2977 = vadd.f32 %v2938, %v2957
          %v2978 = vadd.f32 %v2939, %v2957
          %v2979 = vadd.f32 %v2940, %v2957
          %v2980 = vadd.f32 %v2941, %v2957
          %v2981 = vadd.f32 %v2942, %v2957
          %v2982 = vadd.f32 %v2943, %v2957
          %v2983 = vadd.f32 %v2944, %v2957
          %v2984 = vadd.f32 %v2945, %v2957
          %v2985 = vadd.f32 %v2946, %v2957
          %v2986 = vadd.f32 %v2947, %v2957
          %v2987 = vadd.f32 %v2948, %v2957
          %v2988 = vadd.f32 %v2949, %v2957
          %v2989 = vadd.f32 %v2950, %v2957
          %v2990 = vadd.f32 %v2951, %v2957
          %v2991 = vpack.c.bf16 %v2960, %v2959
          %v2992 = vpack.c.bf16 %v2962, %v2961
          %v2993 = vpack.c.bf16 %v2964, %v2963
          %v2994 = vpack.c.bf16 %v2966, %v2965
          %v2995 = vpack.c.bf16 %v2968, %v2967
          %v2996 = vpack.c.bf16 %v2970, %v2969
          %v2997 = vpack.c.bf16 %v2972, %v2971
          %v2998 = vpack.c.bf16 %v2974, %v2973
          %v2999 = vpack.c.bf16 %v2976, %v2975
          %v3000 = vpack.c.bf16 %v2978, %v2977
          %v3001 = vpack.c.bf16 %v2980, %v2979
          %v3002 = vpack.c.bf16 %v2982, %v2981
          %v3003 = vpack.c.bf16 %v2984, %v2983
          %v3004 = vpack.c.bf16 %v2986, %v2985
          %v3005 = vpack.c.bf16 %v2988, %v2987
          %v3006 = vpack.c.bf16 %v2990, %v2989
          %v3023 = vunpack.c.l.b16 %v2991
          %v3024 = vunpack.c.h.b16 %v2991
          %v3025 = vunpack.c.l.b16 %v2992
          %v3026 = vunpack.c.h.b16 %v2992
          %v3027 = vunpack.c.l.b16 %v2993
          %v3028 = vunpack.c.h.b16 %v2993
          %v3029 = vunpack.c.l.b16 %v2994
          %v3030 = vunpack.c.h.b16 %v2994
          %v3031 = vunpack.c.l.b16 %v2995
          %v3032 = vunpack.c.h.b16 %v2995
          %v3033 = vunpack.c.l.b16 %v2996
          %v3034 = vunpack.c.h.b16 %v2996
          %v3035 = vunpack.c.l.b16 %v2997
          %v3036 = vunpack.c.h.b16 %v2997
          %v3037 = vunpack.c.l.b16 %v2998
          %v3038 = vunpack.c.h.b16 %v2998
          %v3039 = vunpack.c.l.b16 %v2999
          %v3040 = vunpack.c.h.b16 %v2999
          %v3041 = vunpack.c.l.b16 %v3000
          %v3042 = vunpack.c.h.b16 %v3000
          %v3043 = vunpack.c.l.b16 %v3001
          %v3044 = vunpack.c.h.b16 %v3001
          %v3045 = vunpack.c.l.b16 %v3002
          %v3046 = vunpack.c.h.b16 %v3002
          %v3047 = vunpack.c.l.b16 %v3003
          %v3048 = vunpack.c.h.b16 %v3003
          %v3049 = vunpack.c.l.b16 %v3004
          %v3050 = vunpack.c.h.b16 %v3004
          %v3051 = vunpack.c.l.b16 %v3005
          %v3052 = vunpack.c.h.b16 %v3005
          %v3053 = vunpack.c.l.b16 %v3006
          %v3054 = vunpack.c.h.b16 %v3006
          %v3055 = vpack.c.b16 %v3023, %v3023
          %v3056 = vpack.c.b16 %v3024, %v3024
          %v3057 = vpack.c.b16 %v3025, %v3025
          %v3058 = vpack.c.b16 %v3026, %v3026
          %v3059 = vpack.c.b16 %v3027, %v3027
          %v3060 = vpack.c.b16 %v3028, %v3028
          %v3061 = vpack.c.b16 %v3029, %v3029
          %v3062 = vpack.c.b16 %v3030, %v3030
          %v3063 = vpack.c.b16 %v3031, %v3031
          %v3064 = vpack.c.b16 %v3032, %v3032
          %v3065 = vpack.c.b16 %v3033, %v3033
          %v3066 = vpack.c.b16 %v3034, %v3034
          %v3067 = vpack.c.b16 %v3035, %v3035
          %v3068 = vpack.c.b16 %v3036, %v3036
          %v3069 = vpack.c.b16 %v3037, %v3037
          %v3070 = vpack.c.b16 %v3038, %v3038
          %v3071 = vpack.c.b16 %v3039, %v3039
          %v3072 = vpack.c.b16 %v3040, %v3040
          %v3073 = vpack.c.b16 %v3041, %v3041
          %v3074 = vpack.c.b16 %v3042, %v3042
          %v3075 = vpack.c.b16 %v3043, %v3043
          %v3076 = vpack.c.b16 %v3044, %v3044
          %v3077 = vpack.c.b16 %v3045, %v3045
          %v3078 = vpack.c.b16 %v3046, %v3046
          %v3079 = vpack.c.b16 %v3047, %v3047
          %v3080 = vpack.c.b16 %v3048, %v3048
          %v3081 = vpack.c.b16 %v3049, %v3049
          %v3082 = vpack.c.b16 %v3050, %v3050
          %v3083 = vpack.c.b16 %v3051, %v3051
          %v3084 = vpack.c.b16 %v3052, %v3052
          %v3085 = vpack.c.b16 %v3053, %v3053
          %v3086 = vpack.c.b16 %v3054, %v3054
          %3119 = vst [vmem:[%s492] sm:$0xf] %v3055
          %3120 = vst [vmem:[%s492 + $0x4] sm:$0xf] %v3056
          %3121 = vst [vmem:[%s492 + $0x8] sm:$0xf] %v3057
          %3122 = vst [vmem:[%s492 + $0xc] sm:$0xf] %v3058
          %3123 = vst [vmem:[%s492 + $0x10] sm:$0xf] %v3059
          %3124 = vst [vmem:[%s492 + $0x14] sm:$0xf] %v3060
          %3125 = vst [vmem:[%s492 + $0x18] sm:$0xf] %v3061
          %3126 = vst [vmem:[%s492 + $0x1c] sm:$0xf] %v3062
          %3127 = vst [vmem:[%s492 + $0x20] sm:$0xf] %v3063
          %3128 = vst [vmem:[%s492 + $0x24] sm:$0xf] %v3064
          %3129 = vst [vmem:[%s492 + $0x28] sm:$0xf] %v3065
          %3130 = vst [vmem:[%s492 + $0x2c] sm:$0xf] %v3066
          %3131 = vst [vmem:[%s492 + $0x30] sm:$0xf] %v3067
          %3132 = vst [vmem:[%s492 + $0x34] sm:$0xf] %v3068
          %3133 = vst [vmem:[%s492 + $0x38] sm:$0xf] %v3069
          %3134 = vst [vmem:[%s492 + $0x3c] sm:$0xf] %v3070
          %3135 = vst [vmem:[%s492 + $0x40] sm:$0xf] %v3071
          %3136 = vst [vmem:[%s492 + $0x44] sm:$0xf] %v3072
          %3137 = vst [vmem:[%s492 + $0x48] sm:$0xf] %v3073
          %3138 = vst [vmem:[%s492 + $0x4c] sm:$0xf] %v3074
          %3139 = vst [vmem:[%s492 + $0x50] sm:$0xf] %v3075
          %3140 = vst [vmem:[%s492 + $0x54] sm:$0xf] %v3076
          %3141 = vst [vmem:[%s492 + $0x58] sm:$0xf] %v3077
          %3142 = vst [vmem:[%s492 + $0x5c] sm:$0xf] %v3078
          %3143 = vst [vmem:[%s492 + $0x60] sm:$0xf] %v3079
          %3144 = vst [vmem:[%s492 + $0x64] sm:$0xf] %v3080
          %3145 = vst [vmem:[%s492 + $0x68] sm:$0xf] %v3081
          %3146 = vst [vmem:[%s492 + $0x6c] sm:$0xf] %v3082
          %3147 = vst [vmem:[%s492 + $0x70] sm:$0xf] %v3083
          %3148 = vst [vmem:[%s492 + $0x74] sm:$0xf] %v3084
          %3149 = vst [vmem:[%s492 + $0x78] sm:$0xf] %v3085
          %3150 = vst [vmem:[%s492 + $0x7c] sm:$0xf] %v3086
        $region83: #{graph_classification_forward.7} parent=70 // pred_fallthru
          _
        %s3151 = smul.u32 32, %s23
        %p3152 = scmp.lt.s32.totalorder %s3151, 127
        %s3153 = scalar_select %p3152, %s3151, 127
        %s3154 = smul.addr %s3153, 4
        %s3155 = scalar_lea.vmem %s8, %s3154
        // Predicated region
        $region84: #{graph_classification_forward.7} parent=70 // pred_check
          %p3156 = pneg %p229
        $region85: #{graph_classification_forward.7} parent=70 // pred_check_branch
          %3158 = sbr.rel (%p3156) target = $region87
        $region86: #{graph_classification_forward.7} parent=70 // pred_region
          %s3159 = smul.u32 32, %s23
        $region87: #{graph_classification_forward.7} parent=70 // pred_fallthru
          _
      $region71: #{graph_classification_forward.7} parent=5 // pred_fallthru
        _
      %p3160 = scmp.le.s32.totalorder 2, %s14
      // Predicated region
      $region88: #{graph_classification_forward.7} parent=5 // pred_check
        %p3161 = pneg %p3160
      $region89: #{graph_classification_forward.7} parent=5 // pred_check_branch
        %3163 = sbr.rel (%p3161) target = $region91
      $region90: #{graph_classification_forward.7} parent=5 // pred_region
        %s3164 = ssub.s32 %s14, 2
        // Predicated region
        $region92: #{graph_classification_forward.7} parent=90 // pred_check
          %p3165 = pneg %p235
        $region93: #{graph_classification_forward.7} parent=90 // pred_check_branch
          %3167 = sbr.rel (%p3165) target = $region95
        $region94: #{graph_classification_forward.7} parent=90 // pred_region
          %s3168 = smul.u32 32, %s25
          %p3169 = scmp.lt.s32.totalorder %s3168, 127
          %s3170 = scalar_select %p3169, %s3168, 127
          %s3171 = smul.addr %s3170, 4
          %s3172 = scalar_lea.vmem %s8, %s3171
        $region95: #{graph_classification_forward.7} parent=90 // pred_fallthru
          _
      $region91: #{graph_classification_forward.7} parent=5 // pred_fallthru
        _
    $region6: #{graph_classification_forward.7} parent=1 // loop_footer
      %s18 = sadd.s32 1, %s14
    $region7: #{graph_classification_forward.7} parent=1 // loop_footer_branch
      %13 = sbr.rel target = $region3
    $region8: #{graph_classification_forward.7} parent=1 // loop_exit
      _

// kernel: graph_classification_forward.6
$region0: #{graph_classification_forward.6}
  #allocation0 [shape = 'u32[]', space=smem, size = 0x4, offset = 0x4, fixed_abs, tag = 'smem constant byte address 0x4 - core index']
  #allocation1 [shape = 'u32[144,128]{1,0:T(1,128)}', space=vmem, size = 0x12000, scoped, tag = 'internal scratch']
  #allocation2 [shape = 'f32[256,128]{1,0:T(8,128)}', space=vmem, size = 0x20000, scoped, tag = 'scratch operand']
  #allocation3 [shape = 'f32[256,1]{1,0:T(8,128)}', space=vmem, size = 0x20000, scoped, tag = 'scratch operand']
  %s0 = inlined_call_operand.vmem [shape: bf16[1024,1024], index: 0, kind: input, shape index: {}]
  %s1 = inlined_call_operand.vmem [shape: bf16[1024,128], index: 1, kind: input, shape index: {}]
  %s2 = inlined_call_operand.vmem [shape: bf16[128,128], index: 2, kind: input, shape index: {}]
  %s3 = inlined_call_operand.vmem [shape: bf16[128,128], index: 3, kind: input, shape index: {}]
  %s4 = inlined_call_operand.vmem [shape: f32[1,128], index: 4, kind: input, shape index: {}]
  %s5 = inlined_call_operand.vmem [shape: f32[1,128], index: 5, kind: input, shape index: {}]
  %s6 = inlined_call_operand.vmem [shape: f32[1,128], index: 6, kind: input, shape index: {}]
  %s7 = inlined_call_operand.vmem [shape: bf16[1024,128], index: 7, kind: output, shape index: {0}]
  %s8 = inlined_call_operand.vmem [shape: f32[1024,1], index: 8, kind: output, shape index: {1}]
  %9 = xla_tuple %s7, %s8
  %s10 = sld [smem:[#allocation0]]
  $region100: #{graph_classification_forward.6} parent=0
    _
  %s12 = ssub.s32 1, %s10
  %s13 = scalar_select 0, %s12, %s10
  $region1: #{graph_classification_forward.6} parent=0
    #allocation4 [shape = 'u8[524288]{0}', space=vmem, size = 0x80000, scoped, tag = 'input window, operand 0']
    loop: start=0, step=1, limit=10
    $region2: #{graph_classification_forward.6} parent=1 // loop_pre_header
      _
    $region3: #{graph_classification_forward.6} parent=1 // loop_header
      %s15 = sphi 0, %s19
      %p16 = scmp.ge.s32.totalorder %s15, 10
      %s22 = sphi 0, %s34
      %s23 = sphi 0, %s30
      %s24 = sphi 0, %s22
      %s25 = sphi 0, %s23
      %s26 = sphi 0, %s24
      %s27 = sphi 0, %s25
      %s39 = sphi 0, %s41
      %s42 = sphi 0, %s39
      %s43 = sphi 0, %s42
      %s59 = sphi 0, %s43
      %s63 = sphi 0, %s63
      %s65 = sphi 0, %s63
      %s66 = sphi 0, %s65
      %s80 = sphi 0, %s66
      %s84 = sphi 0, %s84
      %s86 = sphi 0, %s84
      %s87 = sphi 0, %s86
      %s101 = sphi 0, %s87
      %s105 = sphi 0, %s105
      %s107 = sphi 0, %s105
      %s108 = sphi 0, %s107
      %s122 = sphi 0, %s108
      %s126 = sphi 0, %s126
      %s128 = sphi 0, %s126
      %s129 = sphi 0, %s128
      %s143 = sphi 0, %s129
      %s147 = sphi 0, %s147
      %s149 = sphi 0, %s147
      %s150 = sphi 0, %s149
      %s164 = sphi 0, %s150
      %s168 = sphi 0, %s168
      %s170 = sphi 0, %s168
      %s171 = sphi 0, %s170
      %s185 = sphi 0, %s171
      %s191 = sphi 0, %s193
      %s194 = sphi 0, %s191
      %s195 = sphi 0, %s194
      %s211 = sphi 0, %s195
      %s217 = sphi 0, %s219
      %s220 = sphi 0, %s217
      %s221 = sphi 0, %s220
      %s237 = sphi 0, %s221
    $region4: #{graph_classification_forward.6} parent=1 // loop_header_branch
      %18 = sbr.rel (%p16) target = $region8
    $region5: #{graph_classification_forward.6} parent=1 // loop_body
      %s20 = ssub.s32 %s15, 1
      %s21 = ssub.s32 %s15, 2
      %s28 = sadd.s32 1, %s23
      %p29 = scmp.ge.s32.totalorder %s28, 2
      %s30 = scalar_select %p29, 0, %s28
      %s31 = sadd.s32 1, %s22
      %s32 = scalar_select %p29, %s31, %s22
      %p33 = scmp.ge.s32.totalorder %s32, 4
      %s34 = scalar_select %p33, 0, %s32
      %s35 = ssub.s32 %s22, %s34
      %s36 = ssub.s32 %s23, %s30
      %s37 = sor.u32 %s35, %s36
      %p38 = scmp.eq.s32.totalorder %s37, 0
      %s40 = sadd.s32 %s39, 1
      %s41 = scalar_select %p38, %s39, %s40
      %p44 = pneg %p38
      %p45 = scmp.eq.s32.totalorder %s15, 7
      %p46 = por %p44, %p45
      %p47 = scmp.ne.s32.totalorder %s39, %s42
      %p48 = scmp.eq.s32.totalorder %s15, 0
      %p49 = por %p47, %p48
      %p50 = scmp.ne.s32.totalorder %s39, %s42
      %p51 = scmp.eq.s32.totalorder %s20, 7
      %p52 = por %p50, %p51
      %p53 = scmp.ne.s32.totalorder %s42, %s43
      %p54 = scmp.eq.s32.totalorder %s20, 0
      %p55 = por %p53, %p54
      %p56 = scmp.ne.s32.totalorder %s42, %s43
      %p57 = scmp.eq.s32.totalorder %s21, 7
      %p58 = por %p56, %p57
      %p60 = scmp.ne.s32.totalorder %s43, %s59
      %p61 = scmp.eq.s32.totalorder %s21, 0
      %p62 = por %p60, %p61
      %s64 = sadd.s32 %s63, 1
      %p67 = scmp.eq.s32.totalorder %s15, 7
      %p68 = scmp.ne.s32.totalorder %s63, %s65
      %p69 = scmp.eq.s32.totalorder %s15, 0
      %p70 = por %p68, %p69
      %p71 = scmp.ne.s32.totalorder %s63, %s65
      %p72 = scmp.eq.s32.totalorder %s20, 7
      %p73 = por %p71, %p72
      %p74 = scmp.ne.s32.totalorder %s65, %s66
      %p75 = scmp.eq.s32.totalorder %s20, 0
      %p76 = por %p74, %p75
      %p77 = scmp.ne.s32.totalorder %s65, %s66
      %p78 = scmp.eq.s32.totalorder %s21, 7
      %p79 = por %p77, %p78
      %p81 = scmp.ne.s32.totalorder %s66, %s80
      %p82 = scmp.eq.s32.totalorder %s21, 0
      %p83 = por %p81, %p82
      %s85 = sadd.s32 %s84, 1
      %p88 = scmp.eq.s32.totalorder %s15, 7
      %p89 = scmp.ne.s32.totalorder %s84, %s86
      %p90 = scmp.eq.s32.totalorder %s15, 0
      %p91 = por %p89, %p90
      %p92 = scmp.ne.s32.totalorder %s84, %s86
      %p93 = scmp.eq.s32.totalorder %s20, 7
      %p94 = por %p92, %p93
      %p95 = scmp.ne.s32.totalorder %s86, %s87
      %p96 = scmp.eq.s32.totalorder %s20, 0
      %p97 = por %p95, %p96
      %p98 = scmp.ne.s32.totalorder %s86, %s87
      %p99 = scmp.eq.s32.totalorder %s21, 7
      %p100 = por %p98, %p99
      %p102 = scmp.ne.s32.totalorder %s87, %s101
      %p103 = scmp.eq.s32.totalorder %s21, 0
      %p104 = por %p102, %p103
      %s106 = sadd.s32 %s105, 1
      %p109 = scmp.eq.s32.totalorder %s15, 7
      %p110 = scmp.ne.s32.totalorder %s105, %s107
      %p111 = scmp.eq.s32.totalorder %s15, 0
      %p112 = por %p110, %p111
      %p113 = scmp.ne.s32.totalorder %s105, %s107
      %p114 = scmp.eq.s32.totalorder %s20, 7
      %p115 = por %p113, %p114
      %p116 = scmp.ne.s32.totalorder %s107, %s108
      %p117 = scmp.eq.s32.totalorder %s20, 0
      %p118 = por %p116, %p117
      %p119 = scmp.ne.s32.totalorder %s107, %s108
      %p120 = scmp.eq.s32.totalorder %s21, 7
      %p121 = por %p119, %p120
      %p123 = scmp.ne.s32.totalorder %s108, %s122
      %p124 = scmp.eq.s32.totalorder %s21, 0
      %p125 = por %p123, %p124
      %s127 = sadd.s32 %s126, 1
      %p130 = scmp.eq.s32.totalorder %s15, 7
      %p131 = scmp.ne.s32.totalorder %s126, %s128
      %p132 = scmp.eq.s32.totalorder %s15, 0
      %p133 = por %p131, %p132
      %p134 = scmp.ne.s32.totalorder %s126, %s128
      %p135 = scmp.eq.s32.totalorder %s20, 7
      %p136 = por %p134, %p135
      %p137 = scmp.ne.s32.totalorder %s128, %s129
      %p138 = scmp.eq.s32.totalorder %s20, 0
      %p139 = por %p137, %p138
      %p140 = scmp.ne.s32.totalorder %s128, %s129
      %p141 = scmp.eq.s32.totalorder %s21, 7
      %p142 = por %p140, %p141
      %p144 = scmp.ne.s32.totalorder %s129, %s143
      %p145 = scmp.eq.s32.totalorder %s21, 0
      %p146 = por %p144, %p145
      %s148 = sadd.s32 %s147, 1
      %p151 = scmp.eq.s32.totalorder %s15, 7
      %p152 = scmp.ne.s32.totalorder %s147, %s149
      %p153 = scmp.eq.s32.totalorder %s15, 0
      %p154 = por %p152, %p153
      %p155 = scmp.ne.s32.totalorder %s147, %s149
      %p156 = scmp.eq.s32.totalorder %s20, 7
      %p157 = por %p155, %p156
      %p158 = scmp.ne.s32.totalorder %s149, %s150
      %p159 = scmp.eq.s32.totalorder %s20, 0
      %p160 = por %p158, %p159
      %p161 = scmp.ne.s32.totalorder %s149, %s150
      %p162 = scmp.eq.s32.totalorder %s21, 7
      %p163 = por %p161, %p162
      %p165 = scmp.ne.s32.totalorder %s150, %s164
      %p166 = scmp.eq.s32.totalorder %s21, 0
      %p167 = por %p165, %p166
      %s169 = sadd.s32 %s168, 1
      %p172 = scmp.eq.s32.totalorder %s15, 7
      %p173 = scmp.ne.s32.totalorder %s168, %s170
      %p174 = scmp.eq.s32.totalorder %s15, 0
      %p175 = por %p173, %p174
      %p176 = scmp.ne.s32.totalorder %s168, %s170
      %p177 = scmp.eq.s32.totalorder %s20, 7
      %p178 = por %p176, %p177
      %p179 = scmp.ne.s32.totalorder %s170, %s171
      %p180 = scmp.eq.s32.totalorder %s20, 0
      %p181 = por %p179, %p180
      %p182 = scmp.ne.s32.totalorder %s170, %s171
      %p183 = scmp.eq.s32.totalorder %s21, 7
      %p184 = por %p182, %p183
      %p186 = scmp.ne.s32.totalorder %s171, %s185
      %p187 = scmp.eq.s32.totalorder %s21, 0
      %p188 = por %p186, %p187
      %s189 = ssub.s32 %s22, %s34
      %p190 = scmp.eq.s32.totalorder %s189, 0
      %s192 = sadd.s32 %s191, 1
      %s193 = scalar_select %p190, %s191, %s192
      %p196 = pneg %p190
      %p197 = scmp.eq.s32.totalorder %s15, 7
      %p198 = por %p196, %p197
      %p199 = scmp.ne.s32.totalorder %s191, %s194
      %p200 = scmp.eq.s32.totalorder %s15, 0
      %p201 = por %p199, %p200
      %p202 = scmp.ne.s32.totalorder %s191, %s194
      %p203 = scmp.eq.s32.totalorder %s20, 7
      %p204 = por %p202, %p203
      %p205 = scmp.ne.s32.totalorder %s194, %s195
      %p206 = scmp.eq.s32.totalorder %s20, 0
      %p207 = por %p205, %p206
      %p208 = scmp.ne.s32.totalorder %s194, %s195
      %p209 = scmp.eq.s32.totalorder %s21, 7
      %p210 = por %p208, %p209
      %p212 = scmp.ne.s32.totalorder %s195, %s211
      %p213 = scmp.eq.s32.totalorder %s21, 0
      %p214 = por %p212, %p213
      %s215 = ssub.s32 %s22, %s34
      %p216 = scmp.eq.s32.totalorder %s215, 0
      %s218 = sadd.s32 %s217, 1
      %s219 = scalar_select %p216, %s217, %s218
      %p222 = pneg %p216
      %p223 = scmp.eq.s32.totalorder %s15, 7
      %p224 = por %p222, %p223
      %p225 = scmp.ne.s32.totalorder %s217, %s220
      %p226 = scmp.eq.s32.totalorder %s15, 0
      %p227 = por %p225, %p226
      %p228 = scmp.ne.s32.totalorder %s217, %s220
      %p229 = scmp.eq.s32.totalorder %s20, 7
      %p230 = por %p228, %p229
      %p231 = scmp.ne.s32.totalorder %s220, %s221
      %p232 = scmp.eq.s32.totalorder %s20, 0
      %p233 = por %p231, %p232
      %p234 = scmp.ne.s32.totalorder %s220, %s221
      %p235 = scmp.eq.s32.totalorder %s21, 7
      %p236 = por %p234, %p235
      %p238 = scmp.ne.s32.totalorder %s221, %s237
      %p239 = scmp.eq.s32.totalorder %s21, 0
      %p240 = por %p238, %p239
      %p241 = scmp.le.s32.totalorder 1, %s15
      %p242 = scmp.lt.s32.totalorder %s15, 9
      %p243 = pnand %p241, %p242
      %p244 = pneg %p243
      // Predicated region
      $region9: #{graph_classification_forward.6} parent=5 // pred_check
        _
      $region10: #{graph_classification_forward.6} parent=5 // pred_check_branch
        %246 = sbr.rel (%p243) target = $region12
      $region11: #{graph_classification_forward.6} parent=5 // pred_region
        %s247 = ssub.s32 %s15, 1
        // Predicated region
        $region13: #{graph_classification_forward.6} parent=11 // pred_check
          %p248 = pneg %p76
        $region14: #{graph_classification_forward.6} parent=11 // pred_check_branch
          %250 = sbr.rel (%p248) target = $region16
        $region15: #{graph_classification_forward.6} parent=11 // pred_region
          _
        $region16: #{graph_classification_forward.6} parent=11 // pred_fallthru
          _
        // Predicated region
        $region17: #{graph_classification_forward.6} parent=11 // pred_check
          %p251 = pneg %p97
        $region18: #{graph_classification_forward.6} parent=11 // pred_check_branch
          %253 = sbr.rel (%p251) target = $region20
        $region19: #{graph_classification_forward.6} parent=11 // pred_region
          _
        $region20: #{graph_classification_forward.6} parent=11 // pred_fallthru
          _
        // Predicated region
        $region21: #{graph_classification_forward.6} parent=11 // pred_check
          %p254 = pneg %p118
        $region22: #{graph_classification_forward.6} parent=11 // pred_check_branch
          %256 = sbr.rel (%p254) target = $region24
        $region23: #{graph_classification_forward.6} parent=11 // pred_region
          _
        $region24: #{graph_classification_forward.6} parent=11 // pred_fallthru
          _
        // Predicated region
        $region25: #{graph_classification_forward.6} parent=11 // pred_check
          %p257 = pneg %p139
        $region26: #{graph_classification_forward.6} parent=11 // pred_check_branch
          %259 = sbr.rel (%p257) target = $region28
        $region27: #{graph_classification_forward.6} parent=11 // pred_region
          _
        $region28: #{graph_classification_forward.6} parent=11 // pred_fallthru
          _
        // Predicated region
        $region29: #{graph_classification_forward.6} parent=11 // pred_check
          %p260 = pneg %p160
        $region30: #{graph_classification_forward.6} parent=11 // pred_check_branch
          %262 = sbr.rel (%p260) target = $region32
        $region31: #{graph_classification_forward.6} parent=11 // pred_region
          _
        $region32: #{graph_classification_forward.6} parent=11 // pred_fallthru
          _
        // Predicated region
        $region33: #{graph_classification_forward.6} parent=11 // pred_check
          %p263 = pneg %p181
        $region34: #{graph_classification_forward.6} parent=11 // pred_check_branch
          %265 = sbr.rel (%p263) target = $region36
        $region35: #{graph_classification_forward.6} parent=11 // pred_region
          _
        $region36: #{graph_classification_forward.6} parent=11 // pred_fallthru
          _
      $region12: #{graph_classification_forward.6} parent=5 // pred_fallthru
        _
      %p266 = scmp.lt.s32.totalorder %s15, 8
      // Predicated region
      $region37: #{graph_classification_forward.6} parent=5 // pred_check
        %p267 = pneg %p266
      $region38: #{graph_classification_forward.6} parent=5 // pred_check_branch
        %269 = sbr.rel (%p267) target = $region40
      $region39: #{graph_classification_forward.6} parent=5 // pred_region
        // Predicated region
        $region41: #{graph_classification_forward.6} parent=39 // pred_check
          %p270 = pneg %p49
        $region42: #{graph_classification_forward.6} parent=39 // pred_check_branch
          %272 = sbr.rel (%p270) target = $region44
        $region43: #{graph_classification_forward.6} parent=39 // pred_region
          %s273 = sand.u32 %s39, 1
          %s274 = sand.u32 %s39, 1
          %s275 = smul.addr %s274, 512
          %s276 = scalar_lea.vmem [#allocation4], %s275
          %s277 = smul.u32 32, %s22
          %s278 = smul.u32 4, %s23
          %s279 = smul.addr %s277, 8
          %s280 = sadd.s32 %s278, %s279
          %s281 = smul.addr %s280, 4
          %s282 = scalar_lea.vmem %s0, %s281
          // Predicated region
          $region45: #{graph_classification_forward.6} parent=43 // pred_check
            _
          $region46: #{graph_classification_forward.6} parent=43 // pred_check_branch
            %284 = sbr.rel (0) target = $region48
          $region47: #{graph_classification_forward.6} parent=43 // pred_region
            // Predicated region
            $region49: #{graph_classification_forward.6} parent=47 // pred_check
              _
            $region50: #{graph_classification_forward.6} parent=47 // pred_check_branch
              %286 = sbr.rel (0) target = $region52
            $region51: #{graph_classification_forward.6} parent=47 // pred_region
              loop: start=0, step=1, limit=1
              $region53: #{graph_classification_forward.6} parent=51 // loop_pre_header
                _
              $region54: #{graph_classification_forward.6} parent=51 // loop_header
                %s288 = sphi 0, %s292
                %p289 = scmp.ge.s32.totalorder %s288, 1
                %s293 = sphi %s282, %s282
                %s294 = sphi %s276, %s276
              $region55: #{graph_classification_forward.6} parent=51 // loop_header_branch
                %291 = sbr.rel (%p289) target = $region59
              $region56: #{graph_classification_forward.6} parent=51 // loop_body
                %v295 = vld [vmem:[%s293] sm:$0xff]
                %296 = vst [vmem:[%s294] sm:$0xff] %v295
                %v297 = vld [vmem:[%s293 + $0x8] sm:$0xff]
                %298 = vst [vmem:[%s294 + $0x8] sm:$0xff] %v297
                %v299 = vld [vmem:[%s293 + $0x20] sm:$0xff]
                %300 = vst [vmem:[%s294 + $0x10] sm:$0xff] %v299
                %v301 = vld [vmem:[%s293 + $0x28] sm:$0xff]
                %302 = vst [vmem:[%s294 + $0x18] sm:$0xff] %v301
                %v303 = vld [vmem:[%s293 + $0x40] sm:$0xff]
                %304 = vst [vmem:[%s294 + $0x20] sm:$0xff] %v303
                %v305 = vld [vmem:[%s293 + $0x48] sm:$0xff]
                %306 = vst [vmem:[%s294 + $0x28] sm:$0xff] %v305
                %v307 = vld [vmem:[%s293 + $0x60] sm:$0xff]
                %308 = vst [vmem:[%s294 + $0x30] sm:$0xff] %v307
                %v309 = vld [vmem:[%s293 + $0x68] sm:$0xff]
                %310 = vst [vmem:[%s294 + $0x38] sm:$0xff] %v309
                %v311 = vld [vmem:[%s293 + $0x80] sm:$0xff]
                %312 = vst [vmem:[%s294 + $0x40] sm:$0xff] %v311
                %v313 = vld [vmem:[%s293 + $0x88] sm:$0xff]
                %314 = vst [vmem:[%s294 + $0x48] sm:$0xff] %v313
                %v315 = vld [vmem:[%s293 + $0xa0] sm:$0xff]
                %316 = vst [vmem:[%s294 + $0x50] sm:$0xff] %v315
                %v317 = vld [vmem:[%s293 + $0xa8] sm:$0xff]
                %318 = vst [vmem:[%s294 + $0x58] sm:$0xff] %v317
                %v319 = vld [vmem:[%s293 + $0xc0] sm:$0xff]
                %320 = vst [vmem:[%s294 + $0x60] sm:$0xff] %v319
                %v321 = vld [vmem:[%s293 + $0xc8] sm:$0xff]
                %322 = vst [vmem:[%s294 + $0x68] sm:$0xff] %v321
                %v323 = vld [vmem:[%s293 + $0xe0] sm:$0xff]
                %324 = vst [vmem:[%s294 + $0x70] sm:$0xff] %v323
                %v325 = vld [vmem:[%s293 + $0xe8] sm:$0xff]
                %326 = vst [vmem:[%s294 + $0x78] sm:$0xff] %v325
                %v327 = vld [vmem:[%s293 + $0x100] sm:$0xff]
                %328 = vst [vmem:[%s294 + $0x80] sm:$0xff] %v327
                %v329 = vld [vmem:[%s293 + $0x108] sm:$0xff]
                %330 = vst [vmem:[%s294 + $0x88] sm:$0xff] %v329
                %v331 = vld [vmem:[%s293 + $0x120] sm:$0xff]
                %332 = vst [vmem:[%s294 + $0x90] sm:$0xff] %v331
                %v333 = vld [vmem:[%s293 + $0x128] sm:$0xff]
                %334 = vst [vmem:[%s294 + $0x98] sm:$0xff] %v333
                %v335 = vld [vmem:[%s293 + $0x140] sm:$0xff]
                %336 = vst [vmem:[%s294 + $0xa0] sm:$0xff] %v335
                %v337 = vld [vmem:[%s293 + $0x148] sm:$0xff]
                %338 = vst [vmem:[%s294 + $0xa8] sm:$0xff] %v337
                %v339 = vld [vmem:[%s293 + $0x160] sm:$0xff]
                %340 = vst [vmem:[%s294 + $0xb0] sm:$0xff] %v339
                %v341 = vld [vmem:[%s293 + $0x168] sm:$0xff]
                %342 = vst [vmem:[%s294 + $0xb8] sm:$0xff] %v341
                %v343 = vld [vmem:[%s293 + $0x180] sm:$0xff]
                %344 = vst [vmem:[%s294 + $0xc0] sm:$0xff] %v343
                %v345 = vld [vmem:[%s293 + $0x188] sm:$0xff]
                %346 = vst [vmem:[%s294 + $0xc8] sm:$0xff] %v345
                %v347 = vld [vmem:[%s293 + $0x1a0] sm:$0xff]
                %348 = vst [vmem:[%s294 + $0xd0] sm:$0xff] %v347
                %v349 = vld [vmem:[%s293 + $0x1a8] sm:$0xff]
                %350 = vst [vmem:[%s294 + $0xd8] sm:$0xff] %v349
                %v351 = vld [vmem:[%s293 + $0x1c0] sm:$0xff]
                %352 = vst [vmem:[%s294 + $0xe0] sm:$0xff] %v351
                %v353 = vld [vmem:[%s293 + $0x1c8] sm:$0xff]
                %354 = vst [vmem:[%s294 + $0xe8] sm:$0xff] %v353
                %v355 = vld [vmem:[%s293 + $0x1e0] sm:$0xff]
                %356 = vst [vmem:[%s294 + $0xf0] sm:$0xff] %v355
                %v357 = vld [vmem:[%s293 + $0x1e8] sm:$0xff]
                %358 = vst [vmem:[%s294 + $0xf8] sm:$0xff] %v357
                %v359 = vld [vmem:[%s293 + $0x200] sm:$0xff]
                %360 = vst [vmem:[%s294 + $0x100] sm:$0xff] %v359
                %v361 = vld [vmem:[%s293 + $0x208] sm:$0xff]
                %362 = vst [vmem:[%s294 + $0x108] sm:$0xff] %v361
                %v363 = vld [vmem:[%s293 + $0x220] sm:$0xff]
                %364 = vst [vmem:[%s294 + $0x110] sm:$0xff] %v363
                %v365 = vld [vmem:[%s293 + $0x228] sm:$0xff]
                %366 = vst [vmem:[%s294 + $0x118] sm:$0xff] %v365
                %v367 = vld [vmem:[%s293 + $0x240] sm:$0xff]
                %368 = vst [vmem:[%s294 + $0x120] sm:$0xff] %v367
                %v369 = vld [vmem:[%s293 + $0x248] sm:$0xff]
                %370 = vst [vmem:[%s294 + $0x128] sm:$0xff] %v369
                %v371 = vld [vmem:[%s293 + $0x260] sm:$0xff]
                %372 = vst [vmem:[%s294 + $0x130] sm:$0xff] %v371
                %v373 = vld [vmem:[%s293 + $0x268] sm:$0xff]
                %374 = vst [vmem:[%s294 + $0x138] sm:$0xff] %v373
                %v375 = vld [vmem:[%s293 + $0x280] sm:$0xff]
                %376 = vst [vmem:[%s294 + $0x140] sm:$0xff] %v375
                %v377 = vld [vmem:[%s293 + $0x288] sm:$0xff]
                %378 = vst [vmem:[%s294 + $0x148] sm:$0xff] %v377
                %v379 = vld [vmem:[%s293 + $0x2a0] sm:$0xff]
                %380 = vst [vmem:[%s294 + $0x150] sm:$0xff] %v379
                %v381 = vld [vmem:[%s293 + $0x2a8] sm:$0xff]
                %382 = vst [vmem:[%s294 + $0x158] sm:$0xff] %v381
                %v383 = vld [vmem:[%s293 + $0x2c0] sm:$0xff]
                %384 = vst [vmem:[%s294 + $0x160] sm:$0xff] %v383
                %v385 = vld [vmem:[%s293 + $0x2c8] sm:$0xff]
                %386 = vst [vmem:[%s294 + $0x168] sm:$0xff] %v385
                %v387 = vld [vmem:[%s293 + $0x2e0] sm:$0xff]
                %388 = vst [vmem:[%s294 + $0x170] sm:$0xff] %v387
                %v389 = vld [vmem:[%s293 + $0x2e8] sm:$0xff]
                %390 = vst [vmem:[%s294 + $0x178] sm:$0xff] %v389
                %v391 = vld [vmem:[%s293 + $0x300] sm:$0xff]
                %392 = vst [vmem:[%s294 + $0x180] sm:$0xff] %v391
                %v393 = vld [vmem:[%s293 + $0x308] sm:$0xff]
                %394 = vst [vmem:[%s294 + $0x188] sm:$0xff] %v393
                %v395 = vld [vmem:[%s293 + $0x320] sm:$0xff]
                %396 = vst [vmem:[%s294 + $0x190] sm:$0xff] %v395
                %v397 = vld [vmem:[%s293 + $0x328] sm:$0xff]
                %398 = vst [vmem:[%s294 + $0x198] sm:$0xff] %v397
                %v399 = vld [vmem:[%s293 + $0x340] sm:$0xff]
                %400 = vst [vmem:[%s294 + $0x1a0] sm:$0xff] %v399
                %v401 = vld [vmem:[%s293 + $0x348] sm:$0xff]
                %402 = vst [vmem:[%s294 + $0x1a8] sm:$0xff] %v401
                %v403 = vld [vmem:[%s293 + $0x360] sm:$0xff]
                %404 = vst [vmem:[%s294 + $0x1b0] sm:$0xff] %v403
                %v405 = vld [vmem:[%s293 + $0x368] sm:$0xff]
                %406 = vst [vmem:[%s294 + $0x1b8] sm:$0xff] %v405
                %v407 = vld [vmem:[%s293 + $0x380] sm:$0xff]
                %408 = vst [vmem:[%s294 + $0x1c0] sm:$0xff] %v407
                %v409 = vld [vmem:[%s293 + $0x388] sm:$0xff]
                %410 = vst [vmem:[%s294 + $0x1c8] sm:$0xff] %v409
                %v411 = vld [vmem:[%s293 + $0x3a0] sm:$0xff]
                %412 = vst [vmem:[%s294 + $0x1d0] sm:$0xff] %v411
                %v413 = vld [vmem:[%s293 + $0x3a8] sm:$0xff]
                %414 = vst [vmem:[%s294 + $0x1d8] sm:$0xff] %v413
                %v415 = vld [vmem:[%s293 + $0x3c0] sm:$0xff]
                %416 = vst [vmem:[%s294 + $0x1e0] sm:$0xff] %v415
                %v417 = vld [vmem:[%s293 + $0x3c8] sm:$0xff]
                %418 = vst [vmem:[%s294 + $0x1e8] sm:$0xff] %v417
                %v419 = vld [vmem:[%s293 + $0x3e0] sm:$0xff]
                %420 = vst [vmem:[%s294 + $0x1f0] sm:$0xff] %v419
                %v421 = vld [vmem:[%s293 + $0x3e8] sm:$0xff]
                %422 = vst [vmem:[%s294 + $0x1f8] sm:$0xff] %v421
              $region57: #{graph_classification_forward.6} parent=51 // loop_footer
                %s292 = sadd.s32 1, %s288
              $region58: #{graph_classification_forward.6} parent=51 // loop_footer_branch
                %287 = sbr.rel target = $region54
              $region59: #{graph_classification_forward.6} parent=51 // loop_exit
                _
            $region52: #{graph_classification_forward.6} parent=47 // pred_fallthru
              _
            // Predicated region
            $region60: #{graph_classification_forward.6} parent=47 // pred_check
              _
            $region61: #{graph_classification_forward.6} parent=47 // pred_check_branch
              %424 = sbr.rel target = $region63
            $region62: #{graph_classification_forward.6} parent=47 // pred_region
              _
            $region63: #{graph_classification_forward.6} parent=47 // pred_fallthru
              _
          $region48: #{graph_classification_forward.6} parent=43 // pred_fallthru
            _
          %425 = vnop
        $region44: #{graph_classification_forward.6} parent=39 // pred_fallthru
          _
      $region40: #{graph_classification_forward.6} parent=5 // pred_fallthru
        _
      %p426 = scmp.le.s32.totalorder 1, %s15
      %p427 = scmp.lt.s32.totalorder %s15, 9
      %p428 = pnand %p426, %p427
      %p429 = pneg %p428
      // Predicated region
      $region64: #{graph_classification_forward.6} parent=5 // pred_check
        _
      $region65: #{graph_classification_forward.6} parent=5 // pred_check_branch
        %431 = sbr.rel (%p428) target = $region67
      $region66: #{graph_classification_forward.6} parent=5 // pred_region
        %s432 = ssub.s32 %s15, 1
        %s433 = sand.u32 %s42, 1
        %s434 = sand.u32 %s42, 1
        %s435 = smul.addr %s434, 512
        %s436 = scalar_lea.vmem [#allocation4], %s435
        // Predicated region
        $region68: #{graph_classification_forward.6} parent=66 // pred_check
          %p437 = pneg %p55
        $region69: #{graph_classification_forward.6} parent=66 // pred_check_branch
          %439 = sbr.rel (%p437) target = $region71
        $region70: #{graph_classification_forward.6} parent=66 // pred_region
          _
        $region71: #{graph_classification_forward.6} parent=66 // pred_fallthru
          _
        %s440 = sand.u32 %s42, 1
        %s441 = sand.u32 %s42, 1
        %s442 = smul.addr %s441, 512
        %s443 = scalar_lea.vmem [#allocation4], %s442
        %p444 = pneg %p55
        %p445 = pneg %p52
        %p446 = pneg %p76
        %p447 = pneg %p73
        %p448 = pneg %p97
        %p449 = pneg %p94
        %p450 = pneg %p118
        %p451 = pneg %p115
        %p452 = pneg %p139
        %p453 = pneg %p136
        %p454 = pneg %p160
        %p455 = pneg %p157
        %p456 = pneg %p181
        %p457 = pneg %p178
        %p458 = pneg %p207
        %p459 = pneg %p204
        %s460 = smul.u32 32, %s24
        %p461 = scmp.lt.s32.totalorder %s460, 127
        %s462 = scalar_select %p461, %s460, 127
        %s463 = smul.addr %s462, 4
        %s464 = scalar_lea.vmem %s7, %s463
        %p465 = pneg %p233
        %p466 = pneg %p230
        %s467 = smul.u32 32, %s24
        %p468 = scmp.lt.s32.totalorder %s467, 127
        %s469 = scalar_select %p468, %s467, 127
        %s470 = smul.addr %s469, 8
        %s471 = scalar_lea.vmem %s8, %s470
        %s472 = smul.u32 32, %s24
        %s473 = smul.u32 4, %s25
        %s474 = smul.u32 32, %s24
        %p475 = scmp.lt.s32.totalorder %s474, 127
        %s476 = scalar_select %p475, %s474, 127
        %s477 = smul.addr %s476, 4
        %s478 = scalar_lea.vmem %s7, %s477
        %s479 = smul.u32 32, %s24
        %s480 = smul.u32 32, %s24
        %p481 = scmp.lt.s32.totalorder %s480, 127
        %s482 = scalar_select %p481, %s480, 127
        %s483 = smul.addr %s482, 8
        %s484 = scalar_lea.vmem %s8, %s483
        %s485 = smul.u32 32, %s24
        %p487 = scmp.eq.s32.totalorder %s25, 0
        // Predicated region
        $region72: #{graph_classification_forward.6} parent=66 // pred_check
          %p488 = pneg %p487
        $region73: #{graph_classification_forward.6} parent=66 // pred_check_branch
          %490 = sbr.rel (%p488) target = $region75
        $region74: #{graph_classification_forward.6} parent=66 // pred_region
          %491 = vst [vmem:[#allocation2] sm:$0xff] 0.0
          %492 = vst [vmem:[#allocation2 + $0x8] sm:$0xff] 0.0
          %493 = vst [vmem:[#allocation2 + $0x10] sm:$0xff] 0.0
          %494 = vst [vmem:[#allocation2 + $0x18] sm:$0xff] 0.0
          %495 = vst [vmem:[#allocation2 + $0x20] sm:$0xff] 0.0
          %496 = vst [vmem:[#allocation2 + $0x28] sm:$0xff] 0.0
          %497 = vst [vmem:[#allocation2 + $0x30] sm:$0xff] 0.0
          %498 = vst [vmem:[#allocation2 + $0x38] sm:$0xff] 0.0
          %499 = vst [vmem:[#allocation2 + $0x40] sm:$0xff] 0.0
          %500 = vst [vmem:[#allocation2 + $0x48] sm:$0xff] 0.0
          %501 = vst [vmem:[#allocation2 + $0x50] sm:$0xff] 0.0
          %502 = vst [vmem:[#allocation2 + $0x58] sm:$0xff] 0.0
          %503 = vst [vmem:[#allocation2 + $0x60] sm:$0xff] 0.0
          %504 = vst [vmem:[#allocation2 + $0x68] sm:$0xff] 0.0
          %505 = vst [vmem:[#allocation2 + $0x70] sm:$0xff] 0.0
          %506 = vst [vmem:[#allocation2 + $0x78] sm:$0xff] 0.0
          %507 = vst [vmem:[#allocation2 + $0x80] sm:$0xff] 0.0
          %508 = vst [vmem:[#allocation2 + $0x88] sm:$0xff] 0.0
          %509 = vst [vmem:[#allocation2 + $0x90] sm:$0xff] 0.0
          %510 = vst [vmem:[#allocation2 + $0x98] sm:$0xff] 0.0
          %511 = vst [vmem:[#allocation2 + $0xa0] sm:$0xff] 0.0
          %512 = vst [vmem:[#allocation2 + $0xa8] sm:$0xff] 0.0
          %513 = vst [vmem:[#allocation2 + $0xb0] sm:$0xff] 0.0
          %514 = vst [vmem:[#allocation2 + $0xb8] sm:$0xff] 0.0
          %515 = vst [vmem:[#allocation2 + $0xc0] sm:$0xff] 0.0
          %516 = vst [vmem:[#allocation2 + $0xc8] sm:$0xff] 0.0
          %517 = vst [vmem:[#allocation2 + $0xd0] sm:$0xff] 0.0
          %518 = vst [vmem:[#allocation2 + $0xd8] sm:$0xff] 0.0
          %519 = vst [vmem:[#allocation2 + $0xe0] sm:$0xff] 0.0
          %520 = vst [vmem:[#allocation2 + $0xe8] sm:$0xff] 0.0
          %521 = vst [vmem:[#allocation2 + $0xf0] sm:$0xff] 0.0
          %522 = vst [vmem:[#allocation2 + $0xf8] sm:$0xff] 0.0
          %vm523 = vcmask 7168
          %524 = vst.msk [vmem:[#allocation3] sm:$0xff] %vm523, 0.0
          %525 = vst.msk [vmem:[#allocation3 + $0x8] sm:$0xff] %vm523, 0.0
          %526 = vst.msk [vmem:[#allocation3 + $0x10] sm:$0xff] %vm523, 0.0
          %527 = vst.msk [vmem:[#allocation3 + $0x18] sm:$0xff] %vm523, 0.0
          %528 = vst.msk [vmem:[#allocation3 + $0x20] sm:$0xff] %vm523, 0.0
          %529 = vst.msk [vmem:[#allocation3 + $0x28] sm:$0xff] %vm523, 0.0
          %530 = vst.msk [vmem:[#allocation3 + $0x30] sm:$0xff] %vm523, 0.0
          %531 = vst.msk [vmem:[#allocation3 + $0x38] sm:$0xff] %vm523, 0.0
          %532 = vst.msk [vmem:[#allocation3 + $0x40] sm:$0xff] %vm523, 0.0
          %533 = vst.msk [vmem:[#allocation3 + $0x48] sm:$0xff] %vm523, 0.0
          %534 = vst.msk [vmem:[#allocation3 + $0x50] sm:$0xff] %vm523, 0.0
          %535 = vst.msk [vmem:[#allocation3 + $0x58] sm:$0xff] %vm523, 0.0
          %536 = vst.msk [vmem:[#allocation3 + $0x60] sm:$0xff] %vm523, 0.0
          %537 = vst.msk [vmem:[#allocation3 + $0x68] sm:$0xff] %vm523, 0.0
          %538 = vst.msk [vmem:[#allocation3 + $0x70] sm:$0xff] %vm523, 0.0
          %539 = vst.msk [vmem:[#allocation3 + $0x78] sm:$0xff] %vm523, 0.0
          %540 = vst.msk [vmem:[#allocation3 + $0x80] sm:$0xff] %vm523, 0.0
          %541 = vst.msk [vmem:[#allocation3 + $0x88] sm:$0xff] %vm523, 0.0
          %542 = vst.msk [vmem:[#allocation3 + $0x90] sm:$0xff] %vm523, 0.0
          %543 = vst.msk [vmem:[#allocation3 + $0x98] sm:$0xff] %vm523, 0.0
          %544 = vst.msk [vmem:[#allocation3 + $0xa0] sm:$0xff] %vm523, 0.0
          %545 = vst.msk [vmem:[#allocation3 + $0xa8] sm:$0xff] %vm523, 0.0
          %546 = vst.msk [vmem:[#allocation3 + $0xb0] sm:$0xff] %vm523, 0.0
          %547 = vst.msk [vmem:[#allocation3 + $0xb8] sm:$0xff] %vm523, 0.0
          %548 = vst.msk [vmem:[#allocation3 + $0xc0] sm:$0xff] %vm523, 0.0
          %549 = vst.msk [vmem:[#allocation3 + $0xc8] sm:$0xff] %vm523, 0.0
          %550 = vst.msk [vmem:[#allocation3 + $0xd0] sm:$0xff] %vm523, 0.0
          %551 = vst.msk [vmem:[#allocation3 + $0xd8] sm:$0xff] %vm523, 0.0
          %552 = vst.msk [vmem:[#allocation3 + $0xe0] sm:$0xff] %vm523, 0.0
          %553 = vst.msk [vmem:[#allocation3 + $0xe8] sm:$0xff] %vm523, 0.0
          %554 = vst.msk [vmem:[#allocation3 + $0xf0] sm:$0xff] %vm523, 0.0
          %555 = vst.msk [vmem:[#allocation3 + $0xf8] sm:$0xff] %vm523, 0.0
        $region75: #{graph_classification_forward.6} parent=66 // pred_fallthru
          _
        %v556 = vld [vmem:[%s436] sm:$0xff]
        %v557 = vld [vmem:[%s436 + $0x8] sm:$0xff]
        %v558 = vld [vmem:[%s436 + $0x10] sm:$0xff]
        %v559 = vld [vmem:[%s436 + $0x18] sm:$0xff]
        %v560 = vld [vmem:[%s436 + $0x20] sm:$0xff]
        %v561 = vld [vmem:[%s436 + $0x28] sm:$0xff]
        %v562 = vld [vmem:[%s436 + $0x30] sm:$0xff]
        %v563 = vld [vmem:[%s436 + $0x38] sm:$0xff]
        %v564 = vld [vmem:[%s436 + $0x40] sm:$0xff]
        %v565 = vld [vmem:[%s436 + $0x48] sm:$0xff]
        %v566 = vld [vmem:[%s436 + $0x50] sm:$0xff]
        %v567 = vld [vmem:[%s436 + $0x58] sm:$0xff]
        %v568 = vld [vmem:[%s436 + $0x60] sm:$0xff]
        %v569 = vld [vmem:[%s436 + $0x68] sm:$0xff]
        %v570 = vld [vmem:[%s436 + $0x70] sm:$0xff]
        %v571 = vld [vmem:[%s436 + $0x78] sm:$0xff]
        %v572 = vld [vmem:[%s436 + $0x80] sm:$0xff]
        %v573 = vld [vmem:[%s436 + $0x88] sm:$0xff]
        %v574 = vld [vmem:[%s436 + $0x90] sm:$0xff]
        %v575 = vld [vmem:[%s436 + $0x98] sm:$0xff]
        %v576 = vld [vmem:[%s436 + $0xa0] sm:$0xff]
        %v577 = vld [vmem:[%s436 + $0xa8] sm:$0xff]
        %v578 = vld [vmem:[%s436 + $0xb0] sm:$0xff]
        %v579 = vld [vmem:[%s436 + $0xb8] sm:$0xff]
        %v580 = vld [vmem:[%s436 + $0xc0] sm:$0xff]
        %v581 = vld [vmem:[%s436 + $0xc8] sm:$0xff]
        %v582 = vld [vmem:[%s436 + $0xd0] sm:$0xff]
        %v583 = vld [vmem:[%s436 + $0xd8] sm:$0xff]
        %v584 = vld [vmem:[%s436 + $0xe0] sm:$0xff]
        %v585 = vld [vmem:[%s436 + $0xe8] sm:$0xff]
        %v586 = vld [vmem:[%s436 + $0xf0] sm:$0xff]
        %v587 = vld [vmem:[%s436 + $0xf8] sm:$0xff]
        %v588 = vld [vmem:[%s436 + $0x100] sm:$0xff]
        %v589 = vld [vmem:[%s436 + $0x108] sm:$0xff]
        %v590 = vld [vmem:[%s436 + $0x110] sm:$0xff]
        %v591 = vld [vmem:[%s436 + $0x118] sm:$0xff]
        %v592 = vld [vmem:[%s436 + $0x120] sm:$0xff]
        %v593 = vld [vmem:[%s436 + $0x128] sm:$0xff]
        %v594 = vld [vmem:[%s436 + $0x130] sm:$0xff]
        %v595 = vld [vmem:[%s436 + $0x138] sm:$0xff]
        %v596 = vld [vmem:[%s436 + $0x140] sm:$0xff]
        %v597 = vld [vmem:[%s436 + $0x148] sm:$0xff]
        %v598 = vld [vmem:[%s436 + $0x150] sm:$0xff]
        %v599 = vld [vmem:[%s436 + $0x158] sm:$0xff]
        %v600 = vld [vmem:[%s436 + $0x160] sm:$0xff]
        %v601 = vld [vmem:[%s436 + $0x168] sm:$0xff]
        %v602 = vld [vmem:[%s436 + $0x170] sm:$0xff]
        %v603 = vld [vmem:[%s436 + $0x178] sm:$0xff]
        %v604 = vld [vmem:[%s436 + $0x180] sm:$0xff]
        %v605 = vld [vmem:[%s436 + $0x188] sm:$0xff]
        %v606 = vld [vmem:[%s436 + $0x190] sm:$0xff]
        %v607 = vld [vmem:[%s436 + $0x198] sm:$0xff]
        %v608 = vld [vmem:[%s436 + $0x1a0] sm:$0xff]
        %v609 = vld [vmem:[%s436 + $0x1a8] sm:$0xff]
        %v610 = vld [vmem:[%s436 + $0x1b0] sm:$0xff]
        %v611 = vld [vmem:[%s436 + $0x1b8] sm:$0xff]
        %v612 = vld [vmem:[%s436 + $0x1c0] sm:$0xff]
        %v613 = vld [vmem:[%s436 + $0x1c8] sm:$0xff]
        %v614 = vld [vmem:[%s436 + $0x1d0] sm:$0xff]
        %v615 = vld [vmem:[%s436 + $0x1d8] sm:$0xff]
        %v616 = vld [vmem:[%s436 + $0x1e0] sm:$0xff]
        %v617 = vld [vmem:[%s436 + $0x1e8] sm:$0xff]
        %v618 = vld [vmem:[%s436 + $0x1f0] sm:$0xff]
        %v619 = vld [vmem:[%s436 + $0x1f8] sm:$0xff]
        %s620 = smul.u32 %s25, 512
        %s621 = sshra.s32 %s620, 3
        %s622 = sand.u32 %s620, 7
        %s623 = smul.addr %s621, 4
        %s624 = scalar_lea.vmem %s1, %s623
        %v625 = vld [vmem:[%s624] sm:$0xf]
        %v626 = vld [vmem:[%s624 + $0x4] sm:$0xf]
        %v627 = vld [vmem:[%s624 + $0x8] sm:$0xf]
        %v628 = vld [vmem:[%s624 + $0xc] sm:$0xf]
        %v629 = vld [vmem:[%s624 + $0x10] sm:$0xf]
        %v630 = vld [vmem:[%s624 + $0x14] sm:$0xf]
        %v631 = vld [vmem:[%s624 + $0x18] sm:$0xf]
        %v632 = vld [vmem:[%s624 + $0x1c] sm:$0xf]
        %v633 = vld [vmem:[%s624 + $0x20] sm:$0xf]
        %v634 = vld [vmem:[%s624 + $0x24] sm:$0xf]
        %v635 = vld [vmem:[%s624 + $0x28] sm:$0xf]
        %v636 = vld [vmem:[%s624 + $0x2c] sm:$0xf]
        %v637 = vld [vmem:[%s624 + $0x30] sm:$0xf]
        %v638 = vld [vmem:[%s624 + $0x34] sm:$0xf]
        %v639 = vld [vmem:[%s624 + $0x38] sm:$0xf]
        %v640 = vld [vmem:[%s624 + $0x3c] sm:$0xf]
        %v641 = vld [vmem:[%s624 + $0x40] sm:$0xf]
        %v642 = vld [vmem:[%s624 + $0x44] sm:$0xf]
        %v643 = vld [vmem:[%s624 + $0x48] sm:$0xf]
        %v644 = vld [vmem:[%s624 + $0x4c] sm:$0xf]
        %v645 = vld [vmem:[%s624 + $0x50] sm:$0xf]
        %v646 = vld [vmem:[%s624 + $0x54] sm:$0xf]
        %v647 = vld [vmem:[%s624 + $0x58] sm:$0xf]
        %v648 = vld [vmem:[%s624 + $0x5c] sm:$0xf]
        %v649 = vld [vmem:[%s624 + $0x60] sm:$0xf]
        %v650 = vld [vmem:[%s624 + $0x64] sm:$0xf]
        %v651 = vld [vmem:[%s624 + $0x68] sm:$0xf]
        %v652 = vld [vmem:[%s624 + $0x6c] sm:$0xf]
        %v653 = vld [vmem:[%s624 + $0x70] sm:$0xf]
        %v654 = vld [vmem:[%s624 + $0x74] sm:$0xf]
        %v655 = vld [vmem:[%s624 + $0x78] sm:$0xf]
        %v656 = vld [vmem:[%s624 + $0x7c] sm:$0xf]
        %v657 = vld [vmem:[%s624 + $0x80] sm:$0xf]
        %v658 = vld [vmem:[%s624 + $0x84] sm:$0xf]
        %v659 = vld [vmem:[%s624 + $0x88] sm:$0xf]
        %v660 = vld [vmem:[%s624 + $0x8c] sm:$0xf]
        %v661 = vld [vmem:[%s624 + $0x90] sm:$0xf]
        %v662 = vld [vmem:[%s624 + $0x94] sm:$0xf]
        %v663 = vld [vmem:[%s624 + $0x98] sm:$0xf]
        %v664 = vld [vmem:[%s624 + $0x9c] sm:$0xf]
        %v665 = vld [vmem:[%s624 + $0xa0] sm:$0xf]
        %v666 = vld [vmem:[%s624 + $0xa4] sm:$0xf]
        %v667 = vld [vmem:[%s624 + $0xa8] sm:$0xf]
        %v668 = vld [vmem:[%s624 + $0xac] sm:$0xf]
        %v669 = vld [vmem:[%s624 + $0xb0] sm:$0xf]
        %v670 = vld [vmem:[%s624 + $0xb4] sm:$0xf]
        %v671 = vld [vmem:[%s624 + $0xb8] sm:$0xf]
        %v672 = vld [vmem:[%s624 + $0xbc] sm:$0xf]
        %v673 = vld [vmem:[%s624 + $0xc0] sm:$0xf]
        %v674 = vld [vmem:[%s624 + $0xc4] sm:$0xf]
        %v675 = vld [vmem:[%s624 + $0xc8] sm:$0xf]
        %v676 = vld [vmem:[%s624 + $0xcc] sm:$0xf]
        %v677 = vld [vmem:[%s624 + $0xd0] sm:$0xf]
        %v678 = vld [vmem:[%s624 + $0xd4] sm:$0xf]
        %v679 = vld [vmem:[%s624 + $0xd8] sm:$0xf]
        %v680 = vld [vmem:[%s624 + $0xdc] sm:$0xf]
        %v681 = vld [vmem:[%s624 + $0xe0] sm:$0xf]
        %v682 = vld [vmem:[%s624 + $0xe4] sm:$0xf]
        %v683 = vld [vmem:[%s624 + $0xe8] sm:$0xf]
        %v684 = vld [vmem:[%s624 + $0xec] sm:$0xf]
        %v685 = vld [vmem:[%s624 + $0xf0] sm:$0xf]
        %v686 = vld [vmem:[%s624 + $0xf4] sm:$0xf]
        %v687 = vld [vmem:[%s624 + $0xf8] sm:$0xf]
        %v688 = vld [vmem:[%s624 + $0xfc] sm:$0xf]
        %v689 = vld [vmem:[#allocation2] sm:$0xff]
        %v690 = vld [vmem:[#allocation2 + $0x8] sm:$0xff]
        %v691 = vld [vmem:[#allocation2 + $0x10] sm:$0xff]
        %v692 = vld [vmem:[#allocation2 + $0x18] sm:$0xff]
        %v693 = vld [vmem:[#allocation2 + $0x20] sm:$0xff]
        %v694 = vld [vmem:[#allocation2 + $0x28] sm:$0xff]
        %v695 = vld [vmem:[#allocation2 + $0x30] sm:$0xff]
        %v696 = vld [vmem:[#allocation2 + $0x38] sm:$0xff]
        %v697 = vld [vmem:[#allocation2 + $0x40] sm:$0xff]
        %v698 = vld [vmem:[#allocation2 + $0x48] sm:$0xff]
        %v699 = vld [vmem:[#allocation2 + $0x50] sm:$0xff]
        %v700 = vld [vmem:[#allocation2 + $0x58] sm:$0xff]
        %v701 = vld [vmem:[#allocation2 + $0x60] sm:$0xff]
        %v702 = vld [vmem:[#allocation2 + $0x68] sm:$0xff]
        %v703 = vld [vmem:[#allocation2 + $0x70] sm:$0xff]
        %v704 = vld [vmem:[#allocation2 + $0x78] sm:$0xff]
        %v705 = vld [vmem:[#allocation2 + $0x80] sm:$0xff]
        %v706 = vld [vmem:[#allocation2 + $0x88] sm:$0xff]
        %v707 = vld [vmem:[#allocation2 + $0x90] sm:$0xff]
        %v708 = vld [vmem:[#allocation2 + $0x98] sm:$0xff]
        %v709 = vld [vmem:[#allocation2 + $0xa0] sm:$0xff]
        %v710 = vld [vmem:[#allocation2 + $0xa8] sm:$0xff]
        %v711 = vld [vmem:[#allocation2 + $0xb0] sm:$0xff]
        %v712 = vld [vmem:[#allocation2 + $0xb8] sm:$0xff]
        %v713 = vld [vmem:[#allocation2 + $0xc0] sm:$0xff]
        %v714 = vld [vmem:[#allocation2 + $0xc8] sm:$0xff]
        %v715 = vld [vmem:[#allocation2 + $0xd0] sm:$0xff]
        %v716 = vld [vmem:[#allocation2 + $0xd8] sm:$0xff]
        %v717 = vld [vmem:[#allocation2 + $0xe0] sm:$0xff]
        %v718 = vld [vmem:[#allocation2 + $0xe8] sm:$0xff]
        %v719 = vld [vmem:[#allocation2 + $0xf0] sm:$0xff]
        %v720 = vld [vmem:[#allocation2 + $0xf8] sm:$0xff]
        %v785 = vunpack.c.l.b16 %v556
        %v786 = vunpack.c.h.b16 %v556
        %v787 = vunpack.c.l.b16 %v557
        %v788 = vunpack.c.h.b16 %v557
        %v789 = vunpack.c.l.b16 %v558
        %v790 = vunpack.c.h.b16 %v558
        %v791 = vunpack.c.l.b16 %v559
        %v792 = vunpack.c.h.b16 %v559
        %v793 = vunpack.c.l.b16 %v560
        %v794 = vunpack.c.h.b16 %v560
        %v795 = vunpack.c.l.b16 %v561
        %v796 = vunpack.c.h.b16 %v561
        %v797 = vunpack.c.l.b16 %v562
        %v798 = vunpack.c.h.b16 %v562
        %v799 = vunpack.c.l.b16 %v563
        %v800 = vunpack.c.h.b16 %v563
        %v801 = vunpack.c.l.b16 %v564
        %v802 = vunpack.c.h.b16 %v564
        %v803 = vunpack.c.l.b16 %v565
        %v804 = vunpack.c.h.b16 %v565
        %v805 = vunpack.c.l.b16 %v566
        %v806 = vunpack.c.h.b16 %v566
        %v807 = vunpack.c.l.b16 %v567
        %v808 = vunpack.c.h.b16 %v567
        %v809 = vunpack.c.l.b16 %v568
        %v810 = vunpack.c.h.b16 %v568
        %v811 = vunpack.c.l.b16 %v569
        %v812 = vunpack.c.h.b16 %v569
        %v813 = vunpack.c.l.b16 %v570
        %v814 = vunpack.c.h.b16 %v570
        %v815 = vunpack.c.l.b16 %v571
        %v816 = vunpack.c.h.b16 %v571
        %v817 = vunpack.c.l.b16 %v572
        %v818 = vunpack.c.h.b16 %v572
        %v819 = vunpack.c.l.b16 %v573
        %v820 = vunpack.c.h.b16 %v573
        %v821 = vunpack.c.l.b16 %v574
        %v822 = vunpack.c.h.b16 %v574
        %v823 = vunpack.c.l.b16 %v575
        %v824 = vunpack.c.h.b16 %v575
        %v825 = vunpack.c.l.b16 %v576
        %v826 = vunpack.c.h.b16 %v576
        %v827 = vunpack.c.l.b16 %v577
        %v828 = vunpack.c.h.b16 %v577
        %v829 = vunpack.c.l.b16 %v578
        %v830 = vunpack.c.h.b16 %v578
        %v831 = vunpack.c.l.b16 %v579
        %v832 = vunpack.c.h.b16 %v579
        %v833 = vunpack.c.l.b16 %v580
        %v834 = vunpack.c.h.b16 %v580
        %v835 = vunpack.c.l.b16 %v581
        %v836 = vunpack.c.h.b16 %v581
        %v837 = vunpack.c.l.b16 %v582
        %v838 = vunpack.c.h.b16 %v582
        %v839 = vunpack.c.l.b16 %v583
        %v840 = vunpack.c.h.b16 %v583
        %v841 = vunpack.c.l.b16 %v584
        %v842 = vunpack.c.h.b16 %v584
        %v843 = vunpack.c.l.b16 %v585
        %v844 = vunpack.c.h.b16 %v585
        %v845 = vunpack.c.l.b16 %v586
        %v846 = vunpack.c.h.b16 %v586
        %v847 = vunpack.c.l.b16 %v587
        %v848 = vunpack.c.h.b16 %v587
        %v849 = vunpack.c.l.b16 %v588
        %v850 = vunpack.c.h.b16 %v588
        %v851 = vunpack.c.l.b16 %v589
        %v852 = vunpack.c.h.b16 %v589
        %v853 = vunpack.c.l.b16 %v590
        %v854 = vunpack.c.h.b16 %v590
        %v855 = vunpack.c.l.b16 %v591
        %v856 = vunpack.c.h.b16 %v591
        %v857 = vunpack.c.l.b16 %v592
        %v858 = vunpack.c.h.b16 %v592
        %v859 = vunpack.c.l.b16 %v593
        %v860 = vunpack.c.h.b16 %v593
        %v861 = vunpack.c.l.b16 %v594
        %v862 = vunpack.c.h.b16 %v594
        %v863 = vunpack.c.l.b16 %v595
        %v864 = vunpack.c.h.b16 %v595
        %v865 = vunpack.c.l.b16 %v596
        %v866 = vunpack.c.h.b16 %v596
        %v867 = vunpack.c.l.b16 %v597
        %v868 = vunpack.c.h.b16 %v597
        %v869 = vunpack.c.l.b16 %v598
        %v870 = vunpack.c.h.b16 %v598
        %v871 = vunpack.c.l.b16 %v599
        %v872 = vunpack.c.h.b16 %v599
        %v873 = vunpack.c.l.b16 %v600
        %v874 = vunpack.c.h.b16 %v600
        %v875 = vunpack.c.l.b16 %v601
        %v876 = vunpack.c.h.b16 %v601
        %v877 = vunpack.c.l.b16 %v602
        %v878 = vunpack.c.h.b16 %v602
        %v879 = vunpack.c.l.b16 %v603
        %v880 = vunpack.c.h.b16 %v603
        %v881 = vunpack.c.l.b16 %v604
        %v882 = vunpack.c.h.b16 %v604
        %v883 = vunpack.c.l.b16 %v605
        %v884 = vunpack.c.h.b16 %v605
        %v885 = vunpack.c.l.b16 %v606
        %v886 = vunpack.c.h.b16 %v606
        %v887 = vunpack.c.l.b16 %v607
        %v888 = vunpack.c.h.b16 %v607
        %v889 = vunpack.c.l.b16 %v608
        %v890 = vunpack.c.h.b16 %v608
        %v891 = vunpack.c.l.b16 %v609
        %v892 = vunpack.c.h.b16 %v609
        %v893 = vunpack.c.l.b16 %v610
        %v894 = vunpack.c.h.b16 %v610
        %v895 = vunpack.c.l.b16 %v611
        %v896 = vunpack.c.h.b16 %v611
        %v897 = vunpack.c.l.b16 %v612
        %v898 = vunpack.c.h.b16 %v612
        %v899 = vunpack.c.l.b16 %v613
        %v900 = vunpack.c.h.b16 %v613
        %v901 = vunpack.c.l.b16 %v614
        %v902 = vunpack.c.h.b16 %v614
        %v903 = vunpack.c.l.b16 %v615
        %v904 = vunpack.c.h.b16 %v615
        %v905 = vunpack.c.l.b16 %v616
        %v906 = vunpack.c.h.b16 %v616
        %v907 = vunpack.c.l.b16 %v617
        %v908 = vunpack.c.h.b16 %v617
        %v909 = vunpack.c.l.b16 %v618
        %v910 = vunpack.c.h.b16 %v618
        %v911 = vunpack.c.l.b16 %v619
        %v912 = vunpack.c.h.b16 %v619
        %v913 = vpack.c.b16 %v789, %v785
        %v914 = vpack.c.b16 %v790, %v786
        %v915 = vpack.c.b16 %v791, %v787
        %v916 = vpack.c.b16 %v792, %v788
        %v917 = vpack.c.b16 %v797, %v793
        %v918 = vpack.c.b16 %v798, %v794
        %v919 = vpack.c.b16 %v799, %v795
        %v920 = vpack.c.b16 %v800, %v796
        %v921 = vpack.c.b16 %v805, %v801
        %v922 = vpack.c.b16 %v806, %v802
        %v923 = vpack.c.b16 %v807, %v803
        %v924 = vpack.c.b16 %v808, %v804
        %v925 = vpack.c.b16 %v813, %v809
        %v926 = vpack.c.b16 %v814, %v810
        %v927 = vpack.c.b16 %v815, %v811
        %v928 = vpack.c.b16 %v816, %v812
        %v929 = vpack.c.b16 %v821, %v817
        %v930 = vpack.c.b16 %v822, %v818
        %v931 = vpack.c.b16 %v823, %v819
        %v932 = vpack.c.b16 %v824, %v820
        %v933 = vpack.c.b16 %v829, %v825
        %v934 = vpack.c.b16 %v830, %v826
        %v935 = vpack.c.b16 %v831, %v827
        %v936 = vpack.c.b16 %v832, %v828
        %v937 = vpack.c.b16 %v837, %v833
        %v938 = vpack.c.b16 %v838, %v834
        %v939 = vpack.c.b16 %v839, %v835
        %v940 = vpack.c.b16 %v840, %v836
        %v941 = vpack.c.b16 %v845, %v841
        %v942 = vpack.c.b16 %v846, %v842
        %v943 = vpack.c.b16 %v847, %v843
        %v944 = vpack.c.b16 %v848, %v844
        %v945 = vpack.c.b16 %v853, %v849
        %v946 = vpack.c.b16 %v854, %v850
        %v947 = vpack.c.b16 %v855, %v851
        %v948 = vpack.c.b16 %v856, %v852
        %v949 = vpack.c.b16 %v861, %v857
        %v950 = vpack.c.b16 %v862, %v858
        %v951 = vpack.c.b16 %v863, %v859
        %v952 = vpack.c.b16 %v864, %v860
        %v953 = vpack.c.b16 %v869, %v865
        %v954 = vpack.c.b16 %v870, %v866
        %v955 = vpack.c.b16 %v871, %v867
        %v956 = vpack.c.b16 %v872, %v868
        %v957 = vpack.c.b16 %v877, %v873
        %v958 = vpack.c.b16 %v878, %v874
        %v959 = vpack.c.b16 %v879, %v875
        %v960 = vpack.c.b16 %v880, %v876
        %v961 = vpack.c.b16 %v885, %v881
        %v962 = vpack.c.b16 %v886, %v882
        %v963 = vpack.c.b16 %v887, %v883
        %v964 = vpack.c.b16 %v888, %v884
        %v965 = vpack.c.b16 %v893, %v889
        %v966 = vpack.c.b16 %v894, %v890
        %v967 = vpack.c.b16 %v895, %v891
        %v968 = vpack.c.b16 %v896, %v892
        %v969 = vpack.c.b16 %v901, %v897
        %v970 = vpack.c.b16 %v902, %v898
        %v971 = vpack.c.b16 %v903, %v899
        %v972 = vpack.c.b16 %v904, %v900
        %v973 = vpack.c.b16 %v909, %v905
        %v974 = vpack.c.b16 %v910, %v906
        %v975 = vpack.c.b16 %v911, %v907
        %v976 = vpack.c.b16 %v912, %v908
        %v1105 = vunpack.c.l.b16 %v625
        %v1106 = vunpack.c.l.b16 %v626
        %v1107 = vunpack.c.l.b16 %v627
        %v1108 = vunpack.c.l.b16 %v628
        %v1109 = vunpack.c.l.b16 %v629
        %v1110 = vunpack.c.l.b16 %v630
        %v1111 = vunpack.c.l.b16 %v631
        %v1112 = vunpack.c.l.b16 %v632
        %v1113 = vunpack.c.l.b16 %v633
        %v1114 = vunpack.c.l.b16 %v634
        %v1115 = vunpack.c.l.b16 %v635
        %v1116 = vunpack.c.l.b16 %v636
        %v1117 = vunpack.c.l.b16 %v637
        %v1118 = vunpack.c.l.b16 %v638
        %v1119 = vunpack.c.l.b16 %v639
        %v1120 = vunpack.c.l.b16 %v640
        %v1121 = vunpack.c.l.b16 %v641
        %v1122 = vunpack.c.l.b16 %v642
        %v1123 = vunpack.c.l.b16 %v643
        %v1124 = vunpack.c.l.b16 %v644
        %v1125 = vunpack.c.l.b16 %v645
        %v1126 = vunpack.c.l.b16 %v646
        %v1127 = vunpack.c.l.b16 %v647
        %v1128 = vunpack.c.l.b16 %v648
        %v1129 = vunpack.c.l.b16 %v649
        %v1130 = vunpack.c.l.b16 %v650
        %v1131 = vunpack.c.l.b16 %v651
        %v1132 = vunpack.c.l.b16 %v652
        %v1133 = vunpack.c.l.b16 %v653
        %v1134 = vunpack.c.l.b16 %v654
        %v1135 = vunpack.c.l.b16 %v655
        %v1136 = vunpack.c.l.b16 %v656
        %v1137 = vunpack.c.l.b16 %v657
        %v1138 = vunpack.c.l.b16 %v658
        %v1139 = vunpack.c.l.b16 %v659
        %v1140 = vunpack.c.l.b16 %v660
        %v1141 = vunpack.c.l.b16 %v661
        %v1142 = vunpack.c.l.b16 %v662
        %v1143 = vunpack.c.l.b16 %v663
        %v1144 = vunpack.c.l.b16 %v664
        %v1145 = vunpack.c.l.b16 %v665
        %v1146 = vunpack.c.l.b16 %v666
        %v1147 = vunpack.c.l.b16 %v667
        %v1148 = vunpack.c.l.b16 %v668
        %v1149 = vunpack.c.l.b16 %v669
        %v1150 = vunpack.c.l.b16 %v670
        %v1151 = vunpack.c.l.b16 %v671
        %v1152 = vunpack.c.l.b16 %v672
        %v1153 = vunpack.c.l.b16 %v673
        %v1154 = vunpack.c.l.b16 %v674
        %v1155 = vunpack.c.l.b16 %v675
        %v1156 = vunpack.c.l.b16 %v676
        %v1157 = vunpack.c.l.b16 %v677
        %v1158 = vunpack.c.l.b16 %v678
        %v1159 = vunpack.c.l.b16 %v679
        %v1160 = vunpack.c.l.b16 %v680
        %v1161 = vunpack.c.l.b16 %v681
        %v1162 = vunpack.c.l.b16 %v682
        %v1163 = vunpack.c.l.b16 %v683
        %v1164 = vunpack.c.l.b16 %v684
        %v1165 = vunpack.c.l.b16 %v685
        %v1166 = vunpack.c.l.b16 %v686
        %v1167 = vunpack.c.l.b16 %v687
        %v1168 = vunpack.c.l.b16 %v688
        %v1169 = vpack.c.b16 %v1106, %v1105
        %v1170 = vpack.c.b16 %v1108, %v1107
        %v1171 = vpack.c.b16 %v1110, %v1109
        %v1172 = vpack.c.b16 %v1112, %v1111
        %v1173 = vpack.c.b16 %v1114, %v1113
        %v1174 = vpack.c.b16 %v1116, %v1115
        %v1175 = vpack.c.b16 %v1118, %v1117
        %v1176 = vpack.c.b16 %v1120, %v1119
        %v1177 = vpack.c.b16 %v1122, %v1121
        %v1178 = vpack.c.b16 %v1124, %v1123
        %v1179 = vpack.c.b16 %v1126, %v1125
        %v1180 = vpack.c.b16 %v1128, %v1127
        %v1181 = vpack.c.b16 %v1130, %v1129
        %v1182 = vpack.c.b16 %v1132, %v1131
        %v1183 = vpack.c.b16 %v1134, %v1133
        %v1184 = vpack.c.b16 %v1136, %v1135
        %v1185 = vpack.c.b16 %v1138, %v1137
        %v1186 = vpack.c.b16 %v1140, %v1139
        %v1187 = vpack.c.b16 %v1142, %v1141
        %v1188 = vpack.c.b16 %v1144, %v1143
        %v1189 = vpack.c.b16 %v1146, %v1145
        %v1190 = vpack.c.b16 %v1148, %v1147
        %v1191 = vpack.c.b16 %v1150, %v1149
        %v1192 = vpack.c.b16 %v1152, %v1151
        %v1193 = vpack.c.b16 %v1154, %v1153
        %v1194 = vpack.c.b16 %v1156, %v1155
        %v1195 = vpack.c.b16 %v1158, %v1157
        %v1196 = vpack.c.b16 %v1160, %v1159
        %v1197 = vpack.c.b16 %v1162, %v1161
        %v1198 = vpack.c.b16 %v1164, %v1163
        %v1199 = vpack.c.b16 %v1166, %v1165
        %v1200 = vpack.c.b16 %v1168, %v1167
        %1233 = vmatprep.subr.bf16.mxu0 0
        %1234 = vmatpush1.bf16.msra.mxu0 %v1169
        %1235 = vmatprep.subr.bf16.mxu0 0
        %1236 = vmatpush1.bf16.msra.mxu0 %v1170
        %1237 = vmatprep.subr.bf16.mxu0 0
        %1238 = vmatpush1.bf16.msra.mxu0 %v1171
        %1239 = vmatprep.subr.bf16.mxu0 0
        %1240 = vmatpush1.bf16.msra.mxu0 %v1172
        %1241 = vmatprep.subr.bf16.mxu0 0
        %1242 = vmatpush1.bf16.msra.mxu0 %v1173
        %1243 = vmatprep.subr.bf16.mxu0 0
        %1244 = vmatpush1.bf16.msra.mxu0 %v1174
        %1245 = vmatprep.subr.bf16.mxu0 0
        %1246 = vmatpush1.bf16.msra.mxu0 %v1175
        %1247 = vmatprep.subr.bf16.mxu0 0
        %1248 = vmatpush1.bf16.msra.mxu0 %v1176
        %1249 = vmatprep.subr.bf16.mxu0 0
        %1250 = vmatpush1.bf16.msra.mxu0 %v1177
        %1251 = vmatprep.subr.bf16.mxu0 0
        %1252 = vmatpush1.bf16.msra.mxu0 %v1178
        %1253 = vmatprep.subr.bf16.mxu0 0
        %1254 = vmatpush1.bf16.msra.mxu0 %v1179
        %1255 = vmatprep.subr.bf16.mxu0 0
        %1256 = vmatpush1.bf16.msra.mxu0 %v1180
        %1257 = vmatprep.subr.bf16.mxu0 0
        %1258 = vmatpush1.bf16.msra.mxu0 %v1181
        %1259 = vmatprep.subr.bf16.mxu0 0
        %1260 = vmatpush1.bf16.msra.mxu0 %v1182
        %1261 = vmatprep.subr.bf16.mxu0 0
        %1262 = vmatpush1.bf16.msra.mxu0 %v1183
        %1263 = vmatprep.subr.bf16.mxu0 0
        %1264 = vmatpush1.bf16.msra.mxu0 %v1184
        %1265 = vmatprep.mubr.bf16.mxu0 %v914
        %1266 = vmatmul.mubr.bf16.gmra.mrb[0].mxu0 %v913
        %v1267 = vpop.f32.mrb[0].mxu0
        %v1268 = vadd.f32 0.0, %v1267
        %v1269 = vpop.f32.mrb[0].mxu0
        %v1270 = vpop.f32.mrb[0].mxu0
        %v1271 = vadd.f32 0.0, %v1270
        %v1272 = vpop.f32.mrb[0].mxu0
        %1273 = vmatprep.mubr.bf16.mxu0 %v918
        %1274 = vmatmul.mubr.bf16.gmra.mrb[0].mxu0 %v917
        %v1275 = vpop.f32.mrb[0].mxu0
        %v1276 = vadd.f32 0.0, %v1275
        %v1277 = vpop.f32.mrb[0].mxu0
        %v1278 = vpop.f32.mrb[0].mxu0
        %v1279 = vadd.f32 0.0, %v1278
        %v1280 = vpop.f32.mrb[0].mxu0
        %1281 = vmatprep.mubr.bf16.mxu0 %v922
        %1282 = vmatmul.mubr.bf16.gmra.mrb[0].mxu0 %v921
        %v1283 = vpop.f32.mrb[0].mxu0
        %v1284 = vadd.f32 0.0, %v1283
        %v1285 = vpop.f32.mrb[0].mxu0
        %v1286 = vpop.f32.mrb[0].mxu0
        %v1287 = vadd.f32 0.0, %v1286
        %v1288 = vpop.f32.mrb[0].mxu0
        %1289 = vmatprep.mubr.bf16.mxu0 %v926
        %1290 = vmatmul.mubr.bf16.gmra.mrb[0].mxu0 %v925
        %v1291 = vpop.f32.mrb[0].mxu0
        %v1292 = vadd.f32 0.0, %v1291
        %v1293 = vpop.f32.mrb[0].mxu0
        %v1294 = vpop.f32.mrb[0].mxu0
        %v1295 = vadd.f32 0.0, %v1294
        %v1296 = vpop.f32.mrb[0].mxu0
        %1297 = vmatprep.mubr.bf16.mxu0 %v930
        %1298 = vmatmul.mubr.bf16.gmra.mrb[0].mxu0 %v929
        %v1299 = vpop.f32.mrb[0].mxu0
        %v1300 = vadd.f32 0.0, %v1299
        %v1301 = vpop.f32.mrb[0].mxu0
        %v1302 = vpop.f32.mrb[0].mxu0
        %v1303 = vadd.f32 0.0, %v1302
        %v1304 = vpop.f32.mrb[0].mxu0
        %1305 = vmatprep.mubr.bf16.mxu0 %v934
        %1306 = vmatmul.mubr.bf16.gmra.mrb[0].mxu0 %v933
        %v1307 = vpop.f32.mrb[0].mxu0
        %v1308 = vadd.f32 0.0, %v1307
        %v1309 = vpop.f32.mrb[0].mxu0
        %v1310 = vpop.f32.mrb[0].mxu0
        %v1311 = vadd.f32 0.0, %v1310
        %v1312 = vpop.f32.mrb[0].mxu0
        %1313 = vmatprep.mubr.bf16.mxu0 %v938
        %1314 = vmatmul.mubr.bf16.gmra.mrb[0].mxu0 %v937
        %v1315 = vpop.f32.mrb[0].mxu0
        %v1316 = vadd.f32 0.0, %v1315
        %v1317 = vpop.f32.mrb[0].mxu0
        %v1318 = vpop.f32.mrb[0].mxu0
        %v1319 = vadd.f32 0.0, %v1318
        %v1320 = vpop.f32.mrb[0].mxu0
        %1321 = vmatprep.mubr.bf16.mxu0 %v942
        %1322 = vmatmul.mubr.bf16.gmra.mrb[0].mxu0 %v941
        %v1323 = vpop.f32.mrb[0].mxu0
        %v1324 = vadd.f32 0.0, %v1323
        %v1325 = vpop.f32.mrb[0].mxu0
        %v1326 = vpop.f32.mrb[0].mxu0
        %v1327 = vadd.f32 0.0, %v1326
        %v1328 = vpop.f32.mrb[0].mxu0
        %1329 = vmatprep.mubr.bf16.mxu0 %v946
        %1330 = vmatmul.mubr.bf16.gmra.mrb[0].mxu0 %v945
        %v1331 = vpop.f32.mrb[0].mxu0
        %v1332 = vadd.f32 0.0, %v1331
        %v1333 = vpop.f32.mrb[0].mxu0
        %v1334 = vpop.f32.mrb[0].mxu0
        %v1335 = vadd.f32 0.0, %v1334
        %v1336 = vpop.f32.mrb[0].mxu0
        %1337 = vmatprep.mubr.bf16.mxu0 %v950
        %1338 = vmatmul.mubr.bf16.gmra.mrb[0].mxu0 %v949
        %v1339 = vpop.f32.mrb[0].mxu0
        %v1340 = vadd.f32 0.0, %v1339
        %v1341 = vpop.f32.mrb[0].mxu0
        %v1342 = vpop.f32.mrb[0].mxu0
        %v1343 = vadd.f32 0.0, %v1342
        %v1344 = vpop.f32.mrb[0].mxu0
        %1345 = vmatprep.mubr.bf16.mxu0 %v954
        %1346 = vmatmul.mubr.bf16.gmra.mrb[0].mxu0 %v953
        %v1347 = vpop.f32.mrb[0].mxu0
        %v1348 = vadd.f32 0.0, %v1347
        %v1349 = vpop.f32.mrb[0].mxu0
        %v1350 = vpop.f32.mrb[0].mxu0
        %v1351 = vadd.f32 0.0, %v1350
        %v1352 = vpop.f32.mrb[0].mxu0
        %1353 = vmatprep.mubr.bf16.mxu0 %v958
        %1354 = vmatmul.mubr.bf16.gmra.mrb[0].mxu0 %v957
        %v1355 = vpop.f32.mrb[0].mxu0
        %v1356 = vadd.f32 0.0, %v1355
        %v1357 = vpop.f32.mrb[0].mxu0
        %v1358 = vpop.f32.mrb[0].mxu0
        %v1359 = vadd.f32 0.0, %v1358
        %v1360 = vpop.f32.mrb[0].mxu0
        %1361 = vmatprep.mubr.bf16.mxu0 %v962
        %1362 = vmatmul.mubr.bf16.gmra.mrb[0].mxu0 %v961
        %v1363 = vpop.f32.mrb[0].mxu0
        %v1364 = vadd.f32 0.0, %v1363
        %v1365 = vpop.f32.mrb[0].mxu0
        %v1366 = vpop.f32.mrb[0].mxu0
        %v1367 = vadd.f32 0.0, %v1366
        %v1368 = vpop.f32.mrb[0].mxu0
        %1369 = vmatprep.mubr.bf16.mxu0 %v966
        %1370 = vmatmul.mubr.bf16.gmra.mrb[0].mxu0 %v965
        %v1371 = vpop.f32.mrb[0].mxu0
        %v1372 = vadd.f32 0.0, %v1371
        %v1373 = vpop.f32.mrb[0].mxu0
        %v1374 = vpop.f32.mrb[0].mxu0
        %v1375 = vadd.f32 0.0, %v1374
        %v1376 = vpop.f32.mrb[0].mxu0
        %1377 = vmatprep.mubr.bf16.mxu0 %v970
        %1378 = vmatmul.mubr.bf16.gmra.mrb[0].mxu0 %v969
        %v1379 = vpop.f32.mrb[0].mxu0
        %v1380 = vadd.f32 0.0, %v1379
        %v1381 = vpop.f32.mrb[0].mxu0
        %v1382 = vpop.f32.mrb[0].mxu0
        %v1383 = vadd.f32 0.0, %v1382
        %v1384 = vpop.f32.mrb[0].mxu0
        %1385 = vmatprep.mubr.bf16.mxu0 %v974
        %1386 = vmatmul.mubr.bf16.gmra.mrb[0].mxu0 %v973
        %v1387 = vpop.f32.mrb[0].mxu0
        %v1388 = vadd.f32 0.0, %v1387
        %v1389 = vpop.f32.mrb[0].mxu0
        %v1390 = vpop.f32.mrb[0].mxu0
        %v1391 = vadd.f32 0.0, %v1390
        %v1392 = vpop.f32.mrb[0].mxu0
        %1393 = vdwg.mxu0
        %1394 = vmatprep.subr.bf16.mxu0 0
        %1395 = vmatpush1.bf16.msra.mxu0 %v1185
        %1396 = vmatprep.subr.bf16.mxu0 0
        %1397 = vmatpush1.bf16.msra.mxu0 %v1186
        %1398 = vmatprep.subr.bf16.mxu0 0
        %1399 = vmatpush1.bf16.msra.mxu0 %v1187
        %1400 = vmatprep.subr.bf16.mxu0 0
        %1401 = vmatpush1.bf16.msra.mxu0 %v1188
        %1402 = vmatprep.subr.bf16.mxu0 0
        %1403 = vmatpush1.bf16.msra.mxu0 %v1189
        %1404 = vmatprep.subr.bf16.mxu0 0
        %1405 = vmatpush1.bf16.msra.mxu0 %v1190
        %1406 = vmatprep.subr.bf16.mxu0 0
        %1407 = vmatpush1.bf16.msra.mxu0 %v1191
        %1408 = vmatprep.subr.bf16.mxu0 0
        %1409 = vmatpush1.bf16.msra.mxu0 %v1192
        %1410 = vmatprep.subr.bf16.mxu0 0
        %1411 = vmatpush1.bf16.msra.mxu0 %v1193
        %1412 = vmatprep.subr.bf16.mxu0 0
        %1413 = vmatpush1.bf16.msra.mxu0 %v1194
        %1414 = vmatprep.subr.bf16.mxu0 0
        %1415 = vmatpush1.bf16.msra.mxu0 %v1195
        %1416 = vmatprep.subr.bf16.mxu0 0
        %1417 = vmatpush1.bf16.msra.mxu0 %v1196
        %1418 = vmatprep.subr.bf16.mxu0 0
        %1419 = vmatpush1.bf16.msra.mxu0 %v1197
        %1420 = vmatprep.subr.bf16.mxu0 0
        %1421 = vmatpush1.bf16.msra.mxu0 %v1198
        %1422 = vmatprep.subr.bf16.mxu0 0
        %1423 = vmatpush1.bf16.msra.mxu0 %v1199
        %1424 = vmatprep.subr.bf16.mxu0 0
        %1425 = vmatpush1.bf16.msra.mxu0 %v1200
        %1426 = vmatprep.mubr.bf16.mxu0 %v916
        %1427 = vmatmul.mubr.bf16.gmra.mrb[0].mxu0 %v915
        %v1428 = vpop.f32.mrb[0].mxu0
        %v1429 = vadd.f32 %v1268, %v1428
        %v1430 = vpop.f32.mrb[0].mxu0
        %v1431 = vpop.f32.mrb[0].mxu0
        %v1432 = vadd.f32 %v1271, %v1431
        %v1433 = vpop.f32.mrb[0].mxu0
        %1434 = vmatprep.mubr.bf16.mxu0 %v920
        %1435 = vmatmul.mubr.bf16.gmra.mrb[0].mxu0 %v919
        %v1436 = vpop.f32.mrb[0].mxu0
        %v1437 = vadd.f32 %v1276, %v1436
        %v1438 = vpop.f32.mrb[0].mxu0
        %v1439 = vpop.f32.mrb[0].mxu0
        %v1440 = vadd.f32 %v1279, %v1439
        %v1441 = vpop.f32.mrb[0].mxu0
        %1442 = vmatprep.mubr.bf16.mxu0 %v924
        %1443 = vmatmul.mubr.bf16.gmra.mrb[0].mxu0 %v923
        %v1444 = vpop.f32.mrb[0].mxu0
        %v1445 = vadd.f32 %v1284, %v1444
        %v1446 = vpop.f32.mrb[0].mxu0
        %v1447 = vpop.f32.mrb[0].mxu0
        %v1448 = vadd.f32 %v1287, %v1447
        %v1449 = vpop.f32.mrb[0].mxu0
        %1450 = vmatprep.mubr.bf16.mxu0 %v928
        %1451 = vmatmul.mubr.bf16.gmra.mrb[0].mxu0 %v927
        %v1452 = vpop.f32.mrb[0].mxu0
        %v1453 = vadd.f32 %v1292, %v1452
        %v1454 = vpop.f32.mrb[0].mxu0
        %v1455 = vpop.f32.mrb[0].mxu0
        %v1456 = vadd.f32 %v1295, %v1455
        %v1457 = vpop.f32.mrb[0].mxu0
        %1458 = vmatprep.mubr.bf16.mxu0 %v932
        %1459 = vmatmul.mubr.bf16.gmra.mrb[0].mxu0 %v931
        %v1460 = vpop.f32.mrb[0].mxu0
        %v1461 = vadd.f32 %v1300, %v1460
        %v1462 = vpop.f32.mrb[0].mxu0
        %v1463 = vpop.f32.mrb[0].mxu0
        %v1464 = vadd.f32 %v1303, %v1463
        %v1465 = vpop.f32.mrb[0].mxu0
        %1466 = vmatprep.mubr.bf16.mxu0 %v936
        %1467 = vmatmul.mubr.bf16.gmra.mrb[0].mxu0 %v935
        %v1468 = vpop.f32.mrb[0].mxu0
        %v1469 = vadd.f32 %v1308, %v1468
        %v1470 = vpop.f32.mrb[0].mxu0
        %v1471 = vpop.f32.mrb[0].mxu0
        %v1472 = vadd.f32 %v1311, %v1471
        %v1473 = vpop.f32.mrb[0].mxu0
        %1474 = vmatprep.mubr.bf16.mxu0 %v940
        %1475 = vmatmul.mubr.bf16.gmra.mrb[0].mxu0 %v939
        %v1476 = vpop.f32.mrb[0].mxu0
        %v1477 = vadd.f32 %v1316, %v1476
        %v1478 = vpop.f32.mrb[0].mxu0
        %v1479 = vpop.f32.mrb[0].mxu0
        %v1480 = vadd.f32 %v1319, %v1479
        %v1481 = vpop.f32.mrb[0].mxu0
        %1482 = vmatprep.mubr.bf16.mxu0 %v944
        %1483 = vmatmul.mubr.bf16.gmra.mrb[0].mxu0 %v943
        %v1484 = vpop.f32.mrb[0].mxu0
        %v1485 = vadd.f32 %v1324, %v1484
        %v1486 = vpop.f32.mrb[0].mxu0
        %v1487 = vpop.f32.mrb[0].mxu0
        %v1488 = vadd.f32 %v1327, %v1487
        %v1489 = vpop.f32.mrb[0].mxu0
        %1490 = vmatprep.mubr.bf16.mxu0 %v948
        %1491 = vmatmul.mubr.bf16.gmra.mrb[0].mxu0 %v947
        %v1492 = vpop.f32.mrb[0].mxu0
        %v1493 = vadd.f32 %v1332, %v1492
        %v1494 = vpop.f32.mrb[0].mxu0
        %v1495 = vpop.f32.mrb[0].mxu0
        %v1496 = vadd.f32 %v1335, %v1495
        %v1497 = vpop.f32.mrb[0].mxu0
        %1498 = vmatprep.mubr.bf16.mxu0 %v952
        %1499 = vmatmul.mubr.bf16.gmra.mrb[0].mxu0 %v951
        %v1500 = vpop.f32.mrb[0].mxu0
        %v1501 = vadd.f32 %v1340, %v1500
        %v1502 = vpop.f32.mrb[0].mxu0
        %v1503 = vpop.f32.mrb[0].mxu0
        %v1504 = vadd.f32 %v1343, %v1503
        %v1505 = vpop.f32.mrb[0].mxu0
        %1506 = vmatprep.mubr.bf16.mxu0 %v956
        %1507 = vmatmul.mubr.bf16.gmra.mrb[0].mxu0 %v955
        %v1508 = vpop.f32.mrb[0].mxu0
        %v1509 = vadd.f32 %v1348, %v1508
        %v1510 = vpop.f32.mrb[0].mxu0
        %v1511 = vpop.f32.mrb[0].mxu0
        %v1512 = vadd.f32 %v1351, %v1511
        %v1513 = vpop.f32.mrb[0].mxu0
        %1514 = vmatprep.mubr.bf16.mxu0 %v960
        %1515 = vmatmul.mubr.bf16.gmra.mrb[0].mxu0 %v959
        %v1516 = vpop.f32.mrb[0].mxu0
        %v1517 = vadd.f32 %v1356, %v1516
        %v1518 = vpop.f32.mrb[0].mxu0
        %v1519 = vpop.f32.mrb[0].mxu0
        %v1520 = vadd.f32 %v1359, %v1519
        %v1521 = vpop.f32.mrb[0].mxu0
        %1522 = vmatprep.mubr.bf16.mxu0 %v964
        %1523 = vmatmul.mubr.bf16.gmra.mrb[0].mxu0 %v963
        %v1524 = vpop.f32.mrb[0].mxu0
        %v1525 = vadd.f32 %v1364, %v1524
        %v1526 = vpop.f32.mrb[0].mxu0
        %v1527 = vpop.f32.mrb[0].mxu0
        %v1528 = vadd.f32 %v1367, %v1527
        %v1529 = vpop.f32.mrb[0].mxu0
        %1530 = vmatprep.mubr.bf16.mxu0 %v968
        %1531 = vmatmul.mubr.bf16.gmra.mrb[0].mxu0 %v967
        %v1532 = vpop.f32.mrb[0].mxu0
        %v1533 = vadd.f32 %v1372, %v1532
        %v1534 = vpop.f32.mrb[0].mxu0
        %v1535 = vpop.f32.mrb[0].mxu0
        %v1536 = vadd.f32 %v1375, %v1535
        %v1537 = vpop.f32.mrb[0].mxu0
        %1538 = vmatprep.mubr.bf16.mxu0 %v972
        %1539 = vmatmul.mubr.bf16.gmra.mrb[0].mxu0 %v971
        %v1540 = vpop.f32.mrb[0].mxu0
        %v1541 = vadd.f32 %v1380, %v1540
        %v1542 = vpop.f32.mrb[0].mxu0
        %v1543 = vpop.f32.mrb[0].mxu0
        %v1544 = vadd.f32 %v1383, %v1543
        %v1545 = vpop.f32.mrb[0].mxu0
        %1546 = vmatprep.mubr.bf16.mxu0 %v976
        %1547 = vmatmul.mubr.bf16.gmra.mrb[0].mxu0 %v975
        %v1548 = vpop.f32.mrb[0].mxu0
        %v1549 = vadd.f32 %v1388, %v1548
        %v1550 = vpop.f32.mrb[0].mxu0
        %v1551 = vpop.f32.mrb[0].mxu0
        %v1552 = vadd.f32 %v1391, %v1551
        %v1553 = vpop.f32.mrb[0].mxu0
        %1554 = vdwg.mxu0
        %v1555 = vadd.f32 %v689, %v1429
        %v1556 = vadd.f32 %v690, %v1432
        %v1557 = vadd.f32 %v691, %v1437
        %v1558 = vadd.f32 %v692, %v1440
        %v1559 = vadd.f32 %v693, %v1445
        %v1560 = vadd.f32 %v694, %v1448
        %v1561 = vadd.f32 %v695, %v1453
        %v1562 = vadd.f32 %v696, %v1456
        %v1563 = vadd.f32 %v697, %v1461
        %v1564 = vadd.f32 %v698, %v1464
        %v1565 = vadd.f32 %v699, %v1469
        %v1566 = vadd.f32 %v700, %v1472
        %v1567 = vadd.f32 %v701, %v1477
        %v1568 = vadd.f32 %v702, %v1480
        %v1569 = vadd.f32 %v703, %v1485
        %v1570 = vadd.f32 %v704, %v1488
        %v1571 = vadd.f32 %v705, %v1493
        %v1572 = vadd.f32 %v706, %v1496
        %v1573 = vadd.f32 %v707, %v1501
        %v1574 = vadd.f32 %v708, %v1504
        %v1575 = vadd.f32 %v709, %v1509
        %v1576 = vadd.f32 %v710, %v1512
        %v1577 = vadd.f32 %v711, %v1517
        %v1578 = vadd.f32 %v712, %v1520
        %v1579 = vadd.f32 %v713, %v1525
        %v1580 = vadd.f32 %v714, %v1528
        %v1581 = vadd.f32 %v715, %v1533
        %v1582 = vadd.f32 %v716, %v1536
        %v1583 = vadd.f32 %v717, %v1541
        %v1584 = vadd.f32 %v718, %v1544
        %v1585 = vadd.f32 %v719, %v1549
        %v1586 = vadd.f32 %v720, %v1552
        %1587 = vst [vmem:[#allocation2] sm:$0xff] %v1555
        %1588 = vst [vmem:[#allocation2 + $0x8] sm:$0xff] %v1556
        %1589 = vst [vmem:[#allocation2 + $0x10] sm:$0xff] %v1557
        %1590 = vst [vmem:[#allocation2 + $0x18] sm:$0xff] %v1558
        %1591 = vst [vmem:[#allocation2 + $0x20] sm:$0xff] %v1559
        %1592 = vst [vmem:[#allocation2 + $0x28] sm:$0xff] %v1560
        %1593 = vst [vmem:[#allocation2 + $0x30] sm:$0xff] %v1561
        %1594 = vst [vmem:[#allocation2 + $0x38] sm:$0xff] %v1562
        %1595 = vst [vmem:[#allocation2 + $0x40] sm:$0xff] %v1563
        %1596 = vst [vmem:[#allocation2 + $0x48] sm:$0xff] %v1564
        %1597 = vst [vmem:[#allocation2 + $0x50] sm:$0xff] %v1565
        %1598 = vst [vmem:[#allocation2 + $0x58] sm:$0xff] %v1566
        %1599 = vst [vmem:[#allocation2 + $0x60] sm:$0xff] %v1567
        %1600 = vst [vmem:[#allocation2 + $0x68] sm:$0xff] %v1568
        %1601 = vst [vmem:[#allocation2 + $0x70] sm:$0xff] %v1569
        %1602 = vst [vmem:[#allocation2 + $0x78] sm:$0xff] %v1570
        %1603 = vst [vmem:[#allocation2 + $0x80] sm:$0xff] %v1571
        %1604 = vst [vmem:[#allocation2 + $0x88] sm:$0xff] %v1572
        %1605 = vst [vmem:[#allocation2 + $0x90] sm:$0xff] %v1573
        %1606 = vst [vmem:[#allocation2 + $0x98] sm:$0xff] %v1574
        %1607 = vst [vmem:[#allocation2 + $0xa0] sm:$0xff] %v1575
        %1608 = vst [vmem:[#allocation2 + $0xa8] sm:$0xff] %v1576
        %1609 = vst [vmem:[#allocation2 + $0xb0] sm:$0xff] %v1577
        %1610 = vst [vmem:[#allocation2 + $0xb8] sm:$0xff] %v1578
        %1611 = vst [vmem:[#allocation2 + $0xc0] sm:$0xff] %v1579
        %1612 = vst [vmem:[#allocation2 + $0xc8] sm:$0xff] %v1580
        %1613 = vst [vmem:[#allocation2 + $0xd0] sm:$0xff] %v1581
        %1614 = vst [vmem:[#allocation2 + $0xd8] sm:$0xff] %v1582
        %1615 = vst [vmem:[#allocation2 + $0xe0] sm:$0xff] %v1583
        %1616 = vst [vmem:[#allocation2 + $0xe8] sm:$0xff] %v1584
        %1617 = vst [vmem:[#allocation2 + $0xf0] sm:$0xff] %v1585
        %1618 = vst [vmem:[#allocation2 + $0xf8] sm:$0xff] %v1586
        %v1619 = vld [vmem:[#allocation3] sm:$0xff]
        %v1620 = vld [vmem:[#allocation3 + $0x8] sm:$0xff]
        %v1621 = vld [vmem:[#allocation3 + $0x10] sm:$0xff]
        %v1622 = vld [vmem:[#allocation3 + $0x18] sm:$0xff]
        %v1623 = vld [vmem:[#allocation3 + $0x20] sm:$0xff]
        %v1624 = vld [vmem:[#allocation3 + $0x28] sm:$0xff]
        %v1625 = vld [vmem:[#allocation3 + $0x30] sm:$0xff]
        %v1626 = vld [vmem:[#allocation3 + $0x38] sm:$0xff]
        %v1627 = vld [vmem:[#allocation3 + $0x40] sm:$0xff]
        %v1628 = vld [vmem:[#allocation3 + $0x48] sm:$0xff]
        %v1629 = vld [vmem:[#allocation3 + $0x50] sm:$0xff]
        %v1630 = vld [vmem:[#allocation3 + $0x58] sm:$0xff]
        %v1631 = vld [vmem:[#allocation3 + $0x60] sm:$0xff]
        %v1632 = vld [vmem:[#allocation3 + $0x68] sm:$0xff]
        %v1633 = vld [vmem:[#allocation3 + $0x70] sm:$0xff]
        %v1634 = vld [vmem:[#allocation3 + $0x78] sm:$0xff]
        %v1635 = vld [vmem:[#allocation3 + $0x80] sm:$0xff]
        %v1636 = vld [vmem:[#allocation3 + $0x88] sm:$0xff]
        %v1637 = vld [vmem:[#allocation3 + $0x90] sm:$0xff]
        %v1638 = vld [vmem:[#allocation3 + $0x98] sm:$0xff]
        %v1639 = vld [vmem:[#allocation3 + $0xa0] sm:$0xff]
        %v1640 = vld [vmem:[#allocation3 + $0xa8] sm:$0xff]
        %v1641 = vld [vmem:[#allocation3 + $0xb0] sm:$0xff]
        %v1642 = vld [vmem:[#allocation3 + $0xb8] sm:$0xff]
        %v1643 = vld [vmem:[#allocation3 + $0xc0] sm:$0xff]
        %v1644 = vld [vmem:[#allocation3 + $0xc8] sm:$0xff]
        %v1645 = vld [vmem:[#allocation3 + $0xd0] sm:$0xff]
        %v1646 = vld [vmem:[#allocation3 + $0xd8] sm:$0xff]
        %v1647 = vld [vmem:[#allocation3 + $0xe0] sm:$0xff]
        %v1648 = vld [vmem:[#allocation3 + $0xe8] sm:$0xff]
        %v1649 = vld [vmem:[#allocation3 + $0xf0] sm:$0xff]
        %v1650 = vld [vmem:[#allocation3 + $0xf8] sm:$0xff]
        %v1651 = vunpack.c.l.bf16 %v556
        %v1652 = vunpack.c.h.bf16 %v556
        %v1653 = vunpack.c.l.bf16 %v557
        %v1654 = vunpack.c.h.bf16 %v557
        %v1655 = vunpack.c.l.bf16 %v558
        %v1656 = vunpack.c.h.bf16 %v558
        %v1657 = vunpack.c.l.bf16 %v559
        %v1658 = vunpack.c.h.bf16 %v559
        %v1659 = vunpack.c.l.bf16 %v560
        %v1660 = vunpack.c.h.bf16 %v560
        %v1661 = vunpack.c.l.bf16 %v561
        %v1662 = vunpack.c.h.bf16 %v561
        %v1663 = vunpack.c.l.bf16 %v562
        %v1664 = vunpack.c.h.bf16 %v562
        %v1665 = vunpack.c.l.bf16 %v563
        %v1666 = vunpack.c.h.bf16 %v563
        %v1667 = vunpack.c.l.bf16 %v564
        %v1668 = vunpack.c.h.bf16 %v564
        %v1669 = vunpack.c.l.bf16 %v565
        %v1670 = vunpack.c.h.bf16 %v565
        %v1671 = vunpack.c.l.bf16 %v566
        %v1672 = vunpack.c.h.bf16 %v566
        %v1673 = vunpack.c.l.bf16 %v567
        %v1674 = vunpack.c.h.bf16 %v567
        %v1675 = vunpack.c.l.bf16 %v568
        %v1676 = vunpack.c.h.bf16 %v568
        %v1677 = vunpack.c.l.bf16 %v569
        %v1678 = vunpack.c.h.bf16 %v569
        %v1679 = vunpack.c.l.bf16 %v570
        %v1680 = vunpack.c.h.bf16 %v570
        %v1681 = vunpack.c.l.bf16 %v571
        %v1682 = vunpack.c.h.bf16 %v571
        %v1683 = vunpack.c.l.bf16 %v572
        %v1684 = vunpack.c.h.bf16 %v572
        %v1685 = vunpack.c.l.bf16 %v573
        %v1686 = vunpack.c.h.bf16 %v573
        %v1687 = vunpack.c.l.bf16 %v574
        %v1688 = vunpack.c.h.bf16 %v574
        %v1689 = vunpack.c.l.bf16 %v575
        %v1690 = vunpack.c.h.bf16 %v575
        %v1691 = vunpack.c.l.bf16 %v576
        %v1692 = vunpack.c.h.bf16 %v576
        %v1693 = vunpack.c.l.bf16 %v577
        %v1694 = vunpack.c.h.bf16 %v577
        %v1695 = vunpack.c.l.bf16 %v578
        %v1696 = vunpack.c.h.bf16 %v578
        %v1697 = vunpack.c.l.bf16 %v579
        %v1698 = vunpack.c.h.bf16 %v579
        %v1699 = vunpack.c.l.bf16 %v580
        %v1700 = vunpack.c.h.bf16 %v580
        %v1701 = vunpack.c.l.bf16 %v581
        %v1702 = vunpack.c.h.bf16 %v581
        %v1703 = vunpack.c.l.bf16 %v582
        %v1704 = vunpack.c.h.bf16 %v582
        %v1705 = vunpack.c.l.bf16 %v583
        %v1706 = vunpack.c.h.bf16 %v583
        %v1707 = vunpack.c.l.bf16 %v584
        %v1708 = vunpack.c.h.bf16 %v584
        %v1709 = vunpack.c.l.bf16 %v585
        %v1710 = vunpack.c.h.bf16 %v585
        %v1711 = vunpack.c.l.bf16 %v586
        %v1712 = vunpack.c.h.bf16 %v586
        %v1713 = vunpack.c.l.bf16 %v587
        %v1714 = vunpack.c.h.bf16 %v587
        %v1715 = vunpack.c.l.bf16 %v588
        %v1716 = vunpack.c.h.bf16 %v588
        %v1717 = vunpack.c.l.bf16 %v589
        %v1718 = vunpack.c.h.bf16 %v589
        %v1719 = vunpack.c.l.bf16 %v590
        %v1720 = vunpack.c.h.bf16 %v590
        %v1721 = vunpack.c.l.bf16 %v591
        %v1722 = vunpack.c.h.bf16 %v591
        %v1723 = vunpack.c.l.bf16 %v592
        %v1724 = vunpack.c.h.bf16 %v592
        %v1725 = vunpack.c.l.bf16 %v593
        %v1726 = vunpack.c.h.bf16 %v593
        %v1727 = vunpack.c.l.bf16 %v594
        %v1728 = vunpack.c.h.bf16 %v594
        %v1729 = vunpack.c.l.bf16 %v595
        %v1730 = vunpack.c.h.bf16 %v595
        %v1731 = vunpack.c.l.bf16 %v596
        %v1732 = vunpack.c.h.bf16 %v596
        %v1733 = vunpack.c.l.bf16 %v597
        %v1734 = vunpack.c.h.bf16 %v597
        %v1735 = vunpack.c.l.bf16 %v598
        %v1736 = vunpack.c.h.bf16 %v598
        %v1737 = vunpack.c.l.bf16 %v599
        %v1738 = vunpack.c.h.bf16 %v599
        %v1739 = vunpack.c.l.bf16 %v600
        %v1740 = vunpack.c.h.bf16 %v600
        %v1741 = vunpack.c.l.bf16 %v601
        %v1742 = vunpack.c.h.bf16 %v601
        %v1743 = vunpack.c.l.bf16 %v602
        %v1744 = vunpack.c.h.bf16 %v602
        %v1745 = vunpack.c.l.bf16 %v603
        %v1746 = vunpack.c.h.bf16 %v603
        %v1747 = vunpack.c.l.bf16 %v604
        %v1748 = vunpack.c.h.bf16 %v604
        %v1749 = vunpack.c.l.bf16 %v605
        %v1750 = vunpack.c.h.bf16 %v605
        %v1751 = vunpack.c.l.bf16 %v606
        %v1752 = vunpack.c.h.bf16 %v606
        %v1753 = vunpack.c.l.bf16 %v607
        %v1754 = vunpack.c.h.bf16 %v607
        %v1755 = vunpack.c.l.bf16 %v608
        %v1756 = vunpack.c.h.bf16 %v608
        %v1757 = vunpack.c.l.bf16 %v609
        %v1758 = vunpack.c.h.bf16 %v609
        %v1759 = vunpack.c.l.bf16 %v610
        %v1760 = vunpack.c.h.bf16 %v610
        %v1761 = vunpack.c.l.bf16 %v611
        %v1762 = vunpack.c.h.bf16 %v611
        %v1763 = vunpack.c.l.bf16 %v612
        %v1764 = vunpack.c.h.bf16 %v612
        %v1765 = vunpack.c.l.bf16 %v613
        %v1766 = vunpack.c.h.bf16 %v613
        %v1767 = vunpack.c.l.bf16 %v614
        %v1768 = vunpack.c.h.bf16 %v614
        %v1769 = vunpack.c.l.bf16 %v615
        %v1770 = vunpack.c.h.bf16 %v615
        %v1771 = vunpack.c.l.bf16 %v616
        %v1772 = vunpack.c.h.bf16 %v616
        %v1773 = vunpack.c.l.bf16 %v617
        %v1774 = vunpack.c.h.bf16 %v617
        %v1775 = vunpack.c.l.bf16 %v618
        %v1776 = vunpack.c.h.bf16 %v618
        %v1777 = vunpack.c.l.bf16 %v619
        %v1778 = vunpack.c.h.bf16 %v619
        %v1779 = vadd.f32 %v1651, %v1652
        %v1780 = vadd.f32 %v1779, %v1653
        %v1781 = vadd.f32 %v1780, %v1654
        %1782 = vadd.xlane.f32.xlu0 %v1781
        %v1783 = vpop.xlane.xlu0 %1782
        %v1784 = vadd.f32 %v1655, %v1656
        %v1785 = vadd.f32 %v1784, %v1657
        %v1786 = vadd.f32 %v1785, %v1658
        %1787 = vadd.xlane.f32.xlu0 %v1786
        %v1788 = vpop.xlane.xlu0 %1787
        %v1789 = vadd.f32 %v1659, %v1660
        %v1790 = vadd.f32 %v1789, %v1661
        %v1791 = vadd.f32 %v1790, %v1662
        %1792 = vadd.xlane.f32.xlu0 %v1791
        %v1793 = vpop.xlane.xlu0 %1792
        %v1794 = vadd.f32 %v1663, %v1664
        %v1795 = vadd.f32 %v1794, %v1665
        %v1796 = vadd.f32 %v1795, %v1666
        %1797 = vadd.xlane.f32.xlu0 %v1796
        %v1798 = vpop.xlane.xlu0 %1797
        %v1799 = vadd.f32 %v1667, %v1668
        %v1800 = vadd.f32 %v1799, %v1669
        %v1801 = vadd.f32 %v1800, %v1670
        %1802 = vadd.xlane.f32.xlu0 %v1801
        %v1803 = vpop.xlane.xlu0 %1802
        %v1804 = vadd.f32 %v1671, %v1672
        %v1805 = vadd.f32 %v1804, %v1673
        %v1806 = vadd.f32 %v1805, %v1674
        %1807 = vadd.xlane.f32.xlu0 %v1806
        %v1808 = vpop.xlane.xlu0 %1807
        %v1809 = vadd.f32 %v1675, %v1676
        %v1810 = vadd.f32 %v1809, %v1677
        %v1811 = vadd.f32 %v1810, %v1678
        %1812 = vadd.xlane.f32.xlu0 %v1811
        %v1813 = vpop.xlane.xlu0 %1812
        %v1814 = vadd.f32 %v1679, %v1680
        %v1815 = vadd.f32 %v1814, %v1681
        %v1816 = vadd.f32 %v1815, %v1682
        %1817 = vadd.xlane.f32.xlu0 %v1816
        %v1818 = vpop.xlane.xlu0 %1817
        %v1819 = vadd.f32 %v1683, %v1684
        %v1820 = vadd.f32 %v1819, %v1685
        %v1821 = vadd.f32 %v1820, %v1686
        %1822 = vadd.xlane.f32.xlu0 %v1821
        %v1823 = vpop.xlane.xlu0 %1822
        %v1824 = vadd.f32 %v1687, %v1688
        %v1825 = vadd.f32 %v1824, %v1689
        %v1826 = vadd.f32 %v1825, %v1690
        %1827 = vadd.xlane.f32.xlu0 %v1826
        %v1828 = vpop.xlane.xlu0 %1827
        %v1829 = vadd.f32 %v1691, %v1692
        %v1830 = vadd.f32 %v1829, %v1693
        %v1831 = vadd.f32 %v1830, %v1694
        %1832 = vadd.xlane.f32.xlu0 %v1831
        %v1833 = vpop.xlane.xlu0 %1832
        %v1834 = vadd.f32 %v1695, %v1696
        %v1835 = vadd.f32 %v1834, %v1697
        %v1836 = vadd.f32 %v1835, %v1698
        %1837 = vadd.xlane.f32.xlu0 %v1836
        %v1838 = vpop.xlane.xlu0 %1837
        %v1839 = vadd.f32 %v1699, %v1700
        %v1840 = vadd.f32 %v1839, %v1701
        %v1841 = vadd.f32 %v1840, %v1702
        %1842 = vadd.xlane.f32.xlu0 %v1841
        %v1843 = vpop.xlane.xlu0 %1842
        %v1844 = vadd.f32 %v1703, %v1704
        %v1845 = vadd.f32 %v1844, %v1705
        %v1846 = vadd.f32 %v1845, %v1706
        %1847 = vadd.xlane.f32.xlu0 %v1846
        %v1848 = vpop.xlane.xlu0 %1847
        %v1849 = vadd.f32 %v1707, %v1708
        %v1850 = vadd.f32 %v1849, %v1709
        %v1851 = vadd.f32 %v1850, %v1710
        %1852 = vadd.xlane.f32.xlu0 %v1851
        %v1853 = vpop.xlane.xlu0 %1852
        %v1854 = vadd.f32 %v1711, %v1712
        %v1855 = vadd.f32 %v1854, %v1713
        %v1856 = vadd.f32 %v1855, %v1714
        %1857 = vadd.xlane.f32.xlu0 %v1856
        %v1858 = vpop.xlane.xlu0 %1857
        %v1859 = vadd.f32 %v1715, %v1716
        %v1860 = vadd.f32 %v1859, %v1717
        %v1861 = vadd.f32 %v1860, %v1718
        %1862 = vadd.xlane.f32.xlu0 %v1861
        %v1863 = vpop.xlane.xlu0 %1862
        %v1864 = vadd.f32 %v1719, %v1720
        %v1865 = vadd.f32 %v1864, %v1721
        %v1866 = vadd.f32 %v1865, %v1722
        %1867 = vadd.xlane.f32.xlu0 %v1866
        %v1868 = vpop.xlane.xlu0 %1867
        %v1869 = vadd.f32 %v1723, %v1724
        %v1870 = vadd.f32 %v1869, %v1725
        %v1871 = vadd.f32 %v1870, %v1726
        %1872 = vadd.xlane.f32.xlu0 %v1871
        %v1873 = vpop.xlane.xlu0 %1872
        %v1874 = vadd.f32 %v1727, %v1728
        %v1875 = vadd.f32 %v1874, %v1729
        %v1876 = vadd.f32 %v1875, %v1730
        %1877 = vadd.xlane.f32.xlu0 %v1876
        %v1878 = vpop.xlane.xlu0 %1877
        %v1879 = vadd.f32 %v1731, %v1732
        %v1880 = vadd.f32 %v1879, %v1733
        %v1881 = vadd.f32 %v1880, %v1734
        %1882 = vadd.xlane.f32.xlu0 %v1881
        %v1883 = vpop.xlane.xlu0 %1882
        %v1884 = vadd.f32 %v1735, %v1736
        %v1885 = vadd.f32 %v1884, %v1737
        %v1886 = vadd.f32 %v1885, %v1738
        %1887 = vadd.xlane.f32.xlu0 %v1886
        %v1888 = vpop.xlane.xlu0 %1887
        %v1889 = vadd.f32 %v1739, %v1740
        %v1890 = vadd.f32 %v1889, %v1741
        %v1891 = vadd.f32 %v1890, %v1742
        %1892 = vadd.xlane.f32.xlu0 %v1891
        %v1893 = vpop.xlane.xlu0 %1892
        %v1894 = vadd.f32 %v1743, %v1744
        %v1895 = vadd.f32 %v1894, %v1745
        %v1896 = vadd.f32 %v1895, %v1746
        %1897 = vadd.xlane.f32.xlu0 %v1896
        %v1898 = vpop.xlane.xlu0 %1897
        %v1899 = vadd.f32 %v1747, %v1748
        %v1900 = vadd.f32 %v1899, %v1749
        %v1901 = vadd.f32 %v1900, %v1750
        %1902 = vadd.xlane.f32.xlu0 %v1901
        %v1903 = vpop.xlane.xlu0 %1902
        %v1904 = vadd.f32 %v1751, %v1752
        %v1905 = vadd.f32 %v1904, %v1753
        %v1906 = vadd.f32 %v1905, %v1754
        %1907 = vadd.xlane.f32.xlu0 %v1906
        %v1908 = vpop.xlane.xlu0 %1907
        %v1909 = vadd.f32 %v1755, %v1756
        %v1910 = vadd.f32 %v1909, %v1757
        %v1911 = vadd.f32 %v1910, %v1758
        %1912 = vadd.xlane.f32.xlu0 %v1911
        %v1913 = vpop.xlane.xlu0 %1912
        %v1914 = vadd.f32 %v1759, %v1760
        %v1915 = vadd.f32 %v1914, %v1761
        %v1916 = vadd.f32 %v1915, %v1762
        %1917 = vadd.xlane.f32.xlu0 %v1916
        %v1918 = vpop.xlane.xlu0 %1917
        %v1919 = vadd.f32 %v1763, %v1764
        %v1920 = vadd.f32 %v1919, %v1765
        %v1921 = vadd.f32 %v1920, %v1766
        %1922 = vadd.xlane.f32.xlu0 %v1921
        %v1923 = vpop.xlane.xlu0 %1922
        %v1924 = vadd.f32 %v1767, %v1768
        %v1925 = vadd.f32 %v1924, %v1769
        %v1926 = vadd.f32 %v1925, %v1770
        %1927 = vadd.xlane.f32.xlu0 %v1926
        %v1928 = vpop.xlane.xlu0 %1927
        %v1929 = vadd.f32 %v1771, %v1772
        %v1930 = vadd.f32 %v1929, %v1773
        %v1931 = vadd.f32 %v1930, %v1774
        %1932 = vadd.xlane.f32.xlu0 %v1931
        %v1933 = vpop.xlane.xlu0 %1932
        %v1934 = vadd.f32 %v1775, %v1776
        %v1935 = vadd.f32 %v1934, %v1777
        %v1936 = vadd.f32 %v1935, %v1778
        %1937 = vadd.xlane.f32.xlu0 %v1936
        %v1938 = vpop.xlane.xlu0 %1937
        %v1939 = vadd.f32 %v1619, %v1783
        %v1940 = vadd.f32 %v1620, %v1788
        %v1941 = vadd.f32 %v1621, %v1793
        %v1942 = vadd.f32 %v1622, %v1798
        %v1943 = vadd.f32 %v1623, %v1803
        %v1944 = vadd.f32 %v1624, %v1808
        %v1945 = vadd.f32 %v1625, %v1813
        %v1946 = vadd.f32 %v1626, %v1818
        %v1947 = vadd.f32 %v1627, %v1823
        %v1948 = vadd.f32 %v1628, %v1828
        %v1949 = vadd.f32 %v1629, %v1833
        %v1950 = vadd.f32 %v1630, %v1838
        %v1951 = vadd.f32 %v1631, %v1843
        %v1952 = vadd.f32 %v1632, %v1848
        %v1953 = vadd.f32 %v1633, %v1853
        %v1954 = vadd.f32 %v1634, %v1858
        %v1955 = vadd.f32 %v1635, %v1863
        %v1956 = vadd.f32 %v1636, %v1868
        %v1957 = vadd.f32 %v1637, %v1873
        %v1958 = vadd.f32 %v1638, %v1878
        %v1959 = vadd.f32 %v1639, %v1883
        %v1960 = vadd.f32 %v1640, %v1888
        %v1961 = vadd.f32 %v1641, %v1893
        %v1962 = vadd.f32 %v1642, %v1898
        %v1963 = vadd.f32 %v1643, %v1903
        %v1964 = vadd.f32 %v1644, %v1908
        %v1965 = vadd.f32 %v1645, %v1913
        %v1966 = vadd.f32 %v1646, %v1918
        %v1967 = vadd.f32 %v1647, %v1923
        %v1968 = vadd.f32 %v1648, %v1928
        %v1969 = vadd.f32 %v1649, %v1933
        %v1970 = vadd.f32 %v1650, %v1938
        %vm1971 = vcmask 7168
        %1972 = vst.msk [vmem:[#allocation3] sm:$0xff] %vm1971, %v1939
        %1973 = vst.msk [vmem:[#allocation3 + $0x8] sm:$0xff] %vm1971, %v1940
        %1974 = vst.msk [vmem:[#allocation3 + $0x10] sm:$0xff] %vm1971, %v1941
        %1975 = vst.msk [vmem:[#allocation3 + $0x18] sm:$0xff] %vm1971, %v1942
        %1976 = vst.msk [vmem:[#allocation3 + $0x20] sm:$0xff] %vm1971, %v1943
        %1977 = vst.msk [vmem:[#allocation3 + $0x28] sm:$0xff] %vm1971, %v1944
        %1978 = vst.msk [vmem:[#allocation3 + $0x30] sm:$0xff] %vm1971, %v1945
        %1979 = vst.msk [vmem:[#allocation3 + $0x38] sm:$0xff] %vm1971, %v1946
        %1980 = vst.msk [vmem:[#allocation3 + $0x40] sm:$0xff] %vm1971, %v1947
        %1981 = vst.msk [vmem:[#allocation3 + $0x48] sm:$0xff] %vm1971, %v1948
        %1982 = vst.msk [vmem:[#allocation3 + $0x50] sm:$0xff] %vm1971, %v1949
        %1983 = vst.msk [vmem:[#allocation3 + $0x58] sm:$0xff] %vm1971, %v1950
        %1984 = vst.msk [vmem:[#allocation3 + $0x60] sm:$0xff] %vm1971, %v1951
        %1985 = vst.msk [vmem:[#allocation3 + $0x68] sm:$0xff] %vm1971, %v1952
        %1986 = vst.msk [vmem:[#allocation3 + $0x70] sm:$0xff] %vm1971, %v1953
        %1987 = vst.msk [vmem:[#allocation3 + $0x78] sm:$0xff] %vm1971, %v1954
        %1988 = vst.msk [vmem:[#allocation3 + $0x80] sm:$0xff] %vm1971, %v1955
        %1989 = vst.msk [vmem:[#allocation3 + $0x88] sm:$0xff] %vm1971, %v1956
        %1990 = vst.msk [vmem:[#allocation3 + $0x90] sm:$0xff] %vm1971, %v1957
        %1991 = vst.msk [vmem:[#allocation3 + $0x98] sm:$0xff] %vm1971, %v1958
        %1992 = vst.msk [vmem:[#allocation3 + $0xa0] sm:$0xff] %vm1971, %v1959
        %1993 = vst.msk [vmem:[#allocation3 + $0xa8] sm:$0xff] %vm1971, %v1960
        %1994 = vst.msk [vmem:[#allocation3 + $0xb0] sm:$0xff] %vm1971, %v1961
        %1995 = vst.msk [vmem:[#allocation3 + $0xb8] sm:$0xff] %vm1971, %v1962
        %1996 = vst.msk [vmem:[#allocation3 + $0xc0] sm:$0xff] %vm1971, %v1963
        %1997 = vst.msk [vmem:[#allocation3 + $0xc8] sm:$0xff] %vm1971, %v1964
        %1998 = vst.msk [vmem:[#allocation3 + $0xd0] sm:$0xff] %vm1971, %v1965
        %1999 = vst.msk [vmem:[#allocation3 + $0xd8] sm:$0xff] %vm1971, %v1966
        %2000 = vst.msk [vmem:[#allocation3 + $0xe0] sm:$0xff] %vm1971, %v1967
        %2001 = vst.msk [vmem:[#allocation3 + $0xe8] sm:$0xff] %vm1971, %v1968
        %2002 = vst.msk [vmem:[#allocation3 + $0xf0] sm:$0xff] %vm1971, %v1969
        %2003 = vst.msk [vmem:[#allocation3 + $0xf8] sm:$0xff] %vm1971, %v1970
        %p2004 = scmp.eq.s32.totalorder %s25, 1
        // Predicated region
        $region76: #{graph_classification_forward.6} parent=66 // pred_check
          %p2005 = pneg %p2004
        $region77: #{graph_classification_forward.6} parent=66 // pred_check_branch
          %2007 = sbr.rel (%p2005) target = $region79
        $region78: #{graph_classification_forward.6} parent=66 // pred_region
          %v2008 = vld [vmem:[#allocation3] sm:$0xff]
          %v2009 = vld [vmem:[#allocation3 + $0x8] sm:$0xff]
          %v2010 = vld [vmem:[#allocation3 + $0x10] sm:$0xff]
          %v2011 = vld [vmem:[#allocation3 + $0x18] sm:$0xff]
          %v2012 = vld [vmem:[#allocation3 + $0x20] sm:$0xff]
          %v2013 = vld [vmem:[#allocation3 + $0x28] sm:$0xff]
          %v2014 = vld [vmem:[#allocation3 + $0x30] sm:$0xff]
          %v2015 = vld [vmem:[#allocation3 + $0x38] sm:$0xff]
          %v2016 = vld [vmem:[#allocation3 + $0x40] sm:$0xff]
          %v2017 = vld [vmem:[#allocation3 + $0x48] sm:$0xff]
          %v2018 = vld [vmem:[#allocation3 + $0x50] sm:$0xff]
          %v2019 = vld [vmem:[#allocation3 + $0x58] sm:$0xff]
          %v2020 = vld [vmem:[#allocation3 + $0x60] sm:$0xff]
          %v2021 = vld [vmem:[#allocation3 + $0x68] sm:$0xff]
          %v2022 = vld [vmem:[#allocation3 + $0x70] sm:$0xff]
          %v2023 = vld [vmem:[#allocation3 + $0x78] sm:$0xff]
          %v2024 = vld [vmem:[#allocation3 + $0x80] sm:$0xff]
          %v2025 = vld [vmem:[#allocation3 + $0x88] sm:$0xff]
          %v2026 = vld [vmem:[#allocation3 + $0x90] sm:$0xff]
          %v2027 = vld [vmem:[#allocation3 + $0x98] sm:$0xff]
          %v2028 = vld [vmem:[#allocation3 + $0xa0] sm:$0xff]
          %v2029 = vld [vmem:[#allocation3 + $0xa8] sm:$0xff]
          %v2030 = vld [vmem:[#allocation3 + $0xb0] sm:$0xff]
          %v2031 = vld [vmem:[#allocation3 + $0xb8] sm:$0xff]
          %v2032 = vld [vmem:[#allocation3 + $0xc0] sm:$0xff]
          %v2033 = vld [vmem:[#allocation3 + $0xc8] sm:$0xff]
          %v2034 = vld [vmem:[#allocation3 + $0xd0] sm:$0xff]
          %v2035 = vld [vmem:[#allocation3 + $0xd8] sm:$0xff]
          %v2036 = vld [vmem:[#allocation3 + $0xe0] sm:$0xff]
          %v2037 = vld [vmem:[#allocation3 + $0xe8] sm:$0xff]
          %v2038 = vld [vmem:[#allocation3 + $0xf0] sm:$0xff]
          %v2039 = vld [vmem:[#allocation3 + $0xf8] sm:$0xff]
          %v2040 = vmax.f32 %v2008, 1.0
          %v2041 = vmax.f32 %v2009, 1.0
          %v2042 = vmax.f32 %v2010, 1.0
          %v2043 = vmax.f32 %v2011, 1.0
          %v2044 = vmax.f32 %v2012, 1.0
          %v2045 = vmax.f32 %v2013, 1.0
          %v2046 = vmax.f32 %v2014, 1.0
          %v2047 = vmax.f32 %v2015, 1.0
          %v2048 = vmax.f32 %v2016, 1.0
          %v2049 = vmax.f32 %v2017, 1.0
          %v2050 = vmax.f32 %v2018, 1.0
          %v2051 = vmax.f32 %v2019, 1.0
          %v2052 = vmax.f32 %v2020, 1.0
          %v2053 = vmax.f32 %v2021, 1.0
          %v2054 = vmax.f32 %v2022, 1.0
          %v2055 = vmax.f32 %v2023, 1.0
          %v2056 = vmax.f32 %v2024, 1.0
          %v2057 = vmax.f32 %v2025, 1.0
          %v2058 = vmax.f32 %v2026, 1.0
          %v2059 = vmax.f32 %v2027, 1.0
          %v2060 = vmax.f32 %v2028, 1.0
          %v2061 = vmax.f32 %v2029, 1.0
          %v2062 = vmax.f32 %v2030, 1.0
          %v2063 = vmax.f32 %v2031, 1.0
          %v2064 = vmax.f32 %v2032, 1.0
          %v2065 = vmax.f32 %v2033, 1.0
          %v2066 = vmax.f32 %v2034, 1.0
          %v2067 = vmax.f32 %v2035, 1.0
          %v2068 = vmax.f32 %v2036, 1.0
          %v2069 = vmax.f32 %v2037, 1.0
          %v2070 = vmax.f32 %v2038, 1.0
          %v2071 = vmax.f32 %v2039, 1.0
          %v2072 = vrcp.pop %v2040
          %v2073 = vrcp.pop %v2041
          %v2074 = vrcp.pop %v2042
          %v2075 = vrcp.pop %v2043
          %v2076 = vrcp.pop %v2044
          %v2077 = vrcp.pop %v2045
          %v2078 = vrcp.pop %v2046
          %v2079 = vrcp.pop %v2047
          %v2080 = vrcp.pop %v2048
          %v2081 = vrcp.pop %v2049
          %v2082 = vrcp.pop %v2050
          %v2083 = vrcp.pop %v2051
          %v2084 = vrcp.pop %v2052
          %v2085 = vrcp.pop %v2053
          %v2086 = vrcp.pop %v2054
          %v2087 = vrcp.pop %v2055
          %v2088 = vrcp.pop %v2056
          %v2089 = vrcp.pop %v2057
          %v2090 = vrcp.pop %v2058
          %v2091 = vrcp.pop %v2059
          %v2092 = vrcp.pop %v2060
          %v2093 = vrcp.pop %v2061
          %v2094 = vrcp.pop %v2062
          %v2095 = vrcp.pop %v2063
          %v2096 = vrcp.pop %v2064
          %v2097 = vrcp.pop %v2065
          %v2098 = vrcp.pop %v2066
          %v2099 = vrcp.pop %v2067
          %v2100 = vrcp.pop %v2068
          %v2101 = vrcp.pop %v2069
          %v2102 = vrcp.pop %v2070
          %v2103 = vrcp.pop %v2071
          %v2104 = vmul.f32 %v2040, %v2072
          %v2105 = vmul.f32 %v2041, %v2073
          %v2106 = vmul.f32 %v2042, %v2074
          %v2107 = vmul.f32 %v2043, %v2075
          %v2108 = vmul.f32 %v2044, %v2076
          %v2109 = vmul.f32 %v2045, %v2077
          %v2110 = vmul.f32 %v2046, %v2078
          %v2111 = vmul.f32 %v2047, %v2079
          %v2112 = vmul.f32 %v2048, %v2080
          %v2113 = vmul.f32 %v2049, %v2081
          %v2114 = vmul.f32 %v2050, %v2082
          %v2115 = vmul.f32 %v2051, %v2083
          %v2116 = vmul.f32 %v2052, %v2084
          %v2117 = vmul.f32 %v2053, %v2085
          %v2118 = vmul.f32 %v2054, %v2086
          %v2119 = vmul.f32 %v2055, %v2087
          %v2120 = vmul.f32 %v2056, %v2088
          %v2121 = vmul.f32 %v2057, %v2089
          %v2122 = vmul.f32 %v2058, %v2090
          %v2123 = vmul.f32 %v2059, %v2091
          %v2124 = vmul.f32 %v2060, %v2092
          %v2125 = vmul.f32 %v2061, %v2093
          %v2126 = vmul.f32 %v2062, %v2094
          %v2127 = vmul.f32 %v2063, %v2095
          %v2128 = vmul.f32 %v2064, %v2096
          %v2129 = vmul.f32 %v2065, %v2097
          %v2130 = vmul.f32 %v2066, %v2098
          %v2131 = vmul.f32 %v2067, %v2099
          %v2132 = vmul.f32 %v2068, %v2100
          %v2133 = vmul.f32 %v2069, %v2101
          %v2134 = vmul.f32 %v2070, %v2102
          %v2135 = vmul.f32 %v2071, %v2103
          %v2136 = vsub.f32 2.0, %v2104
          %v2137 = vsub.f32 2.0, %v2105
          %v2138 = vsub.f32 2.0, %v2106
          %v2139 = vsub.f32 2.0, %v2107
          %v2140 = vsub.f32 2.0, %v2108
          %v2141 = vsub.f32 2.0, %v2109
          %v2142 = vsub.f32 2.0, %v2110
          %v2143 = vsub.f32 2.0, %v2111
          %v2144 = vsub.f32 2.0, %v2112
          %v2145 = vsub.f32 2.0, %v2113
          %v2146 = vsub.f32 2.0, %v2114
          %v2147 = vsub.f32 2.0, %v2115
          %v2148 = vsub.f32 2.0, %v2116
          %v2149 = vsub.f32 2.0, %v2117
          %v2150 = vsub.f32 2.0, %v2118
          %v2151 = vsub.f32 2.0, %v2119
          %v2152 = vsub.f32 2.0, %v2120
          %v2153 = vsub.f32 2.0, %v2121
          %v2154 = vsub.f32 2.0, %v2122
          %v2155 = vsub.f32 2.0, %v2123
          %v2156 = vsub.f32 2.0, %v2124
          %v2157 = vsub.f32 2.0, %v2125
          %v2158 = vsub.f32 2.0, %v2126
          %v2159 = vsub.f32 2.0, %v2127
          %v2160 = vsub.f32 2.0, %v2128
          %v2161 = vsub.f32 2.0, %v2129
          %v2162 = vsub.f32 2.0, %v2130
          %v2163 = vsub.f32 2.0, %v2131
          %v2164 = vsub.f32 2.0, %v2132
          %v2165 = vsub.f32 2.0, %v2133
          %v2166 = vsub.f32 2.0, %v2134
          %v2167 = vsub.f32 2.0, %v2135
          %v2168 = vmul.f32 %v2072, %v2136
          %v2169 = vmul.f32 %v2073, %v2137
          %v2170 = vmul.f32 %v2074, %v2138
          %v2171 = vmul.f32 %v2075, %v2139
          %v2172 = vmul.f32 %v2076, %v2140
          %v2173 = vmul.f32 %v2077, %v2141
          %v2174 = vmul.f32 %v2078, %v2142
          %v2175 = vmul.f32 %v2079, %v2143
          %v2176 = vmul.f32 %v2080, %v2144
          %v2177 = vmul.f32 %v2081, %v2145
          %v2178 = vmul.f32 %v2082, %v2146
          %v2179 = vmul.f32 %v2083, %v2147
          %v2180 = vmul.f32 %v2084, %v2148
          %v2181 = vmul.f32 %v2085, %v2149
          %v2182 = vmul.f32 %v2086, %v2150
          %v2183 = vmul.f32 %v2087, %v2151
          %v2184 = vmul.f32 %v2088, %v2152
          %v2185 = vmul.f32 %v2089, %v2153
          %v2186 = vmul.f32 %v2090, %v2154
          %v2187 = vmul.f32 %v2091, %v2155
          %v2188 = vmul.f32 %v2092, %v2156
          %v2189 = vmul.f32 %v2093, %v2157
          %v2190 = vmul.f32 %v2094, %v2158
          %v2191 = vmul.f32 %v2095, %v2159
          %v2192 = vmul.f32 %v2096, %v2160
          %v2193 = vmul.f32 %v2097, %v2161
          %v2194 = vmul.f32 %v2098, %v2162
          %v2195 = vmul.f32 %v2099, %v2163
          %v2196 = vmul.f32 %v2100, %v2164
          %v2197 = vmul.f32 %v2101, %v2165
          %v2198 = vmul.f32 %v2102, %v2166
          %v2199 = vmul.f32 %v2103, %v2167
          %2200 = vst.msk [vmem:[%s484] sm:$0xff] %vm1971, %v2168
          %2201 = vst.msk [vmem:[%s484 + $0x8] sm:$0xff] %vm1971, %v2169
          %2202 = vst.msk [vmem:[%s484 + $0x10] sm:$0xff] %vm1971, %v2170
          %2203 = vst.msk [vmem:[%s484 + $0x18] sm:$0xff] %vm1971, %v2171
          %2204 = vst.msk [vmem:[%s484 + $0x20] sm:$0xff] %vm1971, %v2172
          %2205 = vst.msk [vmem:[%s484 + $0x28] sm:$0xff] %vm1971, %v2173
          %2206 = vst.msk [vmem:[%s484 + $0x30] sm:$0xff] %vm1971, %v2174
          %2207 = vst.msk [vmem:[%s484 + $0x38] sm:$0xff] %vm1971, %v2175
          %2208 = vst.msk [vmem:[%s484 + $0x40] sm:$0xff] %vm1971, %v2176
          %2209 = vst.msk [vmem:[%s484 + $0x48] sm:$0xff] %vm1971, %v2177
          %2210 = vst.msk [vmem:[%s484 + $0x50] sm:$0xff] %vm1971, %v2178
          %2211 = vst.msk [vmem:[%s484 + $0x58] sm:$0xff] %vm1971, %v2179
          %2212 = vst.msk [vmem:[%s484 + $0x60] sm:$0xff] %vm1971, %v2180
          %2213 = vst.msk [vmem:[%s484 + $0x68] sm:$0xff] %vm1971, %v2181
          %2214 = vst.msk [vmem:[%s484 + $0x70] sm:$0xff] %vm1971, %v2182
          %2215 = vst.msk [vmem:[%s484 + $0x78] sm:$0xff] %vm1971, %v2183
          %2216 = vst.msk [vmem:[%s484 + $0x80] sm:$0xff] %vm1971, %v2184
          %2217 = vst.msk [vmem:[%s484 + $0x88] sm:$0xff] %vm1971, %v2185
          %2218 = vst.msk [vmem:[%s484 + $0x90] sm:$0xff] %vm1971, %v2186
          %2219 = vst.msk [vmem:[%s484 + $0x98] sm:$0xff] %vm1971, %v2187
          %2220 = vst.msk [vmem:[%s484 + $0xa0] sm:$0xff] %vm1971, %v2188
          %2221 = vst.msk [vmem:[%s484 + $0xa8] sm:$0xff] %vm1971, %v2189
          %2222 = vst.msk [vmem:[%s484 + $0xb0] sm:$0xff] %vm1971, %v2190
          %2223 = vst.msk [vmem:[%s484 + $0xb8] sm:$0xff] %vm1971, %v2191
          %2224 = vst.msk [vmem:[%s484 + $0xc0] sm:$0xff] %vm1971, %v2192
          %2225 = vst.msk [vmem:[%s484 + $0xc8] sm:$0xff] %vm1971, %v2193
          %2226 = vst.msk [vmem:[%s484 + $0xd0] sm:$0xff] %vm1971, %v2194
          %2227 = vst.msk [vmem:[%s484 + $0xd8] sm:$0xff] %vm1971, %v2195
          %2228 = vst.msk [vmem:[%s484 + $0xe0] sm:$0xff] %vm1971, %v2196
          %2229 = vst.msk [vmem:[%s484 + $0xe8] sm:$0xff] %vm1971, %v2197
          %2230 = vst.msk [vmem:[%s484 + $0xf0] sm:$0xff] %vm1971, %v2198
          %2231 = vst.msk [vmem:[%s484 + $0xf8] sm:$0xff] %vm1971, %v2199
          %s2232 = smul.u32 %s24, 256
          %s2233 = sshra.s32 %s2232, 3
          %s2234 = sand.u32 %s2232, 7
          %s2235 = smul.addr %s2233, 4
          %s2236 = scalar_lea.vmem %s1, %s2235
          %v2237 = vld [vmem:[%s2236] sm:$0xf]
          %v2238 = vld [vmem:[%s2236 + $0x4] sm:$0xf]
          %v2239 = vld [vmem:[%s2236 + $0x8] sm:$0xf]
          %v2240 = vld [vmem:[%s2236 + $0xc] sm:$0xf]
          %v2241 = vld [vmem:[%s2236 + $0x10] sm:$0xf]
          %v2242 = vld [vmem:[%s2236 + $0x14] sm:$0xf]
          %v2243 = vld [vmem:[%s2236 + $0x18] sm:$0xf]
          %v2244 = vld [vmem:[%s2236 + $0x1c] sm:$0xf]
          %v2245 = vld [vmem:[%s2236 + $0x20] sm:$0xf]
          %v2246 = vld [vmem:[%s2236 + $0x24] sm:$0xf]
          %v2247 = vld [vmem:[%s2236 + $0x28] sm:$0xf]
          %v2248 = vld [vmem:[%s2236 + $0x2c] sm:$0xf]
          %v2249 = vld [vmem:[%s2236 + $0x30] sm:$0xf]
          %v2250 = vld [vmem:[%s2236 + $0x34] sm:$0xf]
          %v2251 = vld [vmem:[%s2236 + $0x38] sm:$0xf]
          %v2252 = vld [vmem:[%s2236 + $0x3c] sm:$0xf]
          %v2253 = vld [vmem:[%s2236 + $0x40] sm:$0xf]
          %v2254 = vld [vmem:[%s2236 + $0x44] sm:$0xf]
          %v2255 = vld [vmem:[%s2236 + $0x48] sm:$0xf]
          %v2256 = vld [vmem:[%s2236 + $0x4c] sm:$0xf]
          %v2257 = vld [vmem:[%s2236 + $0x50] sm:$0xf]
          %v2258 = vld [vmem:[%s2236 + $0x54] sm:$0xf]
          %v2259 = vld [vmem:[%s2236 + $0x58] sm:$0xf]
          %v2260 = vld [vmem:[%s2236 + $0x5c] sm:$0xf]
          %v2261 = vld [vmem:[%s2236 + $0x60] sm:$0xf]
          %v2262 = vld [vmem:[%s2236 + $0x64] sm:$0xf]
          %v2263 = vld [vmem:[%s2236 + $0x68] sm:$0xf]
          %v2264 = vld [vmem:[%s2236 + $0x6c] sm:$0xf]
          %v2265 = vld [vmem:[%s2236 + $0x70] sm:$0xf]
          %v2266 = vld [vmem:[%s2236 + $0x74] sm:$0xf]
          %v2267 = vld [vmem:[%s2236 + $0x78] sm:$0xf]
          %v2268 = vld [vmem:[%s2236 + $0x7c] sm:$0xf]
          %v2269 = vld [vmem:[#allocation2] sm:$0xff]
          %v2270 = vld [vmem:[#allocation2 + $0x8] sm:$0xff]
          %v2271 = vld [vmem:[#allocation2 + $0x10] sm:$0xff]
          %v2272 = vld [vmem:[#allocation2 + $0x18] sm:$0xff]
          %v2273 = vld [vmem:[#allocation2 + $0x20] sm:$0xff]
          %v2274 = vld [vmem:[#allocation2 + $0x28] sm:$0xff]
          %v2275 = vld [vmem:[#allocation2 + $0x30] sm:$0xff]
          %v2276 = vld [vmem:[#allocation2 + $0x38] sm:$0xff]
          %v2277 = vld [vmem:[#allocation2 + $0x40] sm:$0xff]
          %v2278 = vld [vmem:[#allocation2 + $0x48] sm:$0xff]
          %v2279 = vld [vmem:[#allocation2 + $0x50] sm:$0xff]
          %v2280 = vld [vmem:[#allocation2 + $0x58] sm:$0xff]
          %v2281 = vld [vmem:[#allocation2 + $0x60] sm:$0xff]
          %v2282 = vld [vmem:[#allocation2 + $0x68] sm:$0xff]
          %v2283 = vld [vmem:[#allocation2 + $0x70] sm:$0xff]
          %v2284 = vld [vmem:[#allocation2 + $0x78] sm:$0xff]
          %v2285 = vld [vmem:[#allocation2 + $0x80] sm:$0xff]
          %v2286 = vld [vmem:[#allocation2 + $0x88] sm:$0xff]
          %v2287 = vld [vmem:[#allocation2 + $0x90] sm:$0xff]
          %v2288 = vld [vmem:[#allocation2 + $0x98] sm:$0xff]
          %v2289 = vld [vmem:[#allocation2 + $0xa0] sm:$0xff]
          %v2290 = vld [vmem:[#allocation2 + $0xa8] sm:$0xff]
          %v2291 = vld [vmem:[#allocation2 + $0xb0] sm:$0xff]
          %v2292 = vld [vmem:[#allocation2 + $0xb8] sm:$0xff]
          %v2293 = vld [vmem:[#allocation2 + $0xc0] sm:$0xff]
          %v2294 = vld [vmem:[#allocation2 + $0xc8] sm:$0xff]
          %v2295 = vld [vmem:[#allocation2 + $0xd0] sm:$0xff]
          %v2296 = vld [vmem:[#allocation2 + $0xd8] sm:$0xff]
          %v2297 = vld [vmem:[#allocation2 + $0xe0] sm:$0xff]
          %v2298 = vld [vmem:[#allocation2 + $0xe8] sm:$0xff]
          %v2299 = vld [vmem:[#allocation2 + $0xf0] sm:$0xff]
          %v2300 = vld [vmem:[#allocation2 + $0xf8] sm:$0xff]
          %2302 = vset.pattern.permute.xlu0 0
          %2303 = vperm.xlu0 %2302, %v2168
          %v2304 = vpop.permute.xlu0 %2303
          %2307 = vset.pattern.permute.xlu0 0
          %2308 = vperm.xlu0 %2307, %v2169
          %v2309 = vpop.permute.xlu0 %2308
          %2312 = vset.pattern.permute.xlu0 0
          %2313 = vperm.xlu0 %2312, %v2170
          %v2314 = vpop.permute.xlu0 %2313
          %2317 = vset.pattern.permute.xlu0 0
          %2318 = vperm.xlu0 %2317, %v2171
          %v2319 = vpop.permute.xlu0 %2318
          %2322 = vset.pattern.permute.xlu0 0
          %2323 = vperm.xlu0 %2322, %v2172
          %v2324 = vpop.permute.xlu0 %2323
          %2327 = vset.pattern.permute.xlu0 0
          %2328 = vperm.xlu0 %2327, %v2173
          %v2329 = vpop.permute.xlu0 %2328
          %2332 = vset.pattern.permute.xlu0 0
          %2333 = vperm.xlu0 %2332, %v2174
          %v2334 = vpop.permute.xlu0 %2333
          %2337 = vset.pattern.permute.xlu0 0
          %2338 = vperm.xlu0 %2337, %v2175
          %v2339 = vpop.permute.xlu0 %2338
          %2342 = vset.pattern.permute.xlu0 0
          %2343 = vperm.xlu0 %2342, %v2176
          %v2344 = vpop.permute.xlu0 %2343
          %2347 = vset.pattern.permute.xlu0 0
          %2348 = vperm.xlu0 %2347, %v2177
          %v2349 = vpop.permute.xlu0 %2348
          %2352 = vset.pattern.permute.xlu0 0
          %2353 = vperm.xlu0 %2352, %v2178
          %v2354 = vpop.permute.xlu0 %2353
          %2357 = vset.pattern.permute.xlu0 0
          %2358 = vperm.xlu0 %2357, %v2179
          %v2359 = vpop.permute.xlu0 %2358
          %2362 = vset.pattern.permute.xlu0 0
          %2363 = vperm.xlu0 %2362, %v2180
          %v2364 = vpop.permute.xlu0 %2363
          %2367 = vset.pattern.permute.xlu0 0
          %2368 = vperm.xlu0 %2367, %v2181
          %v2369 = vpop.permute.xlu0 %2368
          %2372 = vset.pattern.permute.xlu0 0
          %2373 = vperm.xlu0 %2372, %v2182
          %v2374 = vpop.permute.xlu0 %2373
          %2377 = vset.pattern.permute.xlu0 0
          %2378 = vperm.xlu0 %2377, %v2183
          %v2379 = vpop.permute.xlu0 %2378
          %2382 = vset.pattern.permute.xlu0 0
          %2383 = vperm.xlu0 %2382, %v2184
          %v2384 = vpop.permute.xlu0 %2383
          %2387 = vset.pattern.permute.xlu0 0
          %2388 = vperm.xlu0 %2387, %v2185
          %v2389 = vpop.permute.xlu0 %2388
          %2392 = vset.pattern.permute.xlu0 0
          %2393 = vperm.xlu0 %2392, %v2186
          %v2394 = vpop.permute.xlu0 %2393
          %2397 = vset.pattern.permute.xlu0 0
          %2398 = vperm.xlu0 %2397, %v2187
          %v2399 = vpop.permute.xlu0 %2398
          %2402 = vset.pattern.permute.xlu0 0
          %2403 = vperm.xlu0 %2402, %v2188
          %v2404 = vpop.permute.xlu0 %2403
          %2407 = vset.pattern.permute.xlu0 0
          %2408 = vperm.xlu0 %2407, %v2189
          %v2409 = vpop.permute.xlu0 %2408
          %2412 = vset.pattern.permute.xlu0 0
          %2413 = vperm.xlu0 %2412, %v2190
          %v2414 = vpop.permute.xlu0 %2413
          %2417 = vset.pattern.permute.xlu0 0
          %2418 = vperm.xlu0 %2417, %v2191
          %v2419 = vpop.permute.xlu0 %2418
          %2422 = vset.pattern.permute.xlu0 0
          %2423 = vperm.xlu0 %2422, %v2192
          %v2424 = vpop.permute.xlu0 %2423
          %2427 = vset.pattern.permute.xlu0 0
          %2428 = vperm.xlu0 %2427, %v2193
          %v2429 = vpop.permute.xlu0 %2428
          %2432 = vset.pattern.permute.xlu0 0
          %2433 = vperm.xlu0 %2432, %v2194
          %v2434 = vpop.permute.xlu0 %2433
          %2437 = vset.pattern.permute.xlu0 0
          %2438 = vperm.xlu0 %2437, %v2195
          %v2439 = vpop.permute.xlu0 %2438
          %2442 = vset.pattern.permute.xlu0 0
          %2443 = vperm.xlu0 %2442, %v2196
          %v2444 = vpop.permute.xlu0 %2443
          %2447 = vset.pattern.permute.xlu0 0
          %2448 = vperm.xlu0 %2447, %v2197
          %v2449 = vpop.permute.xlu0 %2448
          %2452 = vset.pattern.permute.xlu0 0
          %2453 = vperm.xlu0 %2452, %v2198
          %v2454 = vpop.permute.xlu0 %2453
          %2457 = vset.pattern.permute.xlu0 0
          %2458 = vperm.xlu0 %2457, %v2199
          %v2459 = vpop.permute.xlu0 %2458
          %v2461 = vmul.f32 %v2269, %v2304
          %v2462 = vmul.f32 %v2270, %v2309
          %v2463 = vmul.f32 %v2271, %v2314
          %v2464 = vmul.f32 %v2272, %v2319
          %v2465 = vmul.f32 %v2273, %v2324
          %v2466 = vmul.f32 %v2274, %v2329
          %v2467 = vmul.f32 %v2275, %v2334
          %v2468 = vmul.f32 %v2276, %v2339
          %v2469 = vmul.f32 %v2277, %v2344
          %v2470 = vmul.f32 %v2278, %v2349
          %v2471 = vmul.f32 %v2279, %v2354
          %v2472 = vmul.f32 %v2280, %v2359
          %v2473 = vmul.f32 %v2281, %v2364
          %v2474 = vmul.f32 %v2282, %v2369
          %v2475 = vmul.f32 %v2283, %v2374
          %v2476 = vmul.f32 %v2284, %v2379
          %v2477 = vmul.f32 %v2285, %v2384
          %v2478 = vmul.f32 %v2286, %v2389
          %v2479 = vmul.f32 %v2287, %v2394
          %v2480 = vmul.f32 %v2288, %v2399
          %v2481 = vmul.f32 %v2289, %v2404
          %v2482 = vmul.f32 %v2290, %v2409
          %v2483 = vmul.f32 %v2291, %v2414
          %v2484 = vmul.f32 %v2292, %v2419
          %v2485 = vmul.f32 %v2293, %v2424
          %v2486 = vmul.f32 %v2294, %v2429
          %v2487 = vmul.f32 %v2295, %v2434
          %v2488 = vmul.f32 %v2296, %v2439
          %v2489 = vmul.f32 %v2297, %v2444
          %v2490 = vmul.f32 %v2298, %v2449
          %v2491 = vmul.f32 %v2299, %v2454
          %v2492 = vmul.f32 %v2300, %v2459
          %v2493 = vld [vmem:[%s2] sm:$0xf]
          %v2494 = vld [vmem:[%s2 + $0x4] sm:$0xf]
          %v2495 = vld [vmem:[%s2 + $0x8] sm:$0xf]
          %v2496 = vld [vmem:[%s2 + $0xc] sm:$0xf]
          %v2497 = vld [vmem:[%s2 + $0x10] sm:$0xf]
          %v2498 = vld [vmem:[%s2 + $0x14] sm:$0xf]
          %v2499 = vld [vmem:[%s2 + $0x18] sm:$0xf]
          %v2500 = vld [vmem:[%s2 + $0x1c] sm:$0xf]
          %v2501 = vld [vmem:[%s2 + $0x20] sm:$0xf]
          %v2502 = vld [vmem:[%s2 + $0x24] sm:$0xf]
          %v2503 = vld [vmem:[%s2 + $0x28] sm:$0xf]
          %v2504 = vld [vmem:[%s2 + $0x2c] sm:$0xf]
          %v2505 = vld [vmem:[%s2 + $0x30] sm:$0xf]
          %v2506 = vld [vmem:[%s2 + $0x34] sm:$0xf]
          %v2507 = vld [vmem:[%s2 + $0x38] sm:$0xf]
          %v2508 = vld [vmem:[%s2 + $0x3c] sm:$0xf]
          %v2509 = vpack.c.bf16 %v2462, %v2461
          %v2510 = vpack.c.bf16 %v2464, %v2463
          %v2511 = vpack.c.bf16 %v2466, %v2465
          %v2512 = vpack.c.bf16 %v2468, %v2467
          %v2513 = vpack.c.bf16 %v2470, %v2469
          %v2514 = vpack.c.bf16 %v2472, %v2471
          %v2515 = vpack.c.bf16 %v2474, %v2473
          %v2516 = vpack.c.bf16 %v2476, %v2475
          %v2517 = vpack.c.bf16 %v2478, %v2477
          %v2518 = vpack.c.bf16 %v2480, %v2479
          %v2519 = vpack.c.bf16 %v2482, %v2481
          %v2520 = vpack.c.bf16 %v2484, %v2483
          %v2521 = vpack.c.bf16 %v2486, %v2485
          %v2522 = vpack.c.bf16 %v2488, %v2487
          %v2523 = vpack.c.bf16 %v2490, %v2489
          %v2524 = vpack.c.bf16 %v2492, %v2491
          %v2525 = vld [vmem:[%s3] sm:$0xf]
          %v2526 = vld [vmem:[%s3 + $0x4] sm:$0xf]
          %v2527 = vld [vmem:[%s3 + $0x8] sm:$0xf]
          %v2528 = vld [vmem:[%s3 + $0xc] sm:$0xf]
          %v2529 = vld [vmem:[%s3 + $0x10] sm:$0xf]
          %v2530 = vld [vmem:[%s3 + $0x14] sm:$0xf]
          %v2531 = vld [vmem:[%s3 + $0x18] sm:$0xf]
          %v2532 = vld [vmem:[%s3 + $0x1c] sm:$0xf]
          %v2533 = vld [vmem:[%s3 + $0x20] sm:$0xf]
          %v2534 = vld [vmem:[%s3 + $0x24] sm:$0xf]
          %v2535 = vld [vmem:[%s3 + $0x28] sm:$0xf]
          %v2536 = vld [vmem:[%s3 + $0x2c] sm:$0xf]
          %v2537 = vld [vmem:[%s3 + $0x30] sm:$0xf]
          %v2538 = vld [vmem:[%s3 + $0x34] sm:$0xf]
          %v2539 = vld [vmem:[%s3 + $0x38] sm:$0xf]
          %v2540 = vld [vmem:[%s3 + $0x3c] sm:$0xf]
          %v2557 = vunpack.c.l.b16 %v2525
          %v2558 = vunpack.c.l.b16 %v2526
          %v2559 = vunpack.c.l.b16 %v2527
          %v2560 = vunpack.c.l.b16 %v2528
          %v2561 = vunpack.c.l.b16 %v2529
          %v2562 = vunpack.c.l.b16 %v2530
          %v2563 = vunpack.c.l.b16 %v2531
          %v2564 = vunpack.c.l.b16 %v2532
          %v2565 = vunpack.c.l.b16 %v2533
          %v2566 = vunpack.c.l.b16 %v2534
          %v2567 = vunpack.c.l.b16 %v2535
          %v2568 = vunpack.c.l.b16 %v2536
          %v2569 = vunpack.c.l.b16 %v2537
          %v2570 = vunpack.c.l.b16 %v2538
          %v2571 = vunpack.c.l.b16 %v2539
          %v2572 = vunpack.c.l.b16 %v2540
          %v2573 = vpack.c.b16 %v2558, %v2557
          %v2574 = vpack.c.b16 %v2560, %v2559
          %v2575 = vpack.c.b16 %v2562, %v2561
          %v2576 = vpack.c.b16 %v2564, %v2563
          %v2577 = vpack.c.b16 %v2566, %v2565
          %v2578 = vpack.c.b16 %v2568, %v2567
          %v2579 = vpack.c.b16 %v2570, %v2569
          %v2580 = vpack.c.b16 %v2572, %v2571
          %2589 = vmatprep.subr.bf16.mxu0 0
          %2590 = vmatpush1.bf16.msra.mxu0 %v2573
          %2591 = vmatprep.subr.bf16.mxu0 0
          %2592 = vmatpush1.bf16.msra.mxu0 %v2574
          %2593 = vmatprep.subr.bf16.mxu0 0
          %2594 = vmatpush1.bf16.msra.mxu0 %v2575
          %2595 = vmatprep.subr.bf16.mxu0 0
          %2596 = vmatpush1.bf16.msra.mxu0 %v2576
          %2597 = vmatprep.subr.bf16.mxu0 0
          %2598 = vmatpush1.bf16.msra.mxu0 %v2577
          %2599 = vmatprep.subr.bf16.mxu0 0
          %2600 = vmatpush1.bf16.msra.mxu0 %v2578
          %2601 = vmatprep.subr.bf16.mxu0 0
          %2602 = vmatpush1.bf16.msra.mxu0 %v2579
          %2603 = vmatprep.subr.bf16.mxu0 0
          %2604 = vmatpush1.bf16.msra.mxu0 %v2580
          %2605 = vmatprep.subr.bf16.mxu0 0
          %2606 = vmatpush1.bf16.msra.mxu0 0
          %2607 = vmatprep.subr.bf16.mxu0 0
          %2608 = vmatpush1.bf16.msra.mxu0 0
          %2609 = vmatprep.subr.bf16.mxu0 0
          %2610 = vmatpush1.bf16.msra.mxu0 0
          %2611 = vmatprep.subr.bf16.mxu0 0
          %2612 = vmatpush1.bf16.msra.mxu0 0
          %2613 = vmatprep.subr.bf16.mxu0 0
          %2614 = vmatpush1.bf16.msra.mxu0 0
          %2615 = vmatprep.subr.bf16.mxu0 0
          %2616 = vmatpush1.bf16.msra.mxu0 0
          %2617 = vmatprep.subr.bf16.mxu0 0
          %2618 = vmatpush1.bf16.msra.mxu0 0
          %2619 = vmatprep.subr.bf16.mxu0 0
          %2620 = vmatpush1.bf16.msra.mxu0 0
          %2621 = vmatprep.mubr.bf16.mxu0 0
          %2622 = vmatmul.mubr.bf16.gmra.mrb[0].mxu0 %v2509
          %v2623 = vpop.f32.mrb[0].mxu0
          %v2624 = vadd.f32 0.0, %v2623
          %v2625 = vpop.f32.mrb[0].mxu0
          %v2626 = vpop.f32.mrb[0].mxu0
          %v2627 = vadd.f32 0.0, %v2626
          %v2628 = vpop.f32.mrb[0].mxu0
          %2629 = vmatprep.mubr.bf16.mxu0 0
          %2630 = vmatmul.mubr.bf16.gmra.mrb[0].mxu0 %v2510
          %v2631 = vpop.f32.mrb[0].mxu0
          %v2632 = vadd.f32 0.0, %v2631
          %v2633 = vpop.f32.mrb[0].mxu0
          %v2634 = vpop.f32.mrb[0].mxu0
          %v2635 = vadd.f32 0.0, %v2634
          %v2636 = vpop.f32.mrb[0].mxu0
          %2637 = vmatprep.mubr.bf16.mxu0 0
          %2638 = vmatmul.mubr.bf16.gmra.mrb[0].mxu0 %v2511
          %v2639 = vpop.f32.mrb[0].mxu0
          %v2640 = vadd.f32 0.0, %v2639
          %v2641 = vpop.f32.mrb[0].mxu0
          %v2642 = vpop.f32.mrb[0].mxu0
          %v2643 = vadd.f32 0.0, %v2642
          %v2644 = vpop.f32.mrb[0].mxu0
          %2645 = vmatprep.mubr.bf16.mxu0 0
          %2646 = vmatmul.mubr.bf16.gmra.mrb[0].mxu0 %v2512
          %v2647 = vpop.f32.mrb[0].mxu0
          %v2648 = vadd.f32 0.0, %v2647
          %v2649 = vpop.f32.mrb[0].mxu0
          %v2650 = vpop.f32.mrb[0].mxu0
          %v2651 = vadd.f32 0.0, %v2650
          %v2652 = vpop.f32.mrb[0].mxu0
          %2653 = vmatprep.mubr.bf16.mxu0 0
          %2654 = vmatmul.mubr.bf16.gmra.mrb[0].mxu0 %v2513
          %v2655 = vpop.f32.mrb[0].mxu0
          %v2656 = vadd.f32 0.0, %v2655
          %v2657 = vpop.f32.mrb[0].mxu0
          %v2658 = vpop.f32.mrb[0].mxu0
          %v2659 = vadd.f32 0.0, %v2658
          %v2660 = vpop.f32.mrb[0].mxu0
          %2661 = vmatprep.mubr.bf16.mxu0 0
          %2662 = vmatmul.mubr.bf16.gmra.mrb[0].mxu0 %v2514
          %v2663 = vpop.f32.mrb[0].mxu0
          %v2664 = vadd.f32 0.0, %v2663
          %v2665 = vpop.f32.mrb[0].mxu0
          %v2666 = vpop.f32.mrb[0].mxu0
          %v2667 = vadd.f32 0.0, %v2666
          %v2668 = vpop.f32.mrb[0].mxu0
          %2669 = vmatprep.mubr.bf16.mxu0 0
          %2670 = vmatmul.mubr.bf16.gmra.mrb[0].mxu0 %v2515
          %v2671 = vpop.f32.mrb[0].mxu0
          %v2672 = vadd.f32 0.0, %v2671
          %v2673 = vpop.f32.mrb[0].mxu0
          %v2674 = vpop.f32.mrb[0].mxu0
          %v2675 = vadd.f32 0.0, %v2674
          %v2676 = vpop.f32.mrb[0].mxu0
          %2677 = vmatprep.mubr.bf16.mxu0 0
          %2678 = vmatmul.mubr.bf16.gmra.mrb[0].mxu0 %v2516
          %v2679 = vpop.f32.mrb[0].mxu0
          %v2680 = vadd.f32 0.0, %v2679
          %v2681 = vpop.f32.mrb[0].mxu0
          %v2682 = vpop.f32.mrb[0].mxu0
          %v2683 = vadd.f32 0.0, %v2682
          %v2684 = vpop.f32.mrb[0].mxu0
          %2685 = vmatprep.mubr.bf16.mxu0 0
          %2686 = vmatmul.mubr.bf16.gmra.mrb[0].mxu0 %v2517
          %v2687 = vpop.f32.mrb[0].mxu0
          %v2688 = vadd.f32 0.0, %v2687
          %v2689 = vpop.f32.mrb[0].mxu0
          %v2690 = vpop.f32.mrb[0].mxu0
          %v2691 = vadd.f32 0.0, %v2690
          %v2692 = vpop.f32.mrb[0].mxu0
          %2693 = vmatprep.mubr.bf16.mxu0 0
          %2694 = vmatmul.mubr.bf16.gmra.mrb[0].mxu0 %v2518
          %v2695 = vpop.f32.mrb[0].mxu0
          %v2696 = vadd.f32 0.0, %v2695
          %v2697 = vpop.f32.mrb[0].mxu0
          %v2698 = vpop.f32.mrb[0].mxu0
          %v2699 = vadd.f32 0.0, %v2698
          %v2700 = vpop.f32.mrb[0].mxu0
          %2701 = vmatprep.mubr.bf16.mxu0 0
          %2702 = vmatmul.mubr.bf16.gmra.mrb[0].mxu0 %v2519
          %v2703 = vpop.f32.mrb[0].mxu0
          %v2704 = vadd.f32 0.0, %v2703
          %v2705 = vpop.f32.mrb[0].mxu0
          %v2706 = vpop.f32.mrb[0].mxu0
          %v2707 = vadd.f32 0.0, %v2706
          %v2708 = vpop.f32.mrb[0].mxu0
          %2709 = vmatprep.mubr.bf16.mxu0 0
          %2710 = vmatmul.mubr.bf16.gmra.mrb[0].mxu0 %v2520
          %v2711 = vpop.f32.mrb[0].mxu0
          %v2712 = vadd.f32 0.0, %v2711
          %v2713 = vpop.f32.mrb[0].mxu0
          %v2714 = vpop.f32.mrb[0].mxu0
          %v2715 = vadd.f32 0.0, %v2714
          %v2716 = vpop.f32.mrb[0].mxu0
          %2717 = vmatprep.mubr.bf16.mxu0 0
          %2718 = vmatmul.mubr.bf16.gmra.mrb[0].mxu0 %v2521
          %v2719 = vpop.f32.mrb[0].mxu0
          %v2720 = vadd.f32 0.0, %v2719
          %v2721 = vpop.f32.mrb[0].mxu0
          %v2722 = vpop.f32.mrb[0].mxu0
          %v2723 = vadd.f32 0.0, %v2722
          %v2724 = vpop.f32.mrb[0].mxu0
          %2725 = vmatprep.mubr.bf16.mxu0 0
          %2726 = vmatmul.mubr.bf16.gmra.mrb[0].mxu0 %v2522
          %v2727 = vpop.f32.mrb[0].mxu0
          %v2728 = vadd.f32 0.0, %v2727
          %v2729 = vpop.f32.mrb[0].mxu0
          %v2730 = vpop.f32.mrb[0].mxu0
          %v2731 = vadd.f32 0.0, %v2730
          %v2732 = vpop.f32.mrb[0].mxu0
          %2733 = vmatprep.mubr.bf16.mxu0 0
          %2734 = vmatmul.mubr.bf16.gmra.mrb[0].mxu0 %v2523
          %v2735 = vpop.f32.mrb[0].mxu0
          %v2736 = vadd.f32 0.0, %v2735
          %v2737 = vpop.f32.mrb[0].mxu0
          %v2738 = vpop.f32.mrb[0].mxu0
          %v2739 = vadd.f32 0.0, %v2738
          %v2740 = vpop.f32.mrb[0].mxu0
          %2741 = vmatprep.mubr.bf16.mxu0 0
          %2742 = vmatmul.mubr.bf16.gmra.mrb[0].mxu0 %v2524
          %v2743 = vpop.f32.mrb[0].mxu0
          %v2744 = vadd.f32 0.0, %v2743
          %v2745 = vpop.f32.mrb[0].mxu0
          %v2746 = vpop.f32.mrb[0].mxu0
          %v2747 = vadd.f32 0.0, %v2746
          %v2748 = vpop.f32.mrb[0].mxu0
          %2749 = vdwg.mxu0
          %v2782 = vunpack.c.l.b16 %v2237
          %v2783 = vunpack.c.l.b16 %v2238
          %v2784 = vunpack.c.l.b16 %v2239
          %v2785 = vunpack.c.l.b16 %v2240
          %v2786 = vunpack.c.l.b16 %v2241
          %v2787 = vunpack.c.l.b16 %v2242
          %v2788 = vunpack.c.l.b16 %v2243
          %v2789 = vunpack.c.l.b16 %v2244
          %v2790 = vunpack.c.l.b16 %v2245
          %v2791 = vunpack.c.l.b16 %v2246
          %v2792 = vunpack.c.l.b16 %v2247
          %v2793 = vunpack.c.l.b16 %v2248
          %v2794 = vunpack.c.l.b16 %v2249
          %v2795 = vunpack.c.l.b16 %v2250
          %v2796 = vunpack.c.l.b16 %v2251
          %v2797 = vunpack.c.l.b16 %v2252
          %v2798 = vunpack.c.l.b16 %v2253
          %v2799 = vunpack.c.l.b16 %v2254
          %v2800 = vunpack.c.l.b16 %v2255
          %v2801 = vunpack.c.l.b16 %v2256
          %v2802 = vunpack.c.l.b16 %v2257
          %v2803 = vunpack.c.l.b16 %v2258
          %v2804 = vunpack.c.l.b16 %v2259
          %v2805 = vunpack.c.l.b16 %v2260
          %v2806 = vunpack.c.l.b16 %v2261
          %v2807 = vunpack.c.l.b16 %v2262
          %v2808 = vunpack.c.l.b16 %v2263
          %v2809 = vunpack.c.l.b16 %v2264
          %v2810 = vunpack.c.l.b16 %v2265
          %v2811 = vunpack.c.l.b16 %v2266
          %v2812 = vunpack.c.l.b16 %v2267
          %v2813 = vunpack.c.l.b16 %v2268
          %v2814 = vpack.c.b16 %v2783, %v2782
          %v2815 = vpack.c.b16 %v2785, %v2784
          %v2816 = vpack.c.b16 %v2787, %v2786
          %v2817 = vpack.c.b16 %v2789, %v2788
          %v2818 = vpack.c.b16 %v2791, %v2790
          %v2819 = vpack.c.b16 %v2793, %v2792
          %v2820 = vpack.c.b16 %v2795, %v2794
          %v2821 = vpack.c.b16 %v2797, %v2796
          %v2822 = vpack.c.b16 %v2799, %v2798
          %v2823 = vpack.c.b16 %v2801, %v2800
          %v2824 = vpack.c.b16 %v2803, %v2802
          %v2825 = vpack.c.b16 %v2805, %v2804
          %v2826 = vpack.c.b16 %v2807, %v2806
          %v2827 = vpack.c.b16 %v2809, %v2808
          %v2828 = vpack.c.b16 %v2811, %v2810
          %v2829 = vpack.c.b16 %v2813, %v2812
          %v2862 = vunpack.c.l.b16 %v2493
          %v2863 = vunpack.c.l.b16 %v2494
          %v2864 = vunpack.c.l.b16 %v2495
          %v2865 = vunpack.c.l.b16 %v2496
          %v2866 = vunpack.c.l.b16 %v2497
          %v2867 = vunpack.c.l.b16 %v2498
          %v2868 = vunpack.c.l.b16 %v2499
          %v2869 = vunpack.c.l.b16 %v2500
          %v2870 = vunpack.c.l.b16 %v2501
          %v2871 = vunpack.c.l.b16 %v2502
          %v2872 = vunpack.c.l.b16 %v2503
          %v2873 = vunpack.c.l.b16 %v2504
          %v2874 = vunpack.c.l.b16 %v2505
          %v2875 = vunpack.c.l.b16 %v2506
          %v2876 = vunpack.c.l.b16 %v2507
          %v2877 = vunpack.c.l.b16 %v2508
          %v2878 = vpack.c.b16 %v2863, %v2862
          %v2879 = vpack.c.b16 %v2865, %v2864
          %v2880 = vpack.c.b16 %v2867, %v2866
          %v2881 = vpack.c.b16 %v2869, %v2868
          %v2882 = vpack.c.b16 %v2871, %v2870
          %v2883 = vpack.c.b16 %v2873, %v2872
          %v2884 = vpack.c.b16 %v2875, %v2874
          %v2885 = vpack.c.b16 %v2877, %v2876
          %2894 = vmatprep.subr.bf16.mxu0 0
          %2895 = vmatpush1.bf16.msra.mxu0 %v2878
          %2896 = vmatprep.subr.bf16.mxu0 0
          %2897 = vmatpush1.bf16.msra.mxu0 %v2879
          %2898 = vmatprep.subr.bf16.mxu0 0
          %2899 = vmatpush1.bf16.msra.mxu0 %v2880
          %2900 = vmatprep.subr.bf16.mxu0 0
          %2901 = vmatpush1.bf16.msra.mxu0 %v2881
          %2902 = vmatprep.subr.bf16.mxu0 0
          %2903 = vmatpush1.bf16.msra.mxu0 %v2882
          %2904 = vmatprep.subr.bf16.mxu0 0
          %2905 = vmatpush1.bf16.msra.mxu0 %v2883
          %2906 = vmatprep.subr.bf16.mxu0 0
          %2907 = vmatpush1.bf16.msra.mxu0 %v2884
          %2908 = vmatprep.subr.bf16.mxu0 0
          %2909 = vmatpush1.bf16.msra.mxu0 %v2885
          %2910 = vmatprep.subr.bf16.mxu0 0
          %2911 = vmatpush1.bf16.msra.mxu0 0
          %2912 = vmatprep.subr.bf16.mxu0 0
          %2913 = vmatpush1.bf16.msra.mxu0 0
          %2914 = vmatprep.subr.bf16.mxu0 0
          %2915 = vmatpush1.bf16.msra.mxu0 0
          %2916 = vmatprep.subr.bf16.mxu0 0
          %2917 = vmatpush1.bf16.msra.mxu0 0
          %2918 = vmatprep.subr.bf16.mxu0 0
          %2919 = vmatpush1.bf16.msra.mxu0 0
          %2920 = vmatprep.subr.bf16.mxu0 0
          %2921 = vmatpush1.bf16.msra.mxu0 0
          %2922 = vmatprep.subr.bf16.mxu0 0
          %2923 = vmatpush1.bf16.msra.mxu0 0
          %2924 = vmatprep.subr.bf16.mxu0 0
          %2925 = vmatpush1.bf16.msra.mxu0 0
          %2926 = vmatprep.mubr.bf16.mxu0 0
          %2927 = vmatmul.mubr.bf16.gmra.mrb[0].mxu0 %v2814
          %v2928 = vpop.f32.mrb[0].mxu0
          %v2929 = vadd.f32 %v2624, %v2928
          %v2930 = vpop.f32.mrb[0].mxu0
          %v2931 = vpop.f32.mrb[0].mxu0
          %v2932 = vadd.f32 %v2627, %v2931
          %v2933 = vpop.f32.mrb[0].mxu0
          %2934 = vmatprep.mubr.bf16.mxu0 0
          %2935 = vmatmul.mubr.bf16.gmra.mrb[0].mxu0 %v2815
          %v2936 = vpop.f32.mrb[0].mxu0
          %v2937 = vadd.f32 %v2632, %v2936
          %v2938 = vpop.f32.mrb[0].mxu0
          %v2939 = vpop.f32.mrb[0].mxu0
          %v2940 = vadd.f32 %v2635, %v2939
          %v2941 = vpop.f32.mrb[0].mxu0
          %2942 = vmatprep.mubr.bf16.mxu0 0
          %2943 = vmatmul.mubr.bf16.gmra.mrb[0].mxu0 %v2816
          %v2944 = vpop.f32.mrb[0].mxu0
          %v2945 = vadd.f32 %v2640, %v2944
          %v2946 = vpop.f32.mrb[0].mxu0
          %v2947 = vpop.f32.mrb[0].mxu0
          %v2948 = vadd.f32 %v2643, %v2947
          %v2949 = vpop.f32.mrb[0].mxu0
          %2950 = vmatprep.mubr.bf16.mxu0 0
          %2951 = vmatmul.mubr.bf16.gmra.mrb[0].mxu0 %v2817
          %v2952 = vpop.f32.mrb[0].mxu0
          %v2953 = vadd.f32 %v2648, %v2952
          %v2954 = vpop.f32.mrb[0].mxu0
          %v2955 = vpop.f32.mrb[0].mxu0
          %v2956 = vadd.f32 %v2651, %v2955
          %v2957 = vpop.f32.mrb[0].mxu0
          %2958 = vmatprep.mubr.bf16.mxu0 0
          %2959 = vmatmul.mubr.bf16.gmra.mrb[0].mxu0 %v2818
          %v2960 = vpop.f32.mrb[0].mxu0
          %v2961 = vadd.f32 %v2656, %v2960
          %v2962 = vpop.f32.mrb[0].mxu0
          %v2963 = vpop.f32.mrb[0].mxu0
          %v2964 = vadd.f32 %v2659, %v2963
          %v2965 = vpop.f32.mrb[0].mxu0
          %2966 = vmatprep.mubr.bf16.mxu0 0
          %2967 = vmatmul.mubr.bf16.gmra.mrb[0].mxu0 %v2819
          %v2968 = vpop.f32.mrb[0].mxu0
          %v2969 = vadd.f32 %v2664, %v2968
          %v2970 = vpop.f32.mrb[0].mxu0
          %v2971 = vpop.f32.mrb[0].mxu0
          %v2972 = vadd.f32 %v2667, %v2971
          %v2973 = vpop.f32.mrb[0].mxu0
          %2974 = vmatprep.mubr.bf16.mxu0 0
          %2975 = vmatmul.mubr.bf16.gmra.mrb[0].mxu0 %v2820
          %v2976 = vpop.f32.mrb[0].mxu0
          %v2977 = vadd.f32 %v2672, %v2976
          %v2978 = vpop.f32.mrb[0].mxu0
          %v2979 = vpop.f32.mrb[0].mxu0
          %v2980 = vadd.f32 %v2675, %v2979
          %v2981 = vpop.f32.mrb[0].mxu0
          %2982 = vmatprep.mubr.bf16.mxu0 0
          %2983 = vmatmul.mubr.bf16.gmra.mrb[0].mxu0 %v2821
          %v2984 = vpop.f32.mrb[0].mxu0
          %v2985 = vadd.f32 %v2680, %v2984
          %v2986 = vpop.f32.mrb[0].mxu0
          %v2987 = vpop.f32.mrb[0].mxu0
          %v2988 = vadd.f32 %v2683, %v2987
          %v2989 = vpop.f32.mrb[0].mxu0
          %2990 = vmatprep.mubr.bf16.mxu0 0
          %2991 = vmatmul.mubr.bf16.gmra.mrb[0].mxu0 %v2822
          %v2992 = vpop.f32.mrb[0].mxu0
          %v2993 = vadd.f32 %v2688, %v2992
          %v2994 = vpop.f32.mrb[0].mxu0
          %v2995 = vpop.f32.mrb[0].mxu0
          %v2996 = vadd.f32 %v2691, %v2995
          %v2997 = vpop.f32.mrb[0].mxu0
          %2998 = vmatprep.mubr.bf16.mxu0 0
          %2999 = vmatmul.mubr.bf16.gmra.mrb[0].mxu0 %v2823
          %v3000 = vpop.f32.mrb[0].mxu0
          %v3001 = vadd.f32 %v2696, %v3000
          %v3002 = vpop.f32.mrb[0].mxu0
          %v3003 = vpop.f32.mrb[0].mxu0
          %v3004 = vadd.f32 %v2699, %v3003
          %v3005 = vpop.f32.mrb[0].mxu0
          %3006 = vmatprep.mubr.bf16.mxu0 0
          %3007 = vmatmul.mubr.bf16.gmra.mrb[0].mxu0 %v2824
          %v3008 = vpop.f32.mrb[0].mxu0
          %v3009 = vadd.f32 %v2704, %v3008
          %v3010 = vpop.f32.mrb[0].mxu0
          %v3011 = vpop.f32.mrb[0].mxu0
          %v3012 = vadd.f32 %v2707, %v3011
          %v3013 = vpop.f32.mrb[0].mxu0
          %3014 = vmatprep.mubr.bf16.mxu0 0
          %3015 = vmatmul.mubr.bf16.gmra.mrb[0].mxu0 %v2825
          %v3016 = vpop.f32.mrb[0].mxu0
          %v3017 = vadd.f32 %v2712, %v3016
          %v3018 = vpop.f32.mrb[0].mxu0
          %v3019 = vpop.f32.mrb[0].mxu0
          %v3020 = vadd.f32 %v2715, %v3019
          %v3021 = vpop.f32.mrb[0].mxu0
          %3022 = vmatprep.mubr.bf16.mxu0 0
          %3023 = vmatmul.mubr.bf16.gmra.mrb[0].mxu0 %v2826
          %v3024 = vpop.f32.mrb[0].mxu0
          %v3025 = vadd.f32 %v2720, %v3024
          %v3026 = vpop.f32.mrb[0].mxu0
          %v3027 = vpop.f32.mrb[0].mxu0
          %v3028 = vadd.f32 %v2723, %v3027
          %v3029 = vpop.f32.mrb[0].mxu0
          %3030 = vmatprep.mubr.bf16.mxu0 0
          %3031 = vmatmul.mubr.bf16.gmra.mrb[0].mxu0 %v2827
          %v3032 = vpop.f32.mrb[0].mxu0
          %v3033 = vadd.f32 %v2728, %v3032
          %v3034 = vpop.f32.mrb[0].mxu0
          %v3035 = vpop.f32.mrb[0].mxu0
          %v3036 = vadd.f32 %v2731, %v3035
          %v3037 = vpop.f32.mrb[0].mxu0
          %3038 = vmatprep.mubr.bf16.mxu0 0
          %3039 = vmatmul.mubr.bf16.gmra.mrb[0].mxu0 %v2828
          %v3040 = vpop.f32.mrb[0].mxu0
          %v3041 = vadd.f32 %v2736, %v3040
          %v3042 = vpop.f32.mrb[0].mxu0
          %v3043 = vpop.f32.mrb[0].mxu0
          %v3044 = vadd.f32 %v2739, %v3043
          %v3045 = vpop.f32.mrb[0].mxu0
          %3046 = vmatprep.mubr.bf16.mxu0 0
          %3047 = vmatmul.mubr.bf16.gmra.mrb[0].mxu0 %v2829
          %v3048 = vpop.f32.mrb[0].mxu0
          %v3049 = vadd.f32 %v2744, %v3048
          %v3050 = vpop.f32.mrb[0].mxu0
          %v3051 = vpop.f32.mrb[0].mxu0
          %v3052 = vadd.f32 %v2747, %v3051
          %v3053 = vpop.f32.mrb[0].mxu0
          %3054 = vdwg.mxu0
          %v3055 = vld [vmem:[%s4] sm:$0x1]
          %v3057 = vlaneseq
          %v3058 = vshrl.u32 %v3057, 7
          %v3059 = vsub.s32 0, %v3058
          %v3060 = vrot.slane %v3055, %v3059
          %v3062 = vadd.f32 %v2929, %v3060
          %v3063 = vadd.f32 %v2932, %v3060
          %v3064 = vadd.f32 %v2937, %v3060
          %v3065 = vadd.f32 %v2940, %v3060
          %v3066 = vadd.f32 %v2945, %v3060
          %v3067 = vadd.f32 %v2948, %v3060
          %v3068 = vadd.f32 %v2953, %v3060
          %v3069 = vadd.f32 %v2956, %v3060
          %v3070 = vadd.f32 %v2961, %v3060
          %v3071 = vadd.f32 %v2964, %v3060
          %v3072 = vadd.f32 %v2969, %v3060
          %v3073 = vadd.f32 %v2972, %v3060
          %v3074 = vadd.f32 %v2977, %v3060
          %v3075 = vadd.f32 %v2980, %v3060
          %v3076 = vadd.f32 %v2985, %v3060
          %v3077 = vadd.f32 %v2988, %v3060
          %v3078 = vadd.f32 %v2993, %v3060
          %v3079 = vadd.f32 %v2996, %v3060
          %v3080 = vadd.f32 %v3001, %v3060
          %v3081 = vadd.f32 %v3004, %v3060
          %v3082 = vadd.f32 %v3009, %v3060
          %v3083 = vadd.f32 %v3012, %v3060
          %v3084 = vadd.f32 %v3017, %v3060
          %v3085 = vadd.f32 %v3020, %v3060
          %v3086 = vadd.f32 %v3025, %v3060
          %v3087 = vadd.f32 %v3028, %v3060
          %v3088 = vadd.f32 %v3033, %v3060
          %v3089 = vadd.f32 %v3036, %v3060
          %v3090 = vadd.f32 %v3041, %v3060
          %v3091 = vadd.f32 %v3044, %v3060
          %v3092 = vadd.f32 %v3049, %v3060
          %v3093 = vadd.f32 %v3052, %v3060
          %v3094 = vmax.f32 %v3062, 0.0
          %v3095 = vmax.f32 %v3063, 0.0
          %v3096 = vmax.f32 %v3064, 0.0
          %v3097 = vmax.f32 %v3065, 0.0
          %v3098 = vmax.f32 %v3066, 0.0
          %v3099 = vmax.f32 %v3067, 0.0
          %v3100 = vmax.f32 %v3068, 0.0
          %v3101 = vmax.f32 %v3069, 0.0
          %v3102 = vmax.f32 %v3070, 0.0
          %v3103 = vmax.f32 %v3071, 0.0
          %v3104 = vmax.f32 %v3072, 0.0
          %v3105 = vmax.f32 %v3073, 0.0
          %v3106 = vmax.f32 %v3074, 0.0
          %v3107 = vmax.f32 %v3075, 0.0
          %v3108 = vmax.f32 %v3076, 0.0
          %v3109 = vmax.f32 %v3077, 0.0
          %v3110 = vmax.f32 %v3078, 0.0
          %v3111 = vmax.f32 %v3079, 0.0
          %v3112 = vmax.f32 %v3080, 0.0
          %v3113 = vmax.f32 %v3081, 0.0
          %v3114 = vmax.f32 %v3082, 0.0
          %v3115 = vmax.f32 %v3083, 0.0
          %v3116 = vmax.f32 %v3084, 0.0
          %v3117 = vmax.f32 %v3085, 0.0
          %v3118 = vmax.f32 %v3086, 0.0
          %v3119 = vmax.f32 %v3087, 0.0
          %v3120 = vmax.f32 %v3088, 0.0
          %v3121 = vmax.f32 %v3089, 0.0
          %v3122 = vmax.f32 %v3090, 0.0
          %v3123 = vmax.f32 %v3091, 0.0
          %v3124 = vmax.f32 %v3092, 0.0
          %v3125 = vmax.f32 %v3093, 0.0
          %v3126 = vlaneseq
          %v3127 = vand.u32 %v3126, 127
          %vm3128 = vcmp.lt.s32.totalorder %v3127, 32
          %v3129 = vsel %vm3128, 1, 0
          %v3130 = vcvt.s32.f32 %v3129
          %3131 = vadd.xlane.f32.xlu0 %v3094
          %v3132 = vpop.xlane.xlu0 %3131
          %3133 = vadd.xlane.f32.xlu0 %v3095
          %v3134 = vpop.xlane.xlu0 %3133
          %3135 = vadd.xlane.f32.xlu0 %v3096
          %v3136 = vpop.xlane.xlu0 %3135
          %3137 = vadd.xlane.f32.xlu0 %v3097
          %v3138 = vpop.xlane.xlu0 %3137
          %3139 = vadd.xlane.f32.xlu0 %v3098
          %v3140 = vpop.xlane.xlu0 %3139
          %3141 = vadd.xlane.f32.xlu0 %v3099
          %v3142 = vpop.xlane.xlu0 %3141
          %3143 = vadd.xlane.f32.xlu0 %v3100
          %v3144 = vpop.xlane.xlu0 %3143
          %3145 = vadd.xlane.f32.xlu0 %v3101
          %v3146 = vpop.xlane.xlu0 %3145
          %3147 = vadd.xlane.f32.xlu0 %v3102
          %v3148 = vpop.xlane.xlu0 %3147
          %3149 = vadd.xlane.f32.xlu0 %v3103
          %v3150 = vpop.xlane.xlu0 %3149
          %3151 = vadd.xlane.f32.xlu0 %v3104
          %v3152 = vpop.xlane.xlu0 %3151
          %3153 = vadd.xlane.f32.xlu0 %v3105
          %v3154 = vpop.xlane.xlu0 %3153
          %3155 = vadd.xlane.f32.xlu0 %v3106
          %v3156 = vpop.xlane.xlu0 %3155
          %3157 = vadd.xlane.f32.xlu0 %v3107
          %v3158 = vpop.xlane.xlu0 %3157
          %3159 = vadd.xlane.f32.xlu0 %v3108
          %v3160 = vpop.xlane.xlu0 %3159
          %3161 = vadd.xlane.f32.xlu0 %v3109
          %v3162 = vpop.xlane.xlu0 %3161
          %3163 = vadd.xlane.f32.xlu0 %v3110
          %v3164 = vpop.xlane.xlu0 %3163
          %3165 = vadd.xlane.f32.xlu0 %v3111
          %v3166 = vpop.xlane.xlu0 %3165
          %3167 = vadd.xlane.f32.xlu0 %v3112
          %v3168 = vpop.xlane.xlu0 %3167
          %3169 = vadd.xlane.f32.xlu0 %v3113
          %v3170 = vpop.xlane.xlu0 %3169
          %3171 = vadd.xlane.f32.xlu0 %v3114
          %v3172 = vpop.xlane.xlu0 %3171
          %3173 = vadd.xlane.f32.xlu0 %v3115
          %v3174 = vpop.xlane.xlu0 %3173
          %3175 = vadd.xlane.f32.xlu0 %v3116
          %v3176 = vpop.xlane.xlu0 %3175
          %3177 = vadd.xlane.f32.xlu0 %v3117
          %v3178 = vpop.xlane.xlu0 %3177
          %3179 = vadd.xlane.f32.xlu0 %v3118
          %v3180 = vpop.xlane.xlu0 %3179
          %3181 = vadd.xlane.f32.xlu0 %v3119
          %v3182 = vpop.xlane.xlu0 %3181
          %3183 = vadd.xlane.f32.xlu0 %v3120
          %v3184 = vpop.xlane.xlu0 %3183
          %3185 = vadd.xlane.f32.xlu0 %v3121
          %v3186 = vpop.xlane.xlu0 %3185
          %3187 = vadd.xlane.f32.xlu0 %v3122
          %v3188 = vpop.xlane.xlu0 %3187
          %3189 = vadd.xlane.f32.xlu0 %v3123
          %v3190 = vpop.xlane.xlu0 %3189
          %3191 = vadd.xlane.f32.xlu0 %v3124
          %v3192 = vpop.xlane.xlu0 %3191
          %3193 = vadd.xlane.f32.xlu0 %v3125
          %v3194 = vpop.xlane.xlu0 %3193
          %v3195 = vmul.f32 %v3132, 0.03125
          %v3196 = vmul.f32 %v3134, 0.03125
          %v3197 = vmul.f32 %v3136, 0.03125
          %v3198 = vmul.f32 %v3138, 0.03125
          %v3199 = vmul.f32 %v3140, 0.03125
          %v3200 = vmul.f32 %v3142, 0.03125
          %v3201 = vmul.f32 %v3144, 0.03125
          %v3202 = vmul.f32 %v3146, 0.03125
          %v3203 = vmul.f32 %v3148, 0.03125
          %v3204 = vmul.f32 %v3150, 0.03125
          %v3205 = vmul.f32 %v3152, 0.03125
          %v3206 = vmul.f32 %v3154, 0.03125
          %v3207 = vmul.f32 %v3156, 0.03125
          %v3208 = vmul.f32 %v3158, 0.03125
          %v3209 = vmul.f32 %v3160, 0.03125
          %v3210 = vmul.f32 %v3162, 0.03125
          %v3211 = vmul.f32 %v3164, 0.03125
          %v3212 = vmul.f32 %v3166, 0.03125
          %v3213 = vmul.f32 %v3168, 0.03125
          %v3214 = vmul.f32 %v3170, 0.03125
          %v3215 = vmul.f32 %v3172, 0.03125
          %v3216 = vmul.f32 %v3174, 0.03125
          %v3217 = vmul.f32 %v3176, 0.03125
          %v3218 = vmul.f32 %v3178, 0.03125
          %v3219 = vmul.f32 %v3180, 0.03125
          %v3220 = vmul.f32 %v3182, 0.03125
          %v3221 = vmul.f32 %v3184, 0.03125
          %v3222 = vmul.f32 %v3186, 0.03125
          %v3223 = vmul.f32 %v3188, 0.03125
          %v3224 = vmul.f32 %v3190, 0.03125
          %v3225 = vmul.f32 %v3192, 0.03125
          %v3226 = vmul.f32 %v3194, 0.03125
          %v3227 = vsub.f32 %v3094, %v3195
          %v3228 = vsub.f32 %v3095, %v3196
          %v3229 = vsub.f32 %v3096, %v3197
          %v3230 = vsub.f32 %v3097, %v3198
          %v3231 = vsub.f32 %v3098, %v3199
          %v3232 = vsub.f32 %v3099, %v3200
          %v3233 = vsub.f32 %v3100, %v3201
          %v3234 = vsub.f32 %v3101, %v3202
          %v3235 = vsub.f32 %v3102, %v3203
          %v3236 = vsub.f32 %v3103, %v3204
          %v3237 = vsub.f32 %v3104, %v3205
          %v3238 = vsub.f32 %v3105, %v3206
          %v3239 = vsub.f32 %v3106, %v3207
          %v3240 = vsub.f32 %v3107, %v3208
          %v3241 = vsub.f32 %v3108, %v3209
          %v3242 = vsub.f32 %v3109, %v3210
          %v3243 = vsub.f32 %v3110, %v3211
          %v3244 = vsub.f32 %v3111, %v3212
          %v3245 = vsub.f32 %v3112, %v3213
          %v3246 = vsub.f32 %v3113, %v3214
          %v3247 = vsub.f32 %v3114, %v3215
          %v3248 = vsub.f32 %v3115, %v3216
          %v3249 = vsub.f32 %v3116, %v3217
          %v3250 = vsub.f32 %v3117, %v3218
          %v3251 = vsub.f32 %v3118, %v3219
          %v3252 = vsub.f32 %v3119, %v3220
          %v3253 = vsub.f32 %v3120, %v3221
          %v3254 = vsub.f32 %v3121, %v3222
          %v3255 = vsub.f32 %v3122, %v3223
          %v3256 = vsub.f32 %v3123, %v3224
          %v3257 = vsub.f32 %v3124, %v3225
          %v3258 = vsub.f32 %v3125, %v3226
          %v3259 = vmul.f32 %v3227, %v3227
          %v3260 = vmul.f32 %v3228, %v3228
          %v3261 = vmul.f32 %v3229, %v3229
          %v3262 = vmul.f32 %v3230, %v3230
          %v3263 = vmul.f32 %v3231, %v3231
          %v3264 = vmul.f32 %v3232, %v3232
          %v3265 = vmul.f32 %v3233, %v3233
          %v3266 = vmul.f32 %v3234, %v3234
          %v3267 = vmul.f32 %v3235, %v3235
          %v3268 = vmul.f32 %v3236, %v3236
          %v3269 = vmul.f32 %v3237, %v3237
          %v3270 = vmul.f32 %v3238, %v3238
          %v3271 = vmul.f32 %v3239, %v3239
          %v3272 = vmul.f32 %v3240, %v3240
          %v3273 = vmul.f32 %v3241, %v3241
          %v3274 = vmul.f32 %v3242, %v3242
          %v3275 = vmul.f32 %v3243, %v3243
          %v3276 = vmul.f32 %v3244, %v3244
          %v3277 = vmul.f32 %v3245, %v3245
          %v3278 = vmul.f32 %v3246, %v3246
          %v3279 = vmul.f32 %v3247, %v3247
          %v3280 = vmul.f32 %v3248, %v3248
          %v3281 = vmul.f32 %v3249, %v3249
          %v3282 = vmul.f32 %v3250, %v3250
          %v3283 = vmul.f32 %v3251, %v3251
          %v3284 = vmul.f32 %v3252, %v3252
          %v3285 = vmul.f32 %v3253, %v3253
          %v3286 = vmul.f32 %v3254, %v3254
          %v3287 = vmul.f32 %v3255, %v3255
          %v3288 = vmul.f32 %v3256, %v3256
          %v3289 = vmul.f32 %v3257, %v3257
          %v3290 = vmul.f32 %v3258, %v3258
          %v3291 = vmul.f32 %v3259, %v3130
          %v3292 = vmul.f32 %v3260, %v3130
          %v3293 = vmul.f32 %v3261, %v3130
          %v3294 = vmul.f32 %v3262, %v3130
          %v3295 = vmul.f32 %v3263, %v3130
          %v3296 = vmul.f32 %v3264, %v3130
          %v3297 = vmul.f32 %v3265, %v3130
          %v3298 = vmul.f32 %v3266, %v3130
          %v3299 = vmul.f32 %v3267, %v3130
          %v3300 = vmul.f32 %v3268, %v3130
          %v3301 = vmul.f32 %v3269, %v3130
          %v3302 = vmul.f32 %v3270, %v3130
          %v3303 = vmul.f32 %v3271, %v3130
          %v3304 = vmul.f32 %v3272, %v3130
          %v3305 = vmul.f32 %v3273, %v3130
          %v3306 = vmul.f32 %v3274, %v3130
          %v3307 = vmul.f32 %v3275, %v3130
          %v3308 = vmul.f32 %v3276, %v3130
          %v3309 = vmul.f32 %v3277, %v3130
          %v3310 = vmul.f32 %v3278, %v3130
          %v3311 = vmul.f32 %v3279, %v3130
          %v3312 = vmul.f32 %v3280, %v3130
          %v3313 = vmul.f32 %v3281, %v3130
          %v3314 = vmul.f32 %v3282, %v3130
          %v3315 = vmul.f32 %v3283, %v3130
          %v3316 = vmul.f32 %v3284, %v3130
          %v3317 = vmul.f32 %v3285, %v3130
          %v3318 = vmul.f32 %v3286, %v3130
          %v3319 = vmul.f32 %v3287, %v3130
          %v3320 = vmul.f32 %v3288, %v3130
          %v3321 = vmul.f32 %v3289, %v3130
          %v3322 = vmul.f32 %v3290, %v3130
          %3323 = vadd.xlane.f32.xlu0 %v3291
          %v3324 = vpop.xlane.xlu0 %3323
          %3325 = vadd.xlane.f32.xlu0 %v3292
          %v3326 = vpop.xlane.xlu0 %3325
          %3327 = vadd.xlane.f32.xlu0 %v3293
          %v3328 = vpop.xlane.xlu0 %3327
          %3329 = vadd.xlane.f32.xlu0 %v3294
          %v3330 = vpop.xlane.xlu0 %3329
          %3331 = vadd.xlane.f32.xlu0 %v3295
          %v3332 = vpop.xlane.xlu0 %3331
          %3333 = vadd.xlane.f32.xlu0 %v3296
          %v3334 = vpop.xlane.xlu0 %3333
          %3335 = vadd.xlane.f32.xlu0 %v3297
          %v3336 = vpop.xlane.xlu0 %3335
          %3337 = vadd.xlane.f32.xlu0 %v3298
          %v3338 = vpop.xlane.xlu0 %3337
          %3339 = vadd.xlane.f32.xlu0 %v3299
          %v3340 = vpop.xlane.xlu0 %3339
          %3341 = vadd.xlane.f32.xlu0 %v3300
          %v3342 = vpop.xlane.xlu0 %3341
          %3343 = vadd.xlane.f32.xlu0 %v3301
          %v3344 = vpop.xlane.xlu0 %3343
          %3345 = vadd.xlane.f32.xlu0 %v3302
          %v3346 = vpop.xlane.xlu0 %3345
          %3347 = vadd.xlane.f32.xlu0 %v3303
          %v3348 = vpop.xlane.xlu0 %3347
          %3349 = vadd.xlane.f32.xlu0 %v3304
          %v3350 = vpop.xlane.xlu0 %3349
          %3351 = vadd.xlane.f32.xlu0 %v3305
          %v3352 = vpop.xlane.xlu0 %3351
          %3353 = vadd.xlane.f32.xlu0 %v3306
          %v3354 = vpop.xlane.xlu0 %3353
          %3355 = vadd.xlane.f32.xlu0 %v3307
          %v3356 = vpop.xlane.xlu0 %3355
          %3357 = vadd.xlane.f32.xlu0 %v3308
          %v3358 = vpop.xlane.xlu0 %3357
          %3359 = vadd.xlane.f32.xlu0 %v3309
          %v3360 = vpop.xlane.xlu0 %3359
          %3361 = vadd.xlane.f32.xlu0 %v3310
          %v3362 = vpop.xlane.xlu0 %3361
          %3363 = vadd.xlane.f32.xlu0 %v3311
          %v3364 = vpop.xlane.xlu0 %3363
          %3365 = vadd.xlane.f32.xlu0 %v3312
          %v3366 = vpop.xlane.xlu0 %3365
          %3367 = vadd.xlane.f32.xlu0 %v3313
          %v3368 = vpop.xlane.xlu0 %3367
          %3369 = vadd.xlane.f32.xlu0 %v3314
          %v3370 = vpop.xlane.xlu0 %3369
          %3371 = vadd.xlane.f32.xlu0 %v3315
          %v3372 = vpop.xlane.xlu0 %3371
          %3373 = vadd.xlane.f32.xlu0 %v3316
          %v3374 = vpop.xlane.xlu0 %3373
          %3375 = vadd.xlane.f32.xlu0 %v3317
          %v3376 = vpop.xlane.xlu0 %3375
          %3377 = vadd.xlane.f32.xlu0 %v3318
          %v3378 = vpop.xlane.xlu0 %3377
          %3379 = vadd.xlane.f32.xlu0 %v3319
          %v3380 = vpop.xlane.xlu0 %3379
          %3381 = vadd.xlane.f32.xlu0 %v3320
          %v3382 = vpop.xlane.xlu0 %3381
          %3383 = vadd.xlane.f32.xlu0 %v3321
          %v3384 = vpop.xlane.xlu0 %3383
          %3385 = vadd.xlane.f32.xlu0 %v3322
          %v3386 = vpop.xlane.xlu0 %3385
          %v3387 = vmul.f32 %v3324, 0.03125
          %v3388 = vmul.f32 %v3326, 0.03125
          %v3389 = vmul.f32 %v3328, 0.03125
          %v3390 = vmul.f32 %v3330, 0.03125
          %v3391 = vmul.f32 %v3332, 0.03125
          %v3392 = vmul.f32 %v3334, 0.03125
          %v3393 = vmul.f32 %v3336, 0.03125
          %v3394 = vmul.f32 %v3338, 0.03125
          %v3395 = vmul.f32 %v3340, 0.03125
          %v3396 = vmul.f32 %v3342, 0.03125
          %v3397 = vmul.f32 %v3344, 0.03125
          %v3398 = vmul.f32 %v3346, 0.03125
          %v3399 = vmul.f32 %v3348, 0.03125
          %v3400 = vmul.f32 %v3350, 0.03125
          %v3401 = vmul.f32 %v3352, 0.03125
          %v3402 = vmul.f32 %v3354, 0.03125
          %v3403 = vmul.f32 %v3356, 0.03125
          %v3404 = vmul.f32 %v3358, 0.03125
          %v3405 = vmul.f32 %v3360, 0.03125
          %v3406 = vmul.f32 %v3362, 0.03125
          %v3407 = vmul.f32 %v3364, 0.03125
          %v3408 = vmul.f32 %v3366, 0.03125
          %v3409 = vmul.f32 %v3368, 0.03125
          %v3410 = vmul.f32 %v3370, 0.03125
          %v3411 = vmul.f32 %v3372, 0.03125
          %v3412 = vmul.f32 %v3374, 0.03125
          %v3413 = vmul.f32 %v3376, 0.03125
          %v3414 = vmul.f32 %v3378, 0.03125
          %v3415 = vmul.f32 %v3380, 0.03125
          %v3416 = vmul.f32 %v3382, 0.03125
          %v3417 = vmul.f32 %v3384, 0.03125
          %v3418 = vmul.f32 %v3386, 0.03125
          %v3419 = vadd.f32 %v3387, 1e-05
          %v3420 = vadd.f32 %v3388, 1e-05
          %v3421 = vadd.f32 %v3389, 1e-05
          %v3422 = vadd.f32 %v3390, 1e-05
          %v3423 = vadd.f32 %v3391, 1e-05
          %v3424 = vadd.f32 %v3392, 1e-05
          %v3425 = vadd.f32 %v3393, 1e-05
          %v3426 = vadd.f32 %v3394, 1e-05
          %v3427 = vadd.f32 %v3395, 1e-05
          %v3428 = vadd.f32 %v3396, 1e-05
          %v3429 = vadd.f32 %v3397, 1e-05
          %v3430 = vadd.f32 %v3398, 1e-05
          %v3431 = vadd.f32 %v3399, 1e-05
          %v3432 = vadd.f32 %v3400, 1e-05
          %v3433 = vadd.f32 %v3401, 1e-05
          %v3434 = vadd.f32 %v3402, 1e-05
          %v3435 = vadd.f32 %v3403, 1e-05
          %v3436 = vadd.f32 %v3404, 1e-05
          %v3437 = vadd.f32 %v3405, 1e-05
          %v3438 = vadd.f32 %v3406, 1e-05
          %v3439 = vadd.f32 %v3407, 1e-05
          %v3440 = vadd.f32 %v3408, 1e-05
          %v3441 = vadd.f32 %v3409, 1e-05
          %v3442 = vadd.f32 %v3410, 1e-05
          %v3443 = vadd.f32 %v3411, 1e-05
          %v3444 = vadd.f32 %v3412, 1e-05
          %v3445 = vadd.f32 %v3413, 1e-05
          %v3446 = vadd.f32 %v3414, 1e-05
          %v3447 = vadd.f32 %v3415, 1e-05
          %v3448 = vadd.f32 %v3416, 1e-05
          %v3449 = vadd.f32 %v3417, 1e-05
          %v3450 = vadd.f32 %v3418, 1e-05
          %v3451 = vrsqrt.pop %v3419
          %v3452 = vrsqrt.pop %v3420
          %v3453 = vrsqrt.pop %v3421
          %v3454 = vrsqrt.pop %v3422
          %v3455 = vrsqrt.pop %v3423
          %v3456 = vrsqrt.pop %v3424
          %v3457 = vrsqrt.pop %v3425
          %v3458 = vrsqrt.pop %v3426
          %v3459 = vrsqrt.pop %v3427
          %v3460 = vrsqrt.pop %v3428
          %v3461 = vrsqrt.pop %v3429
          %v3462 = vrsqrt.pop %v3430
          %v3463 = vrsqrt.pop %v3431
          %v3464 = vrsqrt.pop %v3432
          %v3465 = vrsqrt.pop %v3433
          %v3466 = vrsqrt.pop %v3434
          %v3467 = vrsqrt.pop %v3435
          %v3468 = vrsqrt.pop %v3436
          %v3469 = vrsqrt.pop %v3437
          %v3470 = vrsqrt.pop %v3438
          %v3471 = vrsqrt.pop %v3439
          %v3472 = vrsqrt.pop %v3440
          %v3473 = vrsqrt.pop %v3441
          %v3474 = vrsqrt.pop %v3442
          %v3475 = vrsqrt.pop %v3443
          %v3476 = vrsqrt.pop %v3444
          %v3477 = vrsqrt.pop %v3445
          %v3478 = vrsqrt.pop %v3446
          %v3479 = vrsqrt.pop %v3447
          %v3480 = vrsqrt.pop %v3448
          %v3481 = vrsqrt.pop %v3449
          %v3482 = vrsqrt.pop %v3450
          %v3483 = vmul.f32 %v3227, %v3451
          %v3484 = vmul.f32 %v3228, %v3452
          %v3485 = vmul.f32 %v3229, %v3453
          %v3486 = vmul.f32 %v3230, %v3454
          %v3487 = vmul.f32 %v3231, %v3455
          %v3488 = vmul.f32 %v3232, %v3456
          %v3489 = vmul.f32 %v3233, %v3457
          %v3490 = vmul.f32 %v3234, %v3458
          %v3491 = vmul.f32 %v3235, %v3459
          %v3492 = vmul.f32 %v3236, %v3460
          %v3493 = vmul.f32 %v3237, %v3461
          %v3494 = vmul.f32 %v3238, %v3462
          %v3495 = vmul.f32 %v3239, %v3463
          %v3496 = vmul.f32 %v3240, %v3464
          %v3497 = vmul.f32 %v3241, %v3465
          %v3498 = vmul.f32 %v3242, %v3466
          %v3499 = vmul.f32 %v3243, %v3467
          %v3500 = vmul.f32 %v3244, %v3468
          %v3501 = vmul.f32 %v3245, %v3469
          %v3502 = vmul.f32 %v3246, %v3470
          %v3503 = vmul.f32 %v3247, %v3471
          %v3504 = vmul.f32 %v3248, %v3472
          %v3505 = vmul.f32 %v3249, %v3473
          %v3506 = vmul.f32 %v3250, %v3474
          %v3507 = vmul.f32 %v3251, %v3475
          %v3508 = vmul.f32 %v3252, %v3476
          %v3509 = vmul.f32 %v3253, %v3477
          %v3510 = vmul.f32 %v3254, %v3478
          %v3511 = vmul.f32 %v3255, %v3479
          %v3512 = vmul.f32 %v3256, %v3480
          %v3513 = vmul.f32 %v3257, %v3481
          %v3514 = vmul.f32 %v3258, %v3482
          %v3515 = vld [vmem:[%s5] sm:$0x1]
          %v3517 = vlaneseq
          %v3518 = vshrl.u32 %v3517, 7
          %v3519 = vsub.s32 0, %v3518
          %v3520 = vrot.slane %v3515, %v3519
          %v3522 = vmul.f32 %v3483, %v3520
          %v3523 = vmul.f32 %v3484, %v3520
          %v3524 = vmul.f32 %v3485, %v3520
          %v3525 = vmul.f32 %v3486, %v3520
          %v3526 = vmul.f32 %v3487, %v3520
          %v3527 = vmul.f32 %v3488, %v3520
          %v3528 = vmul.f32 %v3489, %v3520
          %v3529 = vmul.f32 %v3490, %v3520
          %v3530 = vmul.f32 %v3491, %v3520
          %v3531 = vmul.f32 %v3492, %v3520
          %v3532 = vmul.f32 %v3493, %v3520
          %v3533 = vmul.f32 %v3494, %v3520
          %v3534 = vmul.f32 %v3495, %v3520
          %v3535 = vmul.f32 %v3496, %v3520
          %v3536 = vmul.f32 %v3497, %v3520
          %v3537 = vmul.f32 %v3498, %v3520
          %v3538 = vmul.f32 %v3499, %v3520
          %v3539 = vmul.f32 %v3500, %v3520
          %v3540 = vmul.f32 %v3501, %v3520
          %v3541 = vmul.f32 %v3502, %v3520
          %v3542 = vmul.f32 %v3503, %v3520
          %v3543 = vmul.f32 %v3504, %v3520
          %v3544 = vmul.f32 %v3505, %v3520
          %v3545 = vmul.f32 %v3506, %v3520
          %v3546 = vmul.f32 %v3507, %v3520
          %v3547 = vmul.f32 %v3508, %v3520
          %v3548 = vmul.f32 %v3509, %v3520
          %v3549 = vmul.f32 %v3510, %v3520
          %v3550 = vmul.f32 %v3511, %v3520
          %v3551 = vmul.f32 %v3512, %v3520
          %v3552 = vmul.f32 %v3513, %v3520
          %v3553 = vmul.f32 %v3514, %v3520
          %v3554 = vld [vmem:[%s6] sm:$0x1]
          %v3556 = vlaneseq
          %v3557 = vshrl.u32 %v3556, 7
          %v3558 = vsub.s32 0, %v3557
          %v3559 = vrot.slane %v3554, %v3558
          %v3561 = vadd.f32 %v3522, %v3559
          %v3562 = vadd.f32 %v3523, %v3559
          %v3563 = vadd.f32 %v3524, %v3559
          %v3564 = vadd.f32 %v3525, %v3559
          %v3565 = vadd.f32 %v3526, %v3559
          %v3566 = vadd.f32 %v3527, %v3559
          %v3567 = vadd.f32 %v3528, %v3559
          %v3568 = vadd.f32 %v3529, %v3559
          %v3569 = vadd.f32 %v3530, %v3559
          %v3570 = vadd.f32 %v3531, %v3559
          %v3571 = vadd.f32 %v3532, %v3559
          %v3572 = vadd.f32 %v3533, %v3559
          %v3573 = vadd.f32 %v3534, %v3559
          %v3574 = vadd.f32 %v3535, %v3559
          %v3575 = vadd.f32 %v3536, %v3559
          %v3576 = vadd.f32 %v3537, %v3559
          %v3577 = vadd.f32 %v3538, %v3559
          %v3578 = vadd.f32 %v3539, %v3559
          %v3579 = vadd.f32 %v3540, %v3559
          %v3580 = vadd.f32 %v3541, %v3559
          %v3581 = vadd.f32 %v3542, %v3559
          %v3582 = vadd.f32 %v3543, %v3559
          %v3583 = vadd.f32 %v3544, %v3559
          %v3584 = vadd.f32 %v3545, %v3559
          %v3585 = vadd.f32 %v3546, %v3559
          %v3586 = vadd.f32 %v3547, %v3559
          %v3587 = vadd.f32 %v3548, %v3559
          %v3588 = vadd.f32 %v3549, %v3559
          %v3589 = vadd.f32 %v3550, %v3559
          %v3590 = vadd.f32 %v3551, %v3559
          %v3591 = vadd.f32 %v3552, %v3559
          %v3592 = vadd.f32 %v3553, %v3559
          %v3593 = vpack.c.bf16 %v3562, %v3561
          %v3594 = vpack.c.bf16 %v3564, %v3563
          %v3595 = vpack.c.bf16 %v3566, %v3565
          %v3596 = vpack.c.bf16 %v3568, %v3567
          %v3597 = vpack.c.bf16 %v3570, %v3569
          %v3598 = vpack.c.bf16 %v3572, %v3571
          %v3599 = vpack.c.bf16 %v3574, %v3573
          %v3600 = vpack.c.bf16 %v3576, %v3575
          %v3601 = vpack.c.bf16 %v3578, %v3577
          %v3602 = vpack.c.bf16 %v3580, %v3579
          %v3603 = vpack.c.bf16 %v3582, %v3581
          %v3604 = vpack.c.bf16 %v3584, %v3583
          %v3605 = vpack.c.bf16 %v3586, %v3585
          %v3606 = vpack.c.bf16 %v3588, %v3587
          %v3607 = vpack.c.bf16 %v3590, %v3589
          %v3608 = vpack.c.bf16 %v3592, %v3591
          %v3625 = vunpack.c.l.b16 %v3593
          %v3626 = vunpack.c.h.b16 %v3593
          %v3627 = vunpack.c.l.b16 %v3594
          %v3628 = vunpack.c.h.b16 %v3594
          %v3629 = vunpack.c.l.b16 %v3595
          %v3630 = vunpack.c.h.b16 %v3595
          %v3631 = vunpack.c.l.b16 %v3596
          %v3632 = vunpack.c.h.b16 %v3596
          %v3633 = vunpack.c.l.b16 %v3597
          %v3634 = vunpack.c.h.b16 %v3597
          %v3635 = vunpack.c.l.b16 %v3598
          %v3636 = vunpack.c.h.b16 %v3598
          %v3637 = vunpack.c.l.b16 %v3599
          %v3638 = vunpack.c.h.b16 %v3599
          %v3639 = vunpack.c.l.b16 %v3600
          %v3640 = vunpack.c.h.b16 %v3600
          %v3641 = vunpack.c.l.b16 %v3601
          %v3642 = vunpack.c.h.b16 %v3601
          %v3643 = vunpack.c.l.b16 %v3602
          %v3644 = vunpack.c.h.b16 %v3602
          %v3645 = vunpack.c.l.b16 %v3603
          %v3646 = vunpack.c.h.b16 %v3603
          %v3647 = vunpack.c.l.b16 %v3604
          %v3648 = vunpack.c.h.b16 %v3604
          %v3649 = vunpack.c.l.b16 %v3605
          %v3650 = vunpack.c.h.b16 %v3605
          %v3651 = vunpack.c.l.b16 %v3606
          %v3652 = vunpack.c.h.b16 %v3606
          %v3653 = vunpack.c.l.b16 %v3607
          %v3654 = vunpack.c.h.b16 %v3607
          %v3655 = vunpack.c.l.b16 %v3608
          %v3656 = vunpack.c.h.b16 %v3608
          %v3657 = vpack.c.b16 %v3625, %v3625
          %v3658 = vpack.c.b16 %v3626, %v3626
          %v3659 = vpack.c.b16 %v3627, %v3627
          %v3660 = vpack.c.b16 %v3628, %v3628
          %v3661 = vpack.c.b16 %v3629, %v3629
          %v3662 = vpack.c.b16 %v3630, %v3630
          %v3663 = vpack.c.b16 %v3631, %v3631
          %v3664 = vpack.c.b16 %v3632, %v3632
          %v3665 = vpack.c.b16 %v3633, %v3633
          %v3666 = vpack.c.b16 %v3634, %v3634
          %v3667 = vpack.c.b16 %v3635, %v3635
          %v3668 = vpack.c.b16 %v3636, %v3636
          %v3669 = vpack.c.b16 %v3637, %v3637
          %v3670 = vpack.c.b16 %v3638, %v3638
          %v3671 = vpack.c.b16 %v3639, %v3639
          %v3672 = vpack.c.b16 %v3640, %v3640
          %v3673 = vpack.c.b16 %v3641, %v3641
          %v3674 = vpack.c.b16 %v3642, %v3642
          %v3675 = vpack.c.b16 %v3643, %v3643
          %v3676 = vpack.c.b16 %v3644, %v3644
          %v3677 = vpack.c.b16 %v3645, %v3645
          %v3678 = vpack.c.b16 %v3646, %v3646
          %v3679 = vpack.c.b16 %v3647, %v3647
          %v3680 = vpack.c.b16 %v3648, %v3648
          %v3681 = vpack.c.b16 %v3649, %v3649
          %v3682 = vpack.c.b16 %v3650, %v3650
          %v3683 = vpack.c.b16 %v3651, %v3651
          %v3684 = vpack.c.b16 %v3652, %v3652
          %v3685 = vpack.c.b16 %v3653, %v3653
          %v3686 = vpack.c.b16 %v3654, %v3654
          %v3687 = vpack.c.b16 %v3655, %v3655
          %v3688 = vpack.c.b16 %v3656, %v3656
          %3721 = vst [vmem:[%s478] sm:$0xf] %v3657
          %3722 = vst [vmem:[%s478 + $0x4] sm:$0xf] %v3658
          %3723 = vst [vmem:[%s478 + $0x8] sm:$0xf] %v3659
          %3724 = vst [vmem:[%s478 + $0xc] sm:$0xf] %v3660
          %3725 = vst [vmem:[%s478 + $0x10] sm:$0xf] %v3661
          %3726 = vst [vmem:[%s478 + $0x14] sm:$0xf] %v3662
          %3727 = vst [vmem:[%s478 + $0x18] sm:$0xf] %v3663
          %3728 = vst [vmem:[%s478 + $0x1c] sm:$0xf] %v3664
          %3729 = vst [vmem:[%s478 + $0x20] sm:$0xf] %v3665
          %3730 = vst [vmem:[%s478 + $0x24] sm:$0xf] %v3666
          %3731 = vst [vmem:[%s478 + $0x28] sm:$0xf] %v3667
          %3732 = vst [vmem:[%s478 + $0x2c] sm:$0xf] %v3668
          %3733 = vst [vmem:[%s478 + $0x30] sm:$0xf] %v3669
          %3734 = vst [vmem:[%s478 + $0x34] sm:$0xf] %v3670
          %3735 = vst [vmem:[%s478 + $0x38] sm:$0xf] %v3671
          %3736 = vst [vmem:[%s478 + $0x3c] sm:$0xf] %v3672
          %3737 = vst [vmem:[%s478 + $0x40] sm:$0xf] %v3673
          %3738 = vst [vmem:[%s478 + $0x44] sm:$0xf] %v3674
          %3739 = vst [vmem:[%s478 + $0x48] sm:$0xf] %v3675
          %3740 = vst [vmem:[%s478 + $0x4c] sm:$0xf] %v3676
          %3741 = vst [vmem:[%s478 + $0x50] sm:$0xf] %v3677
          %3742 = vst [vmem:[%s478 + $0x54] sm:$0xf] %v3678
          %3743 = vst [vmem:[%s478 + $0x58] sm:$0xf] %v3679
          %3744 = vst [vmem:[%s478 + $0x5c] sm:$0xf] %v3680
          %3745 = vst [vmem:[%s478 + $0x60] sm:$0xf] %v3681
          %3746 = vst [vmem:[%s478 + $0x64] sm:$0xf] %v3682
          %3747 = vst [vmem:[%s478 + $0x68] sm:$0xf] %v3683
          %3748 = vst [vmem:[%s478 + $0x6c] sm:$0xf] %v3684
          %3749 = vst [vmem:[%s478 + $0x70] sm:$0xf] %v3685
          %3750 = vst [vmem:[%s478 + $0x74] sm:$0xf] %v3686
          %3751 = vst [vmem:[%s478 + $0x78] sm:$0xf] %v3687
          %3752 = vst [vmem:[%s478 + $0x7c] sm:$0xf] %v3688
        $region79: #{graph_classification_forward.6} parent=66 // pred_fallthru
          _
        %s3753 = smul.u32 32, %s24
        %p3754 = scmp.lt.s32.totalorder %s3753, 127
        %s3755 = scalar_select %p3754, %s3753, 127
        %s3756 = smul.addr %s3755, 4
        %s3757 = scalar_lea.vmem %s7, %s3756
        %s3758 = smul.u32 32, %s24
        %p3759 = scmp.lt.s32.totalorder %s3758, 127
        %s3760 = scalar_select %p3759, %s3758, 127
        %s3761 = smul.addr %s3760, 8
        %s3762 = scalar_lea.vmem %s8, %s3761
        // Predicated region
        $region80: #{graph_classification_forward.6} parent=66 // pred_check
          %p3763 = pneg %p204
        $region81: #{graph_classification_forward.6} parent=66 // pred_check_branch
          %3765 = sbr.rel (%p3763) target = $region83
        $region82: #{graph_classification_forward.6} parent=66 // pred_region
          %s3766 = smul.u32 32, %s24
        $region83: #{graph_classification_forward.6} parent=66 // pred_fallthru
          _
        // Predicated region
        $region84: #{graph_classification_forward.6} parent=66 // pred_check
          %p3767 = pneg %p230
        $region85: #{graph_classification_forward.6} parent=66 // pred_check_branch
          %3769 = sbr.rel (%p3767) target = $region87
        $region86: #{graph_classification_forward.6} parent=66 // pred_region
          %s3770 = smul.u32 32, %s24
        $region87: #{graph_classification_forward.6} parent=66 // pred_fallthru
          _
      $region67: #{graph_classification_forward.6} parent=5 // pred_fallthru
        _
      %p3771 = scmp.le.s32.totalorder 2, %s15
      // Predicated region
      $region88: #{graph_classification_forward.6} parent=5 // pred_check
        %p3772 = pneg %p3771
      $region89: #{graph_classification_forward.6} parent=5 // pred_check_branch
        %3774 = sbr.rel (%p3772) target = $region91
      $region90: #{graph_classification_forward.6} parent=5 // pred_region
        %s3775 = ssub.s32 %s15, 2
        // Predicated region
        $region92: #{graph_classification_forward.6} parent=90 // pred_check
          %p3776 = pneg %p210
        $region93: #{graph_classification_forward.6} parent=90 // pred_check_branch
          %3778 = sbr.rel (%p3776) target = $region95
        $region94: #{graph_classification_forward.6} parent=90 // pred_region
          %s3779 = smul.u32 32, %s26
          %p3780 = scmp.lt.s32.totalorder %s3779, 127
          %s3781 = scalar_select %p3780, %s3779, 127
          %s3782 = smul.addr %s3781, 4
          %s3783 = scalar_lea.vmem %s7, %s3782
        $region95: #{graph_classification_forward.6} parent=90 // pred_fallthru
          _
        // Predicated region
        $region96: #{graph_classification_forward.6} parent=90 // pred_check
          %p3784 = pneg %p236
        $region97: #{graph_classification_forward.6} parent=90 // pred_check_branch
          %3786 = sbr.rel (%p3784) target = $region99
        $region98: #{graph_classification_forward.6} parent=90 // pred_region
          %s3787 = smul.u32 32, %s26
          %p3788 = scmp.lt.s32.totalorder %s3787, 127
          %s3789 = scalar_select %p3788, %s3787, 127
          %s3790 = smul.addr %s3789, 8
          %s3791 = scalar_lea.vmem %s8, %s3790
        $region99: #{graph_classification_forward.6} parent=90 // pred_fallthru
          _
      $region91: #{graph_classification_forward.6} parent=5 // pred_fallthru
        _
    $region6: #{graph_classification_forward.6} parent=1 // loop_footer
      %s19 = sadd.s32 1, %s15
    $region7: #{graph_classification_forward.6} parent=1 // loop_footer_branch
      %14 = sbr.rel target = $region3
    $region8: #{graph_classification_forward.6} parent=1 // loop_exit
      _

</llo_original>
